<compile_context>
chip_gen: v7x
topology: tpu7x:2x2x1
jax: 0.10.0
libtpu: 0.0.40
codegen_flags: <defaults>
</compile_context>

<pallas_src>
import jax
import jax.numpy as jnp
from jax.experimental import pallas as pl
from jax.experimental.pallas import tpu as pltpu


# --------------------------------------------------------------------------
# Kernel
# --------------------------------------------------------------------------
def fusion_kernel(x_ref, w1c_ref, w2_ref, w3c_ref, w4_ref, consts_ref, o_ref):
    """One batch tile of the full FusionNetwork forward."""
    wdtype = w1c_ref.dtype
    h1 = w2_ref.shape[0]          # 1024
    h2 = w3c_ref.shape[0]         # 512
    h3 = w4_ref.shape[0]          # 256
    npad = w4_ref.shape[1]        # 128 (num_classes padded to a full lane block)

    # In-kernel f32 -> bf16 cast of the activations (keeps the wrapper free of
    # a separate XLA cast op).
    x = x_ref[...].astype(wdtype)                         # (tb, D)

    # Packed per-feature constants: [ c1 | bs1 | c2 | c3 | bs2 | b4 ]
    # (all chunk widths are multiples of 128 -> lane-aligned static slices).
    o0 = 0
    c1 = consts_ref[:, o0:o0 + h1];   o0 += h1            # bn1 shift (+ fc1 bias)
    bs1 = consts_ref[:, o0:o0 + h2];  o0 += h2            # skip1 bias
    c2 = consts_ref[:, o0:o0 + h2];   o0 += h2            # bn2 shift (+ fc2 bias)
    c3 = consts_ref[:, o0:o0 + h3];   o0 += h3            # bn3 shift (+ fc3 bias)
    bs2 = consts_ref[:, o0:o0 + npad]; o0 += npad         # skip2 bias (padded)
    b4 = consts_ref[:, o0:o0 + npad]                      # fc4 bias (padded)

    # Fused [fc1*bn1_scale | skip1]: one wide matmul over the shared LHS x.
    t = jnp.dot(x, w1c_ref[...], preferred_element_type=jnp.float32)   # (tb, h1+h2)
    a1 = jnp.maximum(t[:, :h1] + c1, 0.0)                 # relu(bn1(fc1(x)))
    id1 = t[:, h1:] + bs1                                 # identity1 = skip1(x)
    # dropout1: identity in eval mode.

    # relu(bn2(fc2(a1))) + identity1
    a2 = jnp.dot(a1.astype(wdtype), w2_ref[...], preferred_element_type=jnp.float32)
    a2 = jnp.maximum(a2 + c2, 0.0) + id1                  # (tb, h2)
    # dropout2: identity in eval mode.

    # Fused [fc3*bn3_scale | skip2_pad]: one matmul over the shared LHS a2.
    t = jnp.dot(a2.astype(wdtype), w3c_ref[...], preferred_element_type=jnp.float32)  # (tb, h3+npad)
    a3 = jnp.maximum(t[:, :h3] + c3, 0.0)                 # relu(bn3(fc3(a2)))
    id2 = t[:, h3:] + bs2                                 # identity2 = skip2(a2)
    # dropout3: identity in eval mode.

    out = jnp.dot(a3.astype(wdtype), w4_ref[...],
                  preferred_element_type=jnp.float32) + b4 + id2
    o_ref[...] = out.astype(o_ref.dtype)


# --------------------------------------------------------------------------
# Wrapper
# --------------------------------------------------------------------------
def _pick_tb(batch):
    """Largest MXU-filling batch tile that still leaves >= 2 grid steps
    (so both v7x TensorCores get work); 128 is the MXU-M floor."""
    for tb in (512, 256):
        if batch >= 2 * tb:
            return tb
    return 128


def fusion_network_forward(x, kparams, *, tb=None):
    """x: (B, input_dim) float32.  Returns (B, num_classes) float32."""
    B, D = x.shape
    num_classes = kparams["num_classes"]
    npad = kparams["w4"].shape[1]

    if tb is None:
        tb = _pick_tb(B)
    n_tiles = pl.cdiv(B, tb)
    Bp = n_tiles * tb
    xk = x if Bp == B else jnp.pad(x, ((0, Bp - B), (0, 0)))   # zero-pad batch

    def const_spec(arr):
        shp = arr.shape
        # Constant index_map: the same block is reused for every grid step.
        # TODO(synk): pipeline_mode=pl.Buffered(1) would drop the redundant
        # second buffer for these constant operands; omitted to stay on the
        # most portable BlockSpec API (VMEM is nowhere near the limit here).
        return pl.BlockSpec(shp, lambda i: (0,) * len(shp))

    in_specs = [
        pl.BlockSpec((tb, D), lambda i: (i, 0)),   # x, batch-tiled, stays f32
        const_spec(kparams["w1c"]),
        const_spec(kparams["w2"]),
        const_spec(kparams["w3c"]),
        const_spec(kparams["w4"]),
        const_spec(kparams["consts"]),
    ]
    out_specs = pl.BlockSpec((tb, npad), lambda i: (i, 0))     # lane-dense output

    out = pl.pallas_call(
        fusion_kernel,
        out_shape=jax.ShapeDtypeStruct((Bp, npad), jnp.float32),
        grid_spec=pltpu.PrefetchScalarGridSpec(
            num_scalar_prefetch=0,
            grid=(n_tiles,),
            in_specs=in_specs,
            out_specs=out_specs,
        ),
        compiler_params=pltpu.CompilerParams(
            # "parallel" lets the independent batch-tile axis shard across
            # TensorCores (the two TCs on v7x / megacore).
            dimension_semantics=("parallel",),
            # Real footprint is a few MiB even at tb=512; 32 MiB leaves
            # scheduling headroom on v7x's 64 MiB physical VMEM.
            vmem_limit_bytes=32 << 20,
        ),
    )(xk, kparams["w1c"], kparams["w2"], kparams["w3c"],
      kparams["w4"], kparams["consts"])

    # Padded batch rows pick up the bias/shift adds (nonzero) before being
    # sliced off here -- harmless since nothing reduces over batch in-kernel.
    return out[:B, :num_classes]


# --------------------------------------------------------------------------
# Parameters: raw (PyTorch-like, f32) and kernel-prepared (fused/padded, bf16)
# --------------------------------------------------------------------------
def init_raw_params(key, input_dim, num_classes=2):
    """Deterministic synthetic parameters mirroring FusionNetwork.__init__.
    Weights stored (in_features, out_features); BN uses non-trivial running
    stats so the eval-mode fold is genuinely exercised."""
    ks = jax.random.split(key, 24)

    def lin(kw, kb, fi, fo):
        w = 0.02 * jax.random.normal(kw, (fi, fo), jnp.float32)
        b = 0.01 * jax.random.normal(kb, (1, fo), jnp.float32)
        return w, b

    def bn(kg, kb, km, kv, n):
        gamma = 1.0 + 0.05 * jax.random.normal(kg, (1, n), jnp.float32)
        beta = 0.05 * jax.random.normal(kb, (1, n), jnp.float32)
        mean = 0.05 * jax.random.normal(km, (1, n), jnp.float32)
        var = 1.0 + 0.2 * jax.random.uniform(kv, (1, n), jnp.float32)
        return gamma, beta, mean, var

    p = {}
    p["w1"], p["b1"] = lin(ks[0], ks[1], input_dim, 1024)
    p["w2"], p["b2"] = lin(ks[2], ks[3], 1024, 512)
    p["w3"], p["b3"] = lin(ks[4], ks[5], 512, 256)
    p["w4"], p["b4"] = lin(ks[6], ks[7], 256, num_classes)
    p["ws1"], p["bs1"] = lin(ks[8], ks[9], input_dim, 512)
    p["ws2"], p["bs2"] = lin(ks[10], ks[11], 512, num_classes)
    p["g1"], p["be1"], p["m1"], p["v1"] = bn(ks[12], ks[13], ks[14], ks[15], 1024)
    p["g2"], p["be2"], p["m2"], p["v2"] = bn(ks[16], ks[17], ks[18], ks[19], 512)
    p["g3"], p["be3"], p["m3"], p["v3"] = bn(ks[20], ks[21], ks[22], ks[23], 256)
    p["num_classes"] = num_classes
    return p


def prepare_kernel_params(raw, *, pad_classes=128, weight_dtype=jnp.bfloat16,
                          eps=1e-5):
    """Fold BN into the Linears, fuse shared-LHS matmuls, pad the class dim,
    and pack all per-feature vectors into one lane-aligned constant array."""
    nc = raw["num_classes"]

    def fold(g, be, m, v):
        scale = g / jnp.sqrt(v + eps)
        shift = be - m * scale
        return scale, shift

    s1, sh1 = fold(raw["g1"], raw["be1"], raw["m1"], raw["v1"])
    s2, sh2 = fold(raw["g2"], raw["be2"], raw["m2"], raw["v2"])
    s3, sh3 = fold(raw["g3"], raw["be3"], raw["m3"], raw["v3"])

    # BN scale folded into the weight (f32 multiply, single bf16 rounding);
    # Linear bias folded into the BN shift.
    w1f = raw["w1"] * s1
    c1 = raw["b1"] * s1 + sh1
    w2f = raw["w2"] * s2
    c2 = raw["b2"] * s2 + sh2
    w3f = raw["w3"] * s3
    c3 = raw["b3"] * s3 + sh3

    # Zero-pad the tiny class dim to a full 128-lane block.
    cpad = pad_classes - nc
    w4p = jnp.pad(raw["w4"], ((0, 0), (0, cpad)))
    b4p = jnp.pad(raw["b4"], ((0, 0), (0, cpad)))
    ws2p = jnp.pad(raw["ws2"], ((0, 0), (0, cpad)))
    bs2p = jnp.pad(raw["bs2"], ((0, 0), (0, cpad)))

    # Fuse matmuls that share an LHS.
    w1c = jnp.concatenate([w1f, raw["ws1"]], axis=1)       # (D, 1024 + 512)
    w3c = jnp.concatenate([w3f, ws2p], axis=1)             # (512, 256 + 128)

    # Pack every per-feature f32 vector into one operand:
    #   [ c1(1024) | bs1(512) | c2(512) | c3(256) | bs2(128) | b4(128) ] = 2560
    consts = jnp.concatenate([c1, raw["bs1"], c2, c3, bs2p, b4p], axis=1)

    return {
        "w1c": w1c.astype(weight_dtype),
        "w2": w2f.astype(weight_dtype),
        "w3c": w3c.astype(weight_dtype),
        "w4": w4p.astype(weight_dtype),
        "consts": consts.astype(jnp.float32),
        "num_classes": nc,
    }


# --------------------------------------------------------------------------
# Unfused f32 reference of the original PyTorch forward (eval mode)
# --------------------------------------------------------------------------
def reference_forward(x, raw, eps=1e-5):
    hi = jax.lax.Precision.HIGHEST

    def bn(y, g, be, m, v):
        return (y - m) / jnp.sqrt(v + eps) * g + be

    identity1 = jnp.dot(x, raw["ws1"], precision=hi) + raw["bs1"]
    h = jax.nn.relu(bn(jnp.dot(x, raw["w1"], precision=hi) + raw["b1"],
                       raw["g1"], raw["be1"], raw["m1"], raw["v1"]))
    # dropout1: identity (eval)
    h = jax.nn.relu(bn(jnp.dot(h, raw["w2"], precision=hi) + raw["b2"],
                       raw["g2"], raw["be2"], raw["m2"], raw["v2"]))
    h = h + identity1
    # dropout2: identity (eval)
    identity2 = jnp.dot(h, raw["ws2"], precision=hi) + raw["bs2"]
    h = jax.nn.relu(bn(jnp.dot(h, raw["w3"], precision=hi) + raw["b3"],
                       raw["g3"], raw["be3"], raw["m3"], raw["v3"]))
    # dropout3: identity (eval)
    return jnp.dot(h, raw["w4"], precision=hi) + raw["b4"] + identity2


# --------------------------------------------------------------------------
if __name__ == "__main__":
    key = jax.random.PRNGKey(0)
    B, input_dim, num_classes = 512, 128, 2   # tb auto-picks 256 -> 2 grid steps

    kx, kp = jax.random.split(key)
    x = jax.random.normal(kx, (B, input_dim), jnp.float32)
    raw = init_raw_params(kp, input_dim, num_classes)
    kparams = prepare_kernel_params(raw)

    out = fusion_network_forward(x, kparams)
    out = jax.block_until_ready(out)

    ref = reference_forward(x, raw)
    assert out.shape == (B, num_classes)
    assert jnp.allclose(out, ref, atol=2e-2, rtol=2e-2), (
        "mismatch vs unfused f32 reference: max |diff| = "
        f"{float(jnp.max(jnp.abs(out - ref)))}")

    print("KERNEL_OK")
</pallas_src>

<mosaic_0001>
module attributes {stable_mosaic.version = 11 : i64} {
  func.func @fusion_kernel(%arg0: i32, %arg1: memref<256x128xf32, #tpu.memory_space<vmem>>, %arg2: memref<128x1536xbf16, #tpu.memory_space<vmem>>, %arg3: memref<1024x512xbf16, #tpu.memory_space<vmem>>, %arg4: memref<512x384xbf16, #tpu.memory_space<vmem>>, %arg5: memref<256x128xbf16, #tpu.memory_space<vmem>>, %arg6: memref<1x2560xf32, #tpu.memory_space<vmem>>, %arg7: memref<256x128xf32, #tpu.memory_space<vmem>>) attributes {dimension_semantics = [#tpu.dimension_semantics<parallel>], iteration_bounds = array<i64: 2>, scalar_prefetch = 0 : i64, scratch_operands = 0 : i64, tpu.core_type = #tpu.core_type<tc>, window_params = [{transform_indices = @transform_0, window_bounds = array<i64: 256, 128>}, {pipeline_mode = #tpu.pipeline_mode<synchronous>, transform_indices = @transform_1, window_bounds = array<i64: 128, 1536>}, {pipeline_mode = #tpu.pipeline_mode<synchronous>, transform_indices = @transform_2, window_bounds = array<i64: 1024, 512>}, {pipeline_mode = #tpu.pipeline_mode<synchronous>, transform_indices = @transform_3, window_bounds = array<i64: 512, 384>}, {pipeline_mode = #tpu.pipeline_mode<synchronous>, transform_indices = @transform_4, window_bounds = array<i64: 256, 128>}, {pipeline_mode = #tpu.pipeline_mode<synchronous>, transform_indices = @transform_5, window_bounds = array<i64: 1, 2560>}, {transform_indices = @transform_6, window_bounds = array<i64: 256, 128>}]} {
    %c0 = arith.constant 0 : index
    %c0_0 = arith.constant 0 : index
    %0 = vector.load %arg1[%c0, %c0_0] : memref<256x128xf32, #tpu.memory_space<vmem>>, vector<256x128xf32>
    %1 = arith.truncf %0 : vector<256x128xf32> to vector<256x128xbf16>
    %c0_1 = arith.constant 0 : index
    %c0_2 = arith.constant 0 : index
    %2 = vector.load %arg6[%c0_1, %c0_2] : memref<1x2560xf32, #tpu.memory_space<vmem>>, vector<1x1024xf32>
    %c0_3 = arith.constant 0 : index
    %c1024 = arith.constant 1024 : index
    %3 = vector.load %arg6[%c0_3, %c1024] : memref<1x2560xf32, #tpu.memory_space<vmem>>, vector<1x512xf32>
    %c0_4 = arith.constant 0 : index
    %c1536 = arith.constant 1536 : index
    %4 = vector.load %arg6[%c0_4, %c1536] : memref<1x2560xf32, #tpu.memory_space<vmem>>, vector<1x512xf32>
    %c0_5 = arith.constant 0 : index
    %c2048 = arith.constant 2048 : index
    %5 = vector.load %arg6[%c0_5, %c2048] : memref<1x2560xf32, #tpu.memory_space<vmem>>, vector<1x256xf32>
    %c0_6 = arith.constant 0 : index
    %c2304 = arith.constant 2304 : index
    %6 = vector.load %arg6[%c0_6, %c2304] : memref<1x2560xf32, #tpu.memory_space<vmem>>, vector<1x128xf32>
    %c0_7 = arith.constant 0 : index
    %c2432 = arith.constant 2432 : index
    %7 = vector.load %arg6[%c0_7, %c2432] : memref<1x2560xf32, #tpu.memory_space<vmem>>, vector<1x128xf32>
    %c0_8 = arith.constant 0 : index
    %c0_9 = arith.constant 0 : index
    %8 = vector.load %arg2[%c0_8, %c0_9] : memref<128x1536xbf16, #tpu.memory_space<vmem>>, vector<128x1536xbf16>
    %cst = arith.constant dense<0.000000e+00> : vector<256x1536xf32>
    %9 = tpu.matmul %1, %8, %cst {dimension_numbers = #tpu.dot_dimension_numbers<[1], [0], [0], [1], [0, 0, 1, 1], [], []>} : vector<256x128xbf16>, vector<128x1536xbf16>, vector<256x1536xf32> -> vector<256x1536xf32>
    %10 = vector.extract_strided_slice %9 {offsets = [0, 0], sizes = [256, 1024], strides = [1, 1]} : vector<256x1536xf32> to vector<256x1024xf32>
    %11 = vector.broadcast %2 : vector<1x1024xf32> to vector<256x1024xf32>
    %12 = arith.addf %10, %11 : vector<256x1024xf32>
    %cst_10 = arith.constant 0.000000e+00 : f32
    %13 = vector.broadcast %cst_10 : f32 to vector<256x1024xf32>
    %14 = arith.maximumf %12, %13 : vector<256x1024xf32>
    %15 = vector.extract_strided_slice %9 {offsets = [0, 1024], sizes = [256, 512], strides = [1, 1]} : vector<256x1536xf32> to vector<256x512xf32>
    %16 = vector.broadcast %3 : vector<1x512xf32> to vector<256x512xf32>
    %17 = arith.addf %15, %16 : vector<256x512xf32>
    %18 = arith.truncf %14 : vector<256x1024xf32> to vector<256x1024xbf16>
    %c0_11 = arith.constant 0 : index
    %c0_12 = arith.constant 0 : index
    %19 = vector.load %arg3[%c0_11, %c0_12] : memref<1024x512xbf16, #tpu.memory_space<vmem>>, vector<1024x512xbf16>
    %cst_13 = arith.constant dense<0.000000e+00> : vector<256x512xf32>
    %20 = tpu.matmul %18, %19, %cst_13 {dimension_numbers = #tpu.dot_dimension_numbers<[1], [0], [0], [1], [0, 0, 1, 1], [], []>} : vector<256x1024xbf16>, vector<1024x512xbf16>, vector<256x512xf32> -> vector<256x512xf32>
    %21 = vector.broadcast %4 : vector<1x512xf32> to vector<256x512xf32>
    %22 = arith.addf %20, %21 : vector<256x512xf32>
    %cst_14 = arith.constant 0.000000e+00 : f32
    %23 = vector.broadcast %cst_14 : f32 to vector<256x512xf32>
    %24 = arith.maximumf %22, %23 : vector<256x512xf32>
    %25 = arith.addf %24, %17 : vector<256x512xf32>
    %26 = arith.truncf %25 : vector<256x512xf32> to vector<256x512xbf16>
    %c0_15 = arith.constant 0 : index
    %c0_16 = arith.constant 0 : index
    %27 = vector.load %arg4[%c0_15, %c0_16] : memref<512x384xbf16, #tpu.memory_space<vmem>>, vector<512x384xbf16>
    %cst_17 = arith.constant dense<0.000000e+00> : vector<256x384xf32>
    %28 = tpu.matmul %26, %27, %cst_17 {dimension_numbers = #tpu.dot_dimension_numbers<[1], [0], [0], [1], [0, 0, 1, 1], [], []>} : vector<256x512xbf16>, vector<512x384xbf16>, vector<256x384xf32> -> vector<256x384xf32>
    %29 = vector.extract_strided_slice %28 {offsets = [0, 0], sizes = [256, 256], strides = [1, 1]} : vector<256x384xf32> to vector<256x256xf32>
    %30 = vector.broadcast %5 : vector<1x256xf32> to vector<256x256xf32>
    %31 = arith.addf %29, %30 : vector<256x256xf32>
    %cst_18 = arith.constant 0.000000e+00 : f32
    %32 = vector.broadcast %cst_18 : f32 to vector<256x256xf32>
    %33 = arith.maximumf %31, %32 : vector<256x256xf32>
    %34 = vector.extract_strided_slice %28 {offsets = [0, 256], sizes = [256, 128], strides = [1, 1]} : vector<256x384xf32> to vector<256x128xf32>
    %35 = vector.broadcast %6 : vector<1x128xf32> to vector<256x128xf32>
    %36 = arith.addf %34, %35 : vector<256x128xf32>
    %37 = arith.truncf %33 : vector<256x256xf32> to vector<256x256xbf16>
    %c0_19 = arith.constant 0 : index
    %c0_20 = arith.constant 0 : index
    %38 = vector.load %arg5[%c0_19, %c0_20] : memref<256x128xbf16, #tpu.memory_space<vmem>>, vector<256x128xbf16>
    %cst_21 = arith.constant dense<0.000000e+00> : vector<256x128xf32>
    %39 = tpu.matmul %37, %38, %cst_21 {dimension_numbers = #tpu.dot_dimension_numbers<[1], [0], [0], [1], [0, 0, 1, 1], [], []>} : vector<256x256xbf16>, vector<256x128xbf16>, vector<256x128xf32> -> vector<256x128xf32>
    %40 = vector.broadcast %7 : vector<1x128xf32> to vector<256x128xf32>
    %41 = arith.addf %39, %40 : vector<256x128xf32>
    %42 = arith.addf %41, %36 : vector<256x128xf32>
    %c0_22 = arith.constant 0 : index
    %c0_23 = arith.constant 0 : index
    %43 = vector.load %arg7[%c0_22, %c0_23] : memref<256x128xf32, #tpu.memory_space<vmem>>, vector<256x128xf32>
    tpu.vector_store %arg7[%c0_22, %c0_23], %42 {strides = array<i32>} : memref<256x128xf32, #tpu.memory_space<vmem>>, vector<256x128xf32>,
    return
  }
  func.func @transform_0(%arg0: i32) -> (i32, i32) {
    %c0_i32 = arith.constant 0 : i32
    %c0_i32_0 = arith.constant 0 : i32
    return %arg0, %c0_i32 : i32, i32
  }
  func.func @transform_1(%arg0: i32) -> (i32, i32) {
    %c0_i32 = arith.constant 0 : i32
    %c0_i32_0 = arith.constant 0 : i32
    %c0_i32_1 = arith.constant 0 : i32
    return %c0_i32, %c0_i32_0 : i32, i32
  }
  func.func @transform_2(%arg0: i32) -> (i32, i32) {
    %c0_i32 = arith.constant 0 : i32
    %c0_i32_0 = arith.constant 0 : i32
    %c0_i32_1 = arith.constant 0 : i32
    return %c0_i32, %c0_i32_0 : i32, i32
  }
  func.func @transform_3(%arg0: i32) -> (i32, i32) {
    %c0_i32 = arith.constant 0 : i32
    %c0_i32_0 = arith.constant 0 : i32
    %c0_i32_1 = arith.constant 0 : i32
    return %c0_i32, %c0_i32_0 : i32, i32
  }
  func.func @transform_4(%arg0: i32) -> (i32, i32) {
    %c0_i32 = arith.constant 0 : i32
    %c0_i32_0 = arith.constant 0 : i32
    %c0_i32_1 = arith.constant 0 : i32
    return %c0_i32, %c0_i32_0 : i32, i32
  }
  func.func @transform_5(%arg0: i32) -> (i32, i32) {
    %c0_i32 = arith.constant 0 : i32
    %c0_i32_0 = arith.constant 0 : i32
    %c0_i32_1 = arith.constant 0 : i32
    return %c0_i32, %c0_i32_0 : i32, i32
  }
  func.func @transform_6(%arg0: i32) -> (i32, i32) {
    %c0_i32 = arith.constant 0 : i32
    %c0_i32_0 = arith.constant 0 : i32
    return %arg0, %c0_i32 : i32, i32
  }
}

</mosaic_0001>

<llo_original>
// kernel: tpu_custom_call.1
$region0: #{tpu_custom_call.1}
  #allocation0 [shape = 'u32[]', space=smem, size = 0x4, offset = 0x4, fixed_abs, tag = 'smem constant byte address 0x4 - core index']
  #allocation1 [shape = 'u32[144,128]{1,0:T(1,128)}', space=vmem, size = 0x12000, scoped, tag = 'internal scratch']
  %s0 = inlined_call_operand.hbm [shape: f32[512,128], index: 0, kind: input, shape index: {}]
  %s1 = inlined_call_operand.hbm [shape: bf16[128,1536], index: 1, kind: input, shape index: {}]
  %s2 = inlined_call_operand.hbm [shape: bf16[1024,512], index: 2, kind: input, shape index: {}]
  %s3 = inlined_call_operand.hbm [shape: bf16[512,384], index: 3, kind: input, shape index: {}]
  %s4 = inlined_call_operand.hbm [shape: bf16[256,128], index: 4, kind: input, shape index: {}]
  %s5 = inlined_call_operand.hbm [shape: f32[1,2560], index: 5, kind: input, shape index: {}]
  %s6 = inlined_call_operand.hbm [shape: f32[512,128], index: 6, kind: output, shape index: {}]
  %s7 = sld [smem:[#allocation0]]
  $region81: #{tpu_custom_call.1} parent=0
    _
  %s9 = ssub.s32 1, %s7
  %s10 = scalar_select 0, %s9, %s7
  $region1: #{tpu_custom_call.1} parent=0
    #allocation2 [shape = 'u8[262144]{0}', space=vmem, size = 0x40000, scoped, tag = 'input window, operand 0']
    #allocation3 [shape = 's32[2]{0}', space=sflag, size = 0x8, scoped, tag = 'scoped memory for tpu_custom_call.1']
    #allocation4 [shape = 's32[2]{0}', space=sflag, size = 0x8, scoped, tag = 'scoped memory for tpu_custom_call.1']
    #allocation5 [shape = 'u8[393216]{0}', space=vmem, size = 0x60000, scoped, tag = 'input window, operand 1, single buffered']
    #allocation6 [shape = 's32[1]{0}', space=sflag, size = 0x4, scoped, tag = 'scoped memory for tpu_custom_call.1']
    #allocation7 [shape = 'u8[1048576]{0}', space=vmem, size = 0x100000, scoped, tag = 'input window, operand 2, single buffered']
    #allocation8 [shape = 'u8[393216]{0}', space=vmem, size = 0x60000, scoped, tag = 'input window, operand 3, single buffered']
    #allocation9 [shape = 's32[1]{0}', space=sflag, size = 0x4, scoped, tag = 'scoped memory for tpu_custom_call.1']
    #allocation10 [shape = 'u8[65536]{0}', space=vmem, size = 0x10000, scoped, tag = 'input window, operand 4, single buffered']
    #allocation11 [shape = 'u8[10240]{0}', space=vmem, size = 0x2800, scoped, tag = 'input window, operand 5, single buffered']
    #allocation12 [shape = 's32[1]{0}', space=sflag, size = 0x4, scoped, tag = 'scoped memory for tpu_custom_call.1']
    #allocation13 [shape = 'u8[262144]{0}', space=vmem, size = 0x40000, scoped, tag = 'output window, operand 0']
    %11 = vsyncpa [#allocation3], 0
    %s12 = scalar_lea.sflag [#allocation3], 1
    %13 = vsyncpa %s12, 0
    %14 = vsyncpa [#allocation6], 0
    %15 = vsyncpa [#allocation9], 0
    %16 = vsyncpa [#allocation12], 0
    %17 = vsyncpa [#allocation4], 0
    %s18 = scalar_lea.sflag [#allocation4], 1
    %19 = vsyncpa %s18, 0
    loop: start=0, step=1, limit=4
    $region2: #{tpu_custom_call.1} parent=1 // loop_pre_header
      _
    $region3: #{tpu_custom_call.1} parent=1 // loop_header
      %s21 = sphi 0, %s25
      %p22 = scmp.ge.s32.totalorder %s21, 4
      %s31 = sphi 0, %s33
      %s34 = sphi 0, %s31
      %s35 = sphi 0, %s34
      %s51 = sphi 0, %s35
      %s55 = sphi 0, %s55
      %s57 = sphi 0, %s55
      %s58 = sphi 0, %s57
      %s72 = sphi 0, %s58
      %s76 = sphi 0, %s76
      %s78 = sphi 0, %s76
      %s79 = sphi 0, %s78
      %s93 = sphi 0, %s79
      %s97 = sphi 0, %s97
      %s99 = sphi 0, %s97
      %s100 = sphi 0, %s99
      %s114 = sphi 0, %s100
      %s118 = sphi 0, %s118
      %s120 = sphi 0, %s118
      %s121 = sphi 0, %s120
      %s135 = sphi 0, %s121
      %s139 = sphi 0, %s139
      %s141 = sphi 0, %s139
      %s142 = sphi 0, %s141
      %s156 = sphi 0, %s142
      %s162 = sphi 0, %s164
      %s165 = sphi 0, %s162
      %s166 = sphi 0, %s165
      %s182 = sphi 0, %s166
    $region4: #{tpu_custom_call.1} parent=1 // loop_header_branch
      %24 = sbr.rel (%p22) target = $region8
    $region5: #{tpu_custom_call.1} parent=1 // loop_body
      %s26 = ssub.s32 %s21, 1
      %s27 = ssub.s32 %s21, 2
      %s28 = sadd.s32 %s21, 1
      %s29 = ssub.s32 %s21, %s28
      %p30 = scmp.eq.s32.totalorder %s29, 0
      %s32 = sadd.s32 %s31, 1
      %s33 = scalar_select %p30, %s31, %s32
      %p36 = pneg %p30
      %p37 = scmp.eq.s32.totalorder %s21, 1
      %p38 = por %p36, %p37
      %p39 = scmp.ne.s32.totalorder %s31, %s34
      %p40 = scmp.eq.s32.totalorder %s21, 0
      %p41 = por %p39, %p40
      %p42 = scmp.ne.s32.totalorder %s31, %s34
      %p43 = scmp.eq.s32.totalorder %s26, 1
      %p44 = por %p42, %p43
      %p45 = scmp.ne.s32.totalorder %s34, %s35
      %p46 = scmp.eq.s32.totalorder %s26, 0
      %p47 = por %p45, %p46
      %p48 = scmp.ne.s32.totalorder %s34, %s35
      %p49 = scmp.eq.s32.totalorder %s27, 1
      %p50 = por %p48, %p49
      %p52 = scmp.ne.s32.totalorder %s35, %s51
      %p53 = scmp.eq.s32.totalorder %s27, 0
      %p54 = por %p52, %p53
      %s56 = sadd.s32 %s55, 1
      %p59 = scmp.eq.s32.totalorder %s21, 1
      %p60 = scmp.ne.s32.totalorder %s55, %s57
      %p61 = scmp.eq.s32.totalorder %s21, 0
      %p62 = por %p60, %p61
      %p63 = scmp.ne.s32.totalorder %s55, %s57
      %p64 = scmp.eq.s32.totalorder %s26, 1
      %p65 = por %p63, %p64
      %p66 = scmp.ne.s32.totalorder %s57, %s58
      %p67 = scmp.eq.s32.totalorder %s26, 0
      %p68 = por %p66, %p67
      %p69 = scmp.ne.s32.totalorder %s57, %s58
      %p70 = scmp.eq.s32.totalorder %s27, 1
      %p71 = por %p69, %p70
      %p73 = scmp.ne.s32.totalorder %s58, %s72
      %p74 = scmp.eq.s32.totalorder %s27, 0
      %p75 = por %p73, %p74
      %s77 = sadd.s32 %s76, 1
      %p80 = scmp.eq.s32.totalorder %s21, 1
      %p81 = scmp.ne.s32.totalorder %s76, %s78
      %p82 = scmp.eq.s32.totalorder %s21, 0
      %p83 = por %p81, %p82
      %p84 = scmp.ne.s32.totalorder %s76, %s78
      %p85 = scmp.eq.s32.totalorder %s26, 1
      %p86 = por %p84, %p85
      %p87 = scmp.ne.s32.totalorder %s78, %s79
      %p88 = scmp.eq.s32.totalorder %s26, 0
      %p89 = por %p87, %p88
      %p90 = scmp.ne.s32.totalorder %s78, %s79
      %p91 = scmp.eq.s32.totalorder %s27, 1
      %p92 = por %p90, %p91
      %p94 = scmp.ne.s32.totalorder %s79, %s93
      %p95 = scmp.eq.s32.totalorder %s27, 0
      %p96 = por %p94, %p95
      %s98 = sadd.s32 %s97, 1
      %p101 = scmp.eq.s32.totalorder %s21, 1
      %p102 = scmp.ne.s32.totalorder %s97, %s99
      %p103 = scmp.eq.s32.totalorder %s21, 0
      %p104 = por %p102, %p103
      %p105 = scmp.ne.s32.totalorder %s97, %s99
      %p106 = scmp.eq.s32.totalorder %s26, 1
      %p107 = por %p105, %p106
      %p108 = scmp.ne.s32.totalorder %s99, %s100
      %p109 = scmp.eq.s32.totalorder %s26, 0
      %p110 = por %p108, %p109
      %p111 = scmp.ne.s32.totalorder %s99, %s100
      %p112 = scmp.eq.s32.totalorder %s27, 1
      %p113 = por %p111, %p112
      %p115 = scmp.ne.s32.totalorder %s100, %s114
      %p116 = scmp.eq.s32.totalorder %s27, 0
      %p117 = por %p115, %p116
      %s119 = sadd.s32 %s118, 1
      %p122 = scmp.eq.s32.totalorder %s21, 1
      %p123 = scmp.ne.s32.totalorder %s118, %s120
      %p124 = scmp.eq.s32.totalorder %s21, 0
      %p125 = por %p123, %p124
      %p126 = scmp.ne.s32.totalorder %s118, %s120
      %p127 = scmp.eq.s32.totalorder %s26, 1
      %p128 = por %p126, %p127
      %p129 = scmp.ne.s32.totalorder %s120, %s121
      %p130 = scmp.eq.s32.totalorder %s26, 0
      %p131 = por %p129, %p130
      %p132 = scmp.ne.s32.totalorder %s120, %s121
      %p133 = scmp.eq.s32.totalorder %s27, 1
      %p134 = por %p132, %p133
      %p136 = scmp.ne.s32.totalorder %s121, %s135
      %p137 = scmp.eq.s32.totalorder %s27, 0
      %p138 = por %p136, %p137
      %s140 = sadd.s32 %s139, 1
      %p143 = scmp.eq.s32.totalorder %s21, 1
      %p144 = scmp.ne.s32.totalorder %s139, %s141
      %p145 = scmp.eq.s32.totalorder %s21, 0
      %p146 = por %p144, %p145
      %p147 = scmp.ne.s32.totalorder %s139, %s141
      %p148 = scmp.eq.s32.totalorder %s26, 1
      %p149 = por %p147, %p148
      %p150 = scmp.ne.s32.totalorder %s141, %s142
      %p151 = scmp.eq.s32.totalorder %s26, 0
      %p152 = por %p150, %p151
      %p153 = scmp.ne.s32.totalorder %s141, %s142
      %p154 = scmp.eq.s32.totalorder %s27, 1
      %p155 = por %p153, %p154
      %p157 = scmp.ne.s32.totalorder %s142, %s156
      %p158 = scmp.eq.s32.totalorder %s27, 0
      %p159 = por %p157, %p158
      %s160 = ssub.s32 %s21, %s28
      %p161 = scmp.eq.s32.totalorder %s160, 0
      %s163 = sadd.s32 %s162, 1
      %s164 = scalar_select %p161, %s162, %s163
      %p167 = pneg %p161
      %p168 = scmp.eq.s32.totalorder %s21, 1
      %p169 = por %p167, %p168
      %p170 = scmp.ne.s32.totalorder %s162, %s165
      %p171 = scmp.eq.s32.totalorder %s21, 0
      %p172 = por %p170, %p171
      %p173 = scmp.ne.s32.totalorder %s162, %s165
      %p174 = scmp.eq.s32.totalorder %s26, 1
      %p175 = por %p173, %p174
      %p176 = scmp.ne.s32.totalorder %s165, %s166
      %p177 = scmp.eq.s32.totalorder %s26, 0
      %p178 = por %p176, %p177
      %p179 = scmp.ne.s32.totalorder %s165, %s166
      %p180 = scmp.eq.s32.totalorder %s27, 1
      %p181 = por %p179, %p180
      %p183 = scmp.ne.s32.totalorder %s166, %s182
      %p184 = scmp.eq.s32.totalorder %s27, 0
      %p185 = por %p183, %p184
      %p186 = scmp.le.s32.totalorder 1, %s21
      %p187 = scmp.lt.s32.totalorder %s21, 3
      %p188 = pnand %p186, %p187
      %p189 = pneg %p188
      // Predicated region
      $region9: #{tpu_custom_call.1} parent=5 // pred_check
        _
      $region10: #{tpu_custom_call.1} parent=5 // pred_check_branch
        %191 = sbr.rel (%p188) target = $region12
      $region11: #{tpu_custom_call.1} parent=5 // pred_region
        %s192 = ssub.s32 %s21, 1
        // Predicated region
        $region13: #{tpu_custom_call.1} parent=11 // pred_check
          %p193 = pneg %p68
        $region14: #{tpu_custom_call.1} parent=11 // pred_check_branch
          %195 = sbr.rel (%p193) target = $region16
        $region15: #{tpu_custom_call.1} parent=11 // pred_region
          %s197 = ssub.s32 12288, 12288
          %198 = vsyncadd [#allocation6], %s197
          %s199 = sshll.u32 [#allocation5], 4
          %s200 = int_to_ptr.vmem [resolvable:$true] %s199
          %205 = dma.hbm_to_vmem [thread:$0]  %s1, 12288, %s200, [#allocation6], 768, 768, 48
        $region16: #{tpu_custom_call.1} parent=11 // pred_fallthru
          _
        // Predicated region
        $region17: #{tpu_custom_call.1} parent=11 // pred_check
          %p206 = pneg %p89
        $region18: #{tpu_custom_call.1} parent=11 // pred_check_branch
          %208 = sbr.rel (%p206) target = $region20
        $region19: #{tpu_custom_call.1} parent=11 // pred_region
          %s210 = ssub.s32 32768, 32768
          %211 = vsyncadd [#allocation6], %s210
          %s212 = sshll.u32 [#allocation7], 4
          %s213 = int_to_ptr.vmem [resolvable:$true] %s212
          %218 = dma.hbm_to_vmem [thread:$0]  %s2, 32768, %s213, [#allocation6], 256, 256, 16
        $region20: #{tpu_custom_call.1} parent=11 // pred_fallthru
          _
        // Predicated region
        $region21: #{tpu_custom_call.1} parent=11 // pred_check
          %p219 = pneg %p110
        $region22: #{tpu_custom_call.1} parent=11 // pred_check_branch
          %221 = sbr.rel (%p219) target = $region24
        $region23: #{tpu_custom_call.1} parent=11 // pred_region
          %s223 = ssub.s32 12288, 12288
          %224 = vsyncadd [#allocation9], %s223
          %s225 = sshll.u32 [#allocation8], 4
          %s226 = int_to_ptr.vmem [resolvable:$true] %s225
          %231 = dma.hbm_to_vmem [thread:$0]  %s3, 12288, %s226, [#allocation9], 192, 192, 12
        $region24: #{tpu_custom_call.1} parent=11 // pred_fallthru
          _
        // Predicated region
        $region25: #{tpu_custom_call.1} parent=11 // pred_check
          %p232 = pneg %p131
        $region26: #{tpu_custom_call.1} parent=11 // pred_check_branch
          %234 = sbr.rel (%p232) target = $region28
        $region27: #{tpu_custom_call.1} parent=11 // pred_region
          %s236 = ssub.s32 2048, 2048
          %237 = vsyncadd [#allocation9], %s236
          %s238 = sshll.u32 [#allocation10], 4
          %s239 = int_to_ptr.vmem [resolvable:$true] %s238
          %244 = dma.hbm_to_vmem [thread:$0]  %s4, 2048, %s239, [#allocation9], 64, 64, 4
        $region28: #{tpu_custom_call.1} parent=11 // pred_fallthru
          _
        // Predicated region
        $region29: #{tpu_custom_call.1} parent=11 // pred_check
          %p245 = pneg %p152
        $region30: #{tpu_custom_call.1} parent=11 // pred_check_branch
          %247 = sbr.rel (%p245) target = $region32
        $region31: #{tpu_custom_call.1} parent=11 // pred_region
          %s249 = ssub.s32 320, 320
          %250 = vsyncadd [#allocation12], %s249
          %s252 = sshll.u32 [#allocation11], 4
          %s253 = int_to_ptr.vmem [resolvable:$true] %s252
          %255 = dma.hbm_to_vmem [thread:$0]  %s5, 320, %s253, [#allocation12]
        $region32: #{tpu_custom_call.1} parent=11 // pred_fallthru
          _
      $region12: #{tpu_custom_call.1} parent=5 // pred_fallthru
        _
      %p256 = scmp.lt.s32.totalorder %s21, 2
      // Predicated region
      $region33: #{tpu_custom_call.1} parent=5 // pred_check
        %p257 = pneg %p256
      $region34: #{tpu_custom_call.1} parent=5 // pred_check_branch
        %259 = sbr.rel (%p257) target = $region36
      $region35: #{tpu_custom_call.1} parent=5 // pred_region
        // Predicated region
        $region37: #{tpu_custom_call.1} parent=35 // pred_check
          %p260 = pneg %p41
        $region38: #{tpu_custom_call.1} parent=35 // pred_check_branch
          %262 = sbr.rel (%p260) target = $region40
        $region39: #{tpu_custom_call.1} parent=35 // pred_region
          %s263 = sand.u32 %s31, 1
          %s264 = scalar_lea.sflag [#allocation3], %s263
          %s265 = sand.u32 %s31, 1
          %s266 = smul.addr %s265, 256
          %s267 = scalar_lea.vmem [#allocation2], %s266
          %s268 = smul.u32 32, %s21
          %s270 = ssub.s32 4096, 4096
          %271 = vsyncadd %s264, %s270
          %s272 = smul.addr %s268, 128
          %s273 = scalar_lea.hbm %s0, %s272
          %s274 = sshll.u32 %s267, 4
          %s275 = int_to_ptr.vmem [resolvable:$true] %s274
          %280 = dma.hbm_to_vmem [thread:$0]  %s273, 4096, %s275, %s264, 128, 128, 8
        $region40: #{tpu_custom_call.1} parent=35 // pred_fallthru
          _
      $region36: #{tpu_custom_call.1} parent=5 // pred_fallthru
        _
      %p281 = scmp.le.s32.totalorder 1, %s21
      %p282 = scmp.lt.s32.totalorder %s21, 3
      %p283 = pnand %p281, %p282
      %p284 = pneg %p283
      // Predicated region
      $region41: #{tpu_custom_call.1} parent=5 // pred_check
        _
      $region42: #{tpu_custom_call.1} parent=5 // pred_check_branch
        %286 = sbr.rel (%p283) target = $region44
      $region43: #{tpu_custom_call.1} parent=5 // pred_region
        %s287 = ssub.s32 %s21, 1
        %s288 = sand.u32 %s34, 1
        %s289 = scalar_lea.sflag [#allocation3], %s288
        %s290 = sand.u32 %s34, 1
        %s291 = smul.addr %s290, 256
        %s292 = scalar_lea.vmem [#allocation2], %s291
        // Predicated region
        $region45: #{tpu_custom_call.1} parent=43 // pred_check
          %p293 = pneg %p47
        $region46: #{tpu_custom_call.1} parent=43 // pred_check_branch
          %295 = sbr.rel (%p293) target = $region48
        $region47: #{tpu_custom_call.1} parent=43 // pred_region
          %296 = dma.done %s289, 4096
        $region48: #{tpu_custom_call.1} parent=43 // pred_fallthru
          _
        // Predicated region
        $region49: #{tpu_custom_call.1} parent=43 // pred_check
          %p297 = pneg %p68
        $region50: #{tpu_custom_call.1} parent=43 // pred_check_branch
          %299 = sbr.rel (%p297) target = $region52
        $region51: #{tpu_custom_call.1} parent=43 // pred_region
          %300 = dma.done [#allocation6], 12288
        $region52: #{tpu_custom_call.1} parent=43 // pred_fallthru
          _
        // Predicated region
        $region53: #{tpu_custom_call.1} parent=43 // pred_check
          %p301 = pneg %p89
        $region54: #{tpu_custom_call.1} parent=43 // pred_check_branch
          %303 = sbr.rel (%p301) target = $region56
        $region55: #{tpu_custom_call.1} parent=43 // pred_region
          %304 = dma.done [#allocation6], 32768
        $region56: #{tpu_custom_call.1} parent=43 // pred_fallthru
          _
        // Predicated region
        $region57: #{tpu_custom_call.1} parent=43 // pred_check
          %p305 = pneg %p110
        $region58: #{tpu_custom_call.1} parent=43 // pred_check_branch
          %307 = sbr.rel (%p305) target = $region60
        $region59: #{tpu_custom_call.1} parent=43 // pred_region
          %308 = dma.done [#allocation9], 12288
        $region60: #{tpu_custom_call.1} parent=43 // pred_fallthru
          _
        // Predicated region
        $region61: #{tpu_custom_call.1} parent=43 // pred_check
          %p309 = pneg %p131
        $region62: #{tpu_custom_call.1} parent=43 // pred_check_branch
          %311 = sbr.rel (%p309) target = $region64
        $region63: #{tpu_custom_call.1} parent=43 // pred_region
          %312 = dma.done [#allocation9], 2048
        $region64: #{tpu_custom_call.1} parent=43 // pred_fallthru
          _
        // Predicated region
        $region65: #{tpu_custom_call.1} parent=43 // pred_check
          %p313 = pneg %p152
        $region66: #{tpu_custom_call.1} parent=43 // pred_check_branch
          %315 = sbr.rel (%p313) target = $region68
        $region67: #{tpu_custom_call.1} parent=43 // pred_region
          %316 = dma.done [#allocation12], 320
        $region68: #{tpu_custom_call.1} parent=43 // pred_fallthru
          _
        %s317 = sand.u32 %s34, 1
        %s318 = scalar_lea.sflag [#allocation3], %s317
        %s319 = sand.u32 %s34, 1
        %s320 = smul.addr %s319, 256
        %s321 = scalar_lea.vmem [#allocation2], %s320
        %p322 = pneg %p47
        %p323 = pneg %p44
        %p324 = pneg %p68
        %p325 = pneg %p65
        %p326 = pneg %p89
        %p327 = pneg %p86
        %p328 = pneg %p110
        %p329 = pneg %p107
        %p330 = pneg %p131
        %p331 = pneg %p128
        %p332 = pneg %p152
        %p333 = pneg %p149
        %p334 = pneg %p178
        %p335 = pneg %p175
        %s336 = sand.u32 %s165, 1
        %s337 = scalar_lea.sflag [#allocation4], %s336
        %s338 = sand.u32 %s165, 1
        %s339 = smul.addr %s338, 256
        %s340 = scalar_lea.vmem [#allocation13], %s339
        %s341 = smul.u32 32, %s26
        %s342 = smul.u32 32, %s26
        %v344 = vld [vmem:[%s292] sm:$0xff]
        %v345 = vld [vmem:[%s292 + $0x8] sm:$0xff]
        %v346 = vld [vmem:[%s292 + $0x10] sm:$0xff]
        %v347 = vld [vmem:[%s292 + $0x18] sm:$0xff]
        %v348 = vld [vmem:[%s292 + $0x20] sm:$0xff]
        %v349 = vld [vmem:[%s292 + $0x28] sm:$0xff]
        %v350 = vld [vmem:[%s292 + $0x30] sm:$0xff]
        %v351 = vld [vmem:[%s292 + $0x38] sm:$0xff]
        %v352 = vld [vmem:[%s292 + $0x40] sm:$0xff]
        %v353 = vld [vmem:[%s292 + $0x48] sm:$0xff]
        %v354 = vld [vmem:[%s292 + $0x50] sm:$0xff]
        %v355 = vld [vmem:[%s292 + $0x58] sm:$0xff]
        %v356 = vld [vmem:[%s292 + $0x60] sm:$0xff]
        %v357 = vld [vmem:[%s292 + $0x68] sm:$0xff]
        %v358 = vld [vmem:[%s292 + $0x70] sm:$0xff]
        %v359 = vld [vmem:[%s292 + $0x78] sm:$0xff]
        %v360 = vld [vmem:[%s292 + $0x80] sm:$0xff]
        %v361 = vld [vmem:[%s292 + $0x88] sm:$0xff]
        %v362 = vld [vmem:[%s292 + $0x90] sm:$0xff]
        %v363 = vld [vmem:[%s292 + $0x98] sm:$0xff]
        %v364 = vld [vmem:[%s292 + $0xa0] sm:$0xff]
        %v365 = vld [vmem:[%s292 + $0xa8] sm:$0xff]
        %v366 = vld [vmem:[%s292 + $0xb0] sm:$0xff]
        %v367 = vld [vmem:[%s292 + $0xb8] sm:$0xff]
        %v368 = vld [vmem:[%s292 + $0xc0] sm:$0xff]
        %v369 = vld [vmem:[%s292 + $0xc8] sm:$0xff]
        %v370 = vld [vmem:[%s292 + $0xd0] sm:$0xff]
        %v371 = vld [vmem:[%s292 + $0xd8] sm:$0xff]
        %v372 = vld [vmem:[%s292 + $0xe0] sm:$0xff]
        %v373 = vld [vmem:[%s292 + $0xe8] sm:$0xff]
        %v374 = vld [vmem:[%s292 + $0xf0] sm:$0xff]
        %v375 = vld [vmem:[%s292 + $0xf8] sm:$0xff]
        %v376 = vpack.c.bf16 %v345, %v344
        %v377 = vpack.c.bf16 %v347, %v346
        %v378 = vpack.c.bf16 %v349, %v348
        %v379 = vpack.c.bf16 %v351, %v350
        %v380 = vpack.c.bf16 %v353, %v352
        %v381 = vpack.c.bf16 %v355, %v354
        %v382 = vpack.c.bf16 %v357, %v356
        %v383 = vpack.c.bf16 %v359, %v358
        %v384 = vpack.c.bf16 %v361, %v360
        %v385 = vpack.c.bf16 %v363, %v362
        %v386 = vpack.c.bf16 %v365, %v364
        %v387 = vpack.c.bf16 %v367, %v366
        %v388 = vpack.c.bf16 %v369, %v368
        %v389 = vpack.c.bf16 %v371, %v370
        %v390 = vpack.c.bf16 %v373, %v372
        %v391 = vpack.c.bf16 %v375, %v374
        %v392 = vld [vmem:[#allocation11] sm:$0xff]
        %v393 = vld [vmem:[#allocation11 + $0x8] sm:$0xf]
        %v394 = vld [vmem:[#allocation11 + $0xc] sm:$0xf]
        %v395 = vld [vmem:[#allocation11 + $0x10] sm:$0x3]
        %v396 = vld [vmem:[#allocation11 + $0x12] sm:$0x1]
        %v397 = vld [vmem:[#allocation11 + $0x13] sm:$0x1]
        %v398 = vld [vmem:[#allocation5] sm:$0xff]
        %v399 = vld [vmem:[#allocation5 + $0x8] sm:$0xff]
        %v400 = vld [vmem:[#allocation5 + $0x10] sm:$0xff]
        %v401 = vld [vmem:[#allocation5 + $0x18] sm:$0xff]
        %v402 = vld [vmem:[#allocation5 + $0x20] sm:$0xff]
        %v403 = vld [vmem:[#allocation5 + $0x28] sm:$0xff]
        %v404 = vld [vmem:[#allocation5 + $0x30] sm:$0xff]
        %v405 = vld [vmem:[#allocation5 + $0x38] sm:$0xff]
        %v406 = vld [vmem:[#allocation5 + $0x40] sm:$0xff]
        %v407 = vld [vmem:[#allocation5 + $0x48] sm:$0xff]
        %v408 = vld [vmem:[#allocation5 + $0x50] sm:$0xff]
        %v409 = vld [vmem:[#allocation5 + $0x58] sm:$0xff]
        %v410 = vld [vmem:[#allocation5 + $0x60] sm:$0xff]
        %v411 = vld [vmem:[#allocation5 + $0x68] sm:$0xff]
        %v412 = vld [vmem:[#allocation5 + $0x70] sm:$0xff]
        %v413 = vld [vmem:[#allocation5 + $0x78] sm:$0xff]
        %v414 = vld [vmem:[#allocation5 + $0x80] sm:$0xff]
        %v415 = vld [vmem:[#allocation5 + $0x88] sm:$0xff]
        %v416 = vld [vmem:[#allocation5 + $0x90] sm:$0xff]
        %v417 = vld [vmem:[#allocation5 + $0x98] sm:$0xff]
        %v418 = vld [vmem:[#allocation5 + $0xa0] sm:$0xff]
        %v419 = vld [vmem:[#allocation5 + $0xa8] sm:$0xff]
        %v420 = vld [vmem:[#allocation5 + $0xb0] sm:$0xff]
        %v421 = vld [vmem:[#allocation5 + $0xb8] sm:$0xff]
        %v422 = vld [vmem:[#allocation5 + $0xc0] sm:$0xff]
        %v423 = vld [vmem:[#allocation5 + $0xc8] sm:$0xff]
        %v424 = vld [vmem:[#allocation5 + $0xd0] sm:$0xff]
        %v425 = vld [vmem:[#allocation5 + $0xd8] sm:$0xff]
        %v426 = vld [vmem:[#allocation5 + $0xe0] sm:$0xff]
        %v427 = vld [vmem:[#allocation5 + $0xe8] sm:$0xff]
        %v428 = vld [vmem:[#allocation5 + $0xf0] sm:$0xff]
        %v429 = vld [vmem:[#allocation5 + $0xf8] sm:$0xff]
        %v430 = vld [vmem:[#allocation5 + $0x100] sm:$0xff]
        %v431 = vld [vmem:[#allocation5 + $0x108] sm:$0xff]
        %v432 = vld [vmem:[#allocation5 + $0x110] sm:$0xff]
        %v433 = vld [vmem:[#allocation5 + $0x118] sm:$0xff]
        %v434 = vld [vmem:[#allocation5 + $0x120] sm:$0xff]
        %v435 = vld [vmem:[#allocation5 + $0x128] sm:$0xff]
        %v436 = vld [vmem:[#allocation5 + $0x130] sm:$0xff]
        %v437 = vld [vmem:[#allocation5 + $0x138] sm:$0xff]
        %v438 = vld [vmem:[#allocation5 + $0x140] sm:$0xff]
        %v439 = vld [vmem:[#allocation5 + $0x148] sm:$0xff]
        %v440 = vld [vmem:[#allocation5 + $0x150] sm:$0xff]
        %v441 = vld [vmem:[#allocation5 + $0x158] sm:$0xff]
        %v442 = vld [vmem:[#allocation5 + $0x160] sm:$0xff]
        %v443 = vld [vmem:[#allocation5 + $0x168] sm:$0xff]
        %v444 = vld [vmem:[#allocation5 + $0x170] sm:$0xff]
        %v445 = vld [vmem:[#allocation5 + $0x178] sm:$0xff]
        %v446 = vld [vmem:[#allocation5 + $0x180] sm:$0xff]
        %v447 = vld [vmem:[#allocation5 + $0x188] sm:$0xff]
        %v448 = vld [vmem:[#allocation5 + $0x190] sm:$0xff]
        %v449 = vld [vmem:[#allocation5 + $0x198] sm:$0xff]
        %v450 = vld [vmem:[#allocation5 + $0x1a0] sm:$0xff]
        %v451 = vld [vmem:[#allocation5 + $0x1a8] sm:$0xff]
        %v452 = vld [vmem:[#allocation5 + $0x1b0] sm:$0xff]
        %v453 = vld [vmem:[#allocation5 + $0x1b8] sm:$0xff]
        %v454 = vld [vmem:[#allocation5 + $0x1c0] sm:$0xff]
        %v455 = vld [vmem:[#allocation5 + $0x1c8] sm:$0xff]
        %v456 = vld [vmem:[#allocation5 + $0x1d0] sm:$0xff]
        %v457 = vld [vmem:[#allocation5 + $0x1d8] sm:$0xff]
        %v458 = vld [vmem:[#allocation5 + $0x1e0] sm:$0xff]
        %v459 = vld [vmem:[#allocation5 + $0x1e8] sm:$0xff]
        %v460 = vld [vmem:[#allocation5 + $0x1f0] sm:$0xff]
        %v461 = vld [vmem:[#allocation5 + $0x1f8] sm:$0xff]
        %v462 = vld [vmem:[#allocation5 + $0x200] sm:$0xff]
        %v463 = vld [vmem:[#allocation5 + $0x208] sm:$0xff]
        %v464 = vld [vmem:[#allocation5 + $0x210] sm:$0xff]
        %v465 = vld [vmem:[#allocation5 + $0x218] sm:$0xff]
        %v466 = vld [vmem:[#allocation5 + $0x220] sm:$0xff]
        %v467 = vld [vmem:[#allocation5 + $0x228] sm:$0xff]
        %v468 = vld [vmem:[#allocation5 + $0x230] sm:$0xff]
        %v469 = vld [vmem:[#allocation5 + $0x238] sm:$0xff]
        %v470 = vld [vmem:[#allocation5 + $0x240] sm:$0xff]
        %v471 = vld [vmem:[#allocation5 + $0x248] sm:$0xff]
        %v472 = vld [vmem:[#allocation5 + $0x250] sm:$0xff]
        %v473 = vld [vmem:[#allocation5 + $0x258] sm:$0xff]
        %v474 = vld [vmem:[#allocation5 + $0x260] sm:$0xff]
        %v475 = vld [vmem:[#allocation5 + $0x268] sm:$0xff]
        %v476 = vld [vmem:[#allocation5 + $0x270] sm:$0xff]
        %v477 = vld [vmem:[#allocation5 + $0x278] sm:$0xff]
        %v478 = vld [vmem:[#allocation5 + $0x280] sm:$0xff]
        %v479 = vld [vmem:[#allocation5 + $0x288] sm:$0xff]
        %v480 = vld [vmem:[#allocation5 + $0x290] sm:$0xff]
        %v481 = vld [vmem:[#allocation5 + $0x298] sm:$0xff]
        %v482 = vld [vmem:[#allocation5 + $0x2a0] sm:$0xff]
        %v483 = vld [vmem:[#allocation5 + $0x2a8] sm:$0xff]
        %v484 = vld [vmem:[#allocation5 + $0x2b0] sm:$0xff]
        %v485 = vld [vmem:[#allocation5 + $0x2b8] sm:$0xff]
        %v486 = vld [vmem:[#allocation5 + $0x2c0] sm:$0xff]
        %v487 = vld [vmem:[#allocation5 + $0x2c8] sm:$0xff]
        %v488 = vld [vmem:[#allocation5 + $0x2d0] sm:$0xff]
        %v489 = vld [vmem:[#allocation5 + $0x2d8] sm:$0xff]
        %v490 = vld [vmem:[#allocation5 + $0x2e0] sm:$0xff]
        %v491 = vld [vmem:[#allocation5 + $0x2e8] sm:$0xff]
        %v492 = vld [vmem:[#allocation5 + $0x2f0] sm:$0xff]
        %v493 = vld [vmem:[#allocation5 + $0x2f8] sm:$0xff]
        %v590 = vunpack.c.l.b16 %v398
        %v591 = vunpack.c.h.b16 %v398
        %v592 = vunpack.c.l.b16 %v399
        %v593 = vunpack.c.h.b16 %v399
        %v594 = vunpack.c.l.b16 %v400
        %v595 = vunpack.c.h.b16 %v400
        %v596 = vunpack.c.l.b16 %v401
        %v597 = vunpack.c.h.b16 %v401
        %v598 = vunpack.c.l.b16 %v402
        %v599 = vunpack.c.h.b16 %v402
        %v600 = vunpack.c.l.b16 %v403
        %v601 = vunpack.c.h.b16 %v403
        %v602 = vunpack.c.l.b16 %v404
        %v603 = vunpack.c.h.b16 %v404
        %v604 = vunpack.c.l.b16 %v405
        %v605 = vunpack.c.h.b16 %v405
        %v606 = vunpack.c.l.b16 %v406
        %v607 = vunpack.c.h.b16 %v406
        %v608 = vunpack.c.l.b16 %v407
        %v609 = vunpack.c.h.b16 %v407
        %v610 = vunpack.c.l.b16 %v408
        %v611 = vunpack.c.h.b16 %v408
        %v612 = vunpack.c.l.b16 %v409
        %v613 = vunpack.c.h.b16 %v409
        %v614 = vunpack.c.l.b16 %v410
        %v615 = vunpack.c.h.b16 %v410
        %v616 = vunpack.c.l.b16 %v411
        %v617 = vunpack.c.h.b16 %v411
        %v618 = vunpack.c.l.b16 %v412
        %v619 = vunpack.c.h.b16 %v412
        %v620 = vunpack.c.l.b16 %v413
        %v621 = vunpack.c.h.b16 %v413
        %v622 = vunpack.c.l.b16 %v414
        %v623 = vunpack.c.h.b16 %v414
        %v624 = vunpack.c.l.b16 %v415
        %v625 = vunpack.c.h.b16 %v415
        %v626 = vunpack.c.l.b16 %v416
        %v627 = vunpack.c.h.b16 %v416
        %v628 = vunpack.c.l.b16 %v417
        %v629 = vunpack.c.h.b16 %v417
        %v630 = vunpack.c.l.b16 %v418
        %v631 = vunpack.c.h.b16 %v418
        %v632 = vunpack.c.l.b16 %v419
        %v633 = vunpack.c.h.b16 %v419
        %v634 = vunpack.c.l.b16 %v420
        %v635 = vunpack.c.h.b16 %v420
        %v636 = vunpack.c.l.b16 %v421
        %v637 = vunpack.c.h.b16 %v421
        %v638 = vunpack.c.l.b16 %v422
        %v639 = vunpack.c.h.b16 %v422
        %v640 = vunpack.c.l.b16 %v423
        %v641 = vunpack.c.h.b16 %v423
        %v642 = vunpack.c.l.b16 %v424
        %v643 = vunpack.c.h.b16 %v424
        %v644 = vunpack.c.l.b16 %v425
        %v645 = vunpack.c.h.b16 %v425
        %v646 = vunpack.c.l.b16 %v426
        %v647 = vunpack.c.h.b16 %v426
        %v648 = vunpack.c.l.b16 %v427
        %v649 = vunpack.c.h.b16 %v427
        %v650 = vunpack.c.l.b16 %v428
        %v651 = vunpack.c.h.b16 %v428
        %v652 = vunpack.c.l.b16 %v429
        %v653 = vunpack.c.h.b16 %v429
        %v654 = vunpack.c.l.b16 %v430
        %v655 = vunpack.c.h.b16 %v430
        %v656 = vunpack.c.l.b16 %v431
        %v657 = vunpack.c.h.b16 %v431
        %v658 = vunpack.c.l.b16 %v432
        %v659 = vunpack.c.h.b16 %v432
        %v660 = vunpack.c.l.b16 %v433
        %v661 = vunpack.c.h.b16 %v433
        %v662 = vunpack.c.l.b16 %v434
        %v663 = vunpack.c.h.b16 %v434
        %v664 = vunpack.c.l.b16 %v435
        %v665 = vunpack.c.h.b16 %v435
        %v666 = vunpack.c.l.b16 %v436
        %v667 = vunpack.c.h.b16 %v436
        %v668 = vunpack.c.l.b16 %v437
        %v669 = vunpack.c.h.b16 %v437
        %v670 = vunpack.c.l.b16 %v438
        %v671 = vunpack.c.h.b16 %v438
        %v672 = vunpack.c.l.b16 %v439
        %v673 = vunpack.c.h.b16 %v439
        %v674 = vunpack.c.l.b16 %v440
        %v675 = vunpack.c.h.b16 %v440
        %v676 = vunpack.c.l.b16 %v441
        %v677 = vunpack.c.h.b16 %v441
        %v678 = vunpack.c.l.b16 %v442
        %v679 = vunpack.c.h.b16 %v442
        %v680 = vunpack.c.l.b16 %v443
        %v681 = vunpack.c.h.b16 %v443
        %v682 = vunpack.c.l.b16 %v444
        %v683 = vunpack.c.h.b16 %v444
        %v684 = vunpack.c.l.b16 %v445
        %v685 = vunpack.c.h.b16 %v445
        %v686 = vunpack.c.l.b16 %v446
        %v687 = vunpack.c.h.b16 %v446
        %v688 = vunpack.c.l.b16 %v447
        %v689 = vunpack.c.h.b16 %v447
        %v690 = vunpack.c.l.b16 %v448
        %v691 = vunpack.c.h.b16 %v448
        %v692 = vunpack.c.l.b16 %v449
        %v693 = vunpack.c.h.b16 %v449
        %v694 = vunpack.c.l.b16 %v450
        %v695 = vunpack.c.h.b16 %v450
        %v696 = vunpack.c.l.b16 %v451
        %v697 = vunpack.c.h.b16 %v451
        %v698 = vunpack.c.l.b16 %v452
        %v699 = vunpack.c.h.b16 %v452
        %v700 = vunpack.c.l.b16 %v453
        %v701 = vunpack.c.h.b16 %v453
        %v702 = vunpack.c.l.b16 %v454
        %v703 = vunpack.c.h.b16 %v454
        %v704 = vunpack.c.l.b16 %v455
        %v705 = vunpack.c.h.b16 %v455
        %v706 = vunpack.c.l.b16 %v456
        %v707 = vunpack.c.h.b16 %v456
        %v708 = vunpack.c.l.b16 %v457
        %v709 = vunpack.c.h.b16 %v457
        %v710 = vunpack.c.l.b16 %v458
        %v711 = vunpack.c.h.b16 %v458
        %v712 = vunpack.c.l.b16 %v459
        %v713 = vunpack.c.h.b16 %v459
        %v714 = vunpack.c.l.b16 %v460
        %v715 = vunpack.c.h.b16 %v460
        %v716 = vunpack.c.l.b16 %v461
        %v717 = vunpack.c.h.b16 %v461
        %v718 = vunpack.c.l.b16 %v462
        %v719 = vunpack.c.h.b16 %v462
        %v720 = vunpack.c.l.b16 %v463
        %v721 = vunpack.c.h.b16 %v463
        %v722 = vunpack.c.l.b16 %v464
        %v723 = vunpack.c.h.b16 %v464
        %v724 = vunpack.c.l.b16 %v465
        %v725 = vunpack.c.h.b16 %v465
        %v726 = vunpack.c.l.b16 %v466
        %v727 = vunpack.c.h.b16 %v466
        %v728 = vunpack.c.l.b16 %v467
        %v729 = vunpack.c.h.b16 %v467
        %v730 = vunpack.c.l.b16 %v468
        %v731 = vunpack.c.h.b16 %v468
        %v732 = vunpack.c.l.b16 %v469
        %v733 = vunpack.c.h.b16 %v469
        %v734 = vunpack.c.l.b16 %v470
        %v735 = vunpack.c.h.b16 %v470
        %v736 = vunpack.c.l.b16 %v471
        %v737 = vunpack.c.h.b16 %v471
        %v738 = vunpack.c.l.b16 %v472
        %v739 = vunpack.c.h.b16 %v472
        %v740 = vunpack.c.l.b16 %v473
        %v741 = vunpack.c.h.b16 %v473
        %v742 = vunpack.c.l.b16 %v474
        %v743 = vunpack.c.h.b16 %v474
        %v744 = vunpack.c.l.b16 %v475
        %v745 = vunpack.c.h.b16 %v475
        %v746 = vunpack.c.l.b16 %v476
        %v747 = vunpack.c.h.b16 %v476
        %v748 = vunpack.c.l.b16 %v477
        %v749 = vunpack.c.h.b16 %v477
        %v750 = vunpack.c.l.b16 %v478
        %v751 = vunpack.c.h.b16 %v478
        %v752 = vunpack.c.l.b16 %v479
        %v753 = vunpack.c.h.b16 %v479
        %v754 = vunpack.c.l.b16 %v480
        %v755 = vunpack.c.h.b16 %v480
        %v756 = vunpack.c.l.b16 %v481
        %v757 = vunpack.c.h.b16 %v481
        %v758 = vunpack.c.l.b16 %v482
        %v759 = vunpack.c.h.b16 %v482
        %v760 = vunpack.c.l.b16 %v483
        %v761 = vunpack.c.h.b16 %v483
        %v762 = vunpack.c.l.b16 %v484
        %v763 = vunpack.c.h.b16 %v484
        %v764 = vunpack.c.l.b16 %v485
        %v765 = vunpack.c.h.b16 %v485
        %v766 = vunpack.c.l.b16 %v486
        %v767 = vunpack.c.h.b16 %v486
        %v768 = vunpack.c.l.b16 %v487
        %v769 = vunpack.c.h.b16 %v487
        %v770 = vunpack.c.l.b16 %v488
        %v771 = vunpack.c.h.b16 %v488
        %v772 = vunpack.c.l.b16 %v489
        %v773 = vunpack.c.h.b16 %v489
        %v774 = vunpack.c.l.b16 %v490
        %v775 = vunpack.c.h.b16 %v490
        %v776 = vunpack.c.l.b16 %v491
        %v777 = vunpack.c.h.b16 %v491
        %v778 = vunpack.c.l.b16 %v492
        %v779 = vunpack.c.h.b16 %v492
        %v780 = vunpack.c.l.b16 %v493
        %v781 = vunpack.c.h.b16 %v493
        %v782 = vpack.c.b16 %v602, %v590
        %v783 = vpack.c.b16 %v603, %v591
        %v784 = vpack.c.b16 %v604, %v592
        %v785 = vpack.c.b16 %v605, %v593
        %v786 = vpack.c.b16 %v606, %v594
        %v787 = vpack.c.b16 %v607, %v595
        %v788 = vpack.c.b16 %v608, %v596
        %v789 = vpack.c.b16 %v609, %v597
        %v790 = vpack.c.b16 %v610, %v598
        %v791 = vpack.c.b16 %v611, %v599
        %v792 = vpack.c.b16 %v612, %v600
        %v793 = vpack.c.b16 %v613, %v601
        %v794 = vpack.c.b16 %v626, %v614
        %v795 = vpack.c.b16 %v627, %v615
        %v796 = vpack.c.b16 %v628, %v616
        %v797 = vpack.c.b16 %v629, %v617
        %v798 = vpack.c.b16 %v630, %v618
        %v799 = vpack.c.b16 %v631, %v619
        %v800 = vpack.c.b16 %v632, %v620
        %v801 = vpack.c.b16 %v633, %v621
        %v802 = vpack.c.b16 %v634, %v622
        %v803 = vpack.c.b16 %v635, %v623
        %v804 = vpack.c.b16 %v636, %v624
        %v805 = vpack.c.b16 %v637, %v625
        %v806 = vpack.c.b16 %v650, %v638
        %v807 = vpack.c.b16 %v651, %v639
        %v808 = vpack.c.b16 %v652, %v640
        %v809 = vpack.c.b16 %v653, %v641
        %v810 = vpack.c.b16 %v654, %v642
        %v811 = vpack.c.b16 %v655, %v643
        %v812 = vpack.c.b16 %v656, %v644
        %v813 = vpack.c.b16 %v657, %v645
        %v814 = vpack.c.b16 %v658, %v646
        %v815 = vpack.c.b16 %v659, %v647
        %v816 = vpack.c.b16 %v660, %v648
        %v817 = vpack.c.b16 %v661, %v649
        %v818 = vpack.c.b16 %v674, %v662
        %v819 = vpack.c.b16 %v675, %v663
        %v820 = vpack.c.b16 %v676, %v664
        %v821 = vpack.c.b16 %v677, %v665
        %v822 = vpack.c.b16 %v678, %v666
        %v823 = vpack.c.b16 %v679, %v667
        %v824 = vpack.c.b16 %v680, %v668
        %v825 = vpack.c.b16 %v681, %v669
        %v826 = vpack.c.b16 %v682, %v670
        %v827 = vpack.c.b16 %v683, %v671
        %v828 = vpack.c.b16 %v684, %v672
        %v829 = vpack.c.b16 %v685, %v673
        %v830 = vpack.c.b16 %v698, %v686
        %v831 = vpack.c.b16 %v699, %v687
        %v832 = vpack.c.b16 %v700, %v688
        %v833 = vpack.c.b16 %v701, %v689
        %v834 = vpack.c.b16 %v702, %v690
        %v835 = vpack.c.b16 %v703, %v691
        %v836 = vpack.c.b16 %v704, %v692
        %v837 = vpack.c.b16 %v705, %v693
        %v838 = vpack.c.b16 %v706, %v694
        %v839 = vpack.c.b16 %v707, %v695
        %v840 = vpack.c.b16 %v708, %v696
        %v841 = vpack.c.b16 %v709, %v697
        %v842 = vpack.c.b16 %v722, %v710
        %v843 = vpack.c.b16 %v723, %v711
        %v844 = vpack.c.b16 %v724, %v712
        %v845 = vpack.c.b16 %v725, %v713
        %v846 = vpack.c.b16 %v726, %v714
        %v847 = vpack.c.b16 %v727, %v715
        %v848 = vpack.c.b16 %v728, %v716
        %v849 = vpack.c.b16 %v729, %v717
        %v850 = vpack.c.b16 %v730, %v718
        %v851 = vpack.c.b16 %v731, %v719
        %v852 = vpack.c.b16 %v732, %v720
        %v853 = vpack.c.b16 %v733, %v721
        %v854 = vpack.c.b16 %v746, %v734
        %v855 = vpack.c.b16 %v747, %v735
        %v856 = vpack.c.b16 %v748, %v736
        %v857 = vpack.c.b16 %v749, %v737
        %v858 = vpack.c.b16 %v750, %v738
        %v859 = vpack.c.b16 %v751, %v739
        %v860 = vpack.c.b16 %v752, %v740
        %v861 = vpack.c.b16 %v753, %v741
        %v862 = vpack.c.b16 %v754, %v742
        %v863 = vpack.c.b16 %v755, %v743
        %v864 = vpack.c.b16 %v756, %v744
        %v865 = vpack.c.b16 %v757, %v745
        %v866 = vpack.c.b16 %v770, %v758
        %v867 = vpack.c.b16 %v771, %v759
        %v868 = vpack.c.b16 %v772, %v760
        %v869 = vpack.c.b16 %v773, %v761
        %v870 = vpack.c.b16 %v774, %v762
        %v871 = vpack.c.b16 %v775, %v763
        %v872 = vpack.c.b16 %v776, %v764
        %v873 = vpack.c.b16 %v777, %v765
        %v874 = vpack.c.b16 %v778, %v766
        %v875 = vpack.c.b16 %v779, %v767
        %v876 = vpack.c.b16 %v780, %v768
        %v877 = vpack.c.b16 %v781, %v769
        %974 = vmatprep.subr.bf16.mxu0 %v783
        %975 = vmatpush1.bf16.msra.mxu0 %v782
        %976 = vmatprep.subr.bf16.mxu0 %v795
        %977 = vmatpush1.bf16.msra.mxu0 %v794
        %978 = vmatprep.subr.bf16.mxu0 %v807
        %979 = vmatpush1.bf16.msra.mxu0 %v806
        %980 = vmatprep.subr.bf16.mxu0 %v819
        %981 = vmatpush1.bf16.msra.mxu0 %v818
        %982 = vmatprep.subr.bf16.mxu0 %v831
        %983 = vmatpush1.bf16.msra.mxu0 %v830
        %984 = vmatprep.subr.bf16.mxu0 %v843
        %985 = vmatpush1.bf16.msra.mxu0 %v842
        %986 = vmatprep.subr.bf16.mxu0 %v855
        %987 = vmatpush1.bf16.msra.mxu0 %v854
        %988 = vmatprep.subr.bf16.mxu0 %v867
        %989 = vmatpush1.bf16.msra.mxu0 %v866
        %990 = vmatprep.subr.bf16.mxu0 0
        %991 = vmatpush1.bf16.msra.mxu0 0
        %992 = vmatprep.subr.bf16.mxu0 0
        %993 = vmatpush1.bf16.msra.mxu0 0
        %994 = vmatprep.subr.bf16.mxu0 0
        %995 = vmatpush1.bf16.msra.mxu0 0
        %996 = vmatprep.subr.bf16.mxu0 0
        %997 = vmatpush1.bf16.msra.mxu0 0
        %998 = vmatprep.subr.bf16.mxu0 0
        %999 = vmatpush1.bf16.msra.mxu0 0
        %1000 = vmatprep.subr.bf16.mxu0 0
        %1001 = vmatpush1.bf16.msra.mxu0 0
        %1002 = vmatprep.subr.bf16.mxu0 0
        %1003 = vmatpush1.bf16.msra.mxu0 0
        %1004 = vmatprep.subr.bf16.mxu0 0
        %1005 = vmatpush1.bf16.msra.mxu0 0
        %1006 = vmatprep.mubr.bf16.mxu0 0
        %1007 = vmatmul.mubr.bf16.gmra.mrb[0].mxu0 %v376
        %v1008 = vpop.f32.mrb[0].mxu0
        %v1009 = vadd.f32 0.0, %v1008
        %v1010 = vpop.f32.mrb[0].mxu0
        %v1011 = vadd.f32 0.0, %v1010
        %v1012 = vpop.f32.mrb[0].mxu0
        %v1013 = vadd.f32 0.0, %v1012
        %v1014 = vpop.f32.mrb[0].mxu0
        %v1015 = vadd.f32 0.0, %v1014
        %1016 = vmatprep.mubr.bf16.mxu0 0
        %1017 = vmatmul.mubr.bf16.gmra.mrb[0].mxu0 %v377
        %v1018 = vpop.f32.mrb[0].mxu0
        %v1019 = vadd.f32 0.0, %v1018
        %v1020 = vpop.f32.mrb[0].mxu0
        %v1021 = vadd.f32 0.0, %v1020
        %v1022 = vpop.f32.mrb[0].mxu0
        %v1023 = vadd.f32 0.0, %v1022
        %v1024 = vpop.f32.mrb[0].mxu0
        %v1025 = vadd.f32 0.0, %v1024
        %1026 = vmatprep.mubr.bf16.mxu0 0
        %1027 = vmatmul.mubr.bf16.gmra.mrb[0].mxu0 %v378
        %v1028 = vpop.f32.mrb[0].mxu0
        %v1029 = vadd.f32 0.0, %v1028
        %v1030 = vpop.f32.mrb[0].mxu0
        %v1031 = vadd.f32 0.0, %v1030
        %v1032 = vpop.f32.mrb[0].mxu0
        %v1033 = vadd.f32 0.0, %v1032
        %v1034 = vpop.f32.mrb[0].mxu0
        %v1035 = vadd.f32 0.0, %v1034
        %1036 = vmatprep.mubr.bf16.mxu0 0
        %1037 = vmatmul.mubr.bf16.gmra.mrb[0].mxu0 %v379
        %v1038 = vpop.f32.mrb[0].mxu0
        %v1039 = vadd.f32 0.0, %v1038
        %v1040 = vpop.f32.mrb[0].mxu0
        %v1041 = vadd.f32 0.0, %v1040
        %v1042 = vpop.f32.mrb[0].mxu0
        %v1043 = vadd.f32 0.0, %v1042
        %v1044 = vpop.f32.mrb[0].mxu0
        %v1045 = vadd.f32 0.0, %v1044
        %1046 = vmatprep.mubr.bf16.mxu0 0
        %1047 = vmatmul.mubr.bf16.gmra.mrb[0].mxu0 %v380
        %v1048 = vpop.f32.mrb[0].mxu0
        %v1049 = vadd.f32 0.0, %v1048
        %v1050 = vpop.f32.mrb[0].mxu0
        %v1051 = vadd.f32 0.0, %v1050
        %v1052 = vpop.f32.mrb[0].mxu0
        %v1053 = vadd.f32 0.0, %v1052
        %v1054 = vpop.f32.mrb[0].mxu0
        %v1055 = vadd.f32 0.0, %v1054
        %1056 = vmatprep.mubr.bf16.mxu0 0
        %1057 = vmatmul.mubr.bf16.gmra.mrb[0].mxu0 %v381
        %v1058 = vpop.f32.mrb[0].mxu0
        %v1059 = vadd.f32 0.0, %v1058
        %v1060 = vpop.f32.mrb[0].mxu0
        %v1061 = vadd.f32 0.0, %v1060
        %v1062 = vpop.f32.mrb[0].mxu0
        %v1063 = vadd.f32 0.0, %v1062
        %v1064 = vpop.f32.mrb[0].mxu0
        %v1065 = vadd.f32 0.0, %v1064
        %1066 = vmatprep.mubr.bf16.mxu0 0
        %1067 = vmatmul.mubr.bf16.gmra.mrb[0].mxu0 %v382
        %v1068 = vpop.f32.mrb[0].mxu0
        %v1069 = vadd.f32 0.0, %v1068
        %v1070 = vpop.f32.mrb[0].mxu0
        %v1071 = vadd.f32 0.0, %v1070
        %v1072 = vpop.f32.mrb[0].mxu0
        %v1073 = vadd.f32 0.0, %v1072
        %v1074 = vpop.f32.mrb[0].mxu0
        %v1075 = vadd.f32 0.0, %v1074
        %1076 = vmatprep.mubr.bf16.mxu0 0
        %1077 = vmatmul.mubr.bf16.gmra.mrb[0].mxu0 %v383
        %v1078 = vpop.f32.mrb[0].mxu0
        %v1079 = vadd.f32 0.0, %v1078
        %v1080 = vpop.f32.mrb[0].mxu0
        %v1081 = vadd.f32 0.0, %v1080
        %v1082 = vpop.f32.mrb[0].mxu0
        %v1083 = vadd.f32 0.0, %v1082
        %v1084 = vpop.f32.mrb[0].mxu0
        %v1085 = vadd.f32 0.0, %v1084
        %1086 = vmatprep.mubr.bf16.mxu0 0
        %1087 = vmatmul.mubr.bf16.gmra.mrb[0].mxu0 %v384
        %v1088 = vpop.f32.mrb[0].mxu0
        %v1089 = vadd.f32 0.0, %v1088
        %v1090 = vpop.f32.mrb[0].mxu0
        %v1091 = vadd.f32 0.0, %v1090
        %v1092 = vpop.f32.mrb[0].mxu0
        %v1093 = vadd.f32 0.0, %v1092
        %v1094 = vpop.f32.mrb[0].mxu0
        %v1095 = vadd.f32 0.0, %v1094
        %1096 = vmatprep.mubr.bf16.mxu0 0
        %1097 = vmatmul.mubr.bf16.gmra.mrb[0].mxu0 %v385
        %v1098 = vpop.f32.mrb[0].mxu0
        %v1099 = vadd.f32 0.0, %v1098
        %v1100 = vpop.f32.mrb[0].mxu0
        %v1101 = vadd.f32 0.0, %v1100
        %v1102 = vpop.f32.mrb[0].mxu0
        %v1103 = vadd.f32 0.0, %v1102
        %v1104 = vpop.f32.mrb[0].mxu0
        %v1105 = vadd.f32 0.0, %v1104
        %1106 = vmatprep.mubr.bf16.mxu0 0
        %1107 = vmatmul.mubr.bf16.gmra.mrb[0].mxu0 %v386
        %v1108 = vpop.f32.mrb[0].mxu0
        %v1109 = vadd.f32 0.0, %v1108
        %v1110 = vpop.f32.mrb[0].mxu0
        %v1111 = vadd.f32 0.0, %v1110
        %v1112 = vpop.f32.mrb[0].mxu0
        %v1113 = vadd.f32 0.0, %v1112
        %v1114 = vpop.f32.mrb[0].mxu0
        %v1115 = vadd.f32 0.0, %v1114
        %1116 = vmatprep.mubr.bf16.mxu0 0
        %1117 = vmatmul.mubr.bf16.gmra.mrb[0].mxu0 %v387
        %v1118 = vpop.f32.mrb[0].mxu0
        %v1119 = vadd.f32 0.0, %v1118
        %v1120 = vpop.f32.mrb[0].mxu0
        %v1121 = vadd.f32 0.0, %v1120
        %v1122 = vpop.f32.mrb[0].mxu0
        %v1123 = vadd.f32 0.0, %v1122
        %v1124 = vpop.f32.mrb[0].mxu0
        %v1125 = vadd.f32 0.0, %v1124
        %1126 = vmatprep.mubr.bf16.mxu0 0
        %1127 = vmatmul.mubr.bf16.gmra.mrb[0].mxu0 %v388
        %v1128 = vpop.f32.mrb[0].mxu0
        %v1129 = vadd.f32 0.0, %v1128
        %v1130 = vpop.f32.mrb[0].mxu0
        %v1131 = vadd.f32 0.0, %v1130
        %v1132 = vpop.f32.mrb[0].mxu0
        %v1133 = vadd.f32 0.0, %v1132
        %v1134 = vpop.f32.mrb[0].mxu0
        %v1135 = vadd.f32 0.0, %v1134
        %1136 = vmatprep.mubr.bf16.mxu0 0
        %1137 = vmatmul.mubr.bf16.gmra.mrb[0].mxu0 %v389
        %v1138 = vpop.f32.mrb[0].mxu0
        %v1139 = vadd.f32 0.0, %v1138
        %v1140 = vpop.f32.mrb[0].mxu0
        %v1141 = vadd.f32 0.0, %v1140
        %v1142 = vpop.f32.mrb[0].mxu0
        %v1143 = vadd.f32 0.0, %v1142
        %v1144 = vpop.f32.mrb[0].mxu0
        %v1145 = vadd.f32 0.0, %v1144
        %1146 = vmatprep.mubr.bf16.mxu0 0
        %1147 = vmatmul.mubr.bf16.gmra.mrb[0].mxu0 %v390
        %v1148 = vpop.f32.mrb[0].mxu0
        %v1149 = vadd.f32 0.0, %v1148
        %v1150 = vpop.f32.mrb[0].mxu0
        %v1151 = vadd.f32 0.0, %v1150
        %v1152 = vpop.f32.mrb[0].mxu0
        %v1153 = vadd.f32 0.0, %v1152
        %v1154 = vpop.f32.mrb[0].mxu0
        %v1155 = vadd.f32 0.0, %v1154
        %1156 = vmatprep.mubr.bf16.mxu0 0
        %1157 = vmatmul.mubr.bf16.gmra.mrb[0].mxu0 %v391
        %v1158 = vpop.f32.mrb[0].mxu0
        %v1159 = vadd.f32 0.0, %v1158
        %v1160 = vpop.f32.mrb[0].mxu0
        %v1161 = vadd.f32 0.0, %v1160
        %v1162 = vpop.f32.mrb[0].mxu0
        %v1163 = vadd.f32 0.0, %v1162
        %v1164 = vpop.f32.mrb[0].mxu0
        %v1165 = vadd.f32 0.0, %v1164
        %1166 = vdwg.mxu0
        %1167 = vmatprep.subr.bf16.mxu0 %v785
        %1168 = vmatpush1.bf16.msra.mxu0 %v784
        %1169 = vmatprep.subr.bf16.mxu0 %v797
        %1170 = vmatpush1.bf16.msra.mxu0 %v796
        %1171 = vmatprep.subr.bf16.mxu0 %v809
        %1172 = vmatpush1.bf16.msra.mxu0 %v808
        %1173 = vmatprep.subr.bf16.mxu0 %v821
        %1174 = vmatpush1.bf16.msra.mxu0 %v820
        %1175 = vmatprep.subr.bf16.mxu0 %v833
        %1176 = vmatpush1.bf16.msra.mxu0 %v832
        %1177 = vmatprep.subr.bf16.mxu0 %v845
        %1178 = vmatpush1.bf16.msra.mxu0 %v844
        %1179 = vmatprep.subr.bf16.mxu0 %v857
        %1180 = vmatpush1.bf16.msra.mxu0 %v856
        %1181 = vmatprep.subr.bf16.mxu0 %v869
        %1182 = vmatpush1.bf16.msra.mxu0 %v868
        %1183 = vmatprep.subr.bf16.mxu0 0
        %1184 = vmatpush1.bf16.msra.mxu0 0
        %1185 = vmatprep.subr.bf16.mxu0 0
        %1186 = vmatpush1.bf16.msra.mxu0 0
        %1187 = vmatprep.subr.bf16.mxu0 0
        %1188 = vmatpush1.bf16.msra.mxu0 0
        %1189 = vmatprep.subr.bf16.mxu0 0
        %1190 = vmatpush1.bf16.msra.mxu0 0
        %1191 = vmatprep.subr.bf16.mxu0 0
        %1192 = vmatpush1.bf16.msra.mxu0 0
        %1193 = vmatprep.subr.bf16.mxu0 0
        %1194 = vmatpush1.bf16.msra.mxu0 0
        %1195 = vmatprep.subr.bf16.mxu0 0
        %1196 = vmatpush1.bf16.msra.mxu0 0
        %1197 = vmatprep.subr.bf16.mxu0 0
        %1198 = vmatpush1.bf16.msra.mxu0 0
        %1199 = vmatprep.mubr.bf16.mxu0 0
        %1200 = vmatmul.mubr.bf16.gmra.mrb[0].mxu0 %v376
        %v1201 = vpop.f32.mrb[0].mxu0
        %v1202 = vadd.f32 0.0, %v1201
        %v1203 = vpop.f32.mrb[0].mxu0
        %v1204 = vadd.f32 0.0, %v1203
        %v1205 = vpop.f32.mrb[0].mxu0
        %v1206 = vadd.f32 0.0, %v1205
        %v1207 = vpop.f32.mrb[0].mxu0
        %v1208 = vadd.f32 0.0, %v1207
        %1209 = vmatprep.mubr.bf16.mxu0 0
        %1210 = vmatmul.mubr.bf16.gmra.mrb[0].mxu0 %v377
        %v1211 = vpop.f32.mrb[0].mxu0
        %v1212 = vadd.f32 0.0, %v1211
        %v1213 = vpop.f32.mrb[0].mxu0
        %v1214 = vadd.f32 0.0, %v1213
        %v1215 = vpop.f32.mrb[0].mxu0
        %v1216 = vadd.f32 0.0, %v1215
        %v1217 = vpop.f32.mrb[0].mxu0
        %v1218 = vadd.f32 0.0, %v1217
        %1219 = vmatprep.mubr.bf16.mxu0 0
        %1220 = vmatmul.mubr.bf16.gmra.mrb[0].mxu0 %v378
        %v1221 = vpop.f32.mrb[0].mxu0
        %v1222 = vadd.f32 0.0, %v1221
        %v1223 = vpop.f32.mrb[0].mxu0
        %v1224 = vadd.f32 0.0, %v1223
        %v1225 = vpop.f32.mrb[0].mxu0
        %v1226 = vadd.f32 0.0, %v1225
        %v1227 = vpop.f32.mrb[0].mxu0
        %v1228 = vadd.f32 0.0, %v1227
        %1229 = vmatprep.mubr.bf16.mxu0 0
        %1230 = vmatmul.mubr.bf16.gmra.mrb[0].mxu0 %v379
        %v1231 = vpop.f32.mrb[0].mxu0
        %v1232 = vadd.f32 0.0, %v1231
        %v1233 = vpop.f32.mrb[0].mxu0
        %v1234 = vadd.f32 0.0, %v1233
        %v1235 = vpop.f32.mrb[0].mxu0
        %v1236 = vadd.f32 0.0, %v1235
        %v1237 = vpop.f32.mrb[0].mxu0
        %v1238 = vadd.f32 0.0, %v1237
        %1239 = vmatprep.mubr.bf16.mxu0 0
        %1240 = vmatmul.mubr.bf16.gmra.mrb[0].mxu0 %v380
        %v1241 = vpop.f32.mrb[0].mxu0
        %v1242 = vadd.f32 0.0, %v1241
        %v1243 = vpop.f32.mrb[0].mxu0
        %v1244 = vadd.f32 0.0, %v1243
        %v1245 = vpop.f32.mrb[0].mxu0
        %v1246 = vadd.f32 0.0, %v1245
        %v1247 = vpop.f32.mrb[0].mxu0
        %v1248 = vadd.f32 0.0, %v1247
        %1249 = vmatprep.mubr.bf16.mxu0 0
        %1250 = vmatmul.mubr.bf16.gmra.mrb[0].mxu0 %v381
        %v1251 = vpop.f32.mrb[0].mxu0
        %v1252 = vadd.f32 0.0, %v1251
        %v1253 = vpop.f32.mrb[0].mxu0
        %v1254 = vadd.f32 0.0, %v1253
        %v1255 = vpop.f32.mrb[0].mxu0
        %v1256 = vadd.f32 0.0, %v1255
        %v1257 = vpop.f32.mrb[0].mxu0
        %v1258 = vadd.f32 0.0, %v1257
        %1259 = vmatprep.mubr.bf16.mxu0 0
        %1260 = vmatmul.mubr.bf16.gmra.mrb[0].mxu0 %v382
        %v1261 = vpop.f32.mrb[0].mxu0
        %v1262 = vadd.f32 0.0, %v1261
        %v1263 = vpop.f32.mrb[0].mxu0
        %v1264 = vadd.f32 0.0, %v1263
        %v1265 = vpop.f32.mrb[0].mxu0
        %v1266 = vadd.f32 0.0, %v1265
        %v1267 = vpop.f32.mrb[0].mxu0
        %v1268 = vadd.f32 0.0, %v1267
        %1269 = vmatprep.mubr.bf16.mxu0 0
        %1270 = vmatmul.mubr.bf16.gmra.mrb[0].mxu0 %v383
        %v1271 = vpop.f32.mrb[0].mxu0
        %v1272 = vadd.f32 0.0, %v1271
        %v1273 = vpop.f32.mrb[0].mxu0
        %v1274 = vadd.f32 0.0, %v1273
        %v1275 = vpop.f32.mrb[0].mxu0
        %v1276 = vadd.f32 0.0, %v1275
        %v1277 = vpop.f32.mrb[0].mxu0
        %v1278 = vadd.f32 0.0, %v1277
        %1279 = vmatprep.mubr.bf16.mxu0 0
        %1280 = vmatmul.mubr.bf16.gmra.mrb[0].mxu0 %v384
        %v1281 = vpop.f32.mrb[0].mxu0
        %v1282 = vadd.f32 0.0, %v1281
        %v1283 = vpop.f32.mrb[0].mxu0
        %v1284 = vadd.f32 0.0, %v1283
        %v1285 = vpop.f32.mrb[0].mxu0
        %v1286 = vadd.f32 0.0, %v1285
        %v1287 = vpop.f32.mrb[0].mxu0
        %v1288 = vadd.f32 0.0, %v1287
        %1289 = vmatprep.mubr.bf16.mxu0 0
        %1290 = vmatmul.mubr.bf16.gmra.mrb[0].mxu0 %v385
        %v1291 = vpop.f32.mrb[0].mxu0
        %v1292 = vadd.f32 0.0, %v1291
        %v1293 = vpop.f32.mrb[0].mxu0
        %v1294 = vadd.f32 0.0, %v1293
        %v1295 = vpop.f32.mrb[0].mxu0
        %v1296 = vadd.f32 0.0, %v1295
        %v1297 = vpop.f32.mrb[0].mxu0
        %v1298 = vadd.f32 0.0, %v1297
        %1299 = vmatprep.mubr.bf16.mxu0 0
        %1300 = vmatmul.mubr.bf16.gmra.mrb[0].mxu0 %v386
        %v1301 = vpop.f32.mrb[0].mxu0
        %v1302 = vadd.f32 0.0, %v1301
        %v1303 = vpop.f32.mrb[0].mxu0
        %v1304 = vadd.f32 0.0, %v1303
        %v1305 = vpop.f32.mrb[0].mxu0
        %v1306 = vadd.f32 0.0, %v1305
        %v1307 = vpop.f32.mrb[0].mxu0
        %v1308 = vadd.f32 0.0, %v1307
        %1309 = vmatprep.mubr.bf16.mxu0 0
        %1310 = vmatmul.mubr.bf16.gmra.mrb[0].mxu0 %v387
        %v1311 = vpop.f32.mrb[0].mxu0
        %v1312 = vadd.f32 0.0, %v1311
        %v1313 = vpop.f32.mrb[0].mxu0
        %v1314 = vadd.f32 0.0, %v1313
        %v1315 = vpop.f32.mrb[0].mxu0
        %v1316 = vadd.f32 0.0, %v1315
        %v1317 = vpop.f32.mrb[0].mxu0
        %v1318 = vadd.f32 0.0, %v1317
        %1319 = vmatprep.mubr.bf16.mxu0 0
        %1320 = vmatmul.mubr.bf16.gmra.mrb[0].mxu0 %v388
        %v1321 = vpop.f32.mrb[0].mxu0
        %v1322 = vadd.f32 0.0, %v1321
        %v1323 = vpop.f32.mrb[0].mxu0
        %v1324 = vadd.f32 0.0, %v1323
        %v1325 = vpop.f32.mrb[0].mxu0
        %v1326 = vadd.f32 0.0, %v1325
        %v1327 = vpop.f32.mrb[0].mxu0
        %v1328 = vadd.f32 0.0, %v1327
        %1329 = vmatprep.mubr.bf16.mxu0 0
        %1330 = vmatmul.mubr.bf16.gmra.mrb[0].mxu0 %v389
        %v1331 = vpop.f32.mrb[0].mxu0
        %v1332 = vadd.f32 0.0, %v1331
        %v1333 = vpop.f32.mrb[0].mxu0
        %v1334 = vadd.f32 0.0, %v1333
        %v1335 = vpop.f32.mrb[0].mxu0
        %v1336 = vadd.f32 0.0, %v1335
        %v1337 = vpop.f32.mrb[0].mxu0
        %v1338 = vadd.f32 0.0, %v1337
        %1339 = vmatprep.mubr.bf16.mxu0 0
        %1340 = vmatmul.mubr.bf16.gmra.mrb[0].mxu0 %v390
        %v1341 = vpop.f32.mrb[0].mxu0
        %v1342 = vadd.f32 0.0, %v1341
        %v1343 = vpop.f32.mrb[0].mxu0
        %v1344 = vadd.f32 0.0, %v1343
        %v1345 = vpop.f32.mrb[0].mxu0
        %v1346 = vadd.f32 0.0, %v1345
        %v1347 = vpop.f32.mrb[0].mxu0
        %v1348 = vadd.f32 0.0, %v1347
        %1349 = vmatprep.mubr.bf16.mxu0 0
        %1350 = vmatmul.mubr.bf16.gmra.mrb[0].mxu0 %v391
        %v1351 = vpop.f32.mrb[0].mxu0
        %v1352 = vadd.f32 0.0, %v1351
        %v1353 = vpop.f32.mrb[0].mxu0
        %v1354 = vadd.f32 0.0, %v1353
        %v1355 = vpop.f32.mrb[0].mxu0
        %v1356 = vadd.f32 0.0, %v1355
        %v1357 = vpop.f32.mrb[0].mxu0
        %v1358 = vadd.f32 0.0, %v1357
        %1359 = vdwg.mxu0
        %1360 = vmatprep.subr.bf16.mxu0 %v787
        %1361 = vmatpush1.bf16.msra.mxu0 %v786
        %1362 = vmatprep.subr.bf16.mxu0 %v799
        %1363 = vmatpush1.bf16.msra.mxu0 %v798
        %1364 = vmatprep.subr.bf16.mxu0 %v811
        %1365 = vmatpush1.bf16.msra.mxu0 %v810
        %1366 = vmatprep.subr.bf16.mxu0 %v823
        %1367 = vmatpush1.bf16.msra.mxu0 %v822
        %1368 = vmatprep.subr.bf16.mxu0 %v835
        %1369 = vmatpush1.bf16.msra.mxu0 %v834
        %1370 = vmatprep.subr.bf16.mxu0 %v847
        %1371 = vmatpush1.bf16.msra.mxu0 %v846
        %1372 = vmatprep.subr.bf16.mxu0 %v859
        %1373 = vmatpush1.bf16.msra.mxu0 %v858
        %1374 = vmatprep.subr.bf16.mxu0 %v871
        %1375 = vmatpush1.bf16.msra.mxu0 %v870
        %1376 = vmatprep.subr.bf16.mxu0 0
        %1377 = vmatpush1.bf16.msra.mxu0 0
        %1378 = vmatprep.subr.bf16.mxu0 0
        %1379 = vmatpush1.bf16.msra.mxu0 0
        %1380 = vmatprep.subr.bf16.mxu0 0
        %1381 = vmatpush1.bf16.msra.mxu0 0
        %1382 = vmatprep.subr.bf16.mxu0 0
        %1383 = vmatpush1.bf16.msra.mxu0 0
        %1384 = vmatprep.subr.bf16.mxu0 0
        %1385 = vmatpush1.bf16.msra.mxu0 0
        %1386 = vmatprep.subr.bf16.mxu0 0
        %1387 = vmatpush1.bf16.msra.mxu0 0
        %1388 = vmatprep.subr.bf16.mxu0 0
        %1389 = vmatpush1.bf16.msra.mxu0 0
        %1390 = vmatprep.subr.bf16.mxu0 0
        %1391 = vmatpush1.bf16.msra.mxu0 0
        %1392 = vmatprep.mubr.bf16.mxu0 0
        %1393 = vmatmul.mubr.bf16.gmra.mrb[0].mxu0 %v376
        %v1394 = vpop.f32.mrb[0].mxu0
        %v1395 = vadd.f32 0.0, %v1394
        %v1396 = vpop.f32.mrb[0].mxu0
        %v1397 = vadd.f32 0.0, %v1396
        %v1398 = vpop.f32.mrb[0].mxu0
        %v1399 = vadd.f32 0.0, %v1398
        %v1400 = vpop.f32.mrb[0].mxu0
        %v1401 = vadd.f32 0.0, %v1400
        %1402 = vmatprep.mubr.bf16.mxu0 0
        %1403 = vmatmul.mubr.bf16.gmra.mrb[0].mxu0 %v377
        %v1404 = vpop.f32.mrb[0].mxu0
        %v1405 = vadd.f32 0.0, %v1404
        %v1406 = vpop.f32.mrb[0].mxu0
        %v1407 = vadd.f32 0.0, %v1406
        %v1408 = vpop.f32.mrb[0].mxu0
        %v1409 = vadd.f32 0.0, %v1408
        %v1410 = vpop.f32.mrb[0].mxu0
        %v1411 = vadd.f32 0.0, %v1410
        %1412 = vmatprep.mubr.bf16.mxu0 0
        %1413 = vmatmul.mubr.bf16.gmra.mrb[0].mxu0 %v378
        %v1414 = vpop.f32.mrb[0].mxu0
        %v1415 = vadd.f32 0.0, %v1414
        %v1416 = vpop.f32.mrb[0].mxu0
        %v1417 = vadd.f32 0.0, %v1416
        %v1418 = vpop.f32.mrb[0].mxu0
        %v1419 = vadd.f32 0.0, %v1418
        %v1420 = vpop.f32.mrb[0].mxu0
        %v1421 = vadd.f32 0.0, %v1420
        %1422 = vmatprep.mubr.bf16.mxu0 0
        %1423 = vmatmul.mubr.bf16.gmra.mrb[0].mxu0 %v379
        %v1424 = vpop.f32.mrb[0].mxu0
        %v1425 = vadd.f32 0.0, %v1424
        %v1426 = vpop.f32.mrb[0].mxu0
        %v1427 = vadd.f32 0.0, %v1426
        %v1428 = vpop.f32.mrb[0].mxu0
        %v1429 = vadd.f32 0.0, %v1428
        %v1430 = vpop.f32.mrb[0].mxu0
        %v1431 = vadd.f32 0.0, %v1430
        %1432 = vmatprep.mubr.bf16.mxu0 0
        %1433 = vmatmul.mubr.bf16.gmra.mrb[0].mxu0 %v380
        %v1434 = vpop.f32.mrb[0].mxu0
        %v1435 = vadd.f32 0.0, %v1434
        %v1436 = vpop.f32.mrb[0].mxu0
        %v1437 = vadd.f32 0.0, %v1436
        %v1438 = vpop.f32.mrb[0].mxu0
        %v1439 = vadd.f32 0.0, %v1438
        %v1440 = vpop.f32.mrb[0].mxu0
        %v1441 = vadd.f32 0.0, %v1440
        %1442 = vmatprep.mubr.bf16.mxu0 0
        %1443 = vmatmul.mubr.bf16.gmra.mrb[0].mxu0 %v381
        %v1444 = vpop.f32.mrb[0].mxu0
        %v1445 = vadd.f32 0.0, %v1444
        %v1446 = vpop.f32.mrb[0].mxu0
        %v1447 = vadd.f32 0.0, %v1446
        %v1448 = vpop.f32.mrb[0].mxu0
        %v1449 = vadd.f32 0.0, %v1448
        %v1450 = vpop.f32.mrb[0].mxu0
        %v1451 = vadd.f32 0.0, %v1450
        %1452 = vmatprep.mubr.bf16.mxu0 0
        %1453 = vmatmul.mubr.bf16.gmra.mrb[0].mxu0 %v382
        %v1454 = vpop.f32.mrb[0].mxu0
        %v1455 = vadd.f32 0.0, %v1454
        %v1456 = vpop.f32.mrb[0].mxu0
        %v1457 = vadd.f32 0.0, %v1456
        %v1458 = vpop.f32.mrb[0].mxu0
        %v1459 = vadd.f32 0.0, %v1458
        %v1460 = vpop.f32.mrb[0].mxu0
        %v1461 = vadd.f32 0.0, %v1460
        %1462 = vmatprep.mubr.bf16.mxu0 0
        %1463 = vmatmul.mubr.bf16.gmra.mrb[0].mxu0 %v383
        %v1464 = vpop.f32.mrb[0].mxu0
        %v1465 = vadd.f32 0.0, %v1464
        %v1466 = vpop.f32.mrb[0].mxu0
        %v1467 = vadd.f32 0.0, %v1466
        %v1468 = vpop.f32.mrb[0].mxu0
        %v1469 = vadd.f32 0.0, %v1468
        %v1470 = vpop.f32.mrb[0].mxu0
        %v1471 = vadd.f32 0.0, %v1470
        %1472 = vmatprep.mubr.bf16.mxu0 0
        %1473 = vmatmul.mubr.bf16.gmra.mrb[0].mxu0 %v384
        %v1474 = vpop.f32.mrb[0].mxu0
        %v1475 = vadd.f32 0.0, %v1474
        %v1476 = vpop.f32.mrb[0].mxu0
        %v1477 = vadd.f32 0.0, %v1476
        %v1478 = vpop.f32.mrb[0].mxu0
        %v1479 = vadd.f32 0.0, %v1478
        %v1480 = vpop.f32.mrb[0].mxu0
        %v1481 = vadd.f32 0.0, %v1480
        %1482 = vmatprep.mubr.bf16.mxu0 0
        %1483 = vmatmul.mubr.bf16.gmra.mrb[0].mxu0 %v385
        %v1484 = vpop.f32.mrb[0].mxu0
        %v1485 = vadd.f32 0.0, %v1484
        %v1486 = vpop.f32.mrb[0].mxu0
        %v1487 = vadd.f32 0.0, %v1486
        %v1488 = vpop.f32.mrb[0].mxu0
        %v1489 = vadd.f32 0.0, %v1488
        %v1490 = vpop.f32.mrb[0].mxu0
        %v1491 = vadd.f32 0.0, %v1490
        %1492 = vmatprep.mubr.bf16.mxu0 0
        %1493 = vmatmul.mubr.bf16.gmra.mrb[0].mxu0 %v386
        %v1494 = vpop.f32.mrb[0].mxu0
        %v1495 = vadd.f32 0.0, %v1494
        %v1496 = vpop.f32.mrb[0].mxu0
        %v1497 = vadd.f32 0.0, %v1496
        %v1498 = vpop.f32.mrb[0].mxu0
        %v1499 = vadd.f32 0.0, %v1498
        %v1500 = vpop.f32.mrb[0].mxu0
        %v1501 = vadd.f32 0.0, %v1500
        %1502 = vmatprep.mubr.bf16.mxu0 0
        %1503 = vmatmul.mubr.bf16.gmra.mrb[0].mxu0 %v387
        %v1504 = vpop.f32.mrb[0].mxu0
        %v1505 = vadd.f32 0.0, %v1504
        %v1506 = vpop.f32.mrb[0].mxu0
        %v1507 = vadd.f32 0.0, %v1506
        %v1508 = vpop.f32.mrb[0].mxu0
        %v1509 = vadd.f32 0.0, %v1508
        %v1510 = vpop.f32.mrb[0].mxu0
        %v1511 = vadd.f32 0.0, %v1510
        %1512 = vmatprep.mubr.bf16.mxu0 0
        %1513 = vmatmul.mubr.bf16.gmra.mrb[0].mxu0 %v388
        %v1514 = vpop.f32.mrb[0].mxu0
        %v1515 = vadd.f32 0.0, %v1514
        %v1516 = vpop.f32.mrb[0].mxu0
        %v1517 = vadd.f32 0.0, %v1516
        %v1518 = vpop.f32.mrb[0].mxu0
        %v1519 = vadd.f32 0.0, %v1518
        %v1520 = vpop.f32.mrb[0].mxu0
        %v1521 = vadd.f32 0.0, %v1520
        %1522 = vmatprep.mubr.bf16.mxu0 0
        %1523 = vmatmul.mubr.bf16.gmra.mrb[0].mxu0 %v389
        %v1524 = vpop.f32.mrb[0].mxu0
        %v1525 = vadd.f32 0.0, %v1524
        %v1526 = vpop.f32.mrb[0].mxu0
        %v1527 = vadd.f32 0.0, %v1526
        %v1528 = vpop.f32.mrb[0].mxu0
        %v1529 = vadd.f32 0.0, %v1528
        %v1530 = vpop.f32.mrb[0].mxu0
        %v1531 = vadd.f32 0.0, %v1530
        %1532 = vmatprep.mubr.bf16.mxu0 0
        %1533 = vmatmul.mubr.bf16.gmra.mrb[0].mxu0 %v390
        %v1534 = vpop.f32.mrb[0].mxu0
        %v1535 = vadd.f32 0.0, %v1534
        %v1536 = vpop.f32.mrb[0].mxu0
        %v1537 = vadd.f32 0.0, %v1536
        %v1538 = vpop.f32.mrb[0].mxu0
        %v1539 = vadd.f32 0.0, %v1538
        %v1540 = vpop.f32.mrb[0].mxu0
        %v1541 = vadd.f32 0.0, %v1540
        %1542 = vmatprep.mubr.bf16.mxu0 0
        %1543 = vmatmul.mubr.bf16.gmra.mrb[0].mxu0 %v391
        %v1544 = vpop.f32.mrb[0].mxu0
        %v1545 = vadd.f32 0.0, %v1544
        %v1546 = vpop.f32.mrb[0].mxu0
        %v1547 = vadd.f32 0.0, %v1546
        %v1548 = vpop.f32.mrb[0].mxu0
        %v1549 = vadd.f32 0.0, %v1548
        %v1550 = vpop.f32.mrb[0].mxu0
        %v1551 = vadd.f32 0.0, %v1550
        %1552 = vdwg.mxu0
        %1553 = vmatprep.subr.bf16.mxu0 %v789
        %1554 = vmatpush1.bf16.msra.mxu0 %v788
        %1555 = vmatprep.subr.bf16.mxu0 %v801
        %1556 = vmatpush1.bf16.msra.mxu0 %v800
        %1557 = vmatprep.subr.bf16.mxu0 %v813
        %1558 = vmatpush1.bf16.msra.mxu0 %v812
        %1559 = vmatprep.subr.bf16.mxu0 %v825
        %1560 = vmatpush1.bf16.msra.mxu0 %v824
        %1561 = vmatprep.subr.bf16.mxu0 %v837
        %1562 = vmatpush1.bf16.msra.mxu0 %v836
        %1563 = vmatprep.subr.bf16.mxu0 %v849
        %1564 = vmatpush1.bf16.msra.mxu0 %v848
        %1565 = vmatprep.subr.bf16.mxu0 %v861
        %1566 = vmatpush1.bf16.msra.mxu0 %v860
        %1567 = vmatprep.subr.bf16.mxu0 %v873
        %1568 = vmatpush1.bf16.msra.mxu0 %v872
        %1569 = vmatprep.subr.bf16.mxu0 0
        %1570 = vmatpush1.bf16.msra.mxu0 0
        %1571 = vmatprep.subr.bf16.mxu0 0
        %1572 = vmatpush1.bf16.msra.mxu0 0
        %1573 = vmatprep.subr.bf16.mxu0 0
        %1574 = vmatpush1.bf16.msra.mxu0 0
        %1575 = vmatprep.subr.bf16.mxu0 0
        %1576 = vmatpush1.bf16.msra.mxu0 0
        %1577 = vmatprep.subr.bf16.mxu0 0
        %1578 = vmatpush1.bf16.msra.mxu0 0
        %1579 = vmatprep.subr.bf16.mxu0 0
        %1580 = vmatpush1.bf16.msra.mxu0 0
        %1581 = vmatprep.subr.bf16.mxu0 0
        %1582 = vmatpush1.bf16.msra.mxu0 0
        %1583 = vmatprep.subr.bf16.mxu0 0
        %1584 = vmatpush1.bf16.msra.mxu0 0
        %1585 = vmatprep.mubr.bf16.mxu0 0
        %1586 = vmatmul.mubr.bf16.gmra.mrb[0].mxu0 %v376
        %v1587 = vpop.f32.mrb[0].mxu0
        %v1588 = vadd.f32 0.0, %v1587
        %v1589 = vpop.f32.mrb[0].mxu0
        %v1590 = vadd.f32 0.0, %v1589
        %v1591 = vpop.f32.mrb[0].mxu0
        %v1592 = vadd.f32 0.0, %v1591
        %v1593 = vpop.f32.mrb[0].mxu0
        %v1594 = vadd.f32 0.0, %v1593
        %1595 = vmatprep.mubr.bf16.mxu0 0
        %1596 = vmatmul.mubr.bf16.gmra.mrb[0].mxu0 %v377
        %v1597 = vpop.f32.mrb[0].mxu0
        %v1598 = vadd.f32 0.0, %v1597
        %v1599 = vpop.f32.mrb[0].mxu0
        %v1600 = vadd.f32 0.0, %v1599
        %v1601 = vpop.f32.mrb[0].mxu0
        %v1602 = vadd.f32 0.0, %v1601
        %v1603 = vpop.f32.mrb[0].mxu0
        %v1604 = vadd.f32 0.0, %v1603
        %1605 = vmatprep.mubr.bf16.mxu0 0
        %1606 = vmatmul.mubr.bf16.gmra.mrb[0].mxu0 %v378
        %v1607 = vpop.f32.mrb[0].mxu0
        %v1608 = vadd.f32 0.0, %v1607
        %v1609 = vpop.f32.mrb[0].mxu0
        %v1610 = vadd.f32 0.0, %v1609
        %v1611 = vpop.f32.mrb[0].mxu0
        %v1612 = vadd.f32 0.0, %v1611
        %v1613 = vpop.f32.mrb[0].mxu0
        %v1614 = vadd.f32 0.0, %v1613
        %1615 = vmatprep.mubr.bf16.mxu0 0
        %1616 = vmatmul.mubr.bf16.gmra.mrb[0].mxu0 %v379
        %v1617 = vpop.f32.mrb[0].mxu0
        %v1618 = vadd.f32 0.0, %v1617
        %v1619 = vpop.f32.mrb[0].mxu0
        %v1620 = vadd.f32 0.0, %v1619
        %v1621 = vpop.f32.mrb[0].mxu0
        %v1622 = vadd.f32 0.0, %v1621
        %v1623 = vpop.f32.mrb[0].mxu0
        %v1624 = vadd.f32 0.0, %v1623
        %1625 = vmatprep.mubr.bf16.mxu0 0
        %1626 = vmatmul.mubr.bf16.gmra.mrb[0].mxu0 %v380
        %v1627 = vpop.f32.mrb[0].mxu0
        %v1628 = vadd.f32 0.0, %v1627
        %v1629 = vpop.f32.mrb[0].mxu0
        %v1630 = vadd.f32 0.0, %v1629
        %v1631 = vpop.f32.mrb[0].mxu0
        %v1632 = vadd.f32 0.0, %v1631
        %v1633 = vpop.f32.mrb[0].mxu0
        %v1634 = vadd.f32 0.0, %v1633
        %1635 = vmatprep.mubr.bf16.mxu0 0
        %1636 = vmatmul.mubr.bf16.gmra.mrb[0].mxu0 %v381
        %v1637 = vpop.f32.mrb[0].mxu0
        %v1638 = vadd.f32 0.0, %v1637
        %v1639 = vpop.f32.mrb[0].mxu0
        %v1640 = vadd.f32 0.0, %v1639
        %v1641 = vpop.f32.mrb[0].mxu0
        %v1642 = vadd.f32 0.0, %v1641
        %v1643 = vpop.f32.mrb[0].mxu0
        %v1644 = vadd.f32 0.0, %v1643
        %1645 = vmatprep.mubr.bf16.mxu0 0
        %1646 = vmatmul.mubr.bf16.gmra.mrb[0].mxu0 %v382
        %v1647 = vpop.f32.mrb[0].mxu0
        %v1648 = vadd.f32 0.0, %v1647
        %v1649 = vpop.f32.mrb[0].mxu0
        %v1650 = vadd.f32 0.0, %v1649
        %v1651 = vpop.f32.mrb[0].mxu0
        %v1652 = vadd.f32 0.0, %v1651
        %v1653 = vpop.f32.mrb[0].mxu0
        %v1654 = vadd.f32 0.0, %v1653
        %1655 = vmatprep.mubr.bf16.mxu0 0
        %1656 = vmatmul.mubr.bf16.gmra.mrb[0].mxu0 %v383
        %v1657 = vpop.f32.mrb[0].mxu0
        %v1658 = vadd.f32 0.0, %v1657
        %v1659 = vpop.f32.mrb[0].mxu0
        %v1660 = vadd.f32 0.0, %v1659
        %v1661 = vpop.f32.mrb[0].mxu0
        %v1662 = vadd.f32 0.0, %v1661
        %v1663 = vpop.f32.mrb[0].mxu0
        %v1664 = vadd.f32 0.0, %v1663
        %1665 = vmatprep.mubr.bf16.mxu0 0
        %1666 = vmatmul.mubr.bf16.gmra.mrb[0].mxu0 %v384
        %v1667 = vpop.f32.mrb[0].mxu0
        %v1668 = vadd.f32 0.0, %v1667
        %v1669 = vpop.f32.mrb[0].mxu0
        %v1670 = vadd.f32 0.0, %v1669
        %v1671 = vpop.f32.mrb[0].mxu0
        %v1672 = vadd.f32 0.0, %v1671
        %v1673 = vpop.f32.mrb[0].mxu0
        %v1674 = vadd.f32 0.0, %v1673
        %1675 = vmatprep.mubr.bf16.mxu0 0
        %1676 = vmatmul.mubr.bf16.gmra.mrb[0].mxu0 %v385
        %v1677 = vpop.f32.mrb[0].mxu0
        %v1678 = vadd.f32 0.0, %v1677
        %v1679 = vpop.f32.mrb[0].mxu0
        %v1680 = vadd.f32 0.0, %v1679
        %v1681 = vpop.f32.mrb[0].mxu0
        %v1682 = vadd.f32 0.0, %v1681
        %v1683 = vpop.f32.mrb[0].mxu0
        %v1684 = vadd.f32 0.0, %v1683
        %1685 = vmatprep.mubr.bf16.mxu0 0
        %1686 = vmatmul.mubr.bf16.gmra.mrb[0].mxu0 %v386
        %v1687 = vpop.f32.mrb[0].mxu0
        %v1688 = vadd.f32 0.0, %v1687
        %v1689 = vpop.f32.mrb[0].mxu0
        %v1690 = vadd.f32 0.0, %v1689
        %v1691 = vpop.f32.mrb[0].mxu0
        %v1692 = vadd.f32 0.0, %v1691
        %v1693 = vpop.f32.mrb[0].mxu0
        %v1694 = vadd.f32 0.0, %v1693
        %1695 = vmatprep.mubr.bf16.mxu0 0
        %1696 = vmatmul.mubr.bf16.gmra.mrb[0].mxu0 %v387
        %v1697 = vpop.f32.mrb[0].mxu0
        %v1698 = vadd.f32 0.0, %v1697
        %v1699 = vpop.f32.mrb[0].mxu0
        %v1700 = vadd.f32 0.0, %v1699
        %v1701 = vpop.f32.mrb[0].mxu0
        %v1702 = vadd.f32 0.0, %v1701
        %v1703 = vpop.f32.mrb[0].mxu0
        %v1704 = vadd.f32 0.0, %v1703
        %1705 = vmatprep.mubr.bf16.mxu0 0
        %1706 = vmatmul.mubr.bf16.gmra.mrb[0].mxu0 %v388
        %v1707 = vpop.f32.mrb[0].mxu0
        %v1708 = vadd.f32 0.0, %v1707
        %v1709 = vpop.f32.mrb[0].mxu0
        %v1710 = vadd.f32 0.0, %v1709
        %v1711 = vpop.f32.mrb[0].mxu0
        %v1712 = vadd.f32 0.0, %v1711
        %v1713 = vpop.f32.mrb[0].mxu0
        %v1714 = vadd.f32 0.0, %v1713
        %1715 = vmatprep.mubr.bf16.mxu0 0
        %1716 = vmatmul.mubr.bf16.gmra.mrb[0].mxu0 %v389
        %v1717 = vpop.f32.mrb[0].mxu0
        %v1718 = vadd.f32 0.0, %v1717
        %v1719 = vpop.f32.mrb[0].mxu0
        %v1720 = vadd.f32 0.0, %v1719
        %v1721 = vpop.f32.mrb[0].mxu0
        %v1722 = vadd.f32 0.0, %v1721
        %v1723 = vpop.f32.mrb[0].mxu0
        %v1724 = vadd.f32 0.0, %v1723
        %1725 = vmatprep.mubr.bf16.mxu0 0
        %1726 = vmatmul.mubr.bf16.gmra.mrb[0].mxu0 %v390
        %v1727 = vpop.f32.mrb[0].mxu0
        %v1728 = vadd.f32 0.0, %v1727
        %v1729 = vpop.f32.mrb[0].mxu0
        %v1730 = vadd.f32 0.0, %v1729
        %v1731 = vpop.f32.mrb[0].mxu0
        %v1732 = vadd.f32 0.0, %v1731
        %v1733 = vpop.f32.mrb[0].mxu0
        %v1734 = vadd.f32 0.0, %v1733
        %1735 = vmatprep.mubr.bf16.mxu0 0
        %1736 = vmatmul.mubr.bf16.gmra.mrb[0].mxu0 %v391
        %v1737 = vpop.f32.mrb[0].mxu0
        %v1738 = vadd.f32 0.0, %v1737
        %v1739 = vpop.f32.mrb[0].mxu0
        %v1740 = vadd.f32 0.0, %v1739
        %v1741 = vpop.f32.mrb[0].mxu0
        %v1742 = vadd.f32 0.0, %v1741
        %v1743 = vpop.f32.mrb[0].mxu0
        %v1744 = vadd.f32 0.0, %v1743
        %1745 = vdwg.mxu0
        %1746 = vmatprep.subr.bf16.mxu0 %v791
        %1747 = vmatpush1.bf16.msra.mxu0 %v790
        %1748 = vmatprep.subr.bf16.mxu0 %v803
        %1749 = vmatpush1.bf16.msra.mxu0 %v802
        %1750 = vmatprep.subr.bf16.mxu0 %v815
        %1751 = vmatpush1.bf16.msra.mxu0 %v814
        %1752 = vmatprep.subr.bf16.mxu0 %v827
        %1753 = vmatpush1.bf16.msra.mxu0 %v826
        %1754 = vmatprep.subr.bf16.mxu0 %v839
        %1755 = vmatpush1.bf16.msra.mxu0 %v838
        %1756 = vmatprep.subr.bf16.mxu0 %v851
        %1757 = vmatpush1.bf16.msra.mxu0 %v850
        %1758 = vmatprep.subr.bf16.mxu0 %v863
        %1759 = vmatpush1.bf16.msra.mxu0 %v862
        %1760 = vmatprep.subr.bf16.mxu0 %v875
        %1761 = vmatpush1.bf16.msra.mxu0 %v874
        %1762 = vmatprep.subr.bf16.mxu0 0
        %1763 = vmatpush1.bf16.msra.mxu0 0
        %1764 = vmatprep.subr.bf16.mxu0 0
        %1765 = vmatpush1.bf16.msra.mxu0 0
        %1766 = vmatprep.subr.bf16.mxu0 0
        %1767 = vmatpush1.bf16.msra.mxu0 0
        %1768 = vmatprep.subr.bf16.mxu0 0
        %1769 = vmatpush1.bf16.msra.mxu0 0
        %1770 = vmatprep.subr.bf16.mxu0 0
        %1771 = vmatpush1.bf16.msra.mxu0 0
        %1772 = vmatprep.subr.bf16.mxu0 0
        %1773 = vmatpush1.bf16.msra.mxu0 0
        %1774 = vmatprep.subr.bf16.mxu0 0
        %1775 = vmatpush1.bf16.msra.mxu0 0
        %1776 = vmatprep.subr.bf16.mxu0 0
        %1777 = vmatpush1.bf16.msra.mxu0 0
        %1778 = vmatprep.mubr.bf16.mxu0 0
        %1779 = vmatmul.mubr.bf16.gmra.mrb[0].mxu0 %v376
        %v1780 = vpop.f32.mrb[0].mxu0
        %v1781 = vadd.f32 0.0, %v1780
        %v1782 = vpop.f32.mrb[0].mxu0
        %v1783 = vadd.f32 0.0, %v1782
        %v1784 = vpop.f32.mrb[0].mxu0
        %v1785 = vadd.f32 0.0, %v1784
        %v1786 = vpop.f32.mrb[0].mxu0
        %v1787 = vadd.f32 0.0, %v1786
        %1788 = vmatprep.mubr.bf16.mxu0 0
        %1789 = vmatmul.mubr.bf16.gmra.mrb[0].mxu0 %v377
        %v1790 = vpop.f32.mrb[0].mxu0
        %v1791 = vadd.f32 0.0, %v1790
        %v1792 = vpop.f32.mrb[0].mxu0
        %v1793 = vadd.f32 0.0, %v1792
        %v1794 = vpop.f32.mrb[0].mxu0
        %v1795 = vadd.f32 0.0, %v1794
        %v1796 = vpop.f32.mrb[0].mxu0
        %v1797 = vadd.f32 0.0, %v1796
        %1798 = vmatprep.mubr.bf16.mxu0 0
        %1799 = vmatmul.mubr.bf16.gmra.mrb[0].mxu0 %v378
        %v1800 = vpop.f32.mrb[0].mxu0
        %v1801 = vadd.f32 0.0, %v1800
        %v1802 = vpop.f32.mrb[0].mxu0
        %v1803 = vadd.f32 0.0, %v1802
        %v1804 = vpop.f32.mrb[0].mxu0
        %v1805 = vadd.f32 0.0, %v1804
        %v1806 = vpop.f32.mrb[0].mxu0
        %v1807 = vadd.f32 0.0, %v1806
        %1808 = vmatprep.mubr.bf16.mxu0 0
        %1809 = vmatmul.mubr.bf16.gmra.mrb[0].mxu0 %v379
        %v1810 = vpop.f32.mrb[0].mxu0
        %v1811 = vadd.f32 0.0, %v1810
        %v1812 = vpop.f32.mrb[0].mxu0
        %v1813 = vadd.f32 0.0, %v1812
        %v1814 = vpop.f32.mrb[0].mxu0
        %v1815 = vadd.f32 0.0, %v1814
        %v1816 = vpop.f32.mrb[0].mxu0
        %v1817 = vadd.f32 0.0, %v1816
        %1818 = vmatprep.mubr.bf16.mxu0 0
        %1819 = vmatmul.mubr.bf16.gmra.mrb[0].mxu0 %v380
        %v1820 = vpop.f32.mrb[0].mxu0
        %v1821 = vadd.f32 0.0, %v1820
        %v1822 = vpop.f32.mrb[0].mxu0
        %v1823 = vadd.f32 0.0, %v1822
        %v1824 = vpop.f32.mrb[0].mxu0
        %v1825 = vadd.f32 0.0, %v1824
        %v1826 = vpop.f32.mrb[0].mxu0
        %v1827 = vadd.f32 0.0, %v1826
        %1828 = vmatprep.mubr.bf16.mxu0 0
        %1829 = vmatmul.mubr.bf16.gmra.mrb[0].mxu0 %v381
        %v1830 = vpop.f32.mrb[0].mxu0
        %v1831 = vadd.f32 0.0, %v1830
        %v1832 = vpop.f32.mrb[0].mxu0
        %v1833 = vadd.f32 0.0, %v1832
        %v1834 = vpop.f32.mrb[0].mxu0
        %v1835 = vadd.f32 0.0, %v1834
        %v1836 = vpop.f32.mrb[0].mxu0
        %v1837 = vadd.f32 0.0, %v1836
        %1838 = vmatprep.mubr.bf16.mxu0 0
        %1839 = vmatmul.mubr.bf16.gmra.mrb[0].mxu0 %v382
        %v1840 = vpop.f32.mrb[0].mxu0
        %v1841 = vadd.f32 0.0, %v1840
        %v1842 = vpop.f32.mrb[0].mxu0
        %v1843 = vadd.f32 0.0, %v1842
        %v1844 = vpop.f32.mrb[0].mxu0
        %v1845 = vadd.f32 0.0, %v1844
        %v1846 = vpop.f32.mrb[0].mxu0
        %v1847 = vadd.f32 0.0, %v1846
        %1848 = vmatprep.mubr.bf16.mxu0 0
        %1849 = vmatmul.mubr.bf16.gmra.mrb[0].mxu0 %v383
        %v1850 = vpop.f32.mrb[0].mxu0
        %v1851 = vadd.f32 0.0, %v1850
        %v1852 = vpop.f32.mrb[0].mxu0
        %v1853 = vadd.f32 0.0, %v1852
        %v1854 = vpop.f32.mrb[0].mxu0
        %v1855 = vadd.f32 0.0, %v1854
        %v1856 = vpop.f32.mrb[0].mxu0
        %v1857 = vadd.f32 0.0, %v1856
        %1858 = vmatprep.mubr.bf16.mxu0 0
        %1859 = vmatmul.mubr.bf16.gmra.mrb[0].mxu0 %v384
        %v1860 = vpop.f32.mrb[0].mxu0
        %v1861 = vadd.f32 0.0, %v1860
        %v1862 = vpop.f32.mrb[0].mxu0
        %v1863 = vadd.f32 0.0, %v1862
        %v1864 = vpop.f32.mrb[0].mxu0
        %v1865 = vadd.f32 0.0, %v1864
        %v1866 = vpop.f32.mrb[0].mxu0
        %v1867 = vadd.f32 0.0, %v1866
        %1868 = vmatprep.mubr.bf16.mxu0 0
        %1869 = vmatmul.mubr.bf16.gmra.mrb[0].mxu0 %v385
        %v1870 = vpop.f32.mrb[0].mxu0
        %v1871 = vadd.f32 0.0, %v1870
        %v1872 = vpop.f32.mrb[0].mxu0
        %v1873 = vadd.f32 0.0, %v1872
        %v1874 = vpop.f32.mrb[0].mxu0
        %v1875 = vadd.f32 0.0, %v1874
        %v1876 = vpop.f32.mrb[0].mxu0
        %v1877 = vadd.f32 0.0, %v1876
        %1878 = vmatprep.mubr.bf16.mxu0 0
        %1879 = vmatmul.mubr.bf16.gmra.mrb[0].mxu0 %v386
        %v1880 = vpop.f32.mrb[0].mxu0
        %v1881 = vadd.f32 0.0, %v1880
        %v1882 = vpop.f32.mrb[0].mxu0
        %v1883 = vadd.f32 0.0, %v1882
        %v1884 = vpop.f32.mrb[0].mxu0
        %v1885 = vadd.f32 0.0, %v1884
        %v1886 = vpop.f32.mrb[0].mxu0
        %v1887 = vadd.f32 0.0, %v1886
        %1888 = vmatprep.mubr.bf16.mxu0 0
        %1889 = vmatmul.mubr.bf16.gmra.mrb[0].mxu0 %v387
        %v1890 = vpop.f32.mrb[0].mxu0
        %v1891 = vadd.f32 0.0, %v1890
        %v1892 = vpop.f32.mrb[0].mxu0
        %v1893 = vadd.f32 0.0, %v1892
        %v1894 = vpop.f32.mrb[0].mxu0
        %v1895 = vadd.f32 0.0, %v1894
        %v1896 = vpop.f32.mrb[0].mxu0
        %v1897 = vadd.f32 0.0, %v1896
        %1898 = vmatprep.mubr.bf16.mxu0 0
        %1899 = vmatmul.mubr.bf16.gmra.mrb[0].mxu0 %v388
        %v1900 = vpop.f32.mrb[0].mxu0
        %v1901 = vadd.f32 0.0, %v1900
        %v1902 = vpop.f32.mrb[0].mxu0
        %v1903 = vadd.f32 0.0, %v1902
        %v1904 = vpop.f32.mrb[0].mxu0
        %v1905 = vadd.f32 0.0, %v1904
        %v1906 = vpop.f32.mrb[0].mxu0
        %v1907 = vadd.f32 0.0, %v1906
        %1908 = vmatprep.mubr.bf16.mxu0 0
        %1909 = vmatmul.mubr.bf16.gmra.mrb[0].mxu0 %v389
        %v1910 = vpop.f32.mrb[0].mxu0
        %v1911 = vadd.f32 0.0, %v1910
        %v1912 = vpop.f32.mrb[0].mxu0
        %v1913 = vadd.f32 0.0, %v1912
        %v1914 = vpop.f32.mrb[0].mxu0
        %v1915 = vadd.f32 0.0, %v1914
        %v1916 = vpop.f32.mrb[0].mxu0
        %v1917 = vadd.f32 0.0, %v1916
        %1918 = vmatprep.mubr.bf16.mxu0 0
        %1919 = vmatmul.mubr.bf16.gmra.mrb[0].mxu0 %v390
        %v1920 = vpop.f32.mrb[0].mxu0
        %v1921 = vadd.f32 0.0, %v1920
        %v1922 = vpop.f32.mrb[0].mxu0
        %v1923 = vadd.f32 0.0, %v1922
        %v1924 = vpop.f32.mrb[0].mxu0
        %v1925 = vadd.f32 0.0, %v1924
        %v1926 = vpop.f32.mrb[0].mxu0
        %v1927 = vadd.f32 0.0, %v1926
        %1928 = vmatprep.mubr.bf16.mxu0 0
        %1929 = vmatmul.mubr.bf16.gmra.mrb[0].mxu0 %v391
        %v1930 = vpop.f32.mrb[0].mxu0
        %v1931 = vadd.f32 0.0, %v1930
        %v1932 = vpop.f32.mrb[0].mxu0
        %v1933 = vadd.f32 0.0, %v1932
        %v1934 = vpop.f32.mrb[0].mxu0
        %v1935 = vadd.f32 0.0, %v1934
        %v1936 = vpop.f32.mrb[0].mxu0
        %v1937 = vadd.f32 0.0, %v1936
        %1938 = vdwg.mxu0
        %1939 = vmatprep.subr.bf16.mxu0 %v793
        %1940 = vmatpush1.bf16.msra.mxu0 %v792
        %1941 = vmatprep.subr.bf16.mxu0 %v805
        %1942 = vmatpush1.bf16.msra.mxu0 %v804
        %1943 = vmatprep.subr.bf16.mxu0 %v817
        %1944 = vmatpush1.bf16.msra.mxu0 %v816
        %1945 = vmatprep.subr.bf16.mxu0 %v829
        %1946 = vmatpush1.bf16.msra.mxu0 %v828
        %1947 = vmatprep.subr.bf16.mxu0 %v841
        %1948 = vmatpush1.bf16.msra.mxu0 %v840
        %1949 = vmatprep.subr.bf16.mxu0 %v853
        %1950 = vmatpush1.bf16.msra.mxu0 %v852
        %1951 = vmatprep.subr.bf16.mxu0 %v865
        %1952 = vmatpush1.bf16.msra.mxu0 %v864
        %1953 = vmatprep.subr.bf16.mxu0 %v877
        %1954 = vmatpush1.bf16.msra.mxu0 %v876
        %1955 = vmatprep.subr.bf16.mxu0 0
        %1956 = vmatpush1.bf16.msra.mxu0 0
        %1957 = vmatprep.subr.bf16.mxu0 0
        %1958 = vmatpush1.bf16.msra.mxu0 0
        %1959 = vmatprep.subr.bf16.mxu0 0
        %1960 = vmatpush1.bf16.msra.mxu0 0
        %1961 = vmatprep.subr.bf16.mxu0 0
        %1962 = vmatpush1.bf16.msra.mxu0 0
        %1963 = vmatprep.subr.bf16.mxu0 0
        %1964 = vmatpush1.bf16.msra.mxu0 0
        %1965 = vmatprep.subr.bf16.mxu0 0
        %1966 = vmatpush1.bf16.msra.mxu0 0
        %1967 = vmatprep.subr.bf16.mxu0 0
        %1968 = vmatpush1.bf16.msra.mxu0 0
        %1969 = vmatprep.subr.bf16.mxu0 0
        %1970 = vmatpush1.bf16.msra.mxu0 0
        %1971 = vmatprep.mubr.bf16.mxu0 0
        %1972 = vmatmul.mubr.bf16.gmra.mrb[0].mxu0 %v376
        %v1973 = vpop.f32.mrb[0].mxu0
        %v1974 = vadd.f32 0.0, %v1973
        %v1975 = vpop.f32.mrb[0].mxu0
        %v1976 = vadd.f32 0.0, %v1975
        %v1977 = vpop.f32.mrb[0].mxu0
        %v1978 = vadd.f32 0.0, %v1977
        %v1979 = vpop.f32.mrb[0].mxu0
        %v1980 = vadd.f32 0.0, %v1979
        %1981 = vmatprep.mubr.bf16.mxu0 0
        %1982 = vmatmul.mubr.bf16.gmra.mrb[0].mxu0 %v377
        %v1983 = vpop.f32.mrb[0].mxu0
        %v1984 = vadd.f32 0.0, %v1983
        %v1985 = vpop.f32.mrb[0].mxu0
        %v1986 = vadd.f32 0.0, %v1985
        %v1987 = vpop.f32.mrb[0].mxu0
        %v1988 = vadd.f32 0.0, %v1987
        %v1989 = vpop.f32.mrb[0].mxu0
        %v1990 = vadd.f32 0.0, %v1989
        %1991 = vmatprep.mubr.bf16.mxu0 0
        %1992 = vmatmul.mubr.bf16.gmra.mrb[0].mxu0 %v378
        %v1993 = vpop.f32.mrb[0].mxu0
        %v1994 = vadd.f32 0.0, %v1993
        %v1995 = vpop.f32.mrb[0].mxu0
        %v1996 = vadd.f32 0.0, %v1995
        %v1997 = vpop.f32.mrb[0].mxu0
        %v1998 = vadd.f32 0.0, %v1997
        %v1999 = vpop.f32.mrb[0].mxu0
        %v2000 = vadd.f32 0.0, %v1999
        %2001 = vmatprep.mubr.bf16.mxu0 0
        %2002 = vmatmul.mubr.bf16.gmra.mrb[0].mxu0 %v379
        %v2003 = vpop.f32.mrb[0].mxu0
        %v2004 = vadd.f32 0.0, %v2003
        %v2005 = vpop.f32.mrb[0].mxu0
        %v2006 = vadd.f32 0.0, %v2005
        %v2007 = vpop.f32.mrb[0].mxu0
        %v2008 = vadd.f32 0.0, %v2007
        %v2009 = vpop.f32.mrb[0].mxu0
        %v2010 = vadd.f32 0.0, %v2009
        %2011 = vmatprep.mubr.bf16.mxu0 0
        %2012 = vmatmul.mubr.bf16.gmra.mrb[0].mxu0 %v380
        %v2013 = vpop.f32.mrb[0].mxu0
        %v2014 = vadd.f32 0.0, %v2013
        %v2015 = vpop.f32.mrb[0].mxu0
        %v2016 = vadd.f32 0.0, %v2015
        %v2017 = vpop.f32.mrb[0].mxu0
        %v2018 = vadd.f32 0.0, %v2017
        %v2019 = vpop.f32.mrb[0].mxu0
        %v2020 = vadd.f32 0.0, %v2019
        %2021 = vmatprep.mubr.bf16.mxu0 0
        %2022 = vmatmul.mubr.bf16.gmra.mrb[0].mxu0 %v381
        %v2023 = vpop.f32.mrb[0].mxu0
        %v2024 = vadd.f32 0.0, %v2023
        %v2025 = vpop.f32.mrb[0].mxu0
        %v2026 = vadd.f32 0.0, %v2025
        %v2027 = vpop.f32.mrb[0].mxu0
        %v2028 = vadd.f32 0.0, %v2027
        %v2029 = vpop.f32.mrb[0].mxu0
        %v2030 = vadd.f32 0.0, %v2029
        %2031 = vmatprep.mubr.bf16.mxu0 0
        %2032 = vmatmul.mubr.bf16.gmra.mrb[0].mxu0 %v382
        %v2033 = vpop.f32.mrb[0].mxu0
        %v2034 = vadd.f32 0.0, %v2033
        %v2035 = vpop.f32.mrb[0].mxu0
        %v2036 = vadd.f32 0.0, %v2035
        %v2037 = vpop.f32.mrb[0].mxu0
        %v2038 = vadd.f32 0.0, %v2037
        %v2039 = vpop.f32.mrb[0].mxu0
        %v2040 = vadd.f32 0.0, %v2039
        %2041 = vmatprep.mubr.bf16.mxu0 0
        %2042 = vmatmul.mubr.bf16.gmra.mrb[0].mxu0 %v383
        %v2043 = vpop.f32.mrb[0].mxu0
        %v2044 = vadd.f32 0.0, %v2043
        %v2045 = vpop.f32.mrb[0].mxu0
        %v2046 = vadd.f32 0.0, %v2045
        %v2047 = vpop.f32.mrb[0].mxu0
        %v2048 = vadd.f32 0.0, %v2047
        %v2049 = vpop.f32.mrb[0].mxu0
        %v2050 = vadd.f32 0.0, %v2049
        %2051 = vmatprep.mubr.bf16.mxu0 0
        %2052 = vmatmul.mubr.bf16.gmra.mrb[0].mxu0 %v384
        %v2053 = vpop.f32.mrb[0].mxu0
        %v2054 = vadd.f32 0.0, %v2053
        %v2055 = vpop.f32.mrb[0].mxu0
        %v2056 = vadd.f32 0.0, %v2055
        %v2057 = vpop.f32.mrb[0].mxu0
        %v2058 = vadd.f32 0.0, %v2057
        %v2059 = vpop.f32.mrb[0].mxu0
        %v2060 = vadd.f32 0.0, %v2059
        %2061 = vmatprep.mubr.bf16.mxu0 0
        %2062 = vmatmul.mubr.bf16.gmra.mrb[0].mxu0 %v385
        %v2063 = vpop.f32.mrb[0].mxu0
        %v2064 = vadd.f32 0.0, %v2063
        %v2065 = vpop.f32.mrb[0].mxu0
        %v2066 = vadd.f32 0.0, %v2065
        %v2067 = vpop.f32.mrb[0].mxu0
        %v2068 = vadd.f32 0.0, %v2067
        %v2069 = vpop.f32.mrb[0].mxu0
        %v2070 = vadd.f32 0.0, %v2069
        %2071 = vmatprep.mubr.bf16.mxu0 0
        %2072 = vmatmul.mubr.bf16.gmra.mrb[0].mxu0 %v386
        %v2073 = vpop.f32.mrb[0].mxu0
        %v2074 = vadd.f32 0.0, %v2073
        %v2075 = vpop.f32.mrb[0].mxu0
        %v2076 = vadd.f32 0.0, %v2075
        %v2077 = vpop.f32.mrb[0].mxu0
        %v2078 = vadd.f32 0.0, %v2077
        %v2079 = vpop.f32.mrb[0].mxu0
        %v2080 = vadd.f32 0.0, %v2079
        %2081 = vmatprep.mubr.bf16.mxu0 0
        %2082 = vmatmul.mubr.bf16.gmra.mrb[0].mxu0 %v387
        %v2083 = vpop.f32.mrb[0].mxu0
        %v2084 = vadd.f32 0.0, %v2083
        %v2085 = vpop.f32.mrb[0].mxu0
        %v2086 = vadd.f32 0.0, %v2085
        %v2087 = vpop.f32.mrb[0].mxu0
        %v2088 = vadd.f32 0.0, %v2087
        %v2089 = vpop.f32.mrb[0].mxu0
        %v2090 = vadd.f32 0.0, %v2089
        %2091 = vmatprep.mubr.bf16.mxu0 0
        %2092 = vmatmul.mubr.bf16.gmra.mrb[0].mxu0 %v388
        %v2093 = vpop.f32.mrb[0].mxu0
        %v2094 = vadd.f32 0.0, %v2093
        %v2095 = vpop.f32.mrb[0].mxu0
        %v2096 = vadd.f32 0.0, %v2095
        %v2097 = vpop.f32.mrb[0].mxu0
        %v2098 = vadd.f32 0.0, %v2097
        %v2099 = vpop.f32.mrb[0].mxu0
        %v2100 = vadd.f32 0.0, %v2099
        %2101 = vmatprep.mubr.bf16.mxu0 0
        %2102 = vmatmul.mubr.bf16.gmra.mrb[0].mxu0 %v389
        %v2103 = vpop.f32.mrb[0].mxu0
        %v2104 = vadd.f32 0.0, %v2103
        %v2105 = vpop.f32.mrb[0].mxu0
        %v2106 = vadd.f32 0.0, %v2105
        %v2107 = vpop.f32.mrb[0].mxu0
        %v2108 = vadd.f32 0.0, %v2107
        %v2109 = vpop.f32.mrb[0].mxu0
        %v2110 = vadd.f32 0.0, %v2109
        %2111 = vmatprep.mubr.bf16.mxu0 0
        %2112 = vmatmul.mubr.bf16.gmra.mrb[0].mxu0 %v390
        %v2113 = vpop.f32.mrb[0].mxu0
        %v2114 = vadd.f32 0.0, %v2113
        %v2115 = vpop.f32.mrb[0].mxu0
        %v2116 = vadd.f32 0.0, %v2115
        %v2117 = vpop.f32.mrb[0].mxu0
        %v2118 = vadd.f32 0.0, %v2117
        %v2119 = vpop.f32.mrb[0].mxu0
        %v2120 = vadd.f32 0.0, %v2119
        %2121 = vmatprep.mubr.bf16.mxu0 0
        %2122 = vmatmul.mubr.bf16.gmra.mrb[0].mxu0 %v391
        %v2123 = vpop.f32.mrb[0].mxu0
        %v2124 = vadd.f32 0.0, %v2123
        %v2125 = vpop.f32.mrb[0].mxu0
        %v2126 = vadd.f32 0.0, %v2125
        %v2127 = vpop.f32.mrb[0].mxu0
        %v2128 = vadd.f32 0.0, %v2127
        %v2129 = vpop.f32.mrb[0].mxu0
        %v2130 = vadd.f32 0.0, %v2129
        %2131 = vdwg.mxu0
        %v2133 = vlaneseq
        %v2134 = vshrl.u32 %v2133, 7
        %v2135 = vsub.s32 0, %v2134
        %v2136 = vrot.slane %v392, %v2135
        %v2137 = vlaneseq
        %v2138 = vshrl.u32 %v2137, 7
        %v2139 = vsub.s32 1, %v2138
        %v2140 = vrot.slane %v392, %v2139
        %v2141 = vlaneseq
        %v2142 = vshrl.u32 %v2141, 7
        %v2143 = vsub.s32 2, %v2142
        %v2144 = vrot.slane %v392, %v2143
        %v2145 = vlaneseq
        %v2146 = vshrl.u32 %v2145, 7
        %v2147 = vsub.s32 3, %v2146
        %v2148 = vrot.slane %v392, %v2147
        %v2149 = vlaneseq
        %v2150 = vshrl.u32 %v2149, 7
        %v2151 = vsub.s32 4, %v2150
        %v2152 = vrot.slane %v392, %v2151
        %v2153 = vlaneseq
        %v2154 = vshrl.u32 %v2153, 7
        %v2155 = vsub.s32 5, %v2154
        %v2156 = vrot.slane %v392, %v2155
        %v2157 = vlaneseq
        %v2158 = vshrl.u32 %v2157, 7
        %v2159 = vsub.s32 6, %v2158
        %v2160 = vrot.slane %v392, %v2159
        %v2161 = vlaneseq
        %v2162 = vshrl.u32 %v2161, 7
        %v2163 = vsub.s32 7, %v2162
        %v2164 = vrot.slane %v392, %v2163
        %v2173 = vadd.f32 %v1009, %v2136
        %v2174 = vadd.f32 %v1011, %v2140
        %v2175 = vadd.f32 %v1202, %v2144
        %v2176 = vadd.f32 %v1204, %v2148
        %v2177 = vadd.f32 %v1395, %v2152
        %v2178 = vadd.f32 %v1397, %v2156
        %v2179 = vadd.f32 %v1588, %v2160
        %v2180 = vadd.f32 %v1590, %v2164
        %v2181 = vadd.f32 %v1013, %v2136
        %v2182 = vadd.f32 %v1015, %v2140
        %v2183 = vadd.f32 %v1206, %v2144
        %v2184 = vadd.f32 %v1208, %v2148
        %v2185 = vadd.f32 %v1399, %v2152
        %v2186 = vadd.f32 %v1401, %v2156
        %v2187 = vadd.f32 %v1592, %v2160
        %v2188 = vadd.f32 %v1594, %v2164
        %v2189 = vadd.f32 %v1019, %v2136
        %v2190 = vadd.f32 %v1021, %v2140
        %v2191 = vadd.f32 %v1212, %v2144
        %v2192 = vadd.f32 %v1214, %v2148
        %v2193 = vadd.f32 %v1405, %v2152
        %v2194 = vadd.f32 %v1407, %v2156
        %v2195 = vadd.f32 %v1598, %v2160
        %v2196 = vadd.f32 %v1600, %v2164
        %v2197 = vadd.f32 %v1023, %v2136
        %v2198 = vadd.f32 %v1025, %v2140
        %v2199 = vadd.f32 %v1216, %v2144
        %v2200 = vadd.f32 %v1218, %v2148
        %v2201 = vadd.f32 %v1409, %v2152
        %v2202 = vadd.f32 %v1411, %v2156
        %v2203 = vadd.f32 %v1602, %v2160
        %v2204 = vadd.f32 %v1604, %v2164
        %v2205 = vadd.f32 %v1029, %v2136
        %v2206 = vadd.f32 %v1031, %v2140
        %v2207 = vadd.f32 %v1222, %v2144
        %v2208 = vadd.f32 %v1224, %v2148
        %v2209 = vadd.f32 %v1415, %v2152
        %v2210 = vadd.f32 %v1417, %v2156
        %v2211 = vadd.f32 %v1608, %v2160
        %v2212 = vadd.f32 %v1610, %v2164
        %v2213 = vadd.f32 %v1033, %v2136
        %v2214 = vadd.f32 %v1035, %v2140
        %v2215 = vadd.f32 %v1226, %v2144
        %v2216 = vadd.f32 %v1228, %v2148
        %v2217 = vadd.f32 %v1419, %v2152
        %v2218 = vadd.f32 %v1421, %v2156
        %v2219 = vadd.f32 %v1612, %v2160
        %v2220 = vadd.f32 %v1614, %v2164
        %v2221 = vadd.f32 %v1039, %v2136
        %v2222 = vadd.f32 %v1041, %v2140
        %v2223 = vadd.f32 %v1232, %v2144
        %v2224 = vadd.f32 %v1234, %v2148
        %v2225 = vadd.f32 %v1425, %v2152
        %v2226 = vadd.f32 %v1427, %v2156
        %v2227 = vadd.f32 %v1618, %v2160
        %v2228 = vadd.f32 %v1620, %v2164
        %v2229 = vadd.f32 %v1043, %v2136
        %v2230 = vadd.f32 %v1045, %v2140
        %v2231 = vadd.f32 %v1236, %v2144
        %v2232 = vadd.f32 %v1238, %v2148
        %v2233 = vadd.f32 %v1429, %v2152
        %v2234 = vadd.f32 %v1431, %v2156
        %v2235 = vadd.f32 %v1622, %v2160
        %v2236 = vadd.f32 %v1624, %v2164
        %v2237 = vadd.f32 %v1049, %v2136
        %v2238 = vadd.f32 %v1051, %v2140
        %v2239 = vadd.f32 %v1242, %v2144
        %v2240 = vadd.f32 %v1244, %v2148
        %v2241 = vadd.f32 %v1435, %v2152
        %v2242 = vadd.f32 %v1437, %v2156
        %v2243 = vadd.f32 %v1628, %v2160
        %v2244 = vadd.f32 %v1630, %v2164
        %v2245 = vadd.f32 %v1053, %v2136
        %v2246 = vadd.f32 %v1055, %v2140
        %v2247 = vadd.f32 %v1246, %v2144
        %v2248 = vadd.f32 %v1248, %v2148
        %v2249 = vadd.f32 %v1439, %v2152
        %v2250 = vadd.f32 %v1441, %v2156
        %v2251 = vadd.f32 %v1632, %v2160
        %v2252 = vadd.f32 %v1634, %v2164
        %v2253 = vadd.f32 %v1059, %v2136
        %v2254 = vadd.f32 %v1061, %v2140
        %v2255 = vadd.f32 %v1252, %v2144
        %v2256 = vadd.f32 %v1254, %v2148
        %v2257 = vadd.f32 %v1445, %v2152
        %v2258 = vadd.f32 %v1447, %v2156
        %v2259 = vadd.f32 %v1638, %v2160
        %v2260 = vadd.f32 %v1640, %v2164
        %v2261 = vadd.f32 %v1063, %v2136
        %v2262 = vadd.f32 %v1065, %v2140
        %v2263 = vadd.f32 %v1256, %v2144
        %v2264 = vadd.f32 %v1258, %v2148
        %v2265 = vadd.f32 %v1449, %v2152
        %v2266 = vadd.f32 %v1451, %v2156
        %v2267 = vadd.f32 %v1642, %v2160
        %v2268 = vadd.f32 %v1644, %v2164
        %v2269 = vadd.f32 %v1069, %v2136
        %v2270 = vadd.f32 %v1071, %v2140
        %v2271 = vadd.f32 %v1262, %v2144
        %v2272 = vadd.f32 %v1264, %v2148
        %v2273 = vadd.f32 %v1455, %v2152
        %v2274 = vadd.f32 %v1457, %v2156
        %v2275 = vadd.f32 %v1648, %v2160
        %v2276 = vadd.f32 %v1650, %v2164
        %v2277 = vadd.f32 %v1073, %v2136
        %v2278 = vadd.f32 %v1075, %v2140
        %v2279 = vadd.f32 %v1266, %v2144
        %v2280 = vadd.f32 %v1268, %v2148
        %v2281 = vadd.f32 %v1459, %v2152
        %v2282 = vadd.f32 %v1461, %v2156
        %v2283 = vadd.f32 %v1652, %v2160
        %v2284 = vadd.f32 %v1654, %v2164
        %v2285 = vadd.f32 %v1079, %v2136
        %v2286 = vadd.f32 %v1081, %v2140
        %v2287 = vadd.f32 %v1272, %v2144
        %v2288 = vadd.f32 %v1274, %v2148
        %v2289 = vadd.f32 %v1465, %v2152
        %v2290 = vadd.f32 %v1467, %v2156
        %v2291 = vadd.f32 %v1658, %v2160
        %v2292 = vadd.f32 %v1660, %v2164
        %v2293 = vadd.f32 %v1083, %v2136
        %v2294 = vadd.f32 %v1085, %v2140
        %v2295 = vadd.f32 %v1276, %v2144
        %v2296 = vadd.f32 %v1278, %v2148
        %v2297 = vadd.f32 %v1469, %v2152
        %v2298 = vadd.f32 %v1471, %v2156
        %v2299 = vadd.f32 %v1662, %v2160
        %v2300 = vadd.f32 %v1664, %v2164
        %v2301 = vadd.f32 %v1089, %v2136
        %v2302 = vadd.f32 %v1091, %v2140
        %v2303 = vadd.f32 %v1282, %v2144
        %v2304 = vadd.f32 %v1284, %v2148
        %v2305 = vadd.f32 %v1475, %v2152
        %v2306 = vadd.f32 %v1477, %v2156
        %v2307 = vadd.f32 %v1668, %v2160
        %v2308 = vadd.f32 %v1670, %v2164
        %v2309 = vadd.f32 %v1093, %v2136
        %v2310 = vadd.f32 %v1095, %v2140
        %v2311 = vadd.f32 %v1286, %v2144
        %v2312 = vadd.f32 %v1288, %v2148
        %v2313 = vadd.f32 %v1479, %v2152
        %v2314 = vadd.f32 %v1481, %v2156
        %v2315 = vadd.f32 %v1672, %v2160
        %v2316 = vadd.f32 %v1674, %v2164
        %v2317 = vadd.f32 %v1099, %v2136
        %v2318 = vadd.f32 %v1101, %v2140
        %v2319 = vadd.f32 %v1292, %v2144
        %v2320 = vadd.f32 %v1294, %v2148
        %v2321 = vadd.f32 %v1485, %v2152
        %v2322 = vadd.f32 %v1487, %v2156
        %v2323 = vadd.f32 %v1678, %v2160
        %v2324 = vadd.f32 %v1680, %v2164
        %v2325 = vadd.f32 %v1103, %v2136
        %v2326 = vadd.f32 %v1105, %v2140
        %v2327 = vadd.f32 %v1296, %v2144
        %v2328 = vadd.f32 %v1298, %v2148
        %v2329 = vadd.f32 %v1489, %v2152
        %v2330 = vadd.f32 %v1491, %v2156
        %v2331 = vadd.f32 %v1682, %v2160
        %v2332 = vadd.f32 %v1684, %v2164
        %v2333 = vadd.f32 %v1109, %v2136
        %v2334 = vadd.f32 %v1111, %v2140
        %v2335 = vadd.f32 %v1302, %v2144
        %v2336 = vadd.f32 %v1304, %v2148
        %v2337 = vadd.f32 %v1495, %v2152
        %v2338 = vadd.f32 %v1497, %v2156
        %v2339 = vadd.f32 %v1688, %v2160
        %v2340 = vadd.f32 %v1690, %v2164
        %v2341 = vadd.f32 %v1113, %v2136
        %v2342 = vadd.f32 %v1115, %v2140
        %v2343 = vadd.f32 %v1306, %v2144
        %v2344 = vadd.f32 %v1308, %v2148
        %v2345 = vadd.f32 %v1499, %v2152
        %v2346 = vadd.f32 %v1501, %v2156
        %v2347 = vadd.f32 %v1692, %v2160
        %v2348 = vadd.f32 %v1694, %v2164
        %v2349 = vadd.f32 %v1119, %v2136
        %v2350 = vadd.f32 %v1121, %v2140
        %v2351 = vadd.f32 %v1312, %v2144
        %v2352 = vadd.f32 %v1314, %v2148
        %v2353 = vadd.f32 %v1505, %v2152
        %v2354 = vadd.f32 %v1507, %v2156
        %v2355 = vadd.f32 %v1698, %v2160
        %v2356 = vadd.f32 %v1700, %v2164
        %v2357 = vadd.f32 %v1123, %v2136
        %v2358 = vadd.f32 %v1125, %v2140
        %v2359 = vadd.f32 %v1316, %v2144
        %v2360 = vadd.f32 %v1318, %v2148
        %v2361 = vadd.f32 %v1509, %v2152
        %v2362 = vadd.f32 %v1511, %v2156
        %v2363 = vadd.f32 %v1702, %v2160
        %v2364 = vadd.f32 %v1704, %v2164
        %v2365 = vadd.f32 %v1129, %v2136
        %v2366 = vadd.f32 %v1131, %v2140
        %v2367 = vadd.f32 %v1322, %v2144
        %v2368 = vadd.f32 %v1324, %v2148
        %v2369 = vadd.f32 %v1515, %v2152
        %v2370 = vadd.f32 %v1517, %v2156
        %v2371 = vadd.f32 %v1708, %v2160
        %v2372 = vadd.f32 %v1710, %v2164
        %v2373 = vadd.f32 %v1133, %v2136
        %v2374 = vadd.f32 %v1135, %v2140
        %v2375 = vadd.f32 %v1326, %v2144
        %v2376 = vadd.f32 %v1328, %v2148
        %v2377 = vadd.f32 %v1519, %v2152
        %v2378 = vadd.f32 %v1521, %v2156
        %v2379 = vadd.f32 %v1712, %v2160
        %v2380 = vadd.f32 %v1714, %v2164
        %v2381 = vadd.f32 %v1139, %v2136
        %v2382 = vadd.f32 %v1141, %v2140
        %v2383 = vadd.f32 %v1332, %v2144
        %v2384 = vadd.f32 %v1334, %v2148
        %v2385 = vadd.f32 %v1525, %v2152
        %v2386 = vadd.f32 %v1527, %v2156
        %v2387 = vadd.f32 %v1718, %v2160
        %v2388 = vadd.f32 %v1720, %v2164
        %v2389 = vadd.f32 %v1143, %v2136
        %v2390 = vadd.f32 %v1145, %v2140
        %v2391 = vadd.f32 %v1336, %v2144
        %v2392 = vadd.f32 %v1338, %v2148
        %v2393 = vadd.f32 %v1529, %v2152
        %v2394 = vadd.f32 %v1531, %v2156
        %v2395 = vadd.f32 %v1722, %v2160
        %v2396 = vadd.f32 %v1724, %v2164
        %v2397 = vadd.f32 %v1149, %v2136
        %v2398 = vadd.f32 %v1151, %v2140
        %v2399 = vadd.f32 %v1342, %v2144
        %v2400 = vadd.f32 %v1344, %v2148
        %v2401 = vadd.f32 %v1535, %v2152
        %v2402 = vadd.f32 %v1537, %v2156
        %v2403 = vadd.f32 %v1728, %v2160
        %v2404 = vadd.f32 %v1730, %v2164
        %v2405 = vadd.f32 %v1153, %v2136
        %v2406 = vadd.f32 %v1155, %v2140
        %v2407 = vadd.f32 %v1346, %v2144
        %v2408 = vadd.f32 %v1348, %v2148
        %v2409 = vadd.f32 %v1539, %v2152
        %v2410 = vadd.f32 %v1541, %v2156
        %v2411 = vadd.f32 %v1732, %v2160
        %v2412 = vadd.f32 %v1734, %v2164
        %v2413 = vadd.f32 %v1159, %v2136
        %v2414 = vadd.f32 %v1161, %v2140
        %v2415 = vadd.f32 %v1352, %v2144
        %v2416 = vadd.f32 %v1354, %v2148
        %v2417 = vadd.f32 %v1545, %v2152
        %v2418 = vadd.f32 %v1547, %v2156
        %v2419 = vadd.f32 %v1738, %v2160
        %v2420 = vadd.f32 %v1740, %v2164
        %v2421 = vadd.f32 %v1163, %v2136
        %v2422 = vadd.f32 %v1165, %v2140
        %v2423 = vadd.f32 %v1356, %v2144
        %v2424 = vadd.f32 %v1358, %v2148
        %v2425 = vadd.f32 %v1549, %v2152
        %v2426 = vadd.f32 %v1551, %v2156
        %v2427 = vadd.f32 %v1742, %v2160
        %v2428 = vadd.f32 %v1744, %v2164
        %v2429 = vmax.f32 %v2173, 0.0
        %v2430 = vmax.f32 %v2174, 0.0
        %v2431 = vmax.f32 %v2175, 0.0
        %v2432 = vmax.f32 %v2176, 0.0
        %v2433 = vmax.f32 %v2177, 0.0
        %v2434 = vmax.f32 %v2178, 0.0
        %v2435 = vmax.f32 %v2179, 0.0
        %v2436 = vmax.f32 %v2180, 0.0
        %v2437 = vmax.f32 %v2181, 0.0
        %v2438 = vmax.f32 %v2182, 0.0
        %v2439 = vmax.f32 %v2183, 0.0
        %v2440 = vmax.f32 %v2184, 0.0
        %v2441 = vmax.f32 %v2185, 0.0
        %v2442 = vmax.f32 %v2186, 0.0
        %v2443 = vmax.f32 %v2187, 0.0
        %v2444 = vmax.f32 %v2188, 0.0
        %v2445 = vmax.f32 %v2189, 0.0
        %v2446 = vmax.f32 %v2190, 0.0
        %v2447 = vmax.f32 %v2191, 0.0
        %v2448 = vmax.f32 %v2192, 0.0
        %v2449 = vmax.f32 %v2193, 0.0
        %v2450 = vmax.f32 %v2194, 0.0
        %v2451 = vmax.f32 %v2195, 0.0
        %v2452 = vmax.f32 %v2196, 0.0
        %v2453 = vmax.f32 %v2197, 0.0
        %v2454 = vmax.f32 %v2198, 0.0
        %v2455 = vmax.f32 %v2199, 0.0
        %v2456 = vmax.f32 %v2200, 0.0
        %v2457 = vmax.f32 %v2201, 0.0
        %v2458 = vmax.f32 %v2202, 0.0
        %v2459 = vmax.f32 %v2203, 0.0
        %v2460 = vmax.f32 %v2204, 0.0
        %v2461 = vmax.f32 %v2205, 0.0
        %v2462 = vmax.f32 %v2206, 0.0
        %v2463 = vmax.f32 %v2207, 0.0
        %v2464 = vmax.f32 %v2208, 0.0
        %v2465 = vmax.f32 %v2209, 0.0
        %v2466 = vmax.f32 %v2210, 0.0
        %v2467 = vmax.f32 %v2211, 0.0
        %v2468 = vmax.f32 %v2212, 0.0
        %v2469 = vmax.f32 %v2213, 0.0
        %v2470 = vmax.f32 %v2214, 0.0
        %v2471 = vmax.f32 %v2215, 0.0
        %v2472 = vmax.f32 %v2216, 0.0
        %v2473 = vmax.f32 %v2217, 0.0
        %v2474 = vmax.f32 %v2218, 0.0
        %v2475 = vmax.f32 %v2219, 0.0
        %v2476 = vmax.f32 %v2220, 0.0
        %v2477 = vmax.f32 %v2221, 0.0
        %v2478 = vmax.f32 %v2222, 0.0
        %v2479 = vmax.f32 %v2223, 0.0
        %v2480 = vmax.f32 %v2224, 0.0
        %v2481 = vmax.f32 %v2225, 0.0
        %v2482 = vmax.f32 %v2226, 0.0
        %v2483 = vmax.f32 %v2227, 0.0
        %v2484 = vmax.f32 %v2228, 0.0
        %v2485 = vmax.f32 %v2229, 0.0
        %v2486 = vmax.f32 %v2230, 0.0
        %v2487 = vmax.f32 %v2231, 0.0
        %v2488 = vmax.f32 %v2232, 0.0
        %v2489 = vmax.f32 %v2233, 0.0
        %v2490 = vmax.f32 %v2234, 0.0
        %v2491 = vmax.f32 %v2235, 0.0
        %v2492 = vmax.f32 %v2236, 0.0
        %v2493 = vmax.f32 %v2237, 0.0
        %v2494 = vmax.f32 %v2238, 0.0
        %v2495 = vmax.f32 %v2239, 0.0
        %v2496 = vmax.f32 %v2240, 0.0
        %v2497 = vmax.f32 %v2241, 0.0
        %v2498 = vmax.f32 %v2242, 0.0
        %v2499 = vmax.f32 %v2243, 0.0
        %v2500 = vmax.f32 %v2244, 0.0
        %v2501 = vmax.f32 %v2245, 0.0
        %v2502 = vmax.f32 %v2246, 0.0
        %v2503 = vmax.f32 %v2247, 0.0
        %v2504 = vmax.f32 %v2248, 0.0
        %v2505 = vmax.f32 %v2249, 0.0
        %v2506 = vmax.f32 %v2250, 0.0
        %v2507 = vmax.f32 %v2251, 0.0
        %v2508 = vmax.f32 %v2252, 0.0
        %v2509 = vmax.f32 %v2253, 0.0
        %v2510 = vmax.f32 %v2254, 0.0
        %v2511 = vmax.f32 %v2255, 0.0
        %v2512 = vmax.f32 %v2256, 0.0
        %v2513 = vmax.f32 %v2257, 0.0
        %v2514 = vmax.f32 %v2258, 0.0
        %v2515 = vmax.f32 %v2259, 0.0
        %v2516 = vmax.f32 %v2260, 0.0
        %v2517 = vmax.f32 %v2261, 0.0
        %v2518 = vmax.f32 %v2262, 0.0
        %v2519 = vmax.f32 %v2263, 0.0
        %v2520 = vmax.f32 %v2264, 0.0
        %v2521 = vmax.f32 %v2265, 0.0
        %v2522 = vmax.f32 %v2266, 0.0
        %v2523 = vmax.f32 %v2267, 0.0
        %v2524 = vmax.f32 %v2268, 0.0
        %v2525 = vmax.f32 %v2269, 0.0
        %v2526 = vmax.f32 %v2270, 0.0
        %v2527 = vmax.f32 %v2271, 0.0
        %v2528 = vmax.f32 %v2272, 0.0
        %v2529 = vmax.f32 %v2273, 0.0
        %v2530 = vmax.f32 %v2274, 0.0
        %v2531 = vmax.f32 %v2275, 0.0
        %v2532 = vmax.f32 %v2276, 0.0
        %v2533 = vmax.f32 %v2277, 0.0
        %v2534 = vmax.f32 %v2278, 0.0
        %v2535 = vmax.f32 %v2279, 0.0
        %v2536 = vmax.f32 %v2280, 0.0
        %v2537 = vmax.f32 %v2281, 0.0
        %v2538 = vmax.f32 %v2282, 0.0
        %v2539 = vmax.f32 %v2283, 0.0
        %v2540 = vmax.f32 %v2284, 0.0
        %v2541 = vmax.f32 %v2285, 0.0
        %v2542 = vmax.f32 %v2286, 0.0
        %v2543 = vmax.f32 %v2287, 0.0
        %v2544 = vmax.f32 %v2288, 0.0
        %v2545 = vmax.f32 %v2289, 0.0
        %v2546 = vmax.f32 %v2290, 0.0
        %v2547 = vmax.f32 %v2291, 0.0
        %v2548 = vmax.f32 %v2292, 0.0
        %v2549 = vmax.f32 %v2293, 0.0
        %v2550 = vmax.f32 %v2294, 0.0
        %v2551 = vmax.f32 %v2295, 0.0
        %v2552 = vmax.f32 %v2296, 0.0
        %v2553 = vmax.f32 %v2297, 0.0
        %v2554 = vmax.f32 %v2298, 0.0
        %v2555 = vmax.f32 %v2299, 0.0
        %v2556 = vmax.f32 %v2300, 0.0
        %v2557 = vmax.f32 %v2301, 0.0
        %v2558 = vmax.f32 %v2302, 0.0
        %v2559 = vmax.f32 %v2303, 0.0
        %v2560 = vmax.f32 %v2304, 0.0
        %v2561 = vmax.f32 %v2305, 0.0
        %v2562 = vmax.f32 %v2306, 0.0
        %v2563 = vmax.f32 %v2307, 0.0
        %v2564 = vmax.f32 %v2308, 0.0
        %v2565 = vmax.f32 %v2309, 0.0
        %v2566 = vmax.f32 %v2310, 0.0
        %v2567 = vmax.f32 %v2311, 0.0
        %v2568 = vmax.f32 %v2312, 0.0
        %v2569 = vmax.f32 %v2313, 0.0
        %v2570 = vmax.f32 %v2314, 0.0
        %v2571 = vmax.f32 %v2315, 0.0
        %v2572 = vmax.f32 %v2316, 0.0
        %v2573 = vmax.f32 %v2317, 0.0
        %v2574 = vmax.f32 %v2318, 0.0
        %v2575 = vmax.f32 %v2319, 0.0
        %v2576 = vmax.f32 %v2320, 0.0
        %v2577 = vmax.f32 %v2321, 0.0
        %v2578 = vmax.f32 %v2322, 0.0
        %v2579 = vmax.f32 %v2323, 0.0
        %v2580 = vmax.f32 %v2324, 0.0
        %v2581 = vmax.f32 %v2325, 0.0
        %v2582 = vmax.f32 %v2326, 0.0
        %v2583 = vmax.f32 %v2327, 0.0
        %v2584 = vmax.f32 %v2328, 0.0
        %v2585 = vmax.f32 %v2329, 0.0
        %v2586 = vmax.f32 %v2330, 0.0
        %v2587 = vmax.f32 %v2331, 0.0
        %v2588 = vmax.f32 %v2332, 0.0
        %v2589 = vmax.f32 %v2333, 0.0
        %v2590 = vmax.f32 %v2334, 0.0
        %v2591 = vmax.f32 %v2335, 0.0
        %v2592 = vmax.f32 %v2336, 0.0
        %v2593 = vmax.f32 %v2337, 0.0
        %v2594 = vmax.f32 %v2338, 0.0
        %v2595 = vmax.f32 %v2339, 0.0
        %v2596 = vmax.f32 %v2340, 0.0
        %v2597 = vmax.f32 %v2341, 0.0
        %v2598 = vmax.f32 %v2342, 0.0
        %v2599 = vmax.f32 %v2343, 0.0
        %v2600 = vmax.f32 %v2344, 0.0
        %v2601 = vmax.f32 %v2345, 0.0
        %v2602 = vmax.f32 %v2346, 0.0
        %v2603 = vmax.f32 %v2347, 0.0
        %v2604 = vmax.f32 %v2348, 0.0
        %v2605 = vmax.f32 %v2349, 0.0
        %v2606 = vmax.f32 %v2350, 0.0
        %v2607 = vmax.f32 %v2351, 0.0
        %v2608 = vmax.f32 %v2352, 0.0
        %v2609 = vmax.f32 %v2353, 0.0
        %v2610 = vmax.f32 %v2354, 0.0
        %v2611 = vmax.f32 %v2355, 0.0
        %v2612 = vmax.f32 %v2356, 0.0
        %v2613 = vmax.f32 %v2357, 0.0
        %v2614 = vmax.f32 %v2358, 0.0
        %v2615 = vmax.f32 %v2359, 0.0
        %v2616 = vmax.f32 %v2360, 0.0
        %v2617 = vmax.f32 %v2361, 0.0
        %v2618 = vmax.f32 %v2362, 0.0
        %v2619 = vmax.f32 %v2363, 0.0
        %v2620 = vmax.f32 %v2364, 0.0
        %v2621 = vmax.f32 %v2365, 0.0
        %v2622 = vmax.f32 %v2366, 0.0
        %v2623 = vmax.f32 %v2367, 0.0
        %v2624 = vmax.f32 %v2368, 0.0
        %v2625 = vmax.f32 %v2369, 0.0
        %v2626 = vmax.f32 %v2370, 0.0
        %v2627 = vmax.f32 %v2371, 0.0
        %v2628 = vmax.f32 %v2372, 0.0
        %v2629 = vmax.f32 %v2373, 0.0
        %v2630 = vmax.f32 %v2374, 0.0
        %v2631 = vmax.f32 %v2375, 0.0
        %v2632 = vmax.f32 %v2376, 0.0
        %v2633 = vmax.f32 %v2377, 0.0
        %v2634 = vmax.f32 %v2378, 0.0
        %v2635 = vmax.f32 %v2379, 0.0
        %v2636 = vmax.f32 %v2380, 0.0
        %v2637 = vmax.f32 %v2381, 0.0
        %v2638 = vmax.f32 %v2382, 0.0
        %v2639 = vmax.f32 %v2383, 0.0
        %v2640 = vmax.f32 %v2384, 0.0
        %v2641 = vmax.f32 %v2385, 0.0
        %v2642 = vmax.f32 %v2386, 0.0
        %v2643 = vmax.f32 %v2387, 0.0
        %v2644 = vmax.f32 %v2388, 0.0
        %v2645 = vmax.f32 %v2389, 0.0
        %v2646 = vmax.f32 %v2390, 0.0
        %v2647 = vmax.f32 %v2391, 0.0
        %v2648 = vmax.f32 %v2392, 0.0
        %v2649 = vmax.f32 %v2393, 0.0
        %v2650 = vmax.f32 %v2394, 0.0
        %v2651 = vmax.f32 %v2395, 0.0
        %v2652 = vmax.f32 %v2396, 0.0
        %v2653 = vmax.f32 %v2397, 0.0
        %v2654 = vmax.f32 %v2398, 0.0
        %v2655 = vmax.f32 %v2399, 0.0
        %v2656 = vmax.f32 %v2400, 0.0
        %v2657 = vmax.f32 %v2401, 0.0
        %v2658 = vmax.f32 %v2402, 0.0
        %v2659 = vmax.f32 %v2403, 0.0
        %v2660 = vmax.f32 %v2404, 0.0
        %v2661 = vmax.f32 %v2405, 0.0
        %v2662 = vmax.f32 %v2406, 0.0
        %v2663 = vmax.f32 %v2407, 0.0
        %v2664 = vmax.f32 %v2408, 0.0
        %v2665 = vmax.f32 %v2409, 0.0
        %v2666 = vmax.f32 %v2410, 0.0
        %v2667 = vmax.f32 %v2411, 0.0
        %v2668 = vmax.f32 %v2412, 0.0
        %v2669 = vmax.f32 %v2413, 0.0
        %v2670 = vmax.f32 %v2414, 0.0
        %v2671 = vmax.f32 %v2415, 0.0
        %v2672 = vmax.f32 %v2416, 0.0
        %v2673 = vmax.f32 %v2417, 0.0
        %v2674 = vmax.f32 %v2418, 0.0
        %v2675 = vmax.f32 %v2419, 0.0
        %v2676 = vmax.f32 %v2420, 0.0
        %v2677 = vmax.f32 %v2421, 0.0
        %v2678 = vmax.f32 %v2422, 0.0
        %v2679 = vmax.f32 %v2423, 0.0
        %v2680 = vmax.f32 %v2424, 0.0
        %v2681 = vmax.f32 %v2425, 0.0
        %v2682 = vmax.f32 %v2426, 0.0
        %v2683 = vmax.f32 %v2427, 0.0
        %v2684 = vmax.f32 %v2428, 0.0
        %v2686 = vlaneseq
        %v2687 = vshrl.u32 %v2686, 7
        %v2688 = vsub.s32 0, %v2687
        %v2689 = vrot.slane %v393, %v2688
        %v2690 = vlaneseq
        %v2691 = vshrl.u32 %v2690, 7
        %v2692 = vsub.s32 1, %v2691
        %v2693 = vrot.slane %v393, %v2692
        %v2694 = vlaneseq
        %v2695 = vshrl.u32 %v2694, 7
        %v2696 = vsub.s32 2, %v2695
        %v2697 = vrot.slane %v393, %v2696
        %v2698 = vlaneseq
        %v2699 = vshrl.u32 %v2698, 7
        %v2700 = vsub.s32 3, %v2699
        %v2701 = vrot.slane %v393, %v2700
        %v2706 = vadd.f32 %v1781, %v2689
        %v2707 = vadd.f32 %v1783, %v2693
        %v2708 = vadd.f32 %v1974, %v2697
        %v2709 = vadd.f32 %v1976, %v2701
        %v2710 = vadd.f32 %v1785, %v2689
        %v2711 = vadd.f32 %v1787, %v2693
        %v2712 = vadd.f32 %v1978, %v2697
        %v2713 = vadd.f32 %v1980, %v2701
        %v2714 = vadd.f32 %v1791, %v2689
        %v2715 = vadd.f32 %v1793, %v2693
        %v2716 = vadd.f32 %v1984, %v2697
        %v2717 = vadd.f32 %v1986, %v2701
        %v2718 = vadd.f32 %v1795, %v2689
        %v2719 = vadd.f32 %v1797, %v2693
        %v2720 = vadd.f32 %v1988, %v2697
        %v2721 = vadd.f32 %v1990, %v2701
        %v2722 = vadd.f32 %v1801, %v2689
        %v2723 = vadd.f32 %v1803, %v2693
        %v2724 = vadd.f32 %v1994, %v2697
        %v2725 = vadd.f32 %v1996, %v2701
        %v2726 = vadd.f32 %v1805, %v2689
        %v2727 = vadd.f32 %v1807, %v2693
        %v2728 = vadd.f32 %v1998, %v2697
        %v2729 = vadd.f32 %v2000, %v2701
        %v2730 = vadd.f32 %v1811, %v2689
        %v2731 = vadd.f32 %v1813, %v2693
        %v2732 = vadd.f32 %v2004, %v2697
        %v2733 = vadd.f32 %v2006, %v2701
        %v2734 = vadd.f32 %v1815, %v2689
        %v2735 = vadd.f32 %v1817, %v2693
        %v2736 = vadd.f32 %v2008, %v2697
        %v2737 = vadd.f32 %v2010, %v2701
        %v2738 = vadd.f32 %v1821, %v2689
        %v2739 = vadd.f32 %v1823, %v2693
        %v2740 = vadd.f32 %v2014, %v2697
        %v2741 = vadd.f32 %v2016, %v2701
        %v2742 = vadd.f32 %v1825, %v2689
        %v2743 = vadd.f32 %v1827, %v2693
        %v2744 = vadd.f32 %v2018, %v2697
        %v2745 = vadd.f32 %v2020, %v2701
        %v2746 = vadd.f32 %v1831, %v2689
        %v2747 = vadd.f32 %v1833, %v2693
        %v2748 = vadd.f32 %v2024, %v2697
        %v2749 = vadd.f32 %v2026, %v2701
        %v2750 = vadd.f32 %v1835, %v2689
        %v2751 = vadd.f32 %v1837, %v2693
        %v2752 = vadd.f32 %v2028, %v2697
        %v2753 = vadd.f32 %v2030, %v2701
        %v2754 = vadd.f32 %v1841, %v2689
        %v2755 = vadd.f32 %v1843, %v2693
        %v2756 = vadd.f32 %v2034, %v2697
        %v2757 = vadd.f32 %v2036, %v2701
        %v2758 = vadd.f32 %v1845, %v2689
        %v2759 = vadd.f32 %v1847, %v2693
        %v2760 = vadd.f32 %v2038, %v2697
        %v2761 = vadd.f32 %v2040, %v2701
        %v2762 = vadd.f32 %v1851, %v2689
        %v2763 = vadd.f32 %v1853, %v2693
        %v2764 = vadd.f32 %v2044, %v2697
        %v2765 = vadd.f32 %v2046, %v2701
        %v2766 = vadd.f32 %v1855, %v2689
        %v2767 = vadd.f32 %v1857, %v2693
        %v2768 = vadd.f32 %v2048, %v2697
        %v2769 = vadd.f32 %v2050, %v2701
        %v2770 = vadd.f32 %v1861, %v2689
        %v2771 = vadd.f32 %v1863, %v2693
        %v2772 = vadd.f32 %v2054, %v2697
        %v2773 = vadd.f32 %v2056, %v2701
        %v2774 = vadd.f32 %v1865, %v2689
        %v2775 = vadd.f32 %v1867, %v2693
        %v2776 = vadd.f32 %v2058, %v2697
        %v2777 = vadd.f32 %v2060, %v2701
        %v2778 = vadd.f32 %v1871, %v2689
        %v2779 = vadd.f32 %v1873, %v2693
        %v2780 = vadd.f32 %v2064, %v2697
        %v2781 = vadd.f32 %v2066, %v2701
        %v2782 = vadd.f32 %v1875, %v2689
        %v2783 = vadd.f32 %v1877, %v2693
        %v2784 = vadd.f32 %v2068, %v2697
        %v2785 = vadd.f32 %v2070, %v2701
        %v2786 = vadd.f32 %v1881, %v2689
        %v2787 = vadd.f32 %v1883, %v2693
        %v2788 = vadd.f32 %v2074, %v2697
        %v2789 = vadd.f32 %v2076, %v2701
        %v2790 = vadd.f32 %v1885, %v2689
        %v2791 = vadd.f32 %v1887, %v2693
        %v2792 = vadd.f32 %v2078, %v2697
        %v2793 = vadd.f32 %v2080, %v2701
        %v2794 = vadd.f32 %v1891, %v2689
        %v2795 = vadd.f32 %v1893, %v2693
        %v2796 = vadd.f32 %v2084, %v2697
        %v2797 = vadd.f32 %v2086, %v2701
        %v2798 = vadd.f32 %v1895, %v2689
        %v2799 = vadd.f32 %v1897, %v2693
        %v2800 = vadd.f32 %v2088, %v2697
        %v2801 = vadd.f32 %v2090, %v2701
        %v2802 = vadd.f32 %v1901, %v2689
        %v2803 = vadd.f32 %v1903, %v2693
        %v2804 = vadd.f32 %v2094, %v2697
        %v2805 = vadd.f32 %v2096, %v2701
        %v2806 = vadd.f32 %v1905, %v2689
        %v2807 = vadd.f32 %v1907, %v2693
        %v2808 = vadd.f32 %v2098, %v2697
        %v2809 = vadd.f32 %v2100, %v2701
        %v2810 = vadd.f32 %v1911, %v2689
        %v2811 = vadd.f32 %v1913, %v2693
        %v2812 = vadd.f32 %v2104, %v2697
        %v2813 = vadd.f32 %v2106, %v2701
        %v2814 = vadd.f32 %v1915, %v2689
        %v2815 = vadd.f32 %v1917, %v2693
        %v2816 = vadd.f32 %v2108, %v2697
        %v2817 = vadd.f32 %v2110, %v2701
        %v2818 = vadd.f32 %v1921, %v2689
        %v2819 = vadd.f32 %v1923, %v2693
        %v2820 = vadd.f32 %v2114, %v2697
        %v2821 = vadd.f32 %v2116, %v2701
        %v2822 = vadd.f32 %v1925, %v2689
        %v2823 = vadd.f32 %v1927, %v2693
        %v2824 = vadd.f32 %v2118, %v2697
        %v2825 = vadd.f32 %v2120, %v2701
        %v2826 = vadd.f32 %v1931, %v2689
        %v2827 = vadd.f32 %v1933, %v2693
        %v2828 = vadd.f32 %v2124, %v2697
        %v2829 = vadd.f32 %v2126, %v2701
        %v2830 = vadd.f32 %v1935, %v2689
        %v2831 = vadd.f32 %v1937, %v2693
        %v2832 = vadd.f32 %v2128, %v2697
        %v2833 = vadd.f32 %v2130, %v2701
        %v2834 = vpack.c.bf16 %v2437, %v2429
        %v2835 = vpack.c.bf16 %v2438, %v2430
        %v2836 = vpack.c.bf16 %v2439, %v2431
        %v2837 = vpack.c.bf16 %v2440, %v2432
        %v2838 = vpack.c.bf16 %v2441, %v2433
        %v2839 = vpack.c.bf16 %v2442, %v2434
        %v2840 = vpack.c.bf16 %v2443, %v2435
        %v2841 = vpack.c.bf16 %v2444, %v2436
        %v2842 = vpack.c.bf16 %v2453, %v2445
        %v2843 = vpack.c.bf16 %v2454, %v2446
        %v2844 = vpack.c.bf16 %v2455, %v2447
        %v2845 = vpack.c.bf16 %v2456, %v2448
        %v2846 = vpack.c.bf16 %v2457, %v2449
        %v2847 = vpack.c.bf16 %v2458, %v2450
        %v2848 = vpack.c.bf16 %v2459, %v2451
        %v2849 = vpack.c.bf16 %v2460, %v2452
        %v2850 = vpack.c.bf16 %v2469, %v2461
        %v2851 = vpack.c.bf16 %v2470, %v2462
        %v2852 = vpack.c.bf16 %v2471, %v2463
        %v2853 = vpack.c.bf16 %v2472, %v2464
        %v2854 = vpack.c.bf16 %v2473, %v2465
        %v2855 = vpack.c.bf16 %v2474, %v2466
        %v2856 = vpack.c.bf16 %v2475, %v2467
        %v2857 = vpack.c.bf16 %v2476, %v2468
        %v2858 = vpack.c.bf16 %v2485, %v2477
        %v2859 = vpack.c.bf16 %v2486, %v2478
        %v2860 = vpack.c.bf16 %v2487, %v2479
        %v2861 = vpack.c.bf16 %v2488, %v2480
        %v2862 = vpack.c.bf16 %v2489, %v2481
        %v2863 = vpack.c.bf16 %v2490, %v2482
        %v2864 = vpack.c.bf16 %v2491, %v2483
        %v2865 = vpack.c.bf16 %v2492, %v2484
        %v2866 = vpack.c.bf16 %v2501, %v2493
        %v2867 = vpack.c.bf16 %v2502, %v2494
        %v2868 = vpack.c.bf16 %v2503, %v2495
        %v2869 = vpack.c.bf16 %v2504, %v2496
        %v2870 = vpack.c.bf16 %v2505, %v2497
        %v2871 = vpack.c.bf16 %v2506, %v2498
        %v2872 = vpack.c.bf16 %v2507, %v2499
        %v2873 = vpack.c.bf16 %v2508, %v2500
        %v2874 = vpack.c.bf16 %v2517, %v2509
        %v2875 = vpack.c.bf16 %v2518, %v2510
        %v2876 = vpack.c.bf16 %v2519, %v2511
        %v2877 = vpack.c.bf16 %v2520, %v2512
        %v2878 = vpack.c.bf16 %v2521, %v2513
        %v2879 = vpack.c.bf16 %v2522, %v2514
        %v2880 = vpack.c.bf16 %v2523, %v2515
        %v2881 = vpack.c.bf16 %v2524, %v2516
        %v2882 = vpack.c.bf16 %v2533, %v2525
        %v2883 = vpack.c.bf16 %v2534, %v2526
        %v2884 = vpack.c.bf16 %v2535, %v2527
        %v2885 = vpack.c.bf16 %v2536, %v2528
        %v2886 = vpack.c.bf16 %v2537, %v2529
        %v2887 = vpack.c.bf16 %v2538, %v2530
        %v2888 = vpack.c.bf16 %v2539, %v2531
        %v2889 = vpack.c.bf16 %v2540, %v2532
        %v2890 = vpack.c.bf16 %v2549, %v2541
        %v2891 = vpack.c.bf16 %v2550, %v2542
        %v2892 = vpack.c.bf16 %v2551, %v2543
        %v2893 = vpack.c.bf16 %v2552, %v2544
        %v2894 = vpack.c.bf16 %v2553, %v2545
        %v2895 = vpack.c.bf16 %v2554, %v2546
        %v2896 = vpack.c.bf16 %v2555, %v2547
        %v2897 = vpack.c.bf16 %v2556, %v2548
        %v2898 = vpack.c.bf16 %v2565, %v2557
        %v2899 = vpack.c.bf16 %v2566, %v2558
        %v2900 = vpack.c.bf16 %v2567, %v2559
        %v2901 = vpack.c.bf16 %v2568, %v2560
        %v2902 = vpack.c.bf16 %v2569, %v2561
        %v2903 = vpack.c.bf16 %v2570, %v2562
        %v2904 = vpack.c.bf16 %v2571, %v2563
        %v2905 = vpack.c.bf16 %v2572, %v2564
        %v2906 = vpack.c.bf16 %v2581, %v2573
        %v2907 = vpack.c.bf16 %v2582, %v2574
        %v2908 = vpack.c.bf16 %v2583, %v2575
        %v2909 = vpack.c.bf16 %v2584, %v2576
        %v2910 = vpack.c.bf16 %v2585, %v2577
        %v2911 = vpack.c.bf16 %v2586, %v2578
        %v2912 = vpack.c.bf16 %v2587, %v2579
        %v2913 = vpack.c.bf16 %v2588, %v2580
        %v2914 = vpack.c.bf16 %v2597, %v2589
        %v2915 = vpack.c.bf16 %v2598, %v2590
        %v2916 = vpack.c.bf16 %v2599, %v2591
        %v2917 = vpack.c.bf16 %v2600, %v2592
        %v2918 = vpack.c.bf16 %v2601, %v2593
        %v2919 = vpack.c.bf16 %v2602, %v2594
        %v2920 = vpack.c.bf16 %v2603, %v2595
        %v2921 = vpack.c.bf16 %v2604, %v2596
        %v2922 = vpack.c.bf16 %v2613, %v2605
        %v2923 = vpack.c.bf16 %v2614, %v2606
        %v2924 = vpack.c.bf16 %v2615, %v2607
        %v2925 = vpack.c.bf16 %v2616, %v2608
        %v2926 = vpack.c.bf16 %v2617, %v2609
        %v2927 = vpack.c.bf16 %v2618, %v2610
        %v2928 = vpack.c.bf16 %v2619, %v2611
        %v2929 = vpack.c.bf16 %v2620, %v2612
        %v2930 = vpack.c.bf16 %v2629, %v2621
        %v2931 = vpack.c.bf16 %v2630, %v2622
        %v2932 = vpack.c.bf16 %v2631, %v2623
        %v2933 = vpack.c.bf16 %v2632, %v2624
        %v2934 = vpack.c.bf16 %v2633, %v2625
        %v2935 = vpack.c.bf16 %v2634, %v2626
        %v2936 = vpack.c.bf16 %v2635, %v2627
        %v2937 = vpack.c.bf16 %v2636, %v2628
        %v2938 = vpack.c.bf16 %v2645, %v2637
        %v2939 = vpack.c.bf16 %v2646, %v2638
        %v2940 = vpack.c.bf16 %v2647, %v2639
        %v2941 = vpack.c.bf16 %v2648, %v2640
        %v2942 = vpack.c.bf16 %v2649, %v2641
        %v2943 = vpack.c.bf16 %v2650, %v2642
        %v2944 = vpack.c.bf16 %v2651, %v2643
        %v2945 = vpack.c.bf16 %v2652, %v2644
        %v2946 = vpack.c.bf16 %v2661, %v2653
        %v2947 = vpack.c.bf16 %v2662, %v2654
        %v2948 = vpack.c.bf16 %v2663, %v2655
        %v2949 = vpack.c.bf16 %v2664, %v2656
        %v2950 = vpack.c.bf16 %v2665, %v2657
        %v2951 = vpack.c.bf16 %v2666, %v2658
        %v2952 = vpack.c.bf16 %v2667, %v2659
        %v2953 = vpack.c.bf16 %v2668, %v2660
        %v2954 = vpack.c.bf16 %v2677, %v2669
        %v2955 = vpack.c.bf16 %v2678, %v2670
        %v2956 = vpack.c.bf16 %v2679, %v2671
        %v2957 = vpack.c.bf16 %v2680, %v2672
        %v2958 = vpack.c.bf16 %v2681, %v2673
        %v2959 = vpack.c.bf16 %v2682, %v2674
        %v2960 = vpack.c.bf16 %v2683, %v2675
        %v2961 = vpack.c.bf16 %v2684, %v2676
        %v2962 = vld [vmem:[#allocation7] sm:$0xff]
        %v2963 = vld [vmem:[#allocation7 + $0x8] sm:$0xff]
        %v2964 = vld [vmem:[#allocation7 + $0x10] sm:$0xff]
        %v2965 = vld [vmem:[#allocation7 + $0x18] sm:$0xff]
        %v2966 = vld [vmem:[#allocation7 + $0x20] sm:$0xff]
        %v2967 = vld [vmem:[#allocation7 + $0x28] sm:$0xff]
        %v2968 = vld [vmem:[#allocation7 + $0x30] sm:$0xff]
        %v2969 = vld [vmem:[#allocation7 + $0x38] sm:$0xff]
        %v2970 = vld [vmem:[#allocation7 + $0x40] sm:$0xff]
        %v2971 = vld [vmem:[#allocation7 + $0x48] sm:$0xff]
        %v2972 = vld [vmem:[#allocation7 + $0x50] sm:$0xff]
        %v2973 = vld [vmem:[#allocation7 + $0x58] sm:$0xff]
        %v2974 = vld [vmem:[#allocation7 + $0x60] sm:$0xff]
        %v2975 = vld [vmem:[#allocation7 + $0x68] sm:$0xff]
        %v2976 = vld [vmem:[#allocation7 + $0x70] sm:$0xff]
        %v2977 = vld [vmem:[#allocation7 + $0x78] sm:$0xff]
        %v2978 = vld [vmem:[#allocation7 + $0x80] sm:$0xff]
        %v2979 = vld [vmem:[#allocation7 + $0x88] sm:$0xff]
        %v2980 = vld [vmem:[#allocation7 + $0x90] sm:$0xff]
        %v2981 = vld [vmem:[#allocation7 + $0x98] sm:$0xff]
        %v2982 = vld [vmem:[#allocation7 + $0xa0] sm:$0xff]
        %v2983 = vld [vmem:[#allocation7 + $0xa8] sm:$0xff]
        %v2984 = vld [vmem:[#allocation7 + $0xb0] sm:$0xff]
        %v2985 = vld [vmem:[#allocation7 + $0xb8] sm:$0xff]
        %v2986 = vld [vmem:[#allocation7 + $0xc0] sm:$0xff]
        %v2987 = vld [vmem:[#allocation7 + $0xc8] sm:$0xff]
        %v2988 = vld [vmem:[#allocation7 + $0xd0] sm:$0xff]
        %v2989 = vld [vmem:[#allocation7 + $0xd8] sm:$0xff]
        %v2990 = vld [vmem:[#allocation7 + $0xe0] sm:$0xff]
        %v2991 = vld [vmem:[#allocation7 + $0xe8] sm:$0xff]
        %v2992 = vld [vmem:[#allocation7 + $0xf0] sm:$0xff]
        %v2993 = vld [vmem:[#allocation7 + $0xf8] sm:$0xff]
        %v2994 = vld [vmem:[#allocation7 + $0x100] sm:$0xff]
        %v2995 = vld [vmem:[#allocation7 + $0x108] sm:$0xff]
        %v2996 = vld [vmem:[#allocation7 + $0x110] sm:$0xff]
        %v2997 = vld [vmem:[#allocation7 + $0x118] sm:$0xff]
        %v2998 = vld [vmem:[#allocation7 + $0x120] sm:$0xff]
        %v2999 = vld [vmem:[#allocation7 + $0x128] sm:$0xff]
        %v3000 = vld [vmem:[#allocation7 + $0x130] sm:$0xff]
        %v3001 = vld [vmem:[#allocation7 + $0x138] sm:$0xff]
        %v3002 = vld [vmem:[#allocation7 + $0x140] sm:$0xff]
        %v3003 = vld [vmem:[#allocation7 + $0x148] sm:$0xff]
        %v3004 = vld [vmem:[#allocation7 + $0x150] sm:$0xff]
        %v3005 = vld [vmem:[#allocation7 + $0x158] sm:$0xff]
        %v3006 = vld [vmem:[#allocation7 + $0x160] sm:$0xff]
        %v3007 = vld [vmem:[#allocation7 + $0x168] sm:$0xff]
        %v3008 = vld [vmem:[#allocation7 + $0x170] sm:$0xff]
        %v3009 = vld [vmem:[#allocation7 + $0x178] sm:$0xff]
        %v3010 = vld [vmem:[#allocation7 + $0x180] sm:$0xff]
        %v3011 = vld [vmem:[#allocation7 + $0x188] sm:$0xff]
        %v3012 = vld [vmem:[#allocation7 + $0x190] sm:$0xff]
        %v3013 = vld [vmem:[#allocation7 + $0x198] sm:$0xff]
        %v3014 = vld [vmem:[#allocation7 + $0x1a0] sm:$0xff]
        %v3015 = vld [vmem:[#allocation7 + $0x1a8] sm:$0xff]
        %v3016 = vld [vmem:[#allocation7 + $0x1b0] sm:$0xff]
        %v3017 = vld [vmem:[#allocation7 + $0x1b8] sm:$0xff]
        %v3018 = vld [vmem:[#allocation7 + $0x1c0] sm:$0xff]
        %v3019 = vld [vmem:[#allocation7 + $0x1c8] sm:$0xff]
        %v3020 = vld [vmem:[#allocation7 + $0x1d0] sm:$0xff]
        %v3021 = vld [vmem:[#allocation7 + $0x1d8] sm:$0xff]
        %v3022 = vld [vmem:[#allocation7 + $0x1e0] sm:$0xff]
        %v3023 = vld [vmem:[#allocation7 + $0x1e8] sm:$0xff]
        %v3024 = vld [vmem:[#allocation7 + $0x1f0] sm:$0xff]
        %v3025 = vld [vmem:[#allocation7 + $0x1f8] sm:$0xff]
        %v3026 = vld [vmem:[#allocation7 + $0x200] sm:$0xff]
        %v3027 = vld [vmem:[#allocation7 + $0x208] sm:$0xff]
        %v3028 = vld [vmem:[#allocation7 + $0x210] sm:$0xff]
        %v3029 = vld [vmem:[#allocation7 + $0x218] sm:$0xff]
        %v3030 = vld [vmem:[#allocation7 + $0x220] sm:$0xff]
        %v3031 = vld [vmem:[#allocation7 + $0x228] sm:$0xff]
        %v3032 = vld [vmem:[#allocation7 + $0x230] sm:$0xff]
        %v3033 = vld [vmem:[#allocation7 + $0x238] sm:$0xff]
        %v3034 = vld [vmem:[#allocation7 + $0x240] sm:$0xff]
        %v3035 = vld [vmem:[#allocation7 + $0x248] sm:$0xff]
        %v3036 = vld [vmem:[#allocation7 + $0x250] sm:$0xff]
        %v3037 = vld [vmem:[#allocation7 + $0x258] sm:$0xff]
        %v3038 = vld [vmem:[#allocation7 + $0x260] sm:$0xff]
        %v3039 = vld [vmem:[#allocation7 + $0x268] sm:$0xff]
        %v3040 = vld [vmem:[#allocation7 + $0x270] sm:$0xff]
        %v3041 = vld [vmem:[#allocation7 + $0x278] sm:$0xff]
        %v3042 = vld [vmem:[#allocation7 + $0x280] sm:$0xff]
        %v3043 = vld [vmem:[#allocation7 + $0x288] sm:$0xff]
        %v3044 = vld [vmem:[#allocation7 + $0x290] sm:$0xff]
        %v3045 = vld [vmem:[#allocation7 + $0x298] sm:$0xff]
        %v3046 = vld [vmem:[#allocation7 + $0x2a0] sm:$0xff]
        %v3047 = vld [vmem:[#allocation7 + $0x2a8] sm:$0xff]
        %v3048 = vld [vmem:[#allocation7 + $0x2b0] sm:$0xff]
        %v3049 = vld [vmem:[#allocation7 + $0x2b8] sm:$0xff]
        %v3050 = vld [vmem:[#allocation7 + $0x2c0] sm:$0xff]
        %v3051 = vld [vmem:[#allocation7 + $0x2c8] sm:$0xff]
        %v3052 = vld [vmem:[#allocation7 + $0x2d0] sm:$0xff]
        %v3053 = vld [vmem:[#allocation7 + $0x2d8] sm:$0xff]
        %v3054 = vld [vmem:[#allocation7 + $0x2e0] sm:$0xff]
        %v3055 = vld [vmem:[#allocation7 + $0x2e8] sm:$0xff]
        %v3056 = vld [vmem:[#allocation7 + $0x2f0] sm:$0xff]
        %v3057 = vld [vmem:[#allocation7 + $0x2f8] sm:$0xff]
        %v3058 = vld [vmem:[#allocation7 + $0x300] sm:$0xff]
        %v3059 = vld [vmem:[#allocation7 + $0x308] sm:$0xff]
        %v3060 = vld [vmem:[#allocation7 + $0x310] sm:$0xff]
        %v3061 = vld [vmem:[#allocation7 + $0x318] sm:$0xff]
        %v3062 = vld [vmem:[#allocation7 + $0x320] sm:$0xff]
        %v3063 = vld [vmem:[#allocation7 + $0x328] sm:$0xff]
        %v3064 = vld [vmem:[#allocation7 + $0x330] sm:$0xff]
        %v3065 = vld [vmem:[#allocation7 + $0x338] sm:$0xff]
        %v3066 = vld [vmem:[#allocation7 + $0x340] sm:$0xff]
        %v3067 = vld [vmem:[#allocation7 + $0x348] sm:$0xff]
        %v3068 = vld [vmem:[#allocation7 + $0x350] sm:$0xff]
        %v3069 = vld [vmem:[#allocation7 + $0x358] sm:$0xff]
        %v3070 = vld [vmem:[#allocation7 + $0x360] sm:$0xff]
        %v3071 = vld [vmem:[#allocation7 + $0x368] sm:$0xff]
        %v3072 = vld [vmem:[#allocation7 + $0x370] sm:$0xff]
        %v3073 = vld [vmem:[#allocation7 + $0x378] sm:$0xff]
        %v3074 = vld [vmem:[#allocation7 + $0x380] sm:$0xff]
        %v3075 = vld [vmem:[#allocation7 + $0x388] sm:$0xff]
        %v3076 = vld [vmem:[#allocation7 + $0x390] sm:$0xff]
        %v3077 = vld [vmem:[#allocation7 + $0x398] sm:$0xff]
        %v3078 = vld [vmem:[#allocation7 + $0x3a0] sm:$0xff]
        %v3079 = vld [vmem:[#allocation7 + $0x3a8] sm:$0xff]
        %v3080 = vld [vmem:[#allocation7 + $0x3b0] sm:$0xff]
        %v3081 = vld [vmem:[#allocation7 + $0x3b8] sm:$0xff]
        %v3082 = vld [vmem:[#allocation7 + $0x3c0] sm:$0xff]
        %v3083 = vld [vmem:[#allocation7 + $0x3c8] sm:$0xff]
        %v3084 = vld [vmem:[#allocation7 + $0x3d0] sm:$0xff]
        %v3085 = vld [vmem:[#allocation7 + $0x3d8] sm:$0xff]
        %v3086 = vld [vmem:[#allocation7 + $0x3e0] sm:$0xff]
        %v3087 = vld [vmem:[#allocation7 + $0x3e8] sm:$0xff]
        %v3088 = vld [vmem:[#allocation7 + $0x3f0] sm:$0xff]
        %v3089 = vld [vmem:[#allocation7 + $0x3f8] sm:$0xff]
        %v3090 = vld [vmem:[#allocation7 + $0x400] sm:$0xff]
        %v3091 = vld [vmem:[#allocation7 + $0x408] sm:$0xff]
        %v3092 = vld [vmem:[#allocation7 + $0x410] sm:$0xff]
        %v3093 = vld [vmem:[#allocation7 + $0x418] sm:$0xff]
        %v3094 = vld [vmem:[#allocation7 + $0x420] sm:$0xff]
        %v3095 = vld [vmem:[#allocation7 + $0x428] sm:$0xff]
        %v3096 = vld [vmem:[#allocation7 + $0x430] sm:$0xff]
        %v3097 = vld [vmem:[#allocation7 + $0x438] sm:$0xff]
        %v3098 = vld [vmem:[#allocation7 + $0x440] sm:$0xff]
        %v3099 = vld [vmem:[#allocation7 + $0x448] sm:$0xff]
        %v3100 = vld [vmem:[#allocation7 + $0x450] sm:$0xff]
        %v3101 = vld [vmem:[#allocation7 + $0x458] sm:$0xff]
        %v3102 = vld [vmem:[#allocation7 + $0x460] sm:$0xff]
        %v3103 = vld [vmem:[#allocation7 + $0x468] sm:$0xff]
        %v3104 = vld [vmem:[#allocation7 + $0x470] sm:$0xff]
        %v3105 = vld [vmem:[#allocation7 + $0x478] sm:$0xff]
        %v3106 = vld [vmem:[#allocation7 + $0x480] sm:$0xff]
        %v3107 = vld [vmem:[#allocation7 + $0x488] sm:$0xff]
        %v3108 = vld [vmem:[#allocation7 + $0x490] sm:$0xff]
        %v3109 = vld [vmem:[#allocation7 + $0x498] sm:$0xff]
        %v3110 = vld [vmem:[#allocation7 + $0x4a0] sm:$0xff]
        %v3111 = vld [vmem:[#allocation7 + $0x4a8] sm:$0xff]
        %v3112 = vld [vmem:[#allocation7 + $0x4b0] sm:$0xff]
        %v3113 = vld [vmem:[#allocation7 + $0x4b8] sm:$0xff]
        %v3114 = vld [vmem:[#allocation7 + $0x4c0] sm:$0xff]
        %v3115 = vld [vmem:[#allocation7 + $0x4c8] sm:$0xff]
        %v3116 = vld [vmem:[#allocation7 + $0x4d0] sm:$0xff]
        %v3117 = vld [vmem:[#allocation7 + $0x4d8] sm:$0xff]
        %v3118 = vld [vmem:[#allocation7 + $0x4e0] sm:$0xff]
        %v3119 = vld [vmem:[#allocation7 + $0x4e8] sm:$0xff]
        %v3120 = vld [vmem:[#allocation7 + $0x4f0] sm:$0xff]
        %v3121 = vld [vmem:[#allocation7 + $0x4f8] sm:$0xff]
        %v3122 = vld [vmem:[#allocation7 + $0x500] sm:$0xff]
        %v3123 = vld [vmem:[#allocation7 + $0x508] sm:$0xff]
        %v3124 = vld [vmem:[#allocation7 + $0x510] sm:$0xff]
        %v3125 = vld [vmem:[#allocation7 + $0x518] sm:$0xff]
        %v3126 = vld [vmem:[#allocation7 + $0x520] sm:$0xff]
        %v3127 = vld [vmem:[#allocation7 + $0x528] sm:$0xff]
        %v3128 = vld [vmem:[#allocation7 + $0x530] sm:$0xff]
        %v3129 = vld [vmem:[#allocation7 + $0x538] sm:$0xff]
        %v3130 = vld [vmem:[#allocation7 + $0x540] sm:$0xff]
        %v3131 = vld [vmem:[#allocation7 + $0x548] sm:$0xff]
        %v3132 = vld [vmem:[#allocation7 + $0x550] sm:$0xff]
        %v3133 = vld [vmem:[#allocation7 + $0x558] sm:$0xff]
        %v3134 = vld [vmem:[#allocation7 + $0x560] sm:$0xff]
        %v3135 = vld [vmem:[#allocation7 + $0x568] sm:$0xff]
        %v3136 = vld [vmem:[#allocation7 + $0x570] sm:$0xff]
        %v3137 = vld [vmem:[#allocation7 + $0x578] sm:$0xff]
        %v3138 = vld [vmem:[#allocation7 + $0x580] sm:$0xff]
        %v3139 = vld [vmem:[#allocation7 + $0x588] sm:$0xff]
        %v3140 = vld [vmem:[#allocation7 + $0x590] sm:$0xff]
        %v3141 = vld [vmem:[#allocation7 + $0x598] sm:$0xff]
        %v3142 = vld [vmem:[#allocation7 + $0x5a0] sm:$0xff]
        %v3143 = vld [vmem:[#allocation7 + $0x5a8] sm:$0xff]
        %v3144 = vld [vmem:[#allocation7 + $0x5b0] sm:$0xff]
        %v3145 = vld [vmem:[#allocation7 + $0x5b8] sm:$0xff]
        %v3146 = vld [vmem:[#allocation7 + $0x5c0] sm:$0xff]
        %v3147 = vld [vmem:[#allocation7 + $0x5c8] sm:$0xff]
        %v3148 = vld [vmem:[#allocation7 + $0x5d0] sm:$0xff]
        %v3149 = vld [vmem:[#allocation7 + $0x5d8] sm:$0xff]
        %v3150 = vld [vmem:[#allocation7 + $0x5e0] sm:$0xff]
        %v3151 = vld [vmem:[#allocation7 + $0x5e8] sm:$0xff]
        %v3152 = vld [vmem:[#allocation7 + $0x5f0] sm:$0xff]
        %v3153 = vld [vmem:[#allocation7 + $0x5f8] sm:$0xff]
        %v3154 = vld [vmem:[#allocation7 + $0x600] sm:$0xff]
        %v3155 = vld [vmem:[#allocation7 + $0x608] sm:$0xff]
        %v3156 = vld [vmem:[#allocation7 + $0x610] sm:$0xff]
        %v3157 = vld [vmem:[#allocation7 + $0x618] sm:$0xff]
        %v3158 = vld [vmem:[#allocation7 + $0x620] sm:$0xff]
        %v3159 = vld [vmem:[#allocation7 + $0x628] sm:$0xff]
        %v3160 = vld [vmem:[#allocation7 + $0x630] sm:$0xff]
        %v3161 = vld [vmem:[#allocation7 + $0x638] sm:$0xff]
        %v3162 = vld [vmem:[#allocation7 + $0x640] sm:$0xff]
        %v3163 = vld [vmem:[#allocation7 + $0x648] sm:$0xff]
        %v3164 = vld [vmem:[#allocation7 + $0x650] sm:$0xff]
        %v3165 = vld [vmem:[#allocation7 + $0x658] sm:$0xff]
        %v3166 = vld [vmem:[#allocation7 + $0x660] sm:$0xff]
        %v3167 = vld [vmem:[#allocation7 + $0x668] sm:$0xff]
        %v3168 = vld [vmem:[#allocation7 + $0x670] sm:$0xff]
        %v3169 = vld [vmem:[#allocation7 + $0x678] sm:$0xff]
        %v3170 = vld [vmem:[#allocation7 + $0x680] sm:$0xff]
        %v3171 = vld [vmem:[#allocation7 + $0x688] sm:$0xff]
        %v3172 = vld [vmem:[#allocation7 + $0x690] sm:$0xff]
        %v3173 = vld [vmem:[#allocation7 + $0x698] sm:$0xff]
        %v3174 = vld [vmem:[#allocation7 + $0x6a0] sm:$0xff]
        %v3175 = vld [vmem:[#allocation7 + $0x6a8] sm:$0xff]
        %v3176 = vld [vmem:[#allocation7 + $0x6b0] sm:$0xff]
        %v3177 = vld [vmem:[#allocation7 + $0x6b8] sm:$0xff]
        %v3178 = vld [vmem:[#allocation7 + $0x6c0] sm:$0xff]
        %v3179 = vld [vmem:[#allocation7 + $0x6c8] sm:$0xff]
        %v3180 = vld [vmem:[#allocation7 + $0x6d0] sm:$0xff]
        %v3181 = vld [vmem:[#allocation7 + $0x6d8] sm:$0xff]
        %v3182 = vld [vmem:[#allocation7 + $0x6e0] sm:$0xff]
        %v3183 = vld [vmem:[#allocation7 + $0x6e8] sm:$0xff]
        %v3184 = vld [vmem:[#allocation7 + $0x6f0] sm:$0xff]
        %v3185 = vld [vmem:[#allocation7 + $0x6f8] sm:$0xff]
        %v3186 = vld [vmem:[#allocation7 + $0x700] sm:$0xff]
        %v3187 = vld [vmem:[#allocation7 + $0x708] sm:$0xff]
        %v3188 = vld [vmem:[#allocation7 + $0x710] sm:$0xff]
        %v3189 = vld [vmem:[#allocation7 + $0x718] sm:$0xff]
        %v3190 = vld [vmem:[#allocation7 + $0x720] sm:$0xff]
        %v3191 = vld [vmem:[#allocation7 + $0x728] sm:$0xff]
        %v3192 = vld [vmem:[#allocation7 + $0x730] sm:$0xff]
        %v3193 = vld [vmem:[#allocation7 + $0x738] sm:$0xff]
        %v3194 = vld [vmem:[#allocation7 + $0x740] sm:$0xff]
        %v3195 = vld [vmem:[#allocation7 + $0x748] sm:$0xff]
        %v3196 = vld [vmem:[#allocation7 + $0x750] sm:$0xff]
        %v3197 = vld [vmem:[#allocation7 + $0x758] sm:$0xff]
        %v3198 = vld [vmem:[#allocation7 + $0x760] sm:$0xff]
        %v3199 = vld [vmem:[#allocation7 + $0x768] sm:$0xff]
        %v3200 = vld [vmem:[#allocation7 + $0x770] sm:$0xff]
        %v3201 = vld [vmem:[#allocation7 + $0x778] sm:$0xff]
        %v3202 = vld [vmem:[#allocation7 + $0x780] sm:$0xff]
        %v3203 = vld [vmem:[#allocation7 + $0x788] sm:$0xff]
        %v3204 = vld [vmem:[#allocation7 + $0x790] sm:$0xff]
        %v3205 = vld [vmem:[#allocation7 + $0x798] sm:$0xff]
        %v3206 = vld [vmem:[#allocation7 + $0x7a0] sm:$0xff]
        %v3207 = vld [vmem:[#allocation7 + $0x7a8] sm:$0xff]
        %v3208 = vld [vmem:[#allocation7 + $0x7b0] sm:$0xff]
        %v3209 = vld [vmem:[#allocation7 + $0x7b8] sm:$0xff]
        %v3210 = vld [vmem:[#allocation7 + $0x7c0] sm:$0xff]
        %v3211 = vld [vmem:[#allocation7 + $0x7c8] sm:$0xff]
        %v3212 = vld [vmem:[#allocation7 + $0x7d0] sm:$0xff]
        %v3213 = vld [vmem:[#allocation7 + $0x7d8] sm:$0xff]
        %v3214 = vld [vmem:[#allocation7 + $0x7e0] sm:$0xff]
        %v3215 = vld [vmem:[#allocation7 + $0x7e8] sm:$0xff]
        %v3216 = vld [vmem:[#allocation7 + $0x7f0] sm:$0xff]
        %v3217 = vld [vmem:[#allocation7 + $0x7f8] sm:$0xff]
        %v3219 = vlaneseq
        %v3220 = vshrl.u32 %v3219, 7
        %v3221 = vsub.s32 0, %v3220
        %v3222 = vrot.slane %v394, %v3221
        %v3223 = vlaneseq
        %v3224 = vshrl.u32 %v3223, 7
        %v3225 = vsub.s32 1, %v3224
        %v3226 = vrot.slane %v394, %v3225
        %v3227 = vlaneseq
        %v3228 = vshrl.u32 %v3227, 7
        %v3229 = vsub.s32 2, %v3228
        %v3230 = vrot.slane %v394, %v3229
        %v3231 = vlaneseq
        %v3232 = vshrl.u32 %v3231, 7
        %v3233 = vsub.s32 3, %v3232
        %v3234 = vrot.slane %v394, %v3233
        %v3495 = vunpack.c.l.b16 %v2962
        %v3496 = vunpack.c.h.b16 %v2962
        %v3497 = vunpack.c.l.b16 %v2963
        %v3498 = vunpack.c.h.b16 %v2963
        %v3499 = vunpack.c.l.b16 %v2964
        %v3500 = vunpack.c.h.b16 %v2964
        %v3501 = vunpack.c.l.b16 %v2965
        %v3502 = vunpack.c.h.b16 %v2965
        %v3503 = vunpack.c.l.b16 %v2966
        %v3504 = vunpack.c.h.b16 %v2966
        %v3505 = vunpack.c.l.b16 %v2967
        %v3506 = vunpack.c.h.b16 %v2967
        %v3507 = vunpack.c.l.b16 %v2968
        %v3508 = vunpack.c.h.b16 %v2968
        %v3509 = vunpack.c.l.b16 %v2969
        %v3510 = vunpack.c.h.b16 %v2969
        %v3511 = vunpack.c.l.b16 %v2970
        %v3512 = vunpack.c.h.b16 %v2970
        %v3513 = vunpack.c.l.b16 %v2971
        %v3514 = vunpack.c.h.b16 %v2971
        %v3515 = vunpack.c.l.b16 %v2972
        %v3516 = vunpack.c.h.b16 %v2972
        %v3517 = vunpack.c.l.b16 %v2973
        %v3518 = vunpack.c.h.b16 %v2973
        %v3519 = vunpack.c.l.b16 %v2974
        %v3520 = vunpack.c.h.b16 %v2974
        %v3521 = vunpack.c.l.b16 %v2975
        %v3522 = vunpack.c.h.b16 %v2975
        %v3523 = vunpack.c.l.b16 %v2976
        %v3524 = vunpack.c.h.b16 %v2976
        %v3525 = vunpack.c.l.b16 %v2977
        %v3526 = vunpack.c.h.b16 %v2977
        %v3527 = vunpack.c.l.b16 %v2978
        %v3528 = vunpack.c.h.b16 %v2978
        %v3529 = vunpack.c.l.b16 %v2979
        %v3530 = vunpack.c.h.b16 %v2979
        %v3531 = vunpack.c.l.b16 %v2980
        %v3532 = vunpack.c.h.b16 %v2980
        %v3533 = vunpack.c.l.b16 %v2981
        %v3534 = vunpack.c.h.b16 %v2981
        %v3535 = vunpack.c.l.b16 %v2982
        %v3536 = vunpack.c.h.b16 %v2982
        %v3537 = vunpack.c.l.b16 %v2983
        %v3538 = vunpack.c.h.b16 %v2983
        %v3539 = vunpack.c.l.b16 %v2984
        %v3540 = vunpack.c.h.b16 %v2984
        %v3541 = vunpack.c.l.b16 %v2985
        %v3542 = vunpack.c.h.b16 %v2985
        %v3543 = vunpack.c.l.b16 %v2986
        %v3544 = vunpack.c.h.b16 %v2986
        %v3545 = vunpack.c.l.b16 %v2987
        %v3546 = vunpack.c.h.b16 %v2987
        %v3547 = vunpack.c.l.b16 %v2988
        %v3548 = vunpack.c.h.b16 %v2988
        %v3549 = vunpack.c.l.b16 %v2989
        %v3550 = vunpack.c.h.b16 %v2989
        %v3551 = vunpack.c.l.b16 %v2990
        %v3552 = vunpack.c.h.b16 %v2990
        %v3553 = vunpack.c.l.b16 %v2991
        %v3554 = vunpack.c.h.b16 %v2991
        %v3555 = vunpack.c.l.b16 %v2992
        %v3556 = vunpack.c.h.b16 %v2992
        %v3557 = vunpack.c.l.b16 %v2993
        %v3558 = vunpack.c.h.b16 %v2993
        %v3559 = vunpack.c.l.b16 %v2994
        %v3560 = vunpack.c.h.b16 %v2994
        %v3561 = vunpack.c.l.b16 %v2995
        %v3562 = vunpack.c.h.b16 %v2995
        %v3563 = vunpack.c.l.b16 %v2996
        %v3564 = vunpack.c.h.b16 %v2996
        %v3565 = vunpack.c.l.b16 %v2997
        %v3566 = vunpack.c.h.b16 %v2997
        %v3567 = vunpack.c.l.b16 %v2998
        %v3568 = vunpack.c.h.b16 %v2998
        %v3569 = vunpack.c.l.b16 %v2999
        %v3570 = vunpack.c.h.b16 %v2999
        %v3571 = vunpack.c.l.b16 %v3000
        %v3572 = vunpack.c.h.b16 %v3000
        %v3573 = vunpack.c.l.b16 %v3001
        %v3574 = vunpack.c.h.b16 %v3001
        %v3575 = vunpack.c.l.b16 %v3002
        %v3576 = vunpack.c.h.b16 %v3002
        %v3577 = vunpack.c.l.b16 %v3003
        %v3578 = vunpack.c.h.b16 %v3003
        %v3579 = vunpack.c.l.b16 %v3004
        %v3580 = vunpack.c.h.b16 %v3004
        %v3581 = vunpack.c.l.b16 %v3005
        %v3582 = vunpack.c.h.b16 %v3005
        %v3583 = vunpack.c.l.b16 %v3006
        %v3584 = vunpack.c.h.b16 %v3006
        %v3585 = vunpack.c.l.b16 %v3007
        %v3586 = vunpack.c.h.b16 %v3007
        %v3587 = vunpack.c.l.b16 %v3008
        %v3588 = vunpack.c.h.b16 %v3008
        %v3589 = vunpack.c.l.b16 %v3009
        %v3590 = vunpack.c.h.b16 %v3009
        %v3591 = vunpack.c.l.b16 %v3010
        %v3592 = vunpack.c.h.b16 %v3010
        %v3593 = vunpack.c.l.b16 %v3011
        %v3594 = vunpack.c.h.b16 %v3011
        %v3595 = vunpack.c.l.b16 %v3012
        %v3596 = vunpack.c.h.b16 %v3012
        %v3597 = vunpack.c.l.b16 %v3013
        %v3598 = vunpack.c.h.b16 %v3013
        %v3599 = vunpack.c.l.b16 %v3014
        %v3600 = vunpack.c.h.b16 %v3014
        %v3601 = vunpack.c.l.b16 %v3015
        %v3602 = vunpack.c.h.b16 %v3015
        %v3603 = vunpack.c.l.b16 %v3016
        %v3604 = vunpack.c.h.b16 %v3016
        %v3605 = vunpack.c.l.b16 %v3017
        %v3606 = vunpack.c.h.b16 %v3017
        %v3607 = vunpack.c.l.b16 %v3018
        %v3608 = vunpack.c.h.b16 %v3018
        %v3609 = vunpack.c.l.b16 %v3019
        %v3610 = vunpack.c.h.b16 %v3019
        %v3611 = vunpack.c.l.b16 %v3020
        %v3612 = vunpack.c.h.b16 %v3020
        %v3613 = vunpack.c.l.b16 %v3021
        %v3614 = vunpack.c.h.b16 %v3021
        %v3615 = vunpack.c.l.b16 %v3022
        %v3616 = vunpack.c.h.b16 %v3022
        %v3617 = vunpack.c.l.b16 %v3023
        %v3618 = vunpack.c.h.b16 %v3023
        %v3619 = vunpack.c.l.b16 %v3024
        %v3620 = vunpack.c.h.b16 %v3024
        %v3621 = vunpack.c.l.b16 %v3025
        %v3622 = vunpack.c.h.b16 %v3025
        %v3623 = vunpack.c.l.b16 %v3026
        %v3624 = vunpack.c.h.b16 %v3026
        %v3625 = vunpack.c.l.b16 %v3027
        %v3626 = vunpack.c.h.b16 %v3027
        %v3627 = vunpack.c.l.b16 %v3028
        %v3628 = vunpack.c.h.b16 %v3028
        %v3629 = vunpack.c.l.b16 %v3029
        %v3630 = vunpack.c.h.b16 %v3029
        %v3631 = vunpack.c.l.b16 %v3030
        %v3632 = vunpack.c.h.b16 %v3030
        %v3633 = vunpack.c.l.b16 %v3031
        %v3634 = vunpack.c.h.b16 %v3031
        %v3635 = vunpack.c.l.b16 %v3032
        %v3636 = vunpack.c.h.b16 %v3032
        %v3637 = vunpack.c.l.b16 %v3033
        %v3638 = vunpack.c.h.b16 %v3033
        %v3639 = vunpack.c.l.b16 %v3034
        %v3640 = vunpack.c.h.b16 %v3034
        %v3641 = vunpack.c.l.b16 %v3035
        %v3642 = vunpack.c.h.b16 %v3035
        %v3643 = vunpack.c.l.b16 %v3036
        %v3644 = vunpack.c.h.b16 %v3036
        %v3645 = vunpack.c.l.b16 %v3037
        %v3646 = vunpack.c.h.b16 %v3037
        %v3647 = vunpack.c.l.b16 %v3038
        %v3648 = vunpack.c.h.b16 %v3038
        %v3649 = vunpack.c.l.b16 %v3039
        %v3650 = vunpack.c.h.b16 %v3039
        %v3651 = vunpack.c.l.b16 %v3040
        %v3652 = vunpack.c.h.b16 %v3040
        %v3653 = vunpack.c.l.b16 %v3041
        %v3654 = vunpack.c.h.b16 %v3041
        %v3655 = vunpack.c.l.b16 %v3042
        %v3656 = vunpack.c.h.b16 %v3042
        %v3657 = vunpack.c.l.b16 %v3043
        %v3658 = vunpack.c.h.b16 %v3043
        %v3659 = vunpack.c.l.b16 %v3044
        %v3660 = vunpack.c.h.b16 %v3044
        %v3661 = vunpack.c.l.b16 %v3045
        %v3662 = vunpack.c.h.b16 %v3045
        %v3663 = vunpack.c.l.b16 %v3046
        %v3664 = vunpack.c.h.b16 %v3046
        %v3665 = vunpack.c.l.b16 %v3047
        %v3666 = vunpack.c.h.b16 %v3047
        %v3667 = vunpack.c.l.b16 %v3048
        %v3668 = vunpack.c.h.b16 %v3048
        %v3669 = vunpack.c.l.b16 %v3049
        %v3670 = vunpack.c.h.b16 %v3049
        %v3671 = vunpack.c.l.b16 %v3050
        %v3672 = vunpack.c.h.b16 %v3050
        %v3673 = vunpack.c.l.b16 %v3051
        %v3674 = vunpack.c.h.b16 %v3051
        %v3675 = vunpack.c.l.b16 %v3052
        %v3676 = vunpack.c.h.b16 %v3052
        %v3677 = vunpack.c.l.b16 %v3053
        %v3678 = vunpack.c.h.b16 %v3053
        %v3679 = vunpack.c.l.b16 %v3054
        %v3680 = vunpack.c.h.b16 %v3054
        %v3681 = vunpack.c.l.b16 %v3055
        %v3682 = vunpack.c.h.b16 %v3055
        %v3683 = vunpack.c.l.b16 %v3056
        %v3684 = vunpack.c.h.b16 %v3056
        %v3685 = vunpack.c.l.b16 %v3057
        %v3686 = vunpack.c.h.b16 %v3057
        %v3687 = vunpack.c.l.b16 %v3058
        %v3688 = vunpack.c.h.b16 %v3058
        %v3689 = vunpack.c.l.b16 %v3059
        %v3690 = vunpack.c.h.b16 %v3059
        %v3691 = vunpack.c.l.b16 %v3060
        %v3692 = vunpack.c.h.b16 %v3060
        %v3693 = vunpack.c.l.b16 %v3061
        %v3694 = vunpack.c.h.b16 %v3061
        %v3695 = vunpack.c.l.b16 %v3062
        %v3696 = vunpack.c.h.b16 %v3062
        %v3697 = vunpack.c.l.b16 %v3063
        %v3698 = vunpack.c.h.b16 %v3063
        %v3699 = vunpack.c.l.b16 %v3064
        %v3700 = vunpack.c.h.b16 %v3064
        %v3701 = vunpack.c.l.b16 %v3065
        %v3702 = vunpack.c.h.b16 %v3065
        %v3703 = vunpack.c.l.b16 %v3066
        %v3704 = vunpack.c.h.b16 %v3066
        %v3705 = vunpack.c.l.b16 %v3067
        %v3706 = vunpack.c.h.b16 %v3067
        %v3707 = vunpack.c.l.b16 %v3068
        %v3708 = vunpack.c.h.b16 %v3068
        %v3709 = vunpack.c.l.b16 %v3069
        %v3710 = vunpack.c.h.b16 %v3069
        %v3711 = vunpack.c.l.b16 %v3070
        %v3712 = vunpack.c.h.b16 %v3070
        %v3713 = vunpack.c.l.b16 %v3071
        %v3714 = vunpack.c.h.b16 %v3071
        %v3715 = vunpack.c.l.b16 %v3072
        %v3716 = vunpack.c.h.b16 %v3072
        %v3717 = vunpack.c.l.b16 %v3073
        %v3718 = vunpack.c.h.b16 %v3073
        %v3719 = vunpack.c.l.b16 %v3074
        %v3720 = vunpack.c.h.b16 %v3074
        %v3721 = vunpack.c.l.b16 %v3075
        %v3722 = vunpack.c.h.b16 %v3075
        %v3723 = vunpack.c.l.b16 %v3076
        %v3724 = vunpack.c.h.b16 %v3076
        %v3725 = vunpack.c.l.b16 %v3077
        %v3726 = vunpack.c.h.b16 %v3077
        %v3727 = vunpack.c.l.b16 %v3078
        %v3728 = vunpack.c.h.b16 %v3078
        %v3729 = vunpack.c.l.b16 %v3079
        %v3730 = vunpack.c.h.b16 %v3079
        %v3731 = vunpack.c.l.b16 %v3080
        %v3732 = vunpack.c.h.b16 %v3080
        %v3733 = vunpack.c.l.b16 %v3081
        %v3734 = vunpack.c.h.b16 %v3081
        %v3735 = vunpack.c.l.b16 %v3082
        %v3736 = vunpack.c.h.b16 %v3082
        %v3737 = vunpack.c.l.b16 %v3083
        %v3738 = vunpack.c.h.b16 %v3083
        %v3739 = vunpack.c.l.b16 %v3084
        %v3740 = vunpack.c.h.b16 %v3084
        %v3741 = vunpack.c.l.b16 %v3085
        %v3742 = vunpack.c.h.b16 %v3085
        %v3743 = vunpack.c.l.b16 %v3086
        %v3744 = vunpack.c.h.b16 %v3086
        %v3745 = vunpack.c.l.b16 %v3087
        %v3746 = vunpack.c.h.b16 %v3087
        %v3747 = vunpack.c.l.b16 %v3088
        %v3748 = vunpack.c.h.b16 %v3088
        %v3749 = vunpack.c.l.b16 %v3089
        %v3750 = vunpack.c.h.b16 %v3089
        %v3751 = vunpack.c.l.b16 %v3090
        %v3752 = vunpack.c.h.b16 %v3090
        %v3753 = vunpack.c.l.b16 %v3091
        %v3754 = vunpack.c.h.b16 %v3091
        %v3755 = vunpack.c.l.b16 %v3092
        %v3756 = vunpack.c.h.b16 %v3092
        %v3757 = vunpack.c.l.b16 %v3093
        %v3758 = vunpack.c.h.b16 %v3093
        %v3759 = vunpack.c.l.b16 %v3094
        %v3760 = vunpack.c.h.b16 %v3094
        %v3761 = vunpack.c.l.b16 %v3095
        %v3762 = vunpack.c.h.b16 %v3095
        %v3763 = vunpack.c.l.b16 %v3096
        %v3764 = vunpack.c.h.b16 %v3096
        %v3765 = vunpack.c.l.b16 %v3097
        %v3766 = vunpack.c.h.b16 %v3097
        %v3767 = vunpack.c.l.b16 %v3098
        %v3768 = vunpack.c.h.b16 %v3098
        %v3769 = vunpack.c.l.b16 %v3099
        %v3770 = vunpack.c.h.b16 %v3099
        %v3771 = vunpack.c.l.b16 %v3100
        %v3772 = vunpack.c.h.b16 %v3100
        %v3773 = vunpack.c.l.b16 %v3101
        %v3774 = vunpack.c.h.b16 %v3101
        %v3775 = vunpack.c.l.b16 %v3102
        %v3776 = vunpack.c.h.b16 %v3102
        %v3777 = vunpack.c.l.b16 %v3103
        %v3778 = vunpack.c.h.b16 %v3103
        %v3779 = vunpack.c.l.b16 %v3104
        %v3780 = vunpack.c.h.b16 %v3104
        %v3781 = vunpack.c.l.b16 %v3105
        %v3782 = vunpack.c.h.b16 %v3105
        %v3783 = vunpack.c.l.b16 %v3106
        %v3784 = vunpack.c.h.b16 %v3106
        %v3785 = vunpack.c.l.b16 %v3107
        %v3786 = vunpack.c.h.b16 %v3107
        %v3787 = vunpack.c.l.b16 %v3108
        %v3788 = vunpack.c.h.b16 %v3108
        %v3789 = vunpack.c.l.b16 %v3109
        %v3790 = vunpack.c.h.b16 %v3109
        %v3791 = vunpack.c.l.b16 %v3110
        %v3792 = vunpack.c.h.b16 %v3110
        %v3793 = vunpack.c.l.b16 %v3111
        %v3794 = vunpack.c.h.b16 %v3111
        %v3795 = vunpack.c.l.b16 %v3112
        %v3796 = vunpack.c.h.b16 %v3112
        %v3797 = vunpack.c.l.b16 %v3113
        %v3798 = vunpack.c.h.b16 %v3113
        %v3799 = vunpack.c.l.b16 %v3114
        %v3800 = vunpack.c.h.b16 %v3114
        %v3801 = vunpack.c.l.b16 %v3115
        %v3802 = vunpack.c.h.b16 %v3115
        %v3803 = vunpack.c.l.b16 %v3116
        %v3804 = vunpack.c.h.b16 %v3116
        %v3805 = vunpack.c.l.b16 %v3117
        %v3806 = vunpack.c.h.b16 %v3117
        %v3807 = vunpack.c.l.b16 %v3118
        %v3808 = vunpack.c.h.b16 %v3118
        %v3809 = vunpack.c.l.b16 %v3119
        %v3810 = vunpack.c.h.b16 %v3119
        %v3811 = vunpack.c.l.b16 %v3120
        %v3812 = vunpack.c.h.b16 %v3120
        %v3813 = vunpack.c.l.b16 %v3121
        %v3814 = vunpack.c.h.b16 %v3121
        %v3815 = vunpack.c.l.b16 %v3122
        %v3816 = vunpack.c.h.b16 %v3122
        %v3817 = vunpack.c.l.b16 %v3123
        %v3818 = vunpack.c.h.b16 %v3123
        %v3819 = vunpack.c.l.b16 %v3124
        %v3820 = vunpack.c.h.b16 %v3124
        %v3821 = vunpack.c.l.b16 %v3125
        %v3822 = vunpack.c.h.b16 %v3125
        %v3823 = vunpack.c.l.b16 %v3126
        %v3824 = vunpack.c.h.b16 %v3126
        %v3825 = vunpack.c.l.b16 %v3127
        %v3826 = vunpack.c.h.b16 %v3127
        %v3827 = vunpack.c.l.b16 %v3128
        %v3828 = vunpack.c.h.b16 %v3128
        %v3829 = vunpack.c.l.b16 %v3129
        %v3830 = vunpack.c.h.b16 %v3129
        %v3831 = vunpack.c.l.b16 %v3130
        %v3832 = vunpack.c.h.b16 %v3130
        %v3833 = vunpack.c.l.b16 %v3131
        %v3834 = vunpack.c.h.b16 %v3131
        %v3835 = vunpack.c.l.b16 %v3132
        %v3836 = vunpack.c.h.b16 %v3132
        %v3837 = vunpack.c.l.b16 %v3133
        %v3838 = vunpack.c.h.b16 %v3133
        %v3839 = vunpack.c.l.b16 %v3134
        %v3840 = vunpack.c.h.b16 %v3134
        %v3841 = vunpack.c.l.b16 %v3135
        %v3842 = vunpack.c.h.b16 %v3135
        %v3843 = vunpack.c.l.b16 %v3136
        %v3844 = vunpack.c.h.b16 %v3136
        %v3845 = vunpack.c.l.b16 %v3137
        %v3846 = vunpack.c.h.b16 %v3137
        %v3847 = vunpack.c.l.b16 %v3138
        %v3848 = vunpack.c.h.b16 %v3138
        %v3849 = vunpack.c.l.b16 %v3139
        %v3850 = vunpack.c.h.b16 %v3139
        %v3851 = vunpack.c.l.b16 %v3140
        %v3852 = vunpack.c.h.b16 %v3140
        %v3853 = vunpack.c.l.b16 %v3141
        %v3854 = vunpack.c.h.b16 %v3141
        %v3855 = vunpack.c.l.b16 %v3142
        %v3856 = vunpack.c.h.b16 %v3142
        %v3857 = vunpack.c.l.b16 %v3143
        %v3858 = vunpack.c.h.b16 %v3143
        %v3859 = vunpack.c.l.b16 %v3144
        %v3860 = vunpack.c.h.b16 %v3144
        %v3861 = vunpack.c.l.b16 %v3145
        %v3862 = vunpack.c.h.b16 %v3145
        %v3863 = vunpack.c.l.b16 %v3146
        %v3864 = vunpack.c.h.b16 %v3146
        %v3865 = vunpack.c.l.b16 %v3147
        %v3866 = vunpack.c.h.b16 %v3147
        %v3867 = vunpack.c.l.b16 %v3148
        %v3868 = vunpack.c.h.b16 %v3148
        %v3869 = vunpack.c.l.b16 %v3149
        %v3870 = vunpack.c.h.b16 %v3149
        %v3871 = vunpack.c.l.b16 %v3150
        %v3872 = vunpack.c.h.b16 %v3150
        %v3873 = vunpack.c.l.b16 %v3151
        %v3874 = vunpack.c.h.b16 %v3151
        %v3875 = vunpack.c.l.b16 %v3152
        %v3876 = vunpack.c.h.b16 %v3152
        %v3877 = vunpack.c.l.b16 %v3153
        %v3878 = vunpack.c.h.b16 %v3153
        %v3879 = vunpack.c.l.b16 %v3154
        %v3880 = vunpack.c.h.b16 %v3154
        %v3881 = vunpack.c.l.b16 %v3155
        %v3882 = vunpack.c.h.b16 %v3155
        %v3883 = vunpack.c.l.b16 %v3156
        %v3884 = vunpack.c.h.b16 %v3156
        %v3885 = vunpack.c.l.b16 %v3157
        %v3886 = vunpack.c.h.b16 %v3157
        %v3887 = vunpack.c.l.b16 %v3158
        %v3888 = vunpack.c.h.b16 %v3158
        %v3889 = vunpack.c.l.b16 %v3159
        %v3890 = vunpack.c.h.b16 %v3159
        %v3891 = vunpack.c.l.b16 %v3160
        %v3892 = vunpack.c.h.b16 %v3160
        %v3893 = vunpack.c.l.b16 %v3161
        %v3894 = vunpack.c.h.b16 %v3161
        %v3895 = vunpack.c.l.b16 %v3162
        %v3896 = vunpack.c.h.b16 %v3162
        %v3897 = vunpack.c.l.b16 %v3163
        %v3898 = vunpack.c.h.b16 %v3163
        %v3899 = vunpack.c.l.b16 %v3164
        %v3900 = vunpack.c.h.b16 %v3164
        %v3901 = vunpack.c.l.b16 %v3165
        %v3902 = vunpack.c.h.b16 %v3165
        %v3903 = vunpack.c.l.b16 %v3166
        %v3904 = vunpack.c.h.b16 %v3166
        %v3905 = vunpack.c.l.b16 %v3167
        %v3906 = vunpack.c.h.b16 %v3167
        %v3907 = vunpack.c.l.b16 %v3168
        %v3908 = vunpack.c.h.b16 %v3168
        %v3909 = vunpack.c.l.b16 %v3169
        %v3910 = vunpack.c.h.b16 %v3169
        %v3911 = vunpack.c.l.b16 %v3170
        %v3912 = vunpack.c.h.b16 %v3170
        %v3913 = vunpack.c.l.b16 %v3171
        %v3914 = vunpack.c.h.b16 %v3171
        %v3915 = vunpack.c.l.b16 %v3172
        %v3916 = vunpack.c.h.b16 %v3172
        %v3917 = vunpack.c.l.b16 %v3173
        %v3918 = vunpack.c.h.b16 %v3173
        %v3919 = vunpack.c.l.b16 %v3174
        %v3920 = vunpack.c.h.b16 %v3174
        %v3921 = vunpack.c.l.b16 %v3175
        %v3922 = vunpack.c.h.b16 %v3175
        %v3923 = vunpack.c.l.b16 %v3176
        %v3924 = vunpack.c.h.b16 %v3176
        %v3925 = vunpack.c.l.b16 %v3177
        %v3926 = vunpack.c.h.b16 %v3177
        %v3927 = vunpack.c.l.b16 %v3178
        %v3928 = vunpack.c.h.b16 %v3178
        %v3929 = vunpack.c.l.b16 %v3179
        %v3930 = vunpack.c.h.b16 %v3179
        %v3931 = vunpack.c.l.b16 %v3180
        %v3932 = vunpack.c.h.b16 %v3180
        %v3933 = vunpack.c.l.b16 %v3181
        %v3934 = vunpack.c.h.b16 %v3181
        %v3935 = vunpack.c.l.b16 %v3182
        %v3936 = vunpack.c.h.b16 %v3182
        %v3937 = vunpack.c.l.b16 %v3183
        %v3938 = vunpack.c.h.b16 %v3183
        %v3939 = vunpack.c.l.b16 %v3184
        %v3940 = vunpack.c.h.b16 %v3184
        %v3941 = vunpack.c.l.b16 %v3185
        %v3942 = vunpack.c.h.b16 %v3185
        %v3943 = vunpack.c.l.b16 %v3186
        %v3944 = vunpack.c.h.b16 %v3186
        %v3945 = vunpack.c.l.b16 %v3187
        %v3946 = vunpack.c.h.b16 %v3187
        %v3947 = vunpack.c.l.b16 %v3188
        %v3948 = vunpack.c.h.b16 %v3188
        %v3949 = vunpack.c.l.b16 %v3189
        %v3950 = vunpack.c.h.b16 %v3189
        %v3951 = vunpack.c.l.b16 %v3190
        %v3952 = vunpack.c.h.b16 %v3190
        %v3953 = vunpack.c.l.b16 %v3191
        %v3954 = vunpack.c.h.b16 %v3191
        %v3955 = vunpack.c.l.b16 %v3192
        %v3956 = vunpack.c.h.b16 %v3192
        %v3957 = vunpack.c.l.b16 %v3193
        %v3958 = vunpack.c.h.b16 %v3193
        %v3959 = vunpack.c.l.b16 %v3194
        %v3960 = vunpack.c.h.b16 %v3194
        %v3961 = vunpack.c.l.b16 %v3195
        %v3962 = vunpack.c.h.b16 %v3195
        %v3963 = vunpack.c.l.b16 %v3196
        %v3964 = vunpack.c.h.b16 %v3196
        %v3965 = vunpack.c.l.b16 %v3197
        %v3966 = vunpack.c.h.b16 %v3197
        %v3967 = vunpack.c.l.b16 %v3198
        %v3968 = vunpack.c.h.b16 %v3198
        %v3969 = vunpack.c.l.b16 %v3199
        %v3970 = vunpack.c.h.b16 %v3199
        %v3971 = vunpack.c.l.b16 %v3200
        %v3972 = vunpack.c.h.b16 %v3200
        %v3973 = vunpack.c.l.b16 %v3201
        %v3974 = vunpack.c.h.b16 %v3201
        %v3975 = vunpack.c.l.b16 %v3202
        %v3976 = vunpack.c.h.b16 %v3202
        %v3977 = vunpack.c.l.b16 %v3203
        %v3978 = vunpack.c.h.b16 %v3203
        %v3979 = vunpack.c.l.b16 %v3204
        %v3980 = vunpack.c.h.b16 %v3204
        %v3981 = vunpack.c.l.b16 %v3205
        %v3982 = vunpack.c.h.b16 %v3205
        %v3983 = vunpack.c.l.b16 %v3206
        %v3984 = vunpack.c.h.b16 %v3206
        %v3985 = vunpack.c.l.b16 %v3207
        %v3986 = vunpack.c.h.b16 %v3207
        %v3987 = vunpack.c.l.b16 %v3208
        %v3988 = vunpack.c.h.b16 %v3208
        %v3989 = vunpack.c.l.b16 %v3209
        %v3990 = vunpack.c.h.b16 %v3209
        %v3991 = vunpack.c.l.b16 %v3210
        %v3992 = vunpack.c.h.b16 %v3210
        %v3993 = vunpack.c.l.b16 %v3211
        %v3994 = vunpack.c.h.b16 %v3211
        %v3995 = vunpack.c.l.b16 %v3212
        %v3996 = vunpack.c.h.b16 %v3212
        %v3997 = vunpack.c.l.b16 %v3213
        %v3998 = vunpack.c.h.b16 %v3213
        %v3999 = vunpack.c.l.b16 %v3214
        %v4000 = vunpack.c.h.b16 %v3214
        %v4001 = vunpack.c.l.b16 %v3215
        %v4002 = vunpack.c.h.b16 %v3215
        %v4003 = vunpack.c.l.b16 %v3216
        %v4004 = vunpack.c.h.b16 %v3216
        %v4005 = vunpack.c.l.b16 %v3217
        %v4006 = vunpack.c.h.b16 %v3217
        %v4007 = vpack.c.b16 %v3499, %v3495
        %v4008 = vpack.c.b16 %v3500, %v3496
        %v4009 = vpack.c.b16 %v3501, %v3497
        %v4010 = vpack.c.b16 %v3502, %v3498
        %v4011 = vpack.c.b16 %v3507, %v3503
        %v4012 = vpack.c.b16 %v3508, %v3504
        %v4013 = vpack.c.b16 %v3509, %v3505
        %v4014 = vpack.c.b16 %v3510, %v3506
        %v4015 = vpack.c.b16 %v3515, %v3511
        %v4016 = vpack.c.b16 %v3516, %v3512
        %v4017 = vpack.c.b16 %v3517, %v3513
        %v4018 = vpack.c.b16 %v3518, %v3514
        %v4019 = vpack.c.b16 %v3523, %v3519
        %v4020 = vpack.c.b16 %v3524, %v3520
        %v4021 = vpack.c.b16 %v3525, %v3521
        %v4022 = vpack.c.b16 %v3526, %v3522
        %v4023 = vpack.c.b16 %v3531, %v3527
        %v4024 = vpack.c.b16 %v3532, %v3528
        %v4025 = vpack.c.b16 %v3533, %v3529
        %v4026 = vpack.c.b16 %v3534, %v3530
        %v4027 = vpack.c.b16 %v3539, %v3535
        %v4028 = vpack.c.b16 %v3540, %v3536
        %v4029 = vpack.c.b16 %v3541, %v3537
        %v4030 = vpack.c.b16 %v3542, %v3538
        %v4031 = vpack.c.b16 %v3547, %v3543
        %v4032 = vpack.c.b16 %v3548, %v3544
        %v4033 = vpack.c.b16 %v3549, %v3545
        %v4034 = vpack.c.b16 %v3550, %v3546
        %v4035 = vpack.c.b16 %v3555, %v3551
        %v4036 = vpack.c.b16 %v3556, %v3552
        %v4037 = vpack.c.b16 %v3557, %v3553
        %v4038 = vpack.c.b16 %v3558, %v3554
        %v4039 = vpack.c.b16 %v3563, %v3559
        %v4040 = vpack.c.b16 %v3564, %v3560
        %v4041 = vpack.c.b16 %v3565, %v3561
        %v4042 = vpack.c.b16 %v3566, %v3562
        %v4043 = vpack.c.b16 %v3571, %v3567
        %v4044 = vpack.c.b16 %v3572, %v3568
        %v4045 = vpack.c.b16 %v3573, %v3569
        %v4046 = vpack.c.b16 %v3574, %v3570
        %v4047 = vpack.c.b16 %v3579, %v3575
        %v4048 = vpack.c.b16 %v3580, %v3576
        %v4049 = vpack.c.b16 %v3581, %v3577
        %v4050 = vpack.c.b16 %v3582, %v3578
        %v4051 = vpack.c.b16 %v3587, %v3583
        %v4052 = vpack.c.b16 %v3588, %v3584
        %v4053 = vpack.c.b16 %v3589, %v3585
        %v4054 = vpack.c.b16 %v3590, %v3586
        %v4055 = vpack.c.b16 %v3595, %v3591
        %v4056 = vpack.c.b16 %v3596, %v3592
        %v4057 = vpack.c.b16 %v3597, %v3593
        %v4058 = vpack.c.b16 %v3598, %v3594
        %v4059 = vpack.c.b16 %v3603, %v3599
        %v4060 = vpack.c.b16 %v3604, %v3600
        %v4061 = vpack.c.b16 %v3605, %v3601
        %v4062 = vpack.c.b16 %v3606, %v3602
        %v4063 = vpack.c.b16 %v3611, %v3607
        %v4064 = vpack.c.b16 %v3612, %v3608
        %v4065 = vpack.c.b16 %v3613, %v3609
        %v4066 = vpack.c.b16 %v3614, %v3610
        %v4067 = vpack.c.b16 %v3619, %v3615
        %v4068 = vpack.c.b16 %v3620, %v3616
        %v4069 = vpack.c.b16 %v3621, %v3617
        %v4070 = vpack.c.b16 %v3622, %v3618
        %v4071 = vpack.c.b16 %v3627, %v3623
        %v4072 = vpack.c.b16 %v3628, %v3624
        %v4073 = vpack.c.b16 %v3629, %v3625
        %v4074 = vpack.c.b16 %v3630, %v3626
        %v4075 = vpack.c.b16 %v3635, %v3631
        %v4076 = vpack.c.b16 %v3636, %v3632
        %v4077 = vpack.c.b16 %v3637, %v3633
        %v4078 = vpack.c.b16 %v3638, %v3634
        %v4079 = vpack.c.b16 %v3643, %v3639
        %v4080 = vpack.c.b16 %v3644, %v3640
        %v4081 = vpack.c.b16 %v3645, %v3641
        %v4082 = vpack.c.b16 %v3646, %v3642
        %v4083 = vpack.c.b16 %v3651, %v3647
        %v4084 = vpack.c.b16 %v3652, %v3648
        %v4085 = vpack.c.b16 %v3653, %v3649
        %v4086 = vpack.c.b16 %v3654, %v3650
        %v4087 = vpack.c.b16 %v3659, %v3655
        %v4088 = vpack.c.b16 %v3660, %v3656
        %v4089 = vpack.c.b16 %v3661, %v3657
        %v4090 = vpack.c.b16 %v3662, %v3658
        %v4091 = vpack.c.b16 %v3667, %v3663
        %v4092 = vpack.c.b16 %v3668, %v3664
        %v4093 = vpack.c.b16 %v3669, %v3665
        %v4094 = vpack.c.b16 %v3670, %v3666
        %v4095 = vpack.c.b16 %v3675, %v3671
        %v4096 = vpack.c.b16 %v3676, %v3672
        %v4097 = vpack.c.b16 %v3677, %v3673
        %v4098 = vpack.c.b16 %v3678, %v3674
        %v4099 = vpack.c.b16 %v3683, %v3679
        %v4100 = vpack.c.b16 %v3684, %v3680
        %v4101 = vpack.c.b16 %v3685, %v3681
        %v4102 = vpack.c.b16 %v3686, %v3682
        %v4103 = vpack.c.b16 %v3691, %v3687
        %v4104 = vpack.c.b16 %v3692, %v3688
        %v4105 = vpack.c.b16 %v3693, %v3689
        %v4106 = vpack.c.b16 %v3694, %v3690
        %v4107 = vpack.c.b16 %v3699, %v3695
        %v4108 = vpack.c.b16 %v3700, %v3696
        %v4109 = vpack.c.b16 %v3701, %v3697
        %v4110 = vpack.c.b16 %v3702, %v3698
        %v4111 = vpack.c.b16 %v3707, %v3703
        %v4112 = vpack.c.b16 %v3708, %v3704
        %v4113 = vpack.c.b16 %v3709, %v3705
        %v4114 = vpack.c.b16 %v3710, %v3706
        %v4115 = vpack.c.b16 %v3715, %v3711
        %v4116 = vpack.c.b16 %v3716, %v3712
        %v4117 = vpack.c.b16 %v3717, %v3713
        %v4118 = vpack.c.b16 %v3718, %v3714
        %v4119 = vpack.c.b16 %v3723, %v3719
        %v4120 = vpack.c.b16 %v3724, %v3720
        %v4121 = vpack.c.b16 %v3725, %v3721
        %v4122 = vpack.c.b16 %v3726, %v3722
        %v4123 = vpack.c.b16 %v3731, %v3727
        %v4124 = vpack.c.b16 %v3732, %v3728
        %v4125 = vpack.c.b16 %v3733, %v3729
        %v4126 = vpack.c.b16 %v3734, %v3730
        %v4127 = vpack.c.b16 %v3739, %v3735
        %v4128 = vpack.c.b16 %v3740, %v3736
        %v4129 = vpack.c.b16 %v3741, %v3737
        %v4130 = vpack.c.b16 %v3742, %v3738
        %v4131 = vpack.c.b16 %v3747, %v3743
        %v4132 = vpack.c.b16 %v3748, %v3744
        %v4133 = vpack.c.b16 %v3749, %v3745
        %v4134 = vpack.c.b16 %v3750, %v3746
        %v4135 = vpack.c.b16 %v3755, %v3751
        %v4136 = vpack.c.b16 %v3756, %v3752
        %v4137 = vpack.c.b16 %v3757, %v3753
        %v4138 = vpack.c.b16 %v3758, %v3754
        %v4139 = vpack.c.b16 %v3763, %v3759
        %v4140 = vpack.c.b16 %v3764, %v3760
        %v4141 = vpack.c.b16 %v3765, %v3761
        %v4142 = vpack.c.b16 %v3766, %v3762
        %v4143 = vpack.c.b16 %v3771, %v3767
        %v4144 = vpack.c.b16 %v3772, %v3768
        %v4145 = vpack.c.b16 %v3773, %v3769
        %v4146 = vpack.c.b16 %v3774, %v3770
        %v4147 = vpack.c.b16 %v3779, %v3775
        %v4148 = vpack.c.b16 %v3780, %v3776
        %v4149 = vpack.c.b16 %v3781, %v3777
        %v4150 = vpack.c.b16 %v3782, %v3778
        %v4151 = vpack.c.b16 %v3787, %v3783
        %v4152 = vpack.c.b16 %v3788, %v3784
        %v4153 = vpack.c.b16 %v3789, %v3785
        %v4154 = vpack.c.b16 %v3790, %v3786
        %v4155 = vpack.c.b16 %v3795, %v3791
        %v4156 = vpack.c.b16 %v3796, %v3792
        %v4157 = vpack.c.b16 %v3797, %v3793
        %v4158 = vpack.c.b16 %v3798, %v3794
        %v4159 = vpack.c.b16 %v3803, %v3799
        %v4160 = vpack.c.b16 %v3804, %v3800
        %v4161 = vpack.c.b16 %v3805, %v3801
        %v4162 = vpack.c.b16 %v3806, %v3802
        %v4163 = vpack.c.b16 %v3811, %v3807
        %v4164 = vpack.c.b16 %v3812, %v3808
        %v4165 = vpack.c.b16 %v3813, %v3809
        %v4166 = vpack.c.b16 %v3814, %v3810
        %v4167 = vpack.c.b16 %v3819, %v3815
        %v4168 = vpack.c.b16 %v3820, %v3816
        %v4169 = vpack.c.b16 %v3821, %v3817
        %v4170 = vpack.c.b16 %v3822, %v3818
        %v4171 = vpack.c.b16 %v3827, %v3823
        %v4172 = vpack.c.b16 %v3828, %v3824
        %v4173 = vpack.c.b16 %v3829, %v3825
        %v4174 = vpack.c.b16 %v3830, %v3826
        %v4175 = vpack.c.b16 %v3835, %v3831
        %v4176 = vpack.c.b16 %v3836, %v3832
        %v4177 = vpack.c.b16 %v3837, %v3833
        %v4178 = vpack.c.b16 %v3838, %v3834
        %v4179 = vpack.c.b16 %v3843, %v3839
        %v4180 = vpack.c.b16 %v3844, %v3840
        %v4181 = vpack.c.b16 %v3845, %v3841
        %v4182 = vpack.c.b16 %v3846, %v3842
        %v4183 = vpack.c.b16 %v3851, %v3847
        %v4184 = vpack.c.b16 %v3852, %v3848
        %v4185 = vpack.c.b16 %v3853, %v3849
        %v4186 = vpack.c.b16 %v3854, %v3850
        %v4187 = vpack.c.b16 %v3859, %v3855
        %v4188 = vpack.c.b16 %v3860, %v3856
        %v4189 = vpack.c.b16 %v3861, %v3857
        %v4190 = vpack.c.b16 %v3862, %v3858
        %v4191 = vpack.c.b16 %v3867, %v3863
        %v4192 = vpack.c.b16 %v3868, %v3864
        %v4193 = vpack.c.b16 %v3869, %v3865
        %v4194 = vpack.c.b16 %v3870, %v3866
        %v4195 = vpack.c.b16 %v3875, %v3871
        %v4196 = vpack.c.b16 %v3876, %v3872
        %v4197 = vpack.c.b16 %v3877, %v3873
        %v4198 = vpack.c.b16 %v3878, %v3874
        %v4199 = vpack.c.b16 %v3883, %v3879
        %v4200 = vpack.c.b16 %v3884, %v3880
        %v4201 = vpack.c.b16 %v3885, %v3881
        %v4202 = vpack.c.b16 %v3886, %v3882
        %v4203 = vpack.c.b16 %v3891, %v3887
        %v4204 = vpack.c.b16 %v3892, %v3888
        %v4205 = vpack.c.b16 %v3893, %v3889
        %v4206 = vpack.c.b16 %v3894, %v3890
        %v4207 = vpack.c.b16 %v3899, %v3895
        %v4208 = vpack.c.b16 %v3900, %v3896
        %v4209 = vpack.c.b16 %v3901, %v3897
        %v4210 = vpack.c.b16 %v3902, %v3898
        %v4211 = vpack.c.b16 %v3907, %v3903
        %v4212 = vpack.c.b16 %v3908, %v3904
        %v4213 = vpack.c.b16 %v3909, %v3905
        %v4214 = vpack.c.b16 %v3910, %v3906
        %v4215 = vpack.c.b16 %v3915, %v3911
        %v4216 = vpack.c.b16 %v3916, %v3912
        %v4217 = vpack.c.b16 %v3917, %v3913
        %v4218 = vpack.c.b16 %v3918, %v3914
        %v4219 = vpack.c.b16 %v3923, %v3919
        %v4220 = vpack.c.b16 %v3924, %v3920
        %v4221 = vpack.c.b16 %v3925, %v3921
        %v4222 = vpack.c.b16 %v3926, %v3922
        %v4223 = vpack.c.b16 %v3931, %v3927
        %v4224 = vpack.c.b16 %v3932, %v3928
        %v4225 = vpack.c.b16 %v3933, %v3929
        %v4226 = vpack.c.b16 %v3934, %v3930
        %v4227 = vpack.c.b16 %v3939, %v3935
        %v4228 = vpack.c.b16 %v3940, %v3936
        %v4229 = vpack.c.b16 %v3941, %v3937
        %v4230 = vpack.c.b16 %v3942, %v3938
        %v4231 = vpack.c.b16 %v3947, %v3943
        %v4232 = vpack.c.b16 %v3948, %v3944
        %v4233 = vpack.c.b16 %v3949, %v3945
        %v4234 = vpack.c.b16 %v3950, %v3946
        %v4235 = vpack.c.b16 %v3955, %v3951
        %v4236 = vpack.c.b16 %v3956, %v3952
        %v4237 = vpack.c.b16 %v3957, %v3953
        %v4238 = vpack.c.b16 %v3958, %v3954
        %v4239 = vpack.c.b16 %v3963, %v3959
        %v4240 = vpack.c.b16 %v3964, %v3960
        %v4241 = vpack.c.b16 %v3965, %v3961
        %v4242 = vpack.c.b16 %v3966, %v3962
        %v4243 = vpack.c.b16 %v3971, %v3967
        %v4244 = vpack.c.b16 %v3972, %v3968
        %v4245 = vpack.c.b16 %v3973, %v3969
        %v4246 = vpack.c.b16 %v3974, %v3970
        %v4247 = vpack.c.b16 %v3979, %v3975
        %v4248 = vpack.c.b16 %v3980, %v3976
        %v4249 = vpack.c.b16 %v3981, %v3977
        %v4250 = vpack.c.b16 %v3982, %v3978
        %v4251 = vpack.c.b16 %v3987, %v3983
        %v4252 = vpack.c.b16 %v3988, %v3984
        %v4253 = vpack.c.b16 %v3989, %v3985
        %v4254 = vpack.c.b16 %v3990, %v3986
        %v4255 = vpack.c.b16 %v3995, %v3991
        %v4256 = vpack.c.b16 %v3996, %v3992
        %v4257 = vpack.c.b16 %v3997, %v3993
        %v4258 = vpack.c.b16 %v3998, %v3994
        %v4259 = vpack.c.b16 %v4003, %v3999
        %v4260 = vpack.c.b16 %v4004, %v4000
        %v4261 = vpack.c.b16 %v4005, %v4001
        %v4262 = vpack.c.b16 %v4006, %v4002
        %4519 = vmatprep.subr.bf16.mxu0 %v4008
        %4520 = vmatpush1.bf16.msra.mxu0 %v4007
        %4521 = vmatprep.subr.bf16.mxu0 %v4012
        %4522 = vmatpush1.bf16.msra.mxu0 %v4011
        %4523 = vmatprep.subr.bf16.mxu0 %v4016
        %4524 = vmatpush1.bf16.msra.mxu0 %v4015
        %4525 = vmatprep.subr.bf16.mxu0 %v4020
        %4526 = vmatpush1.bf16.msra.mxu0 %v4019
        %4527 = vmatprep.subr.bf16.mxu0 %v4024
        %4528 = vmatpush1.bf16.msra.mxu0 %v4023
        %4529 = vmatprep.subr.bf16.mxu0 %v4028
        %4530 = vmatpush1.bf16.msra.mxu0 %v4027
        %4531 = vmatprep.subr.bf16.mxu0 %v4032
        %4532 = vmatpush1.bf16.msra.mxu0 %v4031
        %4533 = vmatprep.subr.bf16.mxu0 %v4036
        %4534 = vmatpush1.bf16.msra.mxu0 %v4035
        %4535 = vmatprep.subr.bf16.mxu0 %v4040
        %4536 = vmatpush1.bf16.msra.mxu0 %v4039
        %4537 = vmatprep.subr.bf16.mxu0 %v4044
        %4538 = vmatpush1.bf16.msra.mxu0 %v4043
        %4539 = vmatprep.subr.bf16.mxu0 %v4048
        %4540 = vmatpush1.bf16.msra.mxu0 %v4047
        %4541 = vmatprep.subr.bf16.mxu0 %v4052
        %4542 = vmatpush1.bf16.msra.mxu0 %v4051
        %4543 = vmatprep.subr.bf16.mxu0 %v4056
        %4544 = vmatpush1.bf16.msra.mxu0 %v4055
        %4545 = vmatprep.subr.bf16.mxu0 %v4060
        %4546 = vmatpush1.bf16.msra.mxu0 %v4059
        %4547 = vmatprep.subr.bf16.mxu0 %v4064
        %4548 = vmatpush1.bf16.msra.mxu0 %v4063
        %4549 = vmatprep.subr.bf16.mxu0 %v4068
        %4550 = vmatpush1.bf16.msra.mxu0 %v4067
        %4551 = vmatprep.mubr.bf16.mxu0 %v2835
        %4552 = vmatmul.mubr.bf16.gmra.mrb[0].mxu0 %v2834
        %v4553 = vpop.f32.mrb[0].mxu0
        %v4554 = vadd.f32 %v3222, %v4553
        %v4555 = vpop.f32.mrb[0].mxu0
        %v4556 = vadd.f32 %v3226, %v4555
        %v4557 = vpop.f32.mrb[0].mxu0
        %v4558 = vadd.f32 %v3222, %v4557
        %v4559 = vpop.f32.mrb[0].mxu0
        %v4560 = vadd.f32 %v3226, %v4559
        %4561 = vmatprep.mubr.bf16.mxu0 %v2843
        %4562 = vmatmul.mubr.bf16.gmra.mrb[0].mxu0 %v2842
        %v4563 = vpop.f32.mrb[0].mxu0
        %v4564 = vadd.f32 %v3222, %v4563
        %v4565 = vpop.f32.mrb[0].mxu0
        %v4566 = vadd.f32 %v3226, %v4565
        %v4567 = vpop.f32.mrb[0].mxu0
        %v4568 = vadd.f32 %v3222, %v4567
        %v4569 = vpop.f32.mrb[0].mxu0
        %v4570 = vadd.f32 %v3226, %v4569
        %4571 = vmatprep.mubr.bf16.mxu0 %v2851
        %4572 = vmatmul.mubr.bf16.gmra.mrb[0].mxu0 %v2850
        %v4573 = vpop.f32.mrb[0].mxu0
        %v4574 = vadd.f32 %v3222, %v4573
        %v4575 = vpop.f32.mrb[0].mxu0
        %v4576 = vadd.f32 %v3226, %v4575
        %v4577 = vpop.f32.mrb[0].mxu0
        %v4578 = vadd.f32 %v3222, %v4577
        %v4579 = vpop.f32.mrb[0].mxu0
        %v4580 = vadd.f32 %v3226, %v4579
        %4581 = vmatprep.mubr.bf16.mxu0 %v2859
        %4582 = vmatmul.mubr.bf16.gmra.mrb[0].mxu0 %v2858
        %v4583 = vpop.f32.mrb[0].mxu0
        %v4584 = vadd.f32 %v3222, %v4583
        %v4585 = vpop.f32.mrb[0].mxu0
        %v4586 = vadd.f32 %v3226, %v4585
        %v4587 = vpop.f32.mrb[0].mxu0
        %v4588 = vadd.f32 %v3222, %v4587
        %v4589 = vpop.f32.mrb[0].mxu0
        %v4590 = vadd.f32 %v3226, %v4589
        %4591 = vmatprep.mubr.bf16.mxu0 %v2867
        %4592 = vmatmul.mubr.bf16.gmra.mrb[0].mxu0 %v2866
        %v4593 = vpop.f32.mrb[0].mxu0
        %v4594 = vadd.f32 %v3222, %v4593
        %v4595 = vpop.f32.mrb[0].mxu0
        %v4596 = vadd.f32 %v3226, %v4595
        %v4597 = vpop.f32.mrb[0].mxu0
        %v4598 = vadd.f32 %v3222, %v4597
        %v4599 = vpop.f32.mrb[0].mxu0
        %v4600 = vadd.f32 %v3226, %v4599
        %4601 = vmatprep.mubr.bf16.mxu0 %v2875
        %4602 = vmatmul.mubr.bf16.gmra.mrb[0].mxu0 %v2874
        %v4603 = vpop.f32.mrb[0].mxu0
        %v4604 = vadd.f32 %v3222, %v4603
        %v4605 = vpop.f32.mrb[0].mxu0
        %v4606 = vadd.f32 %v3226, %v4605
        %v4607 = vpop.f32.mrb[0].mxu0
        %v4608 = vadd.f32 %v3222, %v4607
        %v4609 = vpop.f32.mrb[0].mxu0
        %v4610 = vadd.f32 %v3226, %v4609
        %4611 = vmatprep.mubr.bf16.mxu0 %v2883
        %4612 = vmatmul.mubr.bf16.gmra.mrb[0].mxu0 %v2882
        %v4613 = vpop.f32.mrb[0].mxu0
        %v4614 = vadd.f32 %v3222, %v4613
        %v4615 = vpop.f32.mrb[0].mxu0
        %v4616 = vadd.f32 %v3226, %v4615
        %v4617 = vpop.f32.mrb[0].mxu0
        %v4618 = vadd.f32 %v3222, %v4617
        %v4619 = vpop.f32.mrb[0].mxu0
        %v4620 = vadd.f32 %v3226, %v4619
        %4621 = vmatprep.mubr.bf16.mxu0 %v2891
        %4622 = vmatmul.mubr.bf16.gmra.mrb[0].mxu0 %v2890
        %v4623 = vpop.f32.mrb[0].mxu0
        %v4624 = vadd.f32 %v3222, %v4623
        %v4625 = vpop.f32.mrb[0].mxu0
        %v4626 = vadd.f32 %v3226, %v4625
        %v4627 = vpop.f32.mrb[0].mxu0
        %v4628 = vadd.f32 %v3222, %v4627
        %v4629 = vpop.f32.mrb[0].mxu0
        %v4630 = vadd.f32 %v3226, %v4629
        %4631 = vmatprep.mubr.bf16.mxu0 %v2899
        %4632 = vmatmul.mubr.bf16.gmra.mrb[0].mxu0 %v2898
        %v4633 = vpop.f32.mrb[0].mxu0
        %v4634 = vadd.f32 %v3222, %v4633
        %v4635 = vpop.f32.mrb[0].mxu0
        %v4636 = vadd.f32 %v3226, %v4635
        %v4637 = vpop.f32.mrb[0].mxu0
        %v4638 = vadd.f32 %v3222, %v4637
        %v4639 = vpop.f32.mrb[0].mxu0
        %v4640 = vadd.f32 %v3226, %v4639
        %4641 = vmatprep.mubr.bf16.mxu0 %v2907
        %4642 = vmatmul.mubr.bf16.gmra.mrb[0].mxu0 %v2906
        %v4643 = vpop.f32.mrb[0].mxu0
        %v4644 = vadd.f32 %v3222, %v4643
        %v4645 = vpop.f32.mrb[0].mxu0
        %v4646 = vadd.f32 %v3226, %v4645
        %v4647 = vpop.f32.mrb[0].mxu0
        %v4648 = vadd.f32 %v3222, %v4647
        %v4649 = vpop.f32.mrb[0].mxu0
        %v4650 = vadd.f32 %v3226, %v4649
        %4651 = vmatprep.mubr.bf16.mxu0 %v2915
        %4652 = vmatmul.mubr.bf16.gmra.mrb[0].mxu0 %v2914
        %v4653 = vpop.f32.mrb[0].mxu0
        %v4654 = vadd.f32 %v3222, %v4653
        %v4655 = vpop.f32.mrb[0].mxu0
        %v4656 = vadd.f32 %v3226, %v4655
        %v4657 = vpop.f32.mrb[0].mxu0
        %v4658 = vadd.f32 %v3222, %v4657
        %v4659 = vpop.f32.mrb[0].mxu0
        %v4660 = vadd.f32 %v3226, %v4659
        %4661 = vmatprep.mubr.bf16.mxu0 %v2923
        %4662 = vmatmul.mubr.bf16.gmra.mrb[0].mxu0 %v2922
        %v4663 = vpop.f32.mrb[0].mxu0
        %v4664 = vadd.f32 %v3222, %v4663
        %v4665 = vpop.f32.mrb[0].mxu0
        %v4666 = vadd.f32 %v3226, %v4665
        %v4667 = vpop.f32.mrb[0].mxu0
        %v4668 = vadd.f32 %v3222, %v4667
        %v4669 = vpop.f32.mrb[0].mxu0
        %v4670 = vadd.f32 %v3226, %v4669
        %4671 = vmatprep.mubr.bf16.mxu0 %v2931
        %4672 = vmatmul.mubr.bf16.gmra.mrb[0].mxu0 %v2930
        %v4673 = vpop.f32.mrb[0].mxu0
        %v4674 = vadd.f32 %v3222, %v4673
        %v4675 = vpop.f32.mrb[0].mxu0
        %v4676 = vadd.f32 %v3226, %v4675
        %v4677 = vpop.f32.mrb[0].mxu0
        %v4678 = vadd.f32 %v3222, %v4677
        %v4679 = vpop.f32.mrb[0].mxu0
        %v4680 = vadd.f32 %v3226, %v4679
        %4681 = vmatprep.mubr.bf16.mxu0 %v2939
        %4682 = vmatmul.mubr.bf16.gmra.mrb[0].mxu0 %v2938
        %v4683 = vpop.f32.mrb[0].mxu0
        %v4684 = vadd.f32 %v3222, %v4683
        %v4685 = vpop.f32.mrb[0].mxu0
        %v4686 = vadd.f32 %v3226, %v4685
        %v4687 = vpop.f32.mrb[0].mxu0
        %v4688 = vadd.f32 %v3222, %v4687
        %v4689 = vpop.f32.mrb[0].mxu0
        %v4690 = vadd.f32 %v3226, %v4689
        %4691 = vmatprep.mubr.bf16.mxu0 %v2947
        %4692 = vmatmul.mubr.bf16.gmra.mrb[0].mxu0 %v2946
        %v4693 = vpop.f32.mrb[0].mxu0
        %v4694 = vadd.f32 %v3222, %v4693
        %v4695 = vpop.f32.mrb[0].mxu0
        %v4696 = vadd.f32 %v3226, %v4695
        %v4697 = vpop.f32.mrb[0].mxu0
        %v4698 = vadd.f32 %v3222, %v4697
        %v4699 = vpop.f32.mrb[0].mxu0
        %v4700 = vadd.f32 %v3226, %v4699
        %4701 = vmatprep.mubr.bf16.mxu0 %v2955
        %4702 = vmatmul.mubr.bf16.gmra.mrb[0].mxu0 %v2954
        %v4703 = vpop.f32.mrb[0].mxu0
        %v4704 = vadd.f32 %v3222, %v4703
        %v4705 = vpop.f32.mrb[0].mxu0
        %v4706 = vadd.f32 %v3226, %v4705
        %v4707 = vpop.f32.mrb[0].mxu0
        %v4708 = vadd.f32 %v3222, %v4707
        %v4709 = vpop.f32.mrb[0].mxu0
        %v4710 = vadd.f32 %v3226, %v4709
        %4711 = vdwg.mxu0
        %4712 = vmatprep.subr.bf16.mxu0 %v4072
        %4713 = vmatpush1.bf16.msra.mxu0 %v4071
        %4714 = vmatprep.subr.bf16.mxu0 %v4076
        %4715 = vmatpush1.bf16.msra.mxu0 %v4075
        %4716 = vmatprep.subr.bf16.mxu0 %v4080
        %4717 = vmatpush1.bf16.msra.mxu0 %v4079
        %4718 = vmatprep.subr.bf16.mxu0 %v4084
        %4719 = vmatpush1.bf16.msra.mxu0 %v4083
        %4720 = vmatprep.subr.bf16.mxu0 %v4088
        %4721 = vmatpush1.bf16.msra.mxu0 %v4087
        %4722 = vmatprep.subr.bf16.mxu0 %v4092
        %4723 = vmatpush1.bf16.msra.mxu0 %v4091
        %4724 = vmatprep.subr.bf16.mxu0 %v4096
        %4725 = vmatpush1.bf16.msra.mxu0 %v4095
        %4726 = vmatprep.subr.bf16.mxu0 %v4100
        %4727 = vmatpush1.bf16.msra.mxu0 %v4099
        %4728 = vmatprep.subr.bf16.mxu0 %v4104
        %4729 = vmatpush1.bf16.msra.mxu0 %v4103
        %4730 = vmatprep.subr.bf16.mxu0 %v4108
        %4731 = vmatpush1.bf16.msra.mxu0 %v4107
        %4732 = vmatprep.subr.bf16.mxu0 %v4112
        %4733 = vmatpush1.bf16.msra.mxu0 %v4111
        %4734 = vmatprep.subr.bf16.mxu0 %v4116
        %4735 = vmatpush1.bf16.msra.mxu0 %v4115
        %4736 = vmatprep.subr.bf16.mxu0 %v4120
        %4737 = vmatpush1.bf16.msra.mxu0 %v4119
        %4738 = vmatprep.subr.bf16.mxu0 %v4124
        %4739 = vmatpush1.bf16.msra.mxu0 %v4123
        %4740 = vmatprep.subr.bf16.mxu0 %v4128
        %4741 = vmatpush1.bf16.msra.mxu0 %v4127
        %4742 = vmatprep.subr.bf16.mxu0 %v4132
        %4743 = vmatpush1.bf16.msra.mxu0 %v4131
        %4744 = vmatprep.mubr.bf16.mxu0 %v2837
        %4745 = vmatmul.mubr.bf16.gmra.mrb[0].mxu0 %v2836
        %v4746 = vpop.f32.mrb[0].mxu0
        %v4747 = vadd.f32 %v4554, %v4746
        %v4748 = vpop.f32.mrb[0].mxu0
        %v4749 = vadd.f32 %v4556, %v4748
        %v4750 = vpop.f32.mrb[0].mxu0
        %v4751 = vadd.f32 %v4558, %v4750
        %v4752 = vpop.f32.mrb[0].mxu0
        %v4753 = vadd.f32 %v4560, %v4752
        %4754 = vmatprep.mubr.bf16.mxu0 %v2845
        %4755 = vmatmul.mubr.bf16.gmra.mrb[0].mxu0 %v2844
        %v4756 = vpop.f32.mrb[0].mxu0
        %v4757 = vadd.f32 %v4564, %v4756
        %v4758 = vpop.f32.mrb[0].mxu0
        %v4759 = vadd.f32 %v4566, %v4758
        %v4760 = vpop.f32.mrb[0].mxu0
        %v4761 = vadd.f32 %v4568, %v4760
        %v4762 = vpop.f32.mrb[0].mxu0
        %v4763 = vadd.f32 %v4570, %v4762
        %4764 = vmatprep.mubr.bf16.mxu0 %v2853
        %4765 = vmatmul.mubr.bf16.gmra.mrb[0].mxu0 %v2852
        %v4766 = vpop.f32.mrb[0].mxu0
        %v4767 = vadd.f32 %v4574, %v4766
        %v4768 = vpop.f32.mrb[0].mxu0
        %v4769 = vadd.f32 %v4576, %v4768
        %v4770 = vpop.f32.mrb[0].mxu0
        %v4771 = vadd.f32 %v4578, %v4770
        %v4772 = vpop.f32.mrb[0].mxu0
        %v4773 = vadd.f32 %v4580, %v4772
        %4774 = vmatprep.mubr.bf16.mxu0 %v2861
        %4775 = vmatmul.mubr.bf16.gmra.mrb[0].mxu0 %v2860
        %v4776 = vpop.f32.mrb[0].mxu0
        %v4777 = vadd.f32 %v4584, %v4776
        %v4778 = vpop.f32.mrb[0].mxu0
        %v4779 = vadd.f32 %v4586, %v4778
        %v4780 = vpop.f32.mrb[0].mxu0
        %v4781 = vadd.f32 %v4588, %v4780
        %v4782 = vpop.f32.mrb[0].mxu0
        %v4783 = vadd.f32 %v4590, %v4782
        %4784 = vmatprep.mubr.bf16.mxu0 %v2869
        %4785 = vmatmul.mubr.bf16.gmra.mrb[0].mxu0 %v2868
        %v4786 = vpop.f32.mrb[0].mxu0
        %v4787 = vadd.f32 %v4594, %v4786
        %v4788 = vpop.f32.mrb[0].mxu0
        %v4789 = vadd.f32 %v4596, %v4788
        %v4790 = vpop.f32.mrb[0].mxu0
        %v4791 = vadd.f32 %v4598, %v4790
        %v4792 = vpop.f32.mrb[0].mxu0
        %v4793 = vadd.f32 %v4600, %v4792
        %4794 = vmatprep.mubr.bf16.mxu0 %v2877
        %4795 = vmatmul.mubr.bf16.gmra.mrb[0].mxu0 %v2876
        %v4796 = vpop.f32.mrb[0].mxu0
        %v4797 = vadd.f32 %v4604, %v4796
        %v4798 = vpop.f32.mrb[0].mxu0
        %v4799 = vadd.f32 %v4606, %v4798
        %v4800 = vpop.f32.mrb[0].mxu0
        %v4801 = vadd.f32 %v4608, %v4800
        %v4802 = vpop.f32.mrb[0].mxu0
        %v4803 = vadd.f32 %v4610, %v4802
        %4804 = vmatprep.mubr.bf16.mxu0 %v2885
        %4805 = vmatmul.mubr.bf16.gmra.mrb[0].mxu0 %v2884
        %v4806 = vpop.f32.mrb[0].mxu0
        %v4807 = vadd.f32 %v4614, %v4806
        %v4808 = vpop.f32.mrb[0].mxu0
        %v4809 = vadd.f32 %v4616, %v4808
        %v4810 = vpop.f32.mrb[0].mxu0
        %v4811 = vadd.f32 %v4618, %v4810
        %v4812 = vpop.f32.mrb[0].mxu0
        %v4813 = vadd.f32 %v4620, %v4812
        %4814 = vmatprep.mubr.bf16.mxu0 %v2893
        %4815 = vmatmul.mubr.bf16.gmra.mrb[0].mxu0 %v2892
        %v4816 = vpop.f32.mrb[0].mxu0
        %v4817 = vadd.f32 %v4624, %v4816
        %v4818 = vpop.f32.mrb[0].mxu0
        %v4819 = vadd.f32 %v4626, %v4818
        %v4820 = vpop.f32.mrb[0].mxu0
        %v4821 = vadd.f32 %v4628, %v4820
        %v4822 = vpop.f32.mrb[0].mxu0
        %v4823 = vadd.f32 %v4630, %v4822
        %4824 = vmatprep.mubr.bf16.mxu0 %v2901
        %4825 = vmatmul.mubr.bf16.gmra.mrb[0].mxu0 %v2900
        %v4826 = vpop.f32.mrb[0].mxu0
        %v4827 = vadd.f32 %v4634, %v4826
        %v4828 = vpop.f32.mrb[0].mxu0
        %v4829 = vadd.f32 %v4636, %v4828
        %v4830 = vpop.f32.mrb[0].mxu0
        %v4831 = vadd.f32 %v4638, %v4830
        %v4832 = vpop.f32.mrb[0].mxu0
        %v4833 = vadd.f32 %v4640, %v4832
        %4834 = vmatprep.mubr.bf16.mxu0 %v2909
        %4835 = vmatmul.mubr.bf16.gmra.mrb[0].mxu0 %v2908
        %v4836 = vpop.f32.mrb[0].mxu0
        %v4837 = vadd.f32 %v4644, %v4836
        %v4838 = vpop.f32.mrb[0].mxu0
        %v4839 = vadd.f32 %v4646, %v4838
        %v4840 = vpop.f32.mrb[0].mxu0
        %v4841 = vadd.f32 %v4648, %v4840
        %v4842 = vpop.f32.mrb[0].mxu0
        %v4843 = vadd.f32 %v4650, %v4842
        %4844 = vmatprep.mubr.bf16.mxu0 %v2917
        %4845 = vmatmul.mubr.bf16.gmra.mrb[0].mxu0 %v2916
        %v4846 = vpop.f32.mrb[0].mxu0
        %v4847 = vadd.f32 %v4654, %v4846
        %v4848 = vpop.f32.mrb[0].mxu0
        %v4849 = vadd.f32 %v4656, %v4848
        %v4850 = vpop.f32.mrb[0].mxu0
        %v4851 = vadd.f32 %v4658, %v4850
        %v4852 = vpop.f32.mrb[0].mxu0
        %v4853 = vadd.f32 %v4660, %v4852
        %4854 = vmatprep.mubr.bf16.mxu0 %v2925
        %4855 = vmatmul.mubr.bf16.gmra.mrb[0].mxu0 %v2924
        %v4856 = vpop.f32.mrb[0].mxu0
        %v4857 = vadd.f32 %v4664, %v4856
        %v4858 = vpop.f32.mrb[0].mxu0
        %v4859 = vadd.f32 %v4666, %v4858
        %v4860 = vpop.f32.mrb[0].mxu0
        %v4861 = vadd.f32 %v4668, %v4860
        %v4862 = vpop.f32.mrb[0].mxu0
        %v4863 = vadd.f32 %v4670, %v4862
        %4864 = vmatprep.mubr.bf16.mxu0 %v2933
        %4865 = vmatmul.mubr.bf16.gmra.mrb[0].mxu0 %v2932
        %v4866 = vpop.f32.mrb[0].mxu0
        %v4867 = vadd.f32 %v4674, %v4866
        %v4868 = vpop.f32.mrb[0].mxu0
        %v4869 = vadd.f32 %v4676, %v4868
        %v4870 = vpop.f32.mrb[0].mxu0
        %v4871 = vadd.f32 %v4678, %v4870
        %v4872 = vpop.f32.mrb[0].mxu0
        %v4873 = vadd.f32 %v4680, %v4872
        %4874 = vmatprep.mubr.bf16.mxu0 %v2941
        %4875 = vmatmul.mubr.bf16.gmra.mrb[0].mxu0 %v2940
        %v4876 = vpop.f32.mrb[0].mxu0
        %v4877 = vadd.f32 %v4684, %v4876
        %v4878 = vpop.f32.mrb[0].mxu0
        %v4879 = vadd.f32 %v4686, %v4878
        %v4880 = vpop.f32.mrb[0].mxu0
        %v4881 = vadd.f32 %v4688, %v4880
        %v4882 = vpop.f32.mrb[0].mxu0
        %v4883 = vadd.f32 %v4690, %v4882
        %4884 = vmatprep.mubr.bf16.mxu0 %v2949
        %4885 = vmatmul.mubr.bf16.gmra.mrb[0].mxu0 %v2948
        %v4886 = vpop.f32.mrb[0].mxu0
        %v4887 = vadd.f32 %v4694, %v4886
        %v4888 = vpop.f32.mrb[0].mxu0
        %v4889 = vadd.f32 %v4696, %v4888
        %v4890 = vpop.f32.mrb[0].mxu0
        %v4891 = vadd.f32 %v4698, %v4890
        %v4892 = vpop.f32.mrb[0].mxu0
        %v4893 = vadd.f32 %v4700, %v4892
        %4894 = vmatprep.mubr.bf16.mxu0 %v2957
        %4895 = vmatmul.mubr.bf16.gmra.mrb[0].mxu0 %v2956
        %v4896 = vpop.f32.mrb[0].mxu0
        %v4897 = vadd.f32 %v4704, %v4896
        %v4898 = vpop.f32.mrb[0].mxu0
        %v4899 = vadd.f32 %v4706, %v4898
        %v4900 = vpop.f32.mrb[0].mxu0
        %v4901 = vadd.f32 %v4708, %v4900
        %v4902 = vpop.f32.mrb[0].mxu0
        %v4903 = vadd.f32 %v4710, %v4902
        %4904 = vdwg.mxu0
        %4905 = vmatprep.subr.bf16.mxu0 %v4136
        %4906 = vmatpush1.bf16.msra.mxu0 %v4135
        %4907 = vmatprep.subr.bf16.mxu0 %v4140
        %4908 = vmatpush1.bf16.msra.mxu0 %v4139
        %4909 = vmatprep.subr.bf16.mxu0 %v4144
        %4910 = vmatpush1.bf16.msra.mxu0 %v4143
        %4911 = vmatprep.subr.bf16.mxu0 %v4148
        %4912 = vmatpush1.bf16.msra.mxu0 %v4147
        %4913 = vmatprep.subr.bf16.mxu0 %v4152
        %4914 = vmatpush1.bf16.msra.mxu0 %v4151
        %4915 = vmatprep.subr.bf16.mxu0 %v4156
        %4916 = vmatpush1.bf16.msra.mxu0 %v4155
        %4917 = vmatprep.subr.bf16.mxu0 %v4160
        %4918 = vmatpush1.bf16.msra.mxu0 %v4159
        %4919 = vmatprep.subr.bf16.mxu0 %v4164
        %4920 = vmatpush1.bf16.msra.mxu0 %v4163
        %4921 = vmatprep.subr.bf16.mxu0 %v4168
        %4922 = vmatpush1.bf16.msra.mxu0 %v4167
        %4923 = vmatprep.subr.bf16.mxu0 %v4172
        %4924 = vmatpush1.bf16.msra.mxu0 %v4171
        %4925 = vmatprep.subr.bf16.mxu0 %v4176
        %4926 = vmatpush1.bf16.msra.mxu0 %v4175
        %4927 = vmatprep.subr.bf16.mxu0 %v4180
        %4928 = vmatpush1.bf16.msra.mxu0 %v4179
        %4929 = vmatprep.subr.bf16.mxu0 %v4184
        %4930 = vmatpush1.bf16.msra.mxu0 %v4183
        %4931 = vmatprep.subr.bf16.mxu0 %v4188
        %4932 = vmatpush1.bf16.msra.mxu0 %v4187
        %4933 = vmatprep.subr.bf16.mxu0 %v4192
        %4934 = vmatpush1.bf16.msra.mxu0 %v4191
        %4935 = vmatprep.subr.bf16.mxu0 %v4196
        %4936 = vmatpush1.bf16.msra.mxu0 %v4195
        %4937 = vmatprep.mubr.bf16.mxu0 %v2839
        %4938 = vmatmul.mubr.bf16.gmra.mrb[0].mxu0 %v2838
        %v4939 = vpop.f32.mrb[0].mxu0
        %v4940 = vadd.f32 %v4747, %v4939
        %v4941 = vpop.f32.mrb[0].mxu0
        %v4942 = vadd.f32 %v4749, %v4941
        %v4943 = vpop.f32.mrb[0].mxu0
        %v4944 = vadd.f32 %v4751, %v4943
        %v4945 = vpop.f32.mrb[0].mxu0
        %v4946 = vadd.f32 %v4753, %v4945
        %4947 = vmatprep.mubr.bf16.mxu0 %v2847
        %4948 = vmatmul.mubr.bf16.gmra.mrb[0].mxu0 %v2846
        %v4949 = vpop.f32.mrb[0].mxu0
        %v4950 = vadd.f32 %v4757, %v4949
        %v4951 = vpop.f32.mrb[0].mxu0
        %v4952 = vadd.f32 %v4759, %v4951
        %v4953 = vpop.f32.mrb[0].mxu0
        %v4954 = vadd.f32 %v4761, %v4953
        %v4955 = vpop.f32.mrb[0].mxu0
        %v4956 = vadd.f32 %v4763, %v4955
        %4957 = vmatprep.mubr.bf16.mxu0 %v2855
        %4958 = vmatmul.mubr.bf16.gmra.mrb[0].mxu0 %v2854
        %v4959 = vpop.f32.mrb[0].mxu0
        %v4960 = vadd.f32 %v4767, %v4959
        %v4961 = vpop.f32.mrb[0].mxu0
        %v4962 = vadd.f32 %v4769, %v4961
        %v4963 = vpop.f32.mrb[0].mxu0
        %v4964 = vadd.f32 %v4771, %v4963
        %v4965 = vpop.f32.mrb[0].mxu0
        %v4966 = vadd.f32 %v4773, %v4965
        %4967 = vmatprep.mubr.bf16.mxu0 %v2863
        %4968 = vmatmul.mubr.bf16.gmra.mrb[0].mxu0 %v2862
        %v4969 = vpop.f32.mrb[0].mxu0
        %v4970 = vadd.f32 %v4777, %v4969
        %v4971 = vpop.f32.mrb[0].mxu0
        %v4972 = vadd.f32 %v4779, %v4971
        %v4973 = vpop.f32.mrb[0].mxu0
        %v4974 = vadd.f32 %v4781, %v4973
        %v4975 = vpop.f32.mrb[0].mxu0
        %v4976 = vadd.f32 %v4783, %v4975
        %4977 = vmatprep.mubr.bf16.mxu0 %v2871
        %4978 = vmatmul.mubr.bf16.gmra.mrb[0].mxu0 %v2870
        %v4979 = vpop.f32.mrb[0].mxu0
        %v4980 = vadd.f32 %v4787, %v4979
        %v4981 = vpop.f32.mrb[0].mxu0
        %v4982 = vadd.f32 %v4789, %v4981
        %v4983 = vpop.f32.mrb[0].mxu0
        %v4984 = vadd.f32 %v4791, %v4983
        %v4985 = vpop.f32.mrb[0].mxu0
        %v4986 = vadd.f32 %v4793, %v4985
        %4987 = vmatprep.mubr.bf16.mxu0 %v2879
        %4988 = vmatmul.mubr.bf16.gmra.mrb[0].mxu0 %v2878
        %v4989 = vpop.f32.mrb[0].mxu0
        %v4990 = vadd.f32 %v4797, %v4989
        %v4991 = vpop.f32.mrb[0].mxu0
        %v4992 = vadd.f32 %v4799, %v4991
        %v4993 = vpop.f32.mrb[0].mxu0
        %v4994 = vadd.f32 %v4801, %v4993
        %v4995 = vpop.f32.mrb[0].mxu0
        %v4996 = vadd.f32 %v4803, %v4995
        %4997 = vmatprep.mubr.bf16.mxu0 %v2887
        %4998 = vmatmul.mubr.bf16.gmra.mrb[0].mxu0 %v2886
        %v4999 = vpop.f32.mrb[0].mxu0
        %v5000 = vadd.f32 %v4807, %v4999
        %v5001 = vpop.f32.mrb[0].mxu0
        %v5002 = vadd.f32 %v4809, %v5001
        %v5003 = vpop.f32.mrb[0].mxu0
        %v5004 = vadd.f32 %v4811, %v5003
        %v5005 = vpop.f32.mrb[0].mxu0
        %v5006 = vadd.f32 %v4813, %v5005
        %5007 = vmatprep.mubr.bf16.mxu0 %v2895
        %5008 = vmatmul.mubr.bf16.gmra.mrb[0].mxu0 %v2894
        %v5009 = vpop.f32.mrb[0].mxu0
        %v5010 = vadd.f32 %v4817, %v5009
        %v5011 = vpop.f32.mrb[0].mxu0
        %v5012 = vadd.f32 %v4819, %v5011
        %v5013 = vpop.f32.mrb[0].mxu0
        %v5014 = vadd.f32 %v4821, %v5013
        %v5015 = vpop.f32.mrb[0].mxu0
        %v5016 = vadd.f32 %v4823, %v5015
        %5017 = vmatprep.mubr.bf16.mxu0 %v2903
        %5018 = vmatmul.mubr.bf16.gmra.mrb[0].mxu0 %v2902
        %v5019 = vpop.f32.mrb[0].mxu0
        %v5020 = vadd.f32 %v4827, %v5019
        %v5021 = vpop.f32.mrb[0].mxu0
        %v5022 = vadd.f32 %v4829, %v5021
        %v5023 = vpop.f32.mrb[0].mxu0
        %v5024 = vadd.f32 %v4831, %v5023
        %v5025 = vpop.f32.mrb[0].mxu0
        %v5026 = vadd.f32 %v4833, %v5025
        %5027 = vmatprep.mubr.bf16.mxu0 %v2911
        %5028 = vmatmul.mubr.bf16.gmra.mrb[0].mxu0 %v2910
        %v5029 = vpop.f32.mrb[0].mxu0
        %v5030 = vadd.f32 %v4837, %v5029
        %v5031 = vpop.f32.mrb[0].mxu0
        %v5032 = vadd.f32 %v4839, %v5031
        %v5033 = vpop.f32.mrb[0].mxu0
        %v5034 = vadd.f32 %v4841, %v5033
        %v5035 = vpop.f32.mrb[0].mxu0
        %v5036 = vadd.f32 %v4843, %v5035
        %5037 = vmatprep.mubr.bf16.mxu0 %v2919
        %5038 = vmatmul.mubr.bf16.gmra.mrb[0].mxu0 %v2918
        %v5039 = vpop.f32.mrb[0].mxu0
        %v5040 = vadd.f32 %v4847, %v5039
        %v5041 = vpop.f32.mrb[0].mxu0
        %v5042 = vadd.f32 %v4849, %v5041
        %v5043 = vpop.f32.mrb[0].mxu0
        %v5044 = vadd.f32 %v4851, %v5043
        %v5045 = vpop.f32.mrb[0].mxu0
        %v5046 = vadd.f32 %v4853, %v5045
        %5047 = vmatprep.mubr.bf16.mxu0 %v2927
        %5048 = vmatmul.mubr.bf16.gmra.mrb[0].mxu0 %v2926
        %v5049 = vpop.f32.mrb[0].mxu0
        %v5050 = vadd.f32 %v4857, %v5049
        %v5051 = vpop.f32.mrb[0].mxu0
        %v5052 = vadd.f32 %v4859, %v5051
        %v5053 = vpop.f32.mrb[0].mxu0
        %v5054 = vadd.f32 %v4861, %v5053
        %v5055 = vpop.f32.mrb[0].mxu0
        %v5056 = vadd.f32 %v4863, %v5055
        %5057 = vmatprep.mubr.bf16.mxu0 %v2935
        %5058 = vmatmul.mubr.bf16.gmra.mrb[0].mxu0 %v2934
        %v5059 = vpop.f32.mrb[0].mxu0
        %v5060 = vadd.f32 %v4867, %v5059
        %v5061 = vpop.f32.mrb[0].mxu0
        %v5062 = vadd.f32 %v4869, %v5061
        %v5063 = vpop.f32.mrb[0].mxu0
        %v5064 = vadd.f32 %v4871, %v5063
        %v5065 = vpop.f32.mrb[0].mxu0
        %v5066 = vadd.f32 %v4873, %v5065
        %5067 = vmatprep.mubr.bf16.mxu0 %v2943
        %5068 = vmatmul.mubr.bf16.gmra.mrb[0].mxu0 %v2942
        %v5069 = vpop.f32.mrb[0].mxu0
        %v5070 = vadd.f32 %v4877, %v5069
        %v5071 = vpop.f32.mrb[0].mxu0
        %v5072 = vadd.f32 %v4879, %v5071
        %v5073 = vpop.f32.mrb[0].mxu0
        %v5074 = vadd.f32 %v4881, %v5073
        %v5075 = vpop.f32.mrb[0].mxu0
        %v5076 = vadd.f32 %v4883, %v5075
        %5077 = vmatprep.mubr.bf16.mxu0 %v2951
        %5078 = vmatmul.mubr.bf16.gmra.mrb[0].mxu0 %v2950
        %v5079 = vpop.f32.mrb[0].mxu0
        %v5080 = vadd.f32 %v4887, %v5079
        %v5081 = vpop.f32.mrb[0].mxu0
        %v5082 = vadd.f32 %v4889, %v5081
        %v5083 = vpop.f32.mrb[0].mxu0
        %v5084 = vadd.f32 %v4891, %v5083
        %v5085 = vpop.f32.mrb[0].mxu0
        %v5086 = vadd.f32 %v4893, %v5085
        %5087 = vmatprep.mubr.bf16.mxu0 %v2959
        %5088 = vmatmul.mubr.bf16.gmra.mrb[0].mxu0 %v2958
        %v5089 = vpop.f32.mrb[0].mxu0
        %v5090 = vadd.f32 %v4897, %v5089
        %v5091 = vpop.f32.mrb[0].mxu0
        %v5092 = vadd.f32 %v4899, %v5091
        %v5093 = vpop.f32.mrb[0].mxu0
        %v5094 = vadd.f32 %v4901, %v5093
        %v5095 = vpop.f32.mrb[0].mxu0
        %v5096 = vadd.f32 %v4903, %v5095
        %5097 = vdwg.mxu0
        %5098 = vmatprep.subr.bf16.mxu0 %v4200
        %5099 = vmatpush1.bf16.msra.mxu0 %v4199
        %5100 = vmatprep.subr.bf16.mxu0 %v4204
        %5101 = vmatpush1.bf16.msra.mxu0 %v4203
        %5102 = vmatprep.subr.bf16.mxu0 %v4208
        %5103 = vmatpush1.bf16.msra.mxu0 %v4207
        %5104 = vmatprep.subr.bf16.mxu0 %v4212
        %5105 = vmatpush1.bf16.msra.mxu0 %v4211
        %5106 = vmatprep.subr.bf16.mxu0 %v4216
        %5107 = vmatpush1.bf16.msra.mxu0 %v4215
        %5108 = vmatprep.subr.bf16.mxu0 %v4220
        %5109 = vmatpush1.bf16.msra.mxu0 %v4219
        %5110 = vmatprep.subr.bf16.mxu0 %v4224
        %5111 = vmatpush1.bf16.msra.mxu0 %v4223
        %5112 = vmatprep.subr.bf16.mxu0 %v4228
        %5113 = vmatpush1.bf16.msra.mxu0 %v4227
        %5114 = vmatprep.subr.bf16.mxu0 %v4232
        %5115 = vmatpush1.bf16.msra.mxu0 %v4231
        %5116 = vmatprep.subr.bf16.mxu0 %v4236
        %5117 = vmatpush1.bf16.msra.mxu0 %v4235
        %5118 = vmatprep.subr.bf16.mxu0 %v4240
        %5119 = vmatpush1.bf16.msra.mxu0 %v4239
        %5120 = vmatprep.subr.bf16.mxu0 %v4244
        %5121 = vmatpush1.bf16.msra.mxu0 %v4243
        %5122 = vmatprep.subr.bf16.mxu0 %v4248
        %5123 = vmatpush1.bf16.msra.mxu0 %v4247
        %5124 = vmatprep.subr.bf16.mxu0 %v4252
        %5125 = vmatpush1.bf16.msra.mxu0 %v4251
        %5126 = vmatprep.subr.bf16.mxu0 %v4256
        %5127 = vmatpush1.bf16.msra.mxu0 %v4255
        %5128 = vmatprep.subr.bf16.mxu0 %v4260
        %5129 = vmatpush1.bf16.msra.mxu0 %v4259
        %5130 = vmatprep.mubr.bf16.mxu0 %v2841
        %5131 = vmatmul.mubr.bf16.gmra.mrb[0].mxu0 %v2840
        %v5132 = vpop.f32.mrb[0].mxu0
        %v5133 = vadd.f32 %v4940, %v5132
        %v5134 = vpop.f32.mrb[0].mxu0
        %v5135 = vadd.f32 %v4942, %v5134
        %v5136 = vpop.f32.mrb[0].mxu0
        %v5137 = vadd.f32 %v4944, %v5136
        %v5138 = vpop.f32.mrb[0].mxu0
        %v5139 = vadd.f32 %v4946, %v5138
        %5140 = vmatprep.mubr.bf16.mxu0 %v2849
        %5141 = vmatmul.mubr.bf16.gmra.mrb[0].mxu0 %v2848
        %v5142 = vpop.f32.mrb[0].mxu0
        %v5143 = vadd.f32 %v4950, %v5142
        %v5144 = vpop.f32.mrb[0].mxu0
        %v5145 = vadd.f32 %v4952, %v5144
        %v5146 = vpop.f32.mrb[0].mxu0
        %v5147 = vadd.f32 %v4954, %v5146
        %v5148 = vpop.f32.mrb[0].mxu0
        %v5149 = vadd.f32 %v4956, %v5148
        %5150 = vmatprep.mubr.bf16.mxu0 %v2857
        %5151 = vmatmul.mubr.bf16.gmra.mrb[0].mxu0 %v2856
        %v5152 = vpop.f32.mrb[0].mxu0
        %v5153 = vadd.f32 %v4960, %v5152
        %v5154 = vpop.f32.mrb[0].mxu0
        %v5155 = vadd.f32 %v4962, %v5154
        %v5156 = vpop.f32.mrb[0].mxu0
        %v5157 = vadd.f32 %v4964, %v5156
        %v5158 = vpop.f32.mrb[0].mxu0
        %v5159 = vadd.f32 %v4966, %v5158
        %5160 = vmatprep.mubr.bf16.mxu0 %v2865
        %5161 = vmatmul.mubr.bf16.gmra.mrb[0].mxu0 %v2864
        %v5162 = vpop.f32.mrb[0].mxu0
        %v5163 = vadd.f32 %v4970, %v5162
        %v5164 = vpop.f32.mrb[0].mxu0
        %v5165 = vadd.f32 %v4972, %v5164
        %v5166 = vpop.f32.mrb[0].mxu0
        %v5167 = vadd.f32 %v4974, %v5166
        %v5168 = vpop.f32.mrb[0].mxu0
        %v5169 = vadd.f32 %v4976, %v5168
        %5170 = vmatprep.mubr.bf16.mxu0 %v2873
        %5171 = vmatmul.mubr.bf16.gmra.mrb[0].mxu0 %v2872
        %v5172 = vpop.f32.mrb[0].mxu0
        %v5173 = vadd.f32 %v4980, %v5172
        %v5174 = vpop.f32.mrb[0].mxu0
        %v5175 = vadd.f32 %v4982, %v5174
        %v5176 = vpop.f32.mrb[0].mxu0
        %v5177 = vadd.f32 %v4984, %v5176
        %v5178 = vpop.f32.mrb[0].mxu0
        %v5179 = vadd.f32 %v4986, %v5178
        %5180 = vmatprep.mubr.bf16.mxu0 %v2881
        %5181 = vmatmul.mubr.bf16.gmra.mrb[0].mxu0 %v2880
        %v5182 = vpop.f32.mrb[0].mxu0
        %v5183 = vadd.f32 %v4990, %v5182
        %v5184 = vpop.f32.mrb[0].mxu0
        %v5185 = vadd.f32 %v4992, %v5184
        %v5186 = vpop.f32.mrb[0].mxu0
        %v5187 = vadd.f32 %v4994, %v5186
        %v5188 = vpop.f32.mrb[0].mxu0
        %v5189 = vadd.f32 %v4996, %v5188
        %5190 = vmatprep.mubr.bf16.mxu0 %v2889
        %5191 = vmatmul.mubr.bf16.gmra.mrb[0].mxu0 %v2888
        %v5192 = vpop.f32.mrb[0].mxu0
        %v5193 = vadd.f32 %v5000, %v5192
        %v5194 = vpop.f32.mrb[0].mxu0
        %v5195 = vadd.f32 %v5002, %v5194
        %v5196 = vpop.f32.mrb[0].mxu0
        %v5197 = vadd.f32 %v5004, %v5196
        %v5198 = vpop.f32.mrb[0].mxu0
        %v5199 = vadd.f32 %v5006, %v5198
        %5200 = vmatprep.mubr.bf16.mxu0 %v2897
        %5201 = vmatmul.mubr.bf16.gmra.mrb[0].mxu0 %v2896
        %v5202 = vpop.f32.mrb[0].mxu0
        %v5203 = vadd.f32 %v5010, %v5202
        %v5204 = vpop.f32.mrb[0].mxu0
        %v5205 = vadd.f32 %v5012, %v5204
        %v5206 = vpop.f32.mrb[0].mxu0
        %v5207 = vadd.f32 %v5014, %v5206
        %v5208 = vpop.f32.mrb[0].mxu0
        %v5209 = vadd.f32 %v5016, %v5208
        %5210 = vmatprep.mubr.bf16.mxu0 %v2905
        %5211 = vmatmul.mubr.bf16.gmra.mrb[0].mxu0 %v2904
        %v5212 = vpop.f32.mrb[0].mxu0
        %v5213 = vadd.f32 %v5020, %v5212
        %v5214 = vpop.f32.mrb[0].mxu0
        %v5215 = vadd.f32 %v5022, %v5214
        %v5216 = vpop.f32.mrb[0].mxu0
        %v5217 = vadd.f32 %v5024, %v5216
        %v5218 = vpop.f32.mrb[0].mxu0
        %v5219 = vadd.f32 %v5026, %v5218
        %5220 = vmatprep.mubr.bf16.mxu0 %v2913
        %5221 = vmatmul.mubr.bf16.gmra.mrb[0].mxu0 %v2912
        %v5222 = vpop.f32.mrb[0].mxu0
        %v5223 = vadd.f32 %v5030, %v5222
        %v5224 = vpop.f32.mrb[0].mxu0
        %v5225 = vadd.f32 %v5032, %v5224
        %v5226 = vpop.f32.mrb[0].mxu0
        %v5227 = vadd.f32 %v5034, %v5226
        %v5228 = vpop.f32.mrb[0].mxu0
        %v5229 = vadd.f32 %v5036, %v5228
        %5230 = vmatprep.mubr.bf16.mxu0 %v2921
        %5231 = vmatmul.mubr.bf16.gmra.mrb[0].mxu0 %v2920
        %v5232 = vpop.f32.mrb[0].mxu0
        %v5233 = vadd.f32 %v5040, %v5232
        %v5234 = vpop.f32.mrb[0].mxu0
        %v5235 = vadd.f32 %v5042, %v5234
        %v5236 = vpop.f32.mrb[0].mxu0
        %v5237 = vadd.f32 %v5044, %v5236
        %v5238 = vpop.f32.mrb[0].mxu0
        %v5239 = vadd.f32 %v5046, %v5238
        %5240 = vmatprep.mubr.bf16.mxu0 %v2929
        %5241 = vmatmul.mubr.bf16.gmra.mrb[0].mxu0 %v2928
        %v5242 = vpop.f32.mrb[0].mxu0
        %v5243 = vadd.f32 %v5050, %v5242
        %v5244 = vpop.f32.mrb[0].mxu0
        %v5245 = vadd.f32 %v5052, %v5244
        %v5246 = vpop.f32.mrb[0].mxu0
        %v5247 = vadd.f32 %v5054, %v5246
        %v5248 = vpop.f32.mrb[0].mxu0
        %v5249 = vadd.f32 %v5056, %v5248
        %5250 = vmatprep.mubr.bf16.mxu0 %v2937
        %5251 = vmatmul.mubr.bf16.gmra.mrb[0].mxu0 %v2936
        %v5252 = vpop.f32.mrb[0].mxu0
        %v5253 = vadd.f32 %v5060, %v5252
        %v5254 = vpop.f32.mrb[0].mxu0
        %v5255 = vadd.f32 %v5062, %v5254
        %v5256 = vpop.f32.mrb[0].mxu0
        %v5257 = vadd.f32 %v5064, %v5256
        %v5258 = vpop.f32.mrb[0].mxu0
        %v5259 = vadd.f32 %v5066, %v5258
        %5260 = vmatprep.mubr.bf16.mxu0 %v2945
        %5261 = vmatmul.mubr.bf16.gmra.mrb[0].mxu0 %v2944
        %v5262 = vpop.f32.mrb[0].mxu0
        %v5263 = vadd.f32 %v5070, %v5262
        %v5264 = vpop.f32.mrb[0].mxu0
        %v5265 = vadd.f32 %v5072, %v5264
        %v5266 = vpop.f32.mrb[0].mxu0
        %v5267 = vadd.f32 %v5074, %v5266
        %v5268 = vpop.f32.mrb[0].mxu0
        %v5269 = vadd.f32 %v5076, %v5268
        %5270 = vmatprep.mubr.bf16.mxu0 %v2953
        %5271 = vmatmul.mubr.bf16.gmra.mrb[0].mxu0 %v2952
        %v5272 = vpop.f32.mrb[0].mxu0
        %v5273 = vadd.f32 %v5080, %v5272
        %v5274 = vpop.f32.mrb[0].mxu0
        %v5275 = vadd.f32 %v5082, %v5274
        %v5276 = vpop.f32.mrb[0].mxu0
        %v5277 = vadd.f32 %v5084, %v5276
        %v5278 = vpop.f32.mrb[0].mxu0
        %v5279 = vadd.f32 %v5086, %v5278
        %5280 = vmatprep.mubr.bf16.mxu0 %v2961
        %5281 = vmatmul.mubr.bf16.gmra.mrb[0].mxu0 %v2960
        %v5282 = vpop.f32.mrb[0].mxu0
        %v5283 = vadd.f32 %v5090, %v5282
        %v5284 = vpop.f32.mrb[0].mxu0
        %v5285 = vadd.f32 %v5092, %v5284
        %v5286 = vpop.f32.mrb[0].mxu0
        %v5287 = vadd.f32 %v5094, %v5286
        %v5288 = vpop.f32.mrb[0].mxu0
        %v5289 = vadd.f32 %v5096, %v5288
        %5290 = vdwg.mxu0
        %5291 = vmatprep.subr.bf16.mxu0 %v4010
        %5292 = vmatpush1.bf16.msra.mxu0 %v4009
        %5293 = vmatprep.subr.bf16.mxu0 %v4014
        %5294 = vmatpush1.bf16.msra.mxu0 %v4013
        %5295 = vmatprep.subr.bf16.mxu0 %v4018
        %5296 = vmatpush1.bf16.msra.mxu0 %v4017
        %5297 = vmatprep.subr.bf16.mxu0 %v4022
        %5298 = vmatpush1.bf16.msra.mxu0 %v4021
        %5299 = vmatprep.subr.bf16.mxu0 %v4026
        %5300 = vmatpush1.bf16.msra.mxu0 %v4025
        %5301 = vmatprep.subr.bf16.mxu0 %v4030
        %5302 = vmatpush1.bf16.msra.mxu0 %v4029
        %5303 = vmatprep.subr.bf16.mxu0 %v4034
        %5304 = vmatpush1.bf16.msra.mxu0 %v4033
        %5305 = vmatprep.subr.bf16.mxu0 %v4038
        %5306 = vmatpush1.bf16.msra.mxu0 %v4037
        %5307 = vmatprep.subr.bf16.mxu0 %v4042
        %5308 = vmatpush1.bf16.msra.mxu0 %v4041
        %5309 = vmatprep.subr.bf16.mxu0 %v4046
        %5310 = vmatpush1.bf16.msra.mxu0 %v4045
        %5311 = vmatprep.subr.bf16.mxu0 %v4050
        %5312 = vmatpush1.bf16.msra.mxu0 %v4049
        %5313 = vmatprep.subr.bf16.mxu0 %v4054
        %5314 = vmatpush1.bf16.msra.mxu0 %v4053
        %5315 = vmatprep.subr.bf16.mxu0 %v4058
        %5316 = vmatpush1.bf16.msra.mxu0 %v4057
        %5317 = vmatprep.subr.bf16.mxu0 %v4062
        %5318 = vmatpush1.bf16.msra.mxu0 %v4061
        %5319 = vmatprep.subr.bf16.mxu0 %v4066
        %5320 = vmatpush1.bf16.msra.mxu0 %v4065
        %5321 = vmatprep.subr.bf16.mxu0 %v4070
        %5322 = vmatpush1.bf16.msra.mxu0 %v4069
        %5323 = vmatprep.mubr.bf16.mxu0 %v2835
        %5324 = vmatmul.mubr.bf16.gmra.mrb[0].mxu0 %v2834
        %v5325 = vpop.f32.mrb[0].mxu0
        %v5326 = vadd.f32 %v3230, %v5325
        %v5327 = vpop.f32.mrb[0].mxu0
        %v5328 = vadd.f32 %v3234, %v5327
        %v5329 = vpop.f32.mrb[0].mxu0
        %v5330 = vadd.f32 %v3230, %v5329
        %v5331 = vpop.f32.mrb[0].mxu0
        %v5332 = vadd.f32 %v3234, %v5331
        %5333 = vmatprep.mubr.bf16.mxu0 %v2843
        %5334 = vmatmul.mubr.bf16.gmra.mrb[0].mxu0 %v2842
        %v5335 = vpop.f32.mrb[0].mxu0
        %v5336 = vadd.f32 %v3230, %v5335
        %v5337 = vpop.f32.mrb[0].mxu0
        %v5338 = vadd.f32 %v3234, %v5337
        %v5339 = vpop.f32.mrb[0].mxu0
        %v5340 = vadd.f32 %v3230, %v5339
        %v5341 = vpop.f32.mrb[0].mxu0
        %v5342 = vadd.f32 %v3234, %v5341
        %5343 = vmatprep.mubr.bf16.mxu0 %v2851
        %5344 = vmatmul.mubr.bf16.gmra.mrb[0].mxu0 %v2850
        %v5345 = vpop.f32.mrb[0].mxu0
        %v5346 = vadd.f32 %v3230, %v5345
        %v5347 = vpop.f32.mrb[0].mxu0
        %v5348 = vadd.f32 %v3234, %v5347
        %v5349 = vpop.f32.mrb[0].mxu0
        %v5350 = vadd.f32 %v3230, %v5349
        %v5351 = vpop.f32.mrb[0].mxu0
        %v5352 = vadd.f32 %v3234, %v5351
        %5353 = vmatprep.mubr.bf16.mxu0 %v2859
        %5354 = vmatmul.mubr.bf16.gmra.mrb[0].mxu0 %v2858
        %v5355 = vpop.f32.mrb[0].mxu0
        %v5356 = vadd.f32 %v3230, %v5355
        %v5357 = vpop.f32.mrb[0].mxu0
        %v5358 = vadd.f32 %v3234, %v5357
        %v5359 = vpop.f32.mrb[0].mxu0
        %v5360 = vadd.f32 %v3230, %v5359
        %v5361 = vpop.f32.mrb[0].mxu0
        %v5362 = vadd.f32 %v3234, %v5361
        %5363 = vmatprep.mubr.bf16.mxu0 %v2867
        %5364 = vmatmul.mubr.bf16.gmra.mrb[0].mxu0 %v2866
        %v5365 = vpop.f32.mrb[0].mxu0
        %v5366 = vadd.f32 %v3230, %v5365
        %v5367 = vpop.f32.mrb[0].mxu0
        %v5368 = vadd.f32 %v3234, %v5367
        %v5369 = vpop.f32.mrb[0].mxu0
        %v5370 = vadd.f32 %v3230, %v5369
        %v5371 = vpop.f32.mrb[0].mxu0
        %v5372 = vadd.f32 %v3234, %v5371
        %5373 = vmatprep.mubr.bf16.mxu0 %v2875
        %5374 = vmatmul.mubr.bf16.gmra.mrb[0].mxu0 %v2874
        %v5375 = vpop.f32.mrb[0].mxu0
        %v5376 = vadd.f32 %v3230, %v5375
        %v5377 = vpop.f32.mrb[0].mxu0
        %v5378 = vadd.f32 %v3234, %v5377
        %v5379 = vpop.f32.mrb[0].mxu0
        %v5380 = vadd.f32 %v3230, %v5379
        %v5381 = vpop.f32.mrb[0].mxu0
        %v5382 = vadd.f32 %v3234, %v5381
        %5383 = vmatprep.mubr.bf16.mxu0 %v2883
        %5384 = vmatmul.mubr.bf16.gmra.mrb[0].mxu0 %v2882
        %v5385 = vpop.f32.mrb[0].mxu0
        %v5386 = vadd.f32 %v3230, %v5385
        %v5387 = vpop.f32.mrb[0].mxu0
        %v5388 = vadd.f32 %v3234, %v5387
        %v5389 = vpop.f32.mrb[0].mxu0
        %v5390 = vadd.f32 %v3230, %v5389
        %v5391 = vpop.f32.mrb[0].mxu0
        %v5392 = vadd.f32 %v3234, %v5391
        %5393 = vmatprep.mubr.bf16.mxu0 %v2891
        %5394 = vmatmul.mubr.bf16.gmra.mrb[0].mxu0 %v2890
        %v5395 = vpop.f32.mrb[0].mxu0
        %v5396 = vadd.f32 %v3230, %v5395
        %v5397 = vpop.f32.mrb[0].mxu0
        %v5398 = vadd.f32 %v3234, %v5397
        %v5399 = vpop.f32.mrb[0].mxu0
        %v5400 = vadd.f32 %v3230, %v5399
        %v5401 = vpop.f32.mrb[0].mxu0
        %v5402 = vadd.f32 %v3234, %v5401
        %5403 = vmatprep.mubr.bf16.mxu0 %v2899
        %5404 = vmatmul.mubr.bf16.gmra.mrb[0].mxu0 %v2898
        %v5405 = vpop.f32.mrb[0].mxu0
        %v5406 = vadd.f32 %v3230, %v5405
        %v5407 = vpop.f32.mrb[0].mxu0
        %v5408 = vadd.f32 %v3234, %v5407
        %v5409 = vpop.f32.mrb[0].mxu0
        %v5410 = vadd.f32 %v3230, %v5409
        %v5411 = vpop.f32.mrb[0].mxu0
        %v5412 = vadd.f32 %v3234, %v5411
        %5413 = vmatprep.mubr.bf16.mxu0 %v2907
        %5414 = vmatmul.mubr.bf16.gmra.mrb[0].mxu0 %v2906
        %v5415 = vpop.f32.mrb[0].mxu0
        %v5416 = vadd.f32 %v3230, %v5415
        %v5417 = vpop.f32.mrb[0].mxu0
        %v5418 = vadd.f32 %v3234, %v5417
        %v5419 = vpop.f32.mrb[0].mxu0
        %v5420 = vadd.f32 %v3230, %v5419
        %v5421 = vpop.f32.mrb[0].mxu0
        %v5422 = vadd.f32 %v3234, %v5421
        %5423 = vmatprep.mubr.bf16.mxu0 %v2915
        %5424 = vmatmul.mubr.bf16.gmra.mrb[0].mxu0 %v2914
        %v5425 = vpop.f32.mrb[0].mxu0
        %v5426 = vadd.f32 %v3230, %v5425
        %v5427 = vpop.f32.mrb[0].mxu0
        %v5428 = vadd.f32 %v3234, %v5427
        %v5429 = vpop.f32.mrb[0].mxu0
        %v5430 = vadd.f32 %v3230, %v5429
        %v5431 = vpop.f32.mrb[0].mxu0
        %v5432 = vadd.f32 %v3234, %v5431
        %5433 = vmatprep.mubr.bf16.mxu0 %v2923
        %5434 = vmatmul.mubr.bf16.gmra.mrb[0].mxu0 %v2922
        %v5435 = vpop.f32.mrb[0].mxu0
        %v5436 = vadd.f32 %v3230, %v5435
        %v5437 = vpop.f32.mrb[0].mxu0
        %v5438 = vadd.f32 %v3234, %v5437
        %v5439 = vpop.f32.mrb[0].mxu0
        %v5440 = vadd.f32 %v3230, %v5439
        %v5441 = vpop.f32.mrb[0].mxu0
        %v5442 = vadd.f32 %v3234, %v5441
        %5443 = vmatprep.mubr.bf16.mxu0 %v2931
        %5444 = vmatmul.mubr.bf16.gmra.mrb[0].mxu0 %v2930
        %v5445 = vpop.f32.mrb[0].mxu0
        %v5446 = vadd.f32 %v3230, %v5445
        %v5447 = vpop.f32.mrb[0].mxu0
        %v5448 = vadd.f32 %v3234, %v5447
        %v5449 = vpop.f32.mrb[0].mxu0
        %v5450 = vadd.f32 %v3230, %v5449
        %v5451 = vpop.f32.mrb[0].mxu0
        %v5452 = vadd.f32 %v3234, %v5451
        %5453 = vmatprep.mubr.bf16.mxu0 %v2939
        %5454 = vmatmul.mubr.bf16.gmra.mrb[0].mxu0 %v2938
        %v5455 = vpop.f32.mrb[0].mxu0
        %v5456 = vadd.f32 %v3230, %v5455
        %v5457 = vpop.f32.mrb[0].mxu0
        %v5458 = vadd.f32 %v3234, %v5457
        %v5459 = vpop.f32.mrb[0].mxu0
        %v5460 = vadd.f32 %v3230, %v5459
        %v5461 = vpop.f32.mrb[0].mxu0
        %v5462 = vadd.f32 %v3234, %v5461
        %5463 = vmatprep.mubr.bf16.mxu0 %v2947
        %5464 = vmatmul.mubr.bf16.gmra.mrb[0].mxu0 %v2946
        %v5465 = vpop.f32.mrb[0].mxu0
        %v5466 = vadd.f32 %v3230, %v5465
        %v5467 = vpop.f32.mrb[0].mxu0
        %v5468 = vadd.f32 %v3234, %v5467
        %v5469 = vpop.f32.mrb[0].mxu0
        %v5470 = vadd.f32 %v3230, %v5469
        %v5471 = vpop.f32.mrb[0].mxu0
        %v5472 = vadd.f32 %v3234, %v5471
        %5473 = vmatprep.mubr.bf16.mxu0 %v2955
        %5474 = vmatmul.mubr.bf16.gmra.mrb[0].mxu0 %v2954
        %v5475 = vpop.f32.mrb[0].mxu0
        %v5476 = vadd.f32 %v3230, %v5475
        %v5477 = vpop.f32.mrb[0].mxu0
        %v5478 = vadd.f32 %v3234, %v5477
        %v5479 = vpop.f32.mrb[0].mxu0
        %v5480 = vadd.f32 %v3230, %v5479
        %v5481 = vpop.f32.mrb[0].mxu0
        %v5482 = vadd.f32 %v3234, %v5481
        %5483 = vdwg.mxu0
        %5484 = vmatprep.subr.bf16.mxu0 %v4074
        %5485 = vmatpush1.bf16.msra.mxu0 %v4073
        %5486 = vmatprep.subr.bf16.mxu0 %v4078
        %5487 = vmatpush1.bf16.msra.mxu0 %v4077
        %5488 = vmatprep.subr.bf16.mxu0 %v4082
        %5489 = vmatpush1.bf16.msra.mxu0 %v4081
        %5490 = vmatprep.subr.bf16.mxu0 %v4086
        %5491 = vmatpush1.bf16.msra.mxu0 %v4085
        %5492 = vmatprep.subr.bf16.mxu0 %v4090
        %5493 = vmatpush1.bf16.msra.mxu0 %v4089
        %5494 = vmatprep.subr.bf16.mxu0 %v4094
        %5495 = vmatpush1.bf16.msra.mxu0 %v4093
        %5496 = vmatprep.subr.bf16.mxu0 %v4098
        %5497 = vmatpush1.bf16.msra.mxu0 %v4097
        %5498 = vmatprep.subr.bf16.mxu0 %v4102
        %5499 = vmatpush1.bf16.msra.mxu0 %v4101
        %5500 = vmatprep.subr.bf16.mxu0 %v4106
        %5501 = vmatpush1.bf16.msra.mxu0 %v4105
        %5502 = vmatprep.subr.bf16.mxu0 %v4110
        %5503 = vmatpush1.bf16.msra.mxu0 %v4109
        %5504 = vmatprep.subr.bf16.mxu0 %v4114
        %5505 = vmatpush1.bf16.msra.mxu0 %v4113
        %5506 = vmatprep.subr.bf16.mxu0 %v4118
        %5507 = vmatpush1.bf16.msra.mxu0 %v4117
        %5508 = vmatprep.subr.bf16.mxu0 %v4122
        %5509 = vmatpush1.bf16.msra.mxu0 %v4121
        %5510 = vmatprep.subr.bf16.mxu0 %v4126
        %5511 = vmatpush1.bf16.msra.mxu0 %v4125
        %5512 = vmatprep.subr.bf16.mxu0 %v4130
        %5513 = vmatpush1.bf16.msra.mxu0 %v4129
        %5514 = vmatprep.subr.bf16.mxu0 %v4134
        %5515 = vmatpush1.bf16.msra.mxu0 %v4133
        %5516 = vmatprep.mubr.bf16.mxu0 %v2837
        %5517 = vmatmul.mubr.bf16.gmra.mrb[0].mxu0 %v2836
        %v5518 = vpop.f32.mrb[0].mxu0
        %v5519 = vadd.f32 %v5326, %v5518
        %v5520 = vpop.f32.mrb[0].mxu0
        %v5521 = vadd.f32 %v5328, %v5520
        %v5522 = vpop.f32.mrb[0].mxu0
        %v5523 = vadd.f32 %v5330, %v5522
        %v5524 = vpop.f32.mrb[0].mxu0
        %v5525 = vadd.f32 %v5332, %v5524
        %5526 = vmatprep.mubr.bf16.mxu0 %v2845
        %5527 = vmatmul.mubr.bf16.gmra.mrb[0].mxu0 %v2844
        %v5528 = vpop.f32.mrb[0].mxu0
        %v5529 = vadd.f32 %v5336, %v5528
        %v5530 = vpop.f32.mrb[0].mxu0
        %v5531 = vadd.f32 %v5338, %v5530
        %v5532 = vpop.f32.mrb[0].mxu0
        %v5533 = vadd.f32 %v5340, %v5532
        %v5534 = vpop.f32.mrb[0].mxu0
        %v5535 = vadd.f32 %v5342, %v5534
        %5536 = vmatprep.mubr.bf16.mxu0 %v2853
        %5537 = vmatmul.mubr.bf16.gmra.mrb[0].mxu0 %v2852
        %v5538 = vpop.f32.mrb[0].mxu0
        %v5539 = vadd.f32 %v5346, %v5538
        %v5540 = vpop.f32.mrb[0].mxu0
        %v5541 = vadd.f32 %v5348, %v5540
        %v5542 = vpop.f32.mrb[0].mxu0
        %v5543 = vadd.f32 %v5350, %v5542
        %v5544 = vpop.f32.mrb[0].mxu0
        %v5545 = vadd.f32 %v5352, %v5544
        %5546 = vmatprep.mubr.bf16.mxu0 %v2861
        %5547 = vmatmul.mubr.bf16.gmra.mrb[0].mxu0 %v2860
        %v5548 = vpop.f32.mrb[0].mxu0
        %v5549 = vadd.f32 %v5356, %v5548
        %v5550 = vpop.f32.mrb[0].mxu0
        %v5551 = vadd.f32 %v5358, %v5550
        %v5552 = vpop.f32.mrb[0].mxu0
        %v5553 = vadd.f32 %v5360, %v5552
        %v5554 = vpop.f32.mrb[0].mxu0
        %v5555 = vadd.f32 %v5362, %v5554
        %5556 = vmatprep.mubr.bf16.mxu0 %v2869
        %5557 = vmatmul.mubr.bf16.gmra.mrb[0].mxu0 %v2868
        %v5558 = vpop.f32.mrb[0].mxu0
        %v5559 = vadd.f32 %v5366, %v5558
        %v5560 = vpop.f32.mrb[0].mxu0
        %v5561 = vadd.f32 %v5368, %v5560
        %v5562 = vpop.f32.mrb[0].mxu0
        %v5563 = vadd.f32 %v5370, %v5562
        %v5564 = vpop.f32.mrb[0].mxu0
        %v5565 = vadd.f32 %v5372, %v5564
        %5566 = vmatprep.mubr.bf16.mxu0 %v2877
        %5567 = vmatmul.mubr.bf16.gmra.mrb[0].mxu0 %v2876
        %v5568 = vpop.f32.mrb[0].mxu0
        %v5569 = vadd.f32 %v5376, %v5568
        %v5570 = vpop.f32.mrb[0].mxu0
        %v5571 = vadd.f32 %v5378, %v5570
        %v5572 = vpop.f32.mrb[0].mxu0
        %v5573 = vadd.f32 %v5380, %v5572
        %v5574 = vpop.f32.mrb[0].mxu0
        %v5575 = vadd.f32 %v5382, %v5574
        %5576 = vmatprep.mubr.bf16.mxu0 %v2885
        %5577 = vmatmul.mubr.bf16.gmra.mrb[0].mxu0 %v2884
        %v5578 = vpop.f32.mrb[0].mxu0
        %v5579 = vadd.f32 %v5386, %v5578
        %v5580 = vpop.f32.mrb[0].mxu0
        %v5581 = vadd.f32 %v5388, %v5580
        %v5582 = vpop.f32.mrb[0].mxu0
        %v5583 = vadd.f32 %v5390, %v5582
        %v5584 = vpop.f32.mrb[0].mxu0
        %v5585 = vadd.f32 %v5392, %v5584
        %5586 = vmatprep.mubr.bf16.mxu0 %v2893
        %5587 = vmatmul.mubr.bf16.gmra.mrb[0].mxu0 %v2892
        %v5588 = vpop.f32.mrb[0].mxu0
        %v5589 = vadd.f32 %v5396, %v5588
        %v5590 = vpop.f32.mrb[0].mxu0
        %v5591 = vadd.f32 %v5398, %v5590
        %v5592 = vpop.f32.mrb[0].mxu0
        %v5593 = vadd.f32 %v5400, %v5592
        %v5594 = vpop.f32.mrb[0].mxu0
        %v5595 = vadd.f32 %v5402, %v5594
        %5596 = vmatprep.mubr.bf16.mxu0 %v2901
        %5597 = vmatmul.mubr.bf16.gmra.mrb[0].mxu0 %v2900
        %v5598 = vpop.f32.mrb[0].mxu0
        %v5599 = vadd.f32 %v5406, %v5598
        %v5600 = vpop.f32.mrb[0].mxu0
        %v5601 = vadd.f32 %v5408, %v5600
        %v5602 = vpop.f32.mrb[0].mxu0
        %v5603 = vadd.f32 %v5410, %v5602
        %v5604 = vpop.f32.mrb[0].mxu0
        %v5605 = vadd.f32 %v5412, %v5604
        %5606 = vmatprep.mubr.bf16.mxu0 %v2909
        %5607 = vmatmul.mubr.bf16.gmra.mrb[0].mxu0 %v2908
        %v5608 = vpop.f32.mrb[0].mxu0
        %v5609 = vadd.f32 %v5416, %v5608
        %v5610 = vpop.f32.mrb[0].mxu0
        %v5611 = vadd.f32 %v5418, %v5610
        %v5612 = vpop.f32.mrb[0].mxu0
        %v5613 = vadd.f32 %v5420, %v5612
        %v5614 = vpop.f32.mrb[0].mxu0
        %v5615 = vadd.f32 %v5422, %v5614
        %5616 = vmatprep.mubr.bf16.mxu0 %v2917
        %5617 = vmatmul.mubr.bf16.gmra.mrb[0].mxu0 %v2916
        %v5618 = vpop.f32.mrb[0].mxu0
        %v5619 = vadd.f32 %v5426, %v5618
        %v5620 = vpop.f32.mrb[0].mxu0
        %v5621 = vadd.f32 %v5428, %v5620
        %v5622 = vpop.f32.mrb[0].mxu0
        %v5623 = vadd.f32 %v5430, %v5622
        %v5624 = vpop.f32.mrb[0].mxu0
        %v5625 = vadd.f32 %v5432, %v5624
        %5626 = vmatprep.mubr.bf16.mxu0 %v2925
        %5627 = vmatmul.mubr.bf16.gmra.mrb[0].mxu0 %v2924
        %v5628 = vpop.f32.mrb[0].mxu0
        %v5629 = vadd.f32 %v5436, %v5628
        %v5630 = vpop.f32.mrb[0].mxu0
        %v5631 = vadd.f32 %v5438, %v5630
        %v5632 = vpop.f32.mrb[0].mxu0
        %v5633 = vadd.f32 %v5440, %v5632
        %v5634 = vpop.f32.mrb[0].mxu0
        %v5635 = vadd.f32 %v5442, %v5634
        %5636 = vmatprep.mubr.bf16.mxu0 %v2933
        %5637 = vmatmul.mubr.bf16.gmra.mrb[0].mxu0 %v2932
        %v5638 = vpop.f32.mrb[0].mxu0
        %v5639 = vadd.f32 %v5446, %v5638
        %v5640 = vpop.f32.mrb[0].mxu0
        %v5641 = vadd.f32 %v5448, %v5640
        %v5642 = vpop.f32.mrb[0].mxu0
        %v5643 = vadd.f32 %v5450, %v5642
        %v5644 = vpop.f32.mrb[0].mxu0
        %v5645 = vadd.f32 %v5452, %v5644
        %5646 = vmatprep.mubr.bf16.mxu0 %v2941
        %5647 = vmatmul.mubr.bf16.gmra.mrb[0].mxu0 %v2940
        %v5648 = vpop.f32.mrb[0].mxu0
        %v5649 = vadd.f32 %v5456, %v5648
        %v5650 = vpop.f32.mrb[0].mxu0
        %v5651 = vadd.f32 %v5458, %v5650
        %v5652 = vpop.f32.mrb[0].mxu0
        %v5653 = vadd.f32 %v5460, %v5652
        %v5654 = vpop.f32.mrb[0].mxu0
        %v5655 = vadd.f32 %v5462, %v5654
        %5656 = vmatprep.mubr.bf16.mxu0 %v2949
        %5657 = vmatmul.mubr.bf16.gmra.mrb[0].mxu0 %v2948
        %v5658 = vpop.f32.mrb[0].mxu0
        %v5659 = vadd.f32 %v5466, %v5658
        %v5660 = vpop.f32.mrb[0].mxu0
        %v5661 = vadd.f32 %v5468, %v5660
        %v5662 = vpop.f32.mrb[0].mxu0
        %v5663 = vadd.f32 %v5470, %v5662
        %v5664 = vpop.f32.mrb[0].mxu0
        %v5665 = vadd.f32 %v5472, %v5664
        %5666 = vmatprep.mubr.bf16.mxu0 %v2957
        %5667 = vmatmul.mubr.bf16.gmra.mrb[0].mxu0 %v2956
        %v5668 = vpop.f32.mrb[0].mxu0
        %v5669 = vadd.f32 %v5476, %v5668
        %v5670 = vpop.f32.mrb[0].mxu0
        %v5671 = vadd.f32 %v5478, %v5670
        %v5672 = vpop.f32.mrb[0].mxu0
        %v5673 = vadd.f32 %v5480, %v5672
        %v5674 = vpop.f32.mrb[0].mxu0
        %v5675 = vadd.f32 %v5482, %v5674
        %5676 = vdwg.mxu0
        %5677 = vmatprep.subr.bf16.mxu0 %v4138
        %5678 = vmatpush1.bf16.msra.mxu0 %v4137
        %5679 = vmatprep.subr.bf16.mxu0 %v4142
        %5680 = vmatpush1.bf16.msra.mxu0 %v4141
        %5681 = vmatprep.subr.bf16.mxu0 %v4146
        %5682 = vmatpush1.bf16.msra.mxu0 %v4145
        %5683 = vmatprep.subr.bf16.mxu0 %v4150
        %5684 = vmatpush1.bf16.msra.mxu0 %v4149
        %5685 = vmatprep.subr.bf16.mxu0 %v4154
        %5686 = vmatpush1.bf16.msra.mxu0 %v4153
        %5687 = vmatprep.subr.bf16.mxu0 %v4158
        %5688 = vmatpush1.bf16.msra.mxu0 %v4157
        %5689 = vmatprep.subr.bf16.mxu0 %v4162
        %5690 = vmatpush1.bf16.msra.mxu0 %v4161
        %5691 = vmatprep.subr.bf16.mxu0 %v4166
        %5692 = vmatpush1.bf16.msra.mxu0 %v4165
        %5693 = vmatprep.subr.bf16.mxu0 %v4170
        %5694 = vmatpush1.bf16.msra.mxu0 %v4169
        %5695 = vmatprep.subr.bf16.mxu0 %v4174
        %5696 = vmatpush1.bf16.msra.mxu0 %v4173
        %5697 = vmatprep.subr.bf16.mxu0 %v4178
        %5698 = vmatpush1.bf16.msra.mxu0 %v4177
        %5699 = vmatprep.subr.bf16.mxu0 %v4182
        %5700 = vmatpush1.bf16.msra.mxu0 %v4181
        %5701 = vmatprep.subr.bf16.mxu0 %v4186
        %5702 = vmatpush1.bf16.msra.mxu0 %v4185
        %5703 = vmatprep.subr.bf16.mxu0 %v4190
        %5704 = vmatpush1.bf16.msra.mxu0 %v4189
        %5705 = vmatprep.subr.bf16.mxu0 %v4194
        %5706 = vmatpush1.bf16.msra.mxu0 %v4193
        %5707 = vmatprep.subr.bf16.mxu0 %v4198
        %5708 = vmatpush1.bf16.msra.mxu0 %v4197
        %5709 = vmatprep.mubr.bf16.mxu0 %v2839
        %5710 = vmatmul.mubr.bf16.gmra.mrb[0].mxu0 %v2838
        %v5711 = vpop.f32.mrb[0].mxu0
        %v5712 = vadd.f32 %v5519, %v5711
        %v5713 = vpop.f32.mrb[0].mxu0
        %v5714 = vadd.f32 %v5521, %v5713
        %v5715 = vpop.f32.mrb[0].mxu0
        %v5716 = vadd.f32 %v5523, %v5715
        %v5717 = vpop.f32.mrb[0].mxu0
        %v5718 = vadd.f32 %v5525, %v5717
        %5719 = vmatprep.mubr.bf16.mxu0 %v2847
        %5720 = vmatmul.mubr.bf16.gmra.mrb[0].mxu0 %v2846
        %v5721 = vpop.f32.mrb[0].mxu0
        %v5722 = vadd.f32 %v5529, %v5721
        %v5723 = vpop.f32.mrb[0].mxu0
        %v5724 = vadd.f32 %v5531, %v5723
        %v5725 = vpop.f32.mrb[0].mxu0
        %v5726 = vadd.f32 %v5533, %v5725
        %v5727 = vpop.f32.mrb[0].mxu0
        %v5728 = vadd.f32 %v5535, %v5727
        %5729 = vmatprep.mubr.bf16.mxu0 %v2855
        %5730 = vmatmul.mubr.bf16.gmra.mrb[0].mxu0 %v2854
        %v5731 = vpop.f32.mrb[0].mxu0
        %v5732 = vadd.f32 %v5539, %v5731
        %v5733 = vpop.f32.mrb[0].mxu0
        %v5734 = vadd.f32 %v5541, %v5733
        %v5735 = vpop.f32.mrb[0].mxu0
        %v5736 = vadd.f32 %v5543, %v5735
        %v5737 = vpop.f32.mrb[0].mxu0
        %v5738 = vadd.f32 %v5545, %v5737
        %5739 = vmatprep.mubr.bf16.mxu0 %v2863
        %5740 = vmatmul.mubr.bf16.gmra.mrb[0].mxu0 %v2862
        %v5741 = vpop.f32.mrb[0].mxu0
        %v5742 = vadd.f32 %v5549, %v5741
        %v5743 = vpop.f32.mrb[0].mxu0
        %v5744 = vadd.f32 %v5551, %v5743
        %v5745 = vpop.f32.mrb[0].mxu0
        %v5746 = vadd.f32 %v5553, %v5745
        %v5747 = vpop.f32.mrb[0].mxu0
        %v5748 = vadd.f32 %v5555, %v5747
        %5749 = vmatprep.mubr.bf16.mxu0 %v2871
        %5750 = vmatmul.mubr.bf16.gmra.mrb[0].mxu0 %v2870
        %v5751 = vpop.f32.mrb[0].mxu0
        %v5752 = vadd.f32 %v5559, %v5751
        %v5753 = vpop.f32.mrb[0].mxu0
        %v5754 = vadd.f32 %v5561, %v5753
        %v5755 = vpop.f32.mrb[0].mxu0
        %v5756 = vadd.f32 %v5563, %v5755
        %v5757 = vpop.f32.mrb[0].mxu0
        %v5758 = vadd.f32 %v5565, %v5757
        %5759 = vmatprep.mubr.bf16.mxu0 %v2879
        %5760 = vmatmul.mubr.bf16.gmra.mrb[0].mxu0 %v2878
        %v5761 = vpop.f32.mrb[0].mxu0
        %v5762 = vadd.f32 %v5569, %v5761
        %v5763 = vpop.f32.mrb[0].mxu0
        %v5764 = vadd.f32 %v5571, %v5763
        %v5765 = vpop.f32.mrb[0].mxu0
        %v5766 = vadd.f32 %v5573, %v5765
        %v5767 = vpop.f32.mrb[0].mxu0
        %v5768 = vadd.f32 %v5575, %v5767
        %5769 = vmatprep.mubr.bf16.mxu0 %v2887
        %5770 = vmatmul.mubr.bf16.gmra.mrb[0].mxu0 %v2886
        %v5771 = vpop.f32.mrb[0].mxu0
        %v5772 = vadd.f32 %v5579, %v5771
        %v5773 = vpop.f32.mrb[0].mxu0
        %v5774 = vadd.f32 %v5581, %v5773
        %v5775 = vpop.f32.mrb[0].mxu0
        %v5776 = vadd.f32 %v5583, %v5775
        %v5777 = vpop.f32.mrb[0].mxu0
        %v5778 = vadd.f32 %v5585, %v5777
        %5779 = vmatprep.mubr.bf16.mxu0 %v2895
        %5780 = vmatmul.mubr.bf16.gmra.mrb[0].mxu0 %v2894
        %v5781 = vpop.f32.mrb[0].mxu0
        %v5782 = vadd.f32 %v5589, %v5781
        %v5783 = vpop.f32.mrb[0].mxu0
        %v5784 = vadd.f32 %v5591, %v5783
        %v5785 = vpop.f32.mrb[0].mxu0
        %v5786 = vadd.f32 %v5593, %v5785
        %v5787 = vpop.f32.mrb[0].mxu0
        %v5788 = vadd.f32 %v5595, %v5787
        %5789 = vmatprep.mubr.bf16.mxu0 %v2903
        %5790 = vmatmul.mubr.bf16.gmra.mrb[0].mxu0 %v2902
        %v5791 = vpop.f32.mrb[0].mxu0
        %v5792 = vadd.f32 %v5599, %v5791
        %v5793 = vpop.f32.mrb[0].mxu0
        %v5794 = vadd.f32 %v5601, %v5793
        %v5795 = vpop.f32.mrb[0].mxu0
        %v5796 = vadd.f32 %v5603, %v5795
        %v5797 = vpop.f32.mrb[0].mxu0
        %v5798 = vadd.f32 %v5605, %v5797
        %5799 = vmatprep.mubr.bf16.mxu0 %v2911
        %5800 = vmatmul.mubr.bf16.gmra.mrb[0].mxu0 %v2910
        %v5801 = vpop.f32.mrb[0].mxu0
        %v5802 = vadd.f32 %v5609, %v5801
        %v5803 = vpop.f32.mrb[0].mxu0
        %v5804 = vadd.f32 %v5611, %v5803
        %v5805 = vpop.f32.mrb[0].mxu0
        %v5806 = vadd.f32 %v5613, %v5805
        %v5807 = vpop.f32.mrb[0].mxu0
        %v5808 = vadd.f32 %v5615, %v5807
        %5809 = vmatprep.mubr.bf16.mxu0 %v2919
        %5810 = vmatmul.mubr.bf16.gmra.mrb[0].mxu0 %v2918
        %v5811 = vpop.f32.mrb[0].mxu0
        %v5812 = vadd.f32 %v5619, %v5811
        %v5813 = vpop.f32.mrb[0].mxu0
        %v5814 = vadd.f32 %v5621, %v5813
        %v5815 = vpop.f32.mrb[0].mxu0
        %v5816 = vadd.f32 %v5623, %v5815
        %v5817 = vpop.f32.mrb[0].mxu0
        %v5818 = vadd.f32 %v5625, %v5817
        %5819 = vmatprep.mubr.bf16.mxu0 %v2927
        %5820 = vmatmul.mubr.bf16.gmra.mrb[0].mxu0 %v2926
        %v5821 = vpop.f32.mrb[0].mxu0
        %v5822 = vadd.f32 %v5629, %v5821
        %v5823 = vpop.f32.mrb[0].mxu0
        %v5824 = vadd.f32 %v5631, %v5823
        %v5825 = vpop.f32.mrb[0].mxu0
        %v5826 = vadd.f32 %v5633, %v5825
        %v5827 = vpop.f32.mrb[0].mxu0
        %v5828 = vadd.f32 %v5635, %v5827
        %5829 = vmatprep.mubr.bf16.mxu0 %v2935
        %5830 = vmatmul.mubr.bf16.gmra.mrb[0].mxu0 %v2934
        %v5831 = vpop.f32.mrb[0].mxu0
        %v5832 = vadd.f32 %v5639, %v5831
        %v5833 = vpop.f32.mrb[0].mxu0
        %v5834 = vadd.f32 %v5641, %v5833
        %v5835 = vpop.f32.mrb[0].mxu0
        %v5836 = vadd.f32 %v5643, %v5835
        %v5837 = vpop.f32.mrb[0].mxu0
        %v5838 = vadd.f32 %v5645, %v5837
        %5839 = vmatprep.mubr.bf16.mxu0 %v2943
        %5840 = vmatmul.mubr.bf16.gmra.mrb[0].mxu0 %v2942
        %v5841 = vpop.f32.mrb[0].mxu0
        %v5842 = vadd.f32 %v5649, %v5841
        %v5843 = vpop.f32.mrb[0].mxu0
        %v5844 = vadd.f32 %v5651, %v5843
        %v5845 = vpop.f32.mrb[0].mxu0
        %v5846 = vadd.f32 %v5653, %v5845
        %v5847 = vpop.f32.mrb[0].mxu0
        %v5848 = vadd.f32 %v5655, %v5847
        %5849 = vmatprep.mubr.bf16.mxu0 %v2951
        %5850 = vmatmul.mubr.bf16.gmra.mrb[0].mxu0 %v2950
        %v5851 = vpop.f32.mrb[0].mxu0
        %v5852 = vadd.f32 %v5659, %v5851
        %v5853 = vpop.f32.mrb[0].mxu0
        %v5854 = vadd.f32 %v5661, %v5853
        %v5855 = vpop.f32.mrb[0].mxu0
        %v5856 = vadd.f32 %v5663, %v5855
        %v5857 = vpop.f32.mrb[0].mxu0
        %v5858 = vadd.f32 %v5665, %v5857
        %5859 = vmatprep.mubr.bf16.mxu0 %v2959
        %5860 = vmatmul.mubr.bf16.gmra.mrb[0].mxu0 %v2958
        %v5861 = vpop.f32.mrb[0].mxu0
        %v5862 = vadd.f32 %v5669, %v5861
        %v5863 = vpop.f32.mrb[0].mxu0
        %v5864 = vadd.f32 %v5671, %v5863
        %v5865 = vpop.f32.mrb[0].mxu0
        %v5866 = vadd.f32 %v5673, %v5865
        %v5867 = vpop.f32.mrb[0].mxu0
        %v5868 = vadd.f32 %v5675, %v5867
        %5869 = vdwg.mxu0
        %5870 = vmatprep.subr.bf16.mxu0 %v4202
        %5871 = vmatpush1.bf16.msra.mxu0 %v4201
        %5872 = vmatprep.subr.bf16.mxu0 %v4206
        %5873 = vmatpush1.bf16.msra.mxu0 %v4205
        %5874 = vmatprep.subr.bf16.mxu0 %v4210
        %5875 = vmatpush1.bf16.msra.mxu0 %v4209
        %5876 = vmatprep.subr.bf16.mxu0 %v4214
        %5877 = vmatpush1.bf16.msra.mxu0 %v4213
        %5878 = vmatprep.subr.bf16.mxu0 %v4218
        %5879 = vmatpush1.bf16.msra.mxu0 %v4217
        %5880 = vmatprep.subr.bf16.mxu0 %v4222
        %5881 = vmatpush1.bf16.msra.mxu0 %v4221
        %5882 = vmatprep.subr.bf16.mxu0 %v4226
        %5883 = vmatpush1.bf16.msra.mxu0 %v4225
        %5884 = vmatprep.subr.bf16.mxu0 %v4230
        %5885 = vmatpush1.bf16.msra.mxu0 %v4229
        %5886 = vmatprep.subr.bf16.mxu0 %v4234
        %5887 = vmatpush1.bf16.msra.mxu0 %v4233
        %5888 = vmatprep.subr.bf16.mxu0 %v4238
        %5889 = vmatpush1.bf16.msra.mxu0 %v4237
        %5890 = vmatprep.subr.bf16.mxu0 %v4242
        %5891 = vmatpush1.bf16.msra.mxu0 %v4241
        %5892 = vmatprep.subr.bf16.mxu0 %v4246
        %5893 = vmatpush1.bf16.msra.mxu0 %v4245
        %5894 = vmatprep.subr.bf16.mxu0 %v4250
        %5895 = vmatpush1.bf16.msra.mxu0 %v4249
        %5896 = vmatprep.subr.bf16.mxu0 %v4254
        %5897 = vmatpush1.bf16.msra.mxu0 %v4253
        %5898 = vmatprep.subr.bf16.mxu0 %v4258
        %5899 = vmatpush1.bf16.msra.mxu0 %v4257
        %5900 = vmatprep.subr.bf16.mxu0 %v4262
        %5901 = vmatpush1.bf16.msra.mxu0 %v4261
        %5902 = vmatprep.mubr.bf16.mxu0 %v2841
        %5903 = vmatmul.mubr.bf16.gmra.mrb[0].mxu0 %v2840
        %v5904 = vpop.f32.mrb[0].mxu0
        %v5905 = vadd.f32 %v5712, %v5904
        %v5906 = vpop.f32.mrb[0].mxu0
        %v5907 = vadd.f32 %v5714, %v5906
        %v5908 = vpop.f32.mrb[0].mxu0
        %v5909 = vadd.f32 %v5716, %v5908
        %v5910 = vpop.f32.mrb[0].mxu0
        %v5911 = vadd.f32 %v5718, %v5910
        %5912 = vmatprep.mubr.bf16.mxu0 %v2849
        %5913 = vmatmul.mubr.bf16.gmra.mrb[0].mxu0 %v2848
        %v5914 = vpop.f32.mrb[0].mxu0
        %v5915 = vadd.f32 %v5722, %v5914
        %v5916 = vpop.f32.mrb[0].mxu0
        %v5917 = vadd.f32 %v5724, %v5916
        %v5918 = vpop.f32.mrb[0].mxu0
        %v5919 = vadd.f32 %v5726, %v5918
        %v5920 = vpop.f32.mrb[0].mxu0
        %v5921 = vadd.f32 %v5728, %v5920
        %5922 = vmatprep.mubr.bf16.mxu0 %v2857
        %5923 = vmatmul.mubr.bf16.gmra.mrb[0].mxu0 %v2856
        %v5924 = vpop.f32.mrb[0].mxu0
        %v5925 = vadd.f32 %v5732, %v5924
        %v5926 = vpop.f32.mrb[0].mxu0
        %v5927 = vadd.f32 %v5734, %v5926
        %v5928 = vpop.f32.mrb[0].mxu0
        %v5929 = vadd.f32 %v5736, %v5928
        %v5930 = vpop.f32.mrb[0].mxu0
        %v5931 = vadd.f32 %v5738, %v5930
        %5932 = vmatprep.mubr.bf16.mxu0 %v2865
        %5933 = vmatmul.mubr.bf16.gmra.mrb[0].mxu0 %v2864
        %v5934 = vpop.f32.mrb[0].mxu0
        %v5935 = vadd.f32 %v5742, %v5934
        %v5936 = vpop.f32.mrb[0].mxu0
        %v5937 = vadd.f32 %v5744, %v5936
        %v5938 = vpop.f32.mrb[0].mxu0
        %v5939 = vadd.f32 %v5746, %v5938
        %v5940 = vpop.f32.mrb[0].mxu0
        %v5941 = vadd.f32 %v5748, %v5940
        %5942 = vmatprep.mubr.bf16.mxu0 %v2873
        %5943 = vmatmul.mubr.bf16.gmra.mrb[0].mxu0 %v2872
        %v5944 = vpop.f32.mrb[0].mxu0
        %v5945 = vadd.f32 %v5752, %v5944
        %v5946 = vpop.f32.mrb[0].mxu0
        %v5947 = vadd.f32 %v5754, %v5946
        %v5948 = vpop.f32.mrb[0].mxu0
        %v5949 = vadd.f32 %v5756, %v5948
        %v5950 = vpop.f32.mrb[0].mxu0
        %v5951 = vadd.f32 %v5758, %v5950
        %5952 = vmatprep.mubr.bf16.mxu0 %v2881
        %5953 = vmatmul.mubr.bf16.gmra.mrb[0].mxu0 %v2880
        %v5954 = vpop.f32.mrb[0].mxu0
        %v5955 = vadd.f32 %v5762, %v5954
        %v5956 = vpop.f32.mrb[0].mxu0
        %v5957 = vadd.f32 %v5764, %v5956
        %v5958 = vpop.f32.mrb[0].mxu0
        %v5959 = vadd.f32 %v5766, %v5958
        %v5960 = vpop.f32.mrb[0].mxu0
        %v5961 = vadd.f32 %v5768, %v5960
        %5962 = vmatprep.mubr.bf16.mxu0 %v2889
        %5963 = vmatmul.mubr.bf16.gmra.mrb[0].mxu0 %v2888
        %v5964 = vpop.f32.mrb[0].mxu0
        %v5965 = vadd.f32 %v5772, %v5964
        %v5966 = vpop.f32.mrb[0].mxu0
        %v5967 = vadd.f32 %v5774, %v5966
        %v5968 = vpop.f32.mrb[0].mxu0
        %v5969 = vadd.f32 %v5776, %v5968
        %v5970 = vpop.f32.mrb[0].mxu0
        %v5971 = vadd.f32 %v5778, %v5970
        %5972 = vmatprep.mubr.bf16.mxu0 %v2897
        %5973 = vmatmul.mubr.bf16.gmra.mrb[0].mxu0 %v2896
        %v5974 = vpop.f32.mrb[0].mxu0
        %v5975 = vadd.f32 %v5782, %v5974
        %v5976 = vpop.f32.mrb[0].mxu0
        %v5977 = vadd.f32 %v5784, %v5976
        %v5978 = vpop.f32.mrb[0].mxu0
        %v5979 = vadd.f32 %v5786, %v5978
        %v5980 = vpop.f32.mrb[0].mxu0
        %v5981 = vadd.f32 %v5788, %v5980
        %5982 = vmatprep.mubr.bf16.mxu0 %v2905
        %5983 = vmatmul.mubr.bf16.gmra.mrb[0].mxu0 %v2904
        %v5984 = vpop.f32.mrb[0].mxu0
        %v5985 = vadd.f32 %v5792, %v5984
        %v5986 = vpop.f32.mrb[0].mxu0
        %v5987 = vadd.f32 %v5794, %v5986
        %v5988 = vpop.f32.mrb[0].mxu0
        %v5989 = vadd.f32 %v5796, %v5988
        %v5990 = vpop.f32.mrb[0].mxu0
        %v5991 = vadd.f32 %v5798, %v5990
        %5992 = vmatprep.mubr.bf16.mxu0 %v2913
        %5993 = vmatmul.mubr.bf16.gmra.mrb[0].mxu0 %v2912
        %v5994 = vpop.f32.mrb[0].mxu0
        %v5995 = vadd.f32 %v5802, %v5994
        %v5996 = vpop.f32.mrb[0].mxu0
        %v5997 = vadd.f32 %v5804, %v5996
        %v5998 = vpop.f32.mrb[0].mxu0
        %v5999 = vadd.f32 %v5806, %v5998
        %v6000 = vpop.f32.mrb[0].mxu0
        %v6001 = vadd.f32 %v5808, %v6000
        %6002 = vmatprep.mubr.bf16.mxu0 %v2921
        %6003 = vmatmul.mubr.bf16.gmra.mrb[0].mxu0 %v2920
        %v6004 = vpop.f32.mrb[0].mxu0
        %v6005 = vadd.f32 %v5812, %v6004
        %v6006 = vpop.f32.mrb[0].mxu0
        %v6007 = vadd.f32 %v5814, %v6006
        %v6008 = vpop.f32.mrb[0].mxu0
        %v6009 = vadd.f32 %v5816, %v6008
        %v6010 = vpop.f32.mrb[0].mxu0
        %v6011 = vadd.f32 %v5818, %v6010
        %6012 = vmatprep.mubr.bf16.mxu0 %v2929
        %6013 = vmatmul.mubr.bf16.gmra.mrb[0].mxu0 %v2928
        %v6014 = vpop.f32.mrb[0].mxu0
        %v6015 = vadd.f32 %v5822, %v6014
        %v6016 = vpop.f32.mrb[0].mxu0
        %v6017 = vadd.f32 %v5824, %v6016
        %v6018 = vpop.f32.mrb[0].mxu0
        %v6019 = vadd.f32 %v5826, %v6018
        %v6020 = vpop.f32.mrb[0].mxu0
        %v6021 = vadd.f32 %v5828, %v6020
        %6022 = vmatprep.mubr.bf16.mxu0 %v2937
        %6023 = vmatmul.mubr.bf16.gmra.mrb[0].mxu0 %v2936
        %v6024 = vpop.f32.mrb[0].mxu0
        %v6025 = vadd.f32 %v5832, %v6024
        %v6026 = vpop.f32.mrb[0].mxu0
        %v6027 = vadd.f32 %v5834, %v6026
        %v6028 = vpop.f32.mrb[0].mxu0
        %v6029 = vadd.f32 %v5836, %v6028
        %v6030 = vpop.f32.mrb[0].mxu0
        %v6031 = vadd.f32 %v5838, %v6030
        %6032 = vmatprep.mubr.bf16.mxu0 %v2945
        %6033 = vmatmul.mubr.bf16.gmra.mrb[0].mxu0 %v2944
        %v6034 = vpop.f32.mrb[0].mxu0
        %v6035 = vadd.f32 %v5842, %v6034
        %v6036 = vpop.f32.mrb[0].mxu0
        %v6037 = vadd.f32 %v5844, %v6036
        %v6038 = vpop.f32.mrb[0].mxu0
        %v6039 = vadd.f32 %v5846, %v6038
        %v6040 = vpop.f32.mrb[0].mxu0
        %v6041 = vadd.f32 %v5848, %v6040
        %6042 = vmatprep.mubr.bf16.mxu0 %v2953
        %6043 = vmatmul.mubr.bf16.gmra.mrb[0].mxu0 %v2952
        %v6044 = vpop.f32.mrb[0].mxu0
        %v6045 = vadd.f32 %v5852, %v6044
        %v6046 = vpop.f32.mrb[0].mxu0
        %v6047 = vadd.f32 %v5854, %v6046
        %v6048 = vpop.f32.mrb[0].mxu0
        %v6049 = vadd.f32 %v5856, %v6048
        %v6050 = vpop.f32.mrb[0].mxu0
        %v6051 = vadd.f32 %v5858, %v6050
        %6052 = vmatprep.mubr.bf16.mxu0 %v2961
        %6053 = vmatmul.mubr.bf16.gmra.mrb[0].mxu0 %v2960
        %v6054 = vpop.f32.mrb[0].mxu0
        %v6055 = vadd.f32 %v5862, %v6054
        %v6056 = vpop.f32.mrb[0].mxu0
        %v6057 = vadd.f32 %v5864, %v6056
        %v6058 = vpop.f32.mrb[0].mxu0
        %v6059 = vadd.f32 %v5866, %v6058
        %v6060 = vpop.f32.mrb[0].mxu0
        %v6061 = vadd.f32 %v5868, %v6060
        %6062 = vdwg.mxu0
        %v6063 = vmax.f32 %v5133, 0.0
        %v6064 = vmax.f32 %v5135, 0.0
        %v6065 = vmax.f32 %v5905, 0.0
        %v6066 = vmax.f32 %v5907, 0.0
        %v6067 = vmax.f32 %v5137, 0.0
        %v6068 = vmax.f32 %v5139, 0.0
        %v6069 = vmax.f32 %v5909, 0.0
        %v6070 = vmax.f32 %v5911, 0.0
        %v6071 = vmax.f32 %v5143, 0.0
        %v6072 = vmax.f32 %v5145, 0.0
        %v6073 = vmax.f32 %v5915, 0.0
        %v6074 = vmax.f32 %v5917, 0.0
        %v6075 = vmax.f32 %v5147, 0.0
        %v6076 = vmax.f32 %v5149, 0.0
        %v6077 = vmax.f32 %v5919, 0.0
        %v6078 = vmax.f32 %v5921, 0.0
        %v6079 = vmax.f32 %v5153, 0.0
        %v6080 = vmax.f32 %v5155, 0.0
        %v6081 = vmax.f32 %v5925, 0.0
        %v6082 = vmax.f32 %v5927, 0.0
        %v6083 = vmax.f32 %v5157, 0.0
        %v6084 = vmax.f32 %v5159, 0.0
        %v6085 = vmax.f32 %v5929, 0.0
        %v6086 = vmax.f32 %v5931, 0.0
        %v6087 = vmax.f32 %v5163, 0.0
        %v6088 = vmax.f32 %v5165, 0.0
        %v6089 = vmax.f32 %v5935, 0.0
        %v6090 = vmax.f32 %v5937, 0.0
        %v6091 = vmax.f32 %v5167, 0.0
        %v6092 = vmax.f32 %v5169, 0.0
        %v6093 = vmax.f32 %v5939, 0.0
        %v6094 = vmax.f32 %v5941, 0.0
        %v6095 = vmax.f32 %v5173, 0.0
        %v6096 = vmax.f32 %v5175, 0.0
        %v6097 = vmax.f32 %v5945, 0.0
        %v6098 = vmax.f32 %v5947, 0.0
        %v6099 = vmax.f32 %v5177, 0.0
        %v6100 = vmax.f32 %v5179, 0.0
        %v6101 = vmax.f32 %v5949, 0.0
        %v6102 = vmax.f32 %v5951, 0.0
        %v6103 = vmax.f32 %v5183, 0.0
        %v6104 = vmax.f32 %v5185, 0.0
        %v6105 = vmax.f32 %v5955, 0.0
        %v6106 = vmax.f32 %v5957, 0.0
        %v6107 = vmax.f32 %v5187, 0.0
        %v6108 = vmax.f32 %v5189, 0.0
        %v6109 = vmax.f32 %v5959, 0.0
        %v6110 = vmax.f32 %v5961, 0.0
        %v6111 = vmax.f32 %v5193, 0.0
        %v6112 = vmax.f32 %v5195, 0.0
        %v6113 = vmax.f32 %v5965, 0.0
        %v6114 = vmax.f32 %v5967, 0.0
        %v6115 = vmax.f32 %v5197, 0.0
        %v6116 = vmax.f32 %v5199, 0.0
        %v6117 = vmax.f32 %v5969, 0.0
        %v6118 = vmax.f32 %v5971, 0.0
        %v6119 = vmax.f32 %v5203, 0.0
        %v6120 = vmax.f32 %v5205, 0.0
        %v6121 = vmax.f32 %v5975, 0.0
        %v6122 = vmax.f32 %v5977, 0.0
        %v6123 = vmax.f32 %v5207, 0.0
        %v6124 = vmax.f32 %v5209, 0.0
        %v6125 = vmax.f32 %v5979, 0.0
        %v6126 = vmax.f32 %v5981, 0.0
        %v6127 = vmax.f32 %v5213, 0.0
        %v6128 = vmax.f32 %v5215, 0.0
        %v6129 = vmax.f32 %v5985, 0.0
        %v6130 = vmax.f32 %v5987, 0.0
        %v6131 = vmax.f32 %v5217, 0.0
        %v6132 = vmax.f32 %v5219, 0.0
        %v6133 = vmax.f32 %v5989, 0.0
        %v6134 = vmax.f32 %v5991, 0.0
        %v6135 = vmax.f32 %v5223, 0.0
        %v6136 = vmax.f32 %v5225, 0.0
        %v6137 = vmax.f32 %v5995, 0.0
        %v6138 = vmax.f32 %v5997, 0.0
        %v6139 = vmax.f32 %v5227, 0.0
        %v6140 = vmax.f32 %v5229, 0.0
        %v6141 = vmax.f32 %v5999, 0.0
        %v6142 = vmax.f32 %v6001, 0.0
        %v6143 = vmax.f32 %v5233, 0.0
        %v6144 = vmax.f32 %v5235, 0.0
        %v6145 = vmax.f32 %v6005, 0.0
        %v6146 = vmax.f32 %v6007, 0.0
        %v6147 = vmax.f32 %v5237, 0.0
        %v6148 = vmax.f32 %v5239, 0.0
        %v6149 = vmax.f32 %v6009, 0.0
        %v6150 = vmax.f32 %v6011, 0.0
        %v6151 = vmax.f32 %v5243, 0.0
        %v6152 = vmax.f32 %v5245, 0.0
        %v6153 = vmax.f32 %v6015, 0.0
        %v6154 = vmax.f32 %v6017, 0.0
        %v6155 = vmax.f32 %v5247, 0.0
        %v6156 = vmax.f32 %v5249, 0.0
        %v6157 = vmax.f32 %v6019, 0.0
        %v6158 = vmax.f32 %v6021, 0.0
        %v6159 = vmax.f32 %v5253, 0.0
        %v6160 = vmax.f32 %v5255, 0.0
        %v6161 = vmax.f32 %v6025, 0.0
        %v6162 = vmax.f32 %v6027, 0.0
        %v6163 = vmax.f32 %v5257, 0.0
        %v6164 = vmax.f32 %v5259, 0.0
        %v6165 = vmax.f32 %v6029, 0.0
        %v6166 = vmax.f32 %v6031, 0.0
        %v6167 = vmax.f32 %v5263, 0.0
        %v6168 = vmax.f32 %v5265, 0.0
        %v6169 = vmax.f32 %v6035, 0.0
        %v6170 = vmax.f32 %v6037, 0.0
        %v6171 = vmax.f32 %v5267, 0.0
        %v6172 = vmax.f32 %v5269, 0.0
        %v6173 = vmax.f32 %v6039, 0.0
        %v6174 = vmax.f32 %v6041, 0.0
        %v6175 = vmax.f32 %v5273, 0.0
        %v6176 = vmax.f32 %v5275, 0.0
        %v6177 = vmax.f32 %v6045, 0.0
        %v6178 = vmax.f32 %v6047, 0.0
        %v6179 = vmax.f32 %v5277, 0.0
        %v6180 = vmax.f32 %v5279, 0.0
        %v6181 = vmax.f32 %v6049, 0.0
        %v6182 = vmax.f32 %v6051, 0.0
        %v6183 = vmax.f32 %v5283, 0.0
        %v6184 = vmax.f32 %v5285, 0.0
        %v6185 = vmax.f32 %v6055, 0.0
        %v6186 = vmax.f32 %v6057, 0.0
        %v6187 = vmax.f32 %v5287, 0.0
        %v6188 = vmax.f32 %v5289, 0.0
        %v6189 = vmax.f32 %v6059, 0.0
        %v6190 = vmax.f32 %v6061, 0.0
        %v6191 = vadd.f32 %v6063, %v2706
        %v6192 = vadd.f32 %v6064, %v2707
        %v6193 = vadd.f32 %v6065, %v2708
        %v6194 = vadd.f32 %v6066, %v2709
        %v6195 = vadd.f32 %v6067, %v2710
        %v6196 = vadd.f32 %v6068, %v2711
        %v6197 = vadd.f32 %v6069, %v2712
        %v6198 = vadd.f32 %v6070, %v2713
        %v6199 = vadd.f32 %v6071, %v2714
        %v6200 = vadd.f32 %v6072, %v2715
        %v6201 = vadd.f32 %v6073, %v2716
        %v6202 = vadd.f32 %v6074, %v2717
        %v6203 = vadd.f32 %v6075, %v2718
        %v6204 = vadd.f32 %v6076, %v2719
        %v6205 = vadd.f32 %v6077, %v2720
        %v6206 = vadd.f32 %v6078, %v2721
        %v6207 = vadd.f32 %v6079, %v2722
        %v6208 = vadd.f32 %v6080, %v2723
        %v6209 = vadd.f32 %v6081, %v2724
        %v6210 = vadd.f32 %v6082, %v2725
        %v6211 = vadd.f32 %v6083, %v2726
        %v6212 = vadd.f32 %v6084, %v2727
        %v6213 = vadd.f32 %v6085, %v2728
        %v6214 = vadd.f32 %v6086, %v2729
        %v6215 = vadd.f32 %v6087, %v2730
        %v6216 = vadd.f32 %v6088, %v2731
        %v6217 = vadd.f32 %v6089, %v2732
        %v6218 = vadd.f32 %v6090, %v2733
        %v6219 = vadd.f32 %v6091, %v2734
        %v6220 = vadd.f32 %v6092, %v2735
        %v6221 = vadd.f32 %v6093, %v2736
        %v6222 = vadd.f32 %v6094, %v2737
        %v6223 = vadd.f32 %v6095, %v2738
        %v6224 = vadd.f32 %v6096, %v2739
        %v6225 = vadd.f32 %v6097, %v2740
        %v6226 = vadd.f32 %v6098, %v2741
        %v6227 = vadd.f32 %v6099, %v2742
        %v6228 = vadd.f32 %v6100, %v2743
        %v6229 = vadd.f32 %v6101, %v2744
        %v6230 = vadd.f32 %v6102, %v2745
        %v6231 = vadd.f32 %v6103, %v2746
        %v6232 = vadd.f32 %v6104, %v2747
        %v6233 = vadd.f32 %v6105, %v2748
        %v6234 = vadd.f32 %v6106, %v2749
        %v6235 = vadd.f32 %v6107, %v2750
        %v6236 = vadd.f32 %v6108, %v2751
        %v6237 = vadd.f32 %v6109, %v2752
        %v6238 = vadd.f32 %v6110, %v2753
        %v6239 = vadd.f32 %v6111, %v2754
        %v6240 = vadd.f32 %v6112, %v2755
        %v6241 = vadd.f32 %v6113, %v2756
        %v6242 = vadd.f32 %v6114, %v2757
        %v6243 = vadd.f32 %v6115, %v2758
        %v6244 = vadd.f32 %v6116, %v2759
        %v6245 = vadd.f32 %v6117, %v2760
        %v6246 = vadd.f32 %v6118, %v2761
        %v6247 = vadd.f32 %v6119, %v2762
        %v6248 = vadd.f32 %v6120, %v2763
        %v6249 = vadd.f32 %v6121, %v2764
        %v6250 = vadd.f32 %v6122, %v2765
        %v6251 = vadd.f32 %v6123, %v2766
        %v6252 = vadd.f32 %v6124, %v2767
        %v6253 = vadd.f32 %v6125, %v2768
        %v6254 = vadd.f32 %v6126, %v2769
        %v6255 = vadd.f32 %v6127, %v2770
        %v6256 = vadd.f32 %v6128, %v2771
        %v6257 = vadd.f32 %v6129, %v2772
        %v6258 = vadd.f32 %v6130, %v2773
        %v6259 = vadd.f32 %v6131, %v2774
        %v6260 = vadd.f32 %v6132, %v2775
        %v6261 = vadd.f32 %v6133, %v2776
        %v6262 = vadd.f32 %v6134, %v2777
        %v6263 = vadd.f32 %v6135, %v2778
        %v6264 = vadd.f32 %v6136, %v2779
        %v6265 = vadd.f32 %v6137, %v2780
        %v6266 = vadd.f32 %v6138, %v2781
        %v6267 = vadd.f32 %v6139, %v2782
        %v6268 = vadd.f32 %v6140, %v2783
        %v6269 = vadd.f32 %v6141, %v2784
        %v6270 = vadd.f32 %v6142, %v2785
        %v6271 = vadd.f32 %v6143, %v2786
        %v6272 = vadd.f32 %v6144, %v2787
        %v6273 = vadd.f32 %v6145, %v2788
        %v6274 = vadd.f32 %v6146, %v2789
        %v6275 = vadd.f32 %v6147, %v2790
        %v6276 = vadd.f32 %v6148, %v2791
        %v6277 = vadd.f32 %v6149, %v2792
        %v6278 = vadd.f32 %v6150, %v2793
        %v6279 = vadd.f32 %v6151, %v2794
        %v6280 = vadd.f32 %v6152, %v2795
        %v6281 = vadd.f32 %v6153, %v2796
        %v6282 = vadd.f32 %v6154, %v2797
        %v6283 = vadd.f32 %v6155, %v2798
        %v6284 = vadd.f32 %v6156, %v2799
        %v6285 = vadd.f32 %v6157, %v2800
        %v6286 = vadd.f32 %v6158, %v2801
        %v6287 = vadd.f32 %v6159, %v2802
        %v6288 = vadd.f32 %v6160, %v2803
        %v6289 = vadd.f32 %v6161, %v2804
        %v6290 = vadd.f32 %v6162, %v2805
        %v6291 = vadd.f32 %v6163, %v2806
        %v6292 = vadd.f32 %v6164, %v2807
        %v6293 = vadd.f32 %v6165, %v2808
        %v6294 = vadd.f32 %v6166, %v2809
        %v6295 = vadd.f32 %v6167, %v2810
        %v6296 = vadd.f32 %v6168, %v2811
        %v6297 = vadd.f32 %v6169, %v2812
        %v6298 = vadd.f32 %v6170, %v2813
        %v6299 = vadd.f32 %v6171, %v2814
        %v6300 = vadd.f32 %v6172, %v2815
        %v6301 = vadd.f32 %v6173, %v2816
        %v6302 = vadd.f32 %v6174, %v2817
        %v6303 = vadd.f32 %v6175, %v2818
        %v6304 = vadd.f32 %v6176, %v2819
        %v6305 = vadd.f32 %v6177, %v2820
        %v6306 = vadd.f32 %v6178, %v2821
        %v6307 = vadd.f32 %v6179, %v2822
        %v6308 = vadd.f32 %v6180, %v2823
        %v6309 = vadd.f32 %v6181, %v2824
        %v6310 = vadd.f32 %v6182, %v2825
        %v6311 = vadd.f32 %v6183, %v2826
        %v6312 = vadd.f32 %v6184, %v2827
        %v6313 = vadd.f32 %v6185, %v2828
        %v6314 = vadd.f32 %v6186, %v2829
        %v6315 = vadd.f32 %v6187, %v2830
        %v6316 = vadd.f32 %v6188, %v2831
        %v6317 = vadd.f32 %v6189, %v2832
        %v6318 = vadd.f32 %v6190, %v2833
        %v6319 = vpack.c.bf16 %v6195, %v6191
        %v6320 = vpack.c.bf16 %v6196, %v6192
        %v6321 = vpack.c.bf16 %v6197, %v6193
        %v6322 = vpack.c.bf16 %v6198, %v6194
        %v6323 = vpack.c.bf16 %v6203, %v6199
        %v6324 = vpack.c.bf16 %v6204, %v6200
        %v6325 = vpack.c.bf16 %v6205, %v6201
        %v6326 = vpack.c.bf16 %v6206, %v6202
        %v6327 = vpack.c.bf16 %v6211, %v6207
        %v6328 = vpack.c.bf16 %v6212, %v6208
        %v6329 = vpack.c.bf16 %v6213, %v6209
        %v6330 = vpack.c.bf16 %v6214, %v6210
        %v6331 = vpack.c.bf16 %v6219, %v6215
        %v6332 = vpack.c.bf16 %v6220, %v6216
        %v6333 = vpack.c.bf16 %v6221, %v6217
        %v6334 = vpack.c.bf16 %v6222, %v6218
        %v6335 = vpack.c.bf16 %v6227, %v6223
        %v6336 = vpack.c.bf16 %v6228, %v6224
        %v6337 = vpack.c.bf16 %v6229, %v6225
        %v6338 = vpack.c.bf16 %v6230, %v6226
        %v6339 = vpack.c.bf16 %v6235, %v6231
        %v6340 = vpack.c.bf16 %v6236, %v6232
        %v6341 = vpack.c.bf16 %v6237, %v6233
        %v6342 = vpack.c.bf16 %v6238, %v6234
        %v6343 = vpack.c.bf16 %v6243, %v6239
        %v6344 = vpack.c.bf16 %v6244, %v6240
        %v6345 = vpack.c.bf16 %v6245, %v6241
        %v6346 = vpack.c.bf16 %v6246, %v6242
        %v6347 = vpack.c.bf16 %v6251, %v6247
        %v6348 = vpack.c.bf16 %v6252, %v6248
        %v6349 = vpack.c.bf16 %v6253, %v6249
        %v6350 = vpack.c.bf16 %v6254, %v6250
        %v6351 = vpack.c.bf16 %v6259, %v6255
        %v6352 = vpack.c.bf16 %v6260, %v6256
        %v6353 = vpack.c.bf16 %v6261, %v6257
        %v6354 = vpack.c.bf16 %v6262, %v6258
        %v6355 = vpack.c.bf16 %v6267, %v6263
        %v6356 = vpack.c.bf16 %v6268, %v6264
        %v6357 = vpack.c.bf16 %v6269, %v6265
        %v6358 = vpack.c.bf16 %v6270, %v6266
        %v6359 = vpack.c.bf16 %v6275, %v6271
        %v6360 = vpack.c.bf16 %v6276, %v6272
        %v6361 = vpack.c.bf16 %v6277, %v6273
        %v6362 = vpack.c.bf16 %v6278, %v6274
        %v6363 = vpack.c.bf16 %v6283, %v6279
        %v6364 = vpack.c.bf16 %v6284, %v6280
        %v6365 = vpack.c.bf16 %v6285, %v6281
        %v6366 = vpack.c.bf16 %v6286, %v6282
        %v6367 = vpack.c.bf16 %v6291, %v6287
        %v6368 = vpack.c.bf16 %v6292, %v6288
        %v6369 = vpack.c.bf16 %v6293, %v6289
        %v6370 = vpack.c.bf16 %v6294, %v6290
        %v6371 = vpack.c.bf16 %v6299, %v6295
        %v6372 = vpack.c.bf16 %v6300, %v6296
        %v6373 = vpack.c.bf16 %v6301, %v6297
        %v6374 = vpack.c.bf16 %v6302, %v6298
        %v6375 = vpack.c.bf16 %v6307, %v6303
        %v6376 = vpack.c.bf16 %v6308, %v6304
        %v6377 = vpack.c.bf16 %v6309, %v6305
        %v6378 = vpack.c.bf16 %v6310, %v6306
        %v6379 = vpack.c.bf16 %v6315, %v6311
        %v6380 = vpack.c.bf16 %v6316, %v6312
        %v6381 = vpack.c.bf16 %v6317, %v6313
        %v6382 = vpack.c.bf16 %v6318, %v6314
        %v6383 = vld [vmem:[#allocation8] sm:$0xff]
        %v6384 = vld [vmem:[#allocation8 + $0x8] sm:$0xf]
        %v6385 = vld [vmem:[#allocation8 + $0xc] sm:$0xff]
        %v6386 = vld [vmem:[#allocation8 + $0x14] sm:$0xf]
        %v6387 = vld [vmem:[#allocation8 + $0x18] sm:$0xff]
        %v6388 = vld [vmem:[#allocation8 + $0x20] sm:$0xf]
        %v6389 = vld [vmem:[#allocation8 + $0x24] sm:$0xff]
        %v6390 = vld [vmem:[#allocation8 + $0x2c] sm:$0xf]
        %v6391 = vld [vmem:[#allocation8 + $0x30] sm:$0xff]
        %v6392 = vld [vmem:[#allocation8 + $0x38] sm:$0xf]
        %v6393 = vld [vmem:[#allocation8 + $0x3c] sm:$0xff]
        %v6394 = vld [vmem:[#allocation8 + $0x44] sm:$0xf]
        %v6395 = vld [vmem:[#allocation8 + $0x48] sm:$0xff]
        %v6396 = vld [vmem:[#allocation8 + $0x50] sm:$0xf]
        %v6397 = vld [vmem:[#allocation8 + $0x54] sm:$0xff]
        %v6398 = vld [vmem:[#allocation8 + $0x5c] sm:$0xf]
        %v6399 = vld [vmem:[#allocation8 + $0x60] sm:$0xff]
        %v6400 = vld [vmem:[#allocation8 + $0x68] sm:$0xf]
        %v6401 = vld [vmem:[#allocation8 + $0x6c] sm:$0xff]
        %v6402 = vld [vmem:[#allocation8 + $0x74] sm:$0xf]
        %v6403 = vld [vmem:[#allocation8 + $0x78] sm:$0xff]
        %v6404 = vld [vmem:[#allocation8 + $0x80] sm:$0xf]
        %v6405 = vld [vmem:[#allocation8 + $0x84] sm:$0xff]
        %v6406 = vld [vmem:[#allocation8 + $0x8c] sm:$0xf]
        %v6407 = vld [vmem:[#allocation8 + $0x90] sm:$0xff]
        %v6408 = vld [vmem:[#allocation8 + $0x98] sm:$0xf]
        %v6409 = vld [vmem:[#allocation8 + $0x9c] sm:$0xff]
        %v6410 = vld [vmem:[#allocation8 + $0xa4] sm:$0xf]
        %v6411 = vld [vmem:[#allocation8 + $0xa8] sm:$0xff]
        %v6412 = vld [vmem:[#allocation8 + $0xb0] sm:$0xf]
        %v6413 = vld [vmem:[#allocation8 + $0xb4] sm:$0xff]
        %v6414 = vld [vmem:[#allocation8 + $0xbc] sm:$0xf]
        %v6415 = vld [vmem:[#allocation8 + $0xc0] sm:$0xff]
        %v6416 = vld [vmem:[#allocation8 + $0xc8] sm:$0xf]
        %v6417 = vld [vmem:[#allocation8 + $0xcc] sm:$0xff]
        %v6418 = vld [vmem:[#allocation8 + $0xd4] sm:$0xf]
        %v6419 = vld [vmem:[#allocation8 + $0xd8] sm:$0xff]
        %v6420 = vld [vmem:[#allocation8 + $0xe0] sm:$0xf]
        %v6421 = vld [vmem:[#allocation8 + $0xe4] sm:$0xff]
        %v6422 = vld [vmem:[#allocation8 + $0xec] sm:$0xf]
        %v6423 = vld [vmem:[#allocation8 + $0xf0] sm:$0xff]
        %v6424 = vld [vmem:[#allocation8 + $0xf8] sm:$0xf]
        %v6425 = vld [vmem:[#allocation8 + $0xfc] sm:$0xff]
        %v6426 = vld [vmem:[#allocation8 + $0x104] sm:$0xf]
        %v6427 = vld [vmem:[#allocation8 + $0x108] sm:$0xff]
        %v6428 = vld [vmem:[#allocation8 + $0x110] sm:$0xf]
        %v6429 = vld [vmem:[#allocation8 + $0x114] sm:$0xff]
        %v6430 = vld [vmem:[#allocation8 + $0x11c] sm:$0xf]
        %v6431 = vld [vmem:[#allocation8 + $0x120] sm:$0xff]
        %v6432 = vld [vmem:[#allocation8 + $0x128] sm:$0xf]
        %v6433 = vld [vmem:[#allocation8 + $0x12c] sm:$0xff]
        %v6434 = vld [vmem:[#allocation8 + $0x134] sm:$0xf]
        %v6435 = vld [vmem:[#allocation8 + $0x138] sm:$0xff]
        %v6436 = vld [vmem:[#allocation8 + $0x140] sm:$0xf]
        %v6437 = vld [vmem:[#allocation8 + $0x144] sm:$0xff]
        %v6438 = vld [vmem:[#allocation8 + $0x14c] sm:$0xf]
        %v6439 = vld [vmem:[#allocation8 + $0x150] sm:$0xff]
        %v6440 = vld [vmem:[#allocation8 + $0x158] sm:$0xf]
        %v6441 = vld [vmem:[#allocation8 + $0x15c] sm:$0xff]
        %v6442 = vld [vmem:[#allocation8 + $0x164] sm:$0xf]
        %v6443 = vld [vmem:[#allocation8 + $0x168] sm:$0xff]
        %v6444 = vld [vmem:[#allocation8 + $0x170] sm:$0xf]
        %v6445 = vld [vmem:[#allocation8 + $0x174] sm:$0xff]
        %v6446 = vld [vmem:[#allocation8 + $0x17c] sm:$0xf]
        %v6447 = vld [vmem:[#allocation8 + $0x180] sm:$0xff]
        %v6448 = vld [vmem:[#allocation8 + $0x188] sm:$0xf]
        %v6449 = vld [vmem:[#allocation8 + $0x18c] sm:$0xff]
        %v6450 = vld [vmem:[#allocation8 + $0x194] sm:$0xf]
        %v6451 = vld [vmem:[#allocation8 + $0x198] sm:$0xff]
        %v6452 = vld [vmem:[#allocation8 + $0x1a0] sm:$0xf]
        %v6453 = vld [vmem:[#allocation8 + $0x1a4] sm:$0xff]
        %v6454 = vld [vmem:[#allocation8 + $0x1ac] sm:$0xf]
        %v6455 = vld [vmem:[#allocation8 + $0x1b0] sm:$0xff]
        %v6456 = vld [vmem:[#allocation8 + $0x1b8] sm:$0xf]
        %v6457 = vld [vmem:[#allocation8 + $0x1bc] sm:$0xff]
        %v6458 = vld [vmem:[#allocation8 + $0x1c4] sm:$0xf]
        %v6459 = vld [vmem:[#allocation8 + $0x1c8] sm:$0xff]
        %v6460 = vld [vmem:[#allocation8 + $0x1d0] sm:$0xf]
        %v6461 = vld [vmem:[#allocation8 + $0x1d4] sm:$0xff]
        %v6462 = vld [vmem:[#allocation8 + $0x1dc] sm:$0xf]
        %v6463 = vld [vmem:[#allocation8 + $0x1e0] sm:$0xff]
        %v6464 = vld [vmem:[#allocation8 + $0x1e8] sm:$0xf]
        %v6465 = vld [vmem:[#allocation8 + $0x1ec] sm:$0xff]
        %v6466 = vld [vmem:[#allocation8 + $0x1f4] sm:$0xf]
        %v6467 = vld [vmem:[#allocation8 + $0x1f8] sm:$0xff]
        %v6468 = vld [vmem:[#allocation8 + $0x200] sm:$0xf]
        %v6469 = vld [vmem:[#allocation8 + $0x204] sm:$0xff]
        %v6470 = vld [vmem:[#allocation8 + $0x20c] sm:$0xf]
        %v6471 = vld [vmem:[#allocation8 + $0x210] sm:$0xff]
        %v6472 = vld [vmem:[#allocation8 + $0x218] sm:$0xf]
        %v6473 = vld [vmem:[#allocation8 + $0x21c] sm:$0xff]
        %v6474 = vld [vmem:[#allocation8 + $0x224] sm:$0xf]
        %v6475 = vld [vmem:[#allocation8 + $0x228] sm:$0xff]
        %v6476 = vld [vmem:[#allocation8 + $0x230] sm:$0xf]
        %v6477 = vld [vmem:[#allocation8 + $0x234] sm:$0xff]
        %v6478 = vld [vmem:[#allocation8 + $0x23c] sm:$0xf]
        %v6479 = vld [vmem:[#allocation8 + $0x240] sm:$0xff]
        %v6480 = vld [vmem:[#allocation8 + $0x248] sm:$0xf]
        %v6481 = vld [vmem:[#allocation8 + $0x24c] sm:$0xff]
        %v6482 = vld [vmem:[#allocation8 + $0x254] sm:$0xf]
        %v6483 = vld [vmem:[#allocation8 + $0x258] sm:$0xff]
        %v6484 = vld [vmem:[#allocation8 + $0x260] sm:$0xf]
        %v6485 = vld [vmem:[#allocation8 + $0x264] sm:$0xff]
        %v6486 = vld [vmem:[#allocation8 + $0x26c] sm:$0xf]
        %v6487 = vld [vmem:[#allocation8 + $0x270] sm:$0xff]
        %v6488 = vld [vmem:[#allocation8 + $0x278] sm:$0xf]
        %v6489 = vld [vmem:[#allocation8 + $0x27c] sm:$0xff]
        %v6490 = vld [vmem:[#allocation8 + $0x284] sm:$0xf]
        %v6491 = vld [vmem:[#allocation8 + $0x288] sm:$0xff]
        %v6492 = vld [vmem:[#allocation8 + $0x290] sm:$0xf]
        %v6493 = vld [vmem:[#allocation8 + $0x294] sm:$0xff]
        %v6494 = vld [vmem:[#allocation8 + $0x29c] sm:$0xf]
        %v6495 = vld [vmem:[#allocation8 + $0x2a0] sm:$0xff]
        %v6496 = vld [vmem:[#allocation8 + $0x2a8] sm:$0xf]
        %v6497 = vld [vmem:[#allocation8 + $0x2ac] sm:$0xff]
        %v6498 = vld [vmem:[#allocation8 + $0x2b4] sm:$0xf]
        %v6499 = vld [vmem:[#allocation8 + $0x2b8] sm:$0xff]
        %v6500 = vld [vmem:[#allocation8 + $0x2c0] sm:$0xf]
        %v6501 = vld [vmem:[#allocation8 + $0x2c4] sm:$0xff]
        %v6502 = vld [vmem:[#allocation8 + $0x2cc] sm:$0xf]
        %v6503 = vld [vmem:[#allocation8 + $0x2d0] sm:$0xff]
        %v6504 = vld [vmem:[#allocation8 + $0x2d8] sm:$0xf]
        %v6505 = vld [vmem:[#allocation8 + $0x2dc] sm:$0xff]
        %v6506 = vld [vmem:[#allocation8 + $0x2e4] sm:$0xf]
        %v6507 = vld [vmem:[#allocation8 + $0x2e8] sm:$0xff]
        %v6508 = vld [vmem:[#allocation8 + $0x2f0] sm:$0xf]
        %v6509 = vld [vmem:[#allocation8 + $0x2f4] sm:$0xff]
        %v6510 = vld [vmem:[#allocation8 + $0x2fc] sm:$0xf]
        %v6639 = vunpack.c.l.b16 %v6383
        %v6640 = vunpack.c.h.b16 %v6383
        %v6641 = vunpack.c.l.b16 %v6384
        %v6642 = vunpack.c.l.b16 %v6385
        %v6643 = vunpack.c.h.b16 %v6385
        %v6644 = vunpack.c.l.b16 %v6386
        %v6645 = vunpack.c.l.b16 %v6387
        %v6646 = vunpack.c.h.b16 %v6387
        %v6647 = vunpack.c.l.b16 %v6388
        %v6648 = vunpack.c.l.b16 %v6389
        %v6649 = vunpack.c.h.b16 %v6389
        %v6650 = vunpack.c.l.b16 %v6390
        %v6651 = vunpack.c.l.b16 %v6391
        %v6652 = vunpack.c.h.b16 %v6391
        %v6653 = vunpack.c.l.b16 %v6392
        %v6654 = vunpack.c.l.b16 %v6393
        %v6655 = vunpack.c.h.b16 %v6393
        %v6656 = vunpack.c.l.b16 %v6394
        %v6657 = vunpack.c.l.b16 %v6395
        %v6658 = vunpack.c.h.b16 %v6395
        %v6659 = vunpack.c.l.b16 %v6396
        %v6660 = vunpack.c.l.b16 %v6397
        %v6661 = vunpack.c.h.b16 %v6397
        %v6662 = vunpack.c.l.b16 %v6398
        %v6663 = vunpack.c.l.b16 %v6399
        %v6664 = vunpack.c.h.b16 %v6399
        %v6665 = vunpack.c.l.b16 %v6400
        %v6666 = vunpack.c.l.b16 %v6401
        %v6667 = vunpack.c.h.b16 %v6401
        %v6668 = vunpack.c.l.b16 %v6402
        %v6669 = vunpack.c.l.b16 %v6403
        %v6670 = vunpack.c.h.b16 %v6403
        %v6671 = vunpack.c.l.b16 %v6404
        %v6672 = vunpack.c.l.b16 %v6405
        %v6673 = vunpack.c.h.b16 %v6405
        %v6674 = vunpack.c.l.b16 %v6406
        %v6675 = vunpack.c.l.b16 %v6407
        %v6676 = vunpack.c.h.b16 %v6407
        %v6677 = vunpack.c.l.b16 %v6408
        %v6678 = vunpack.c.l.b16 %v6409
        %v6679 = vunpack.c.h.b16 %v6409
        %v6680 = vunpack.c.l.b16 %v6410
        %v6681 = vunpack.c.l.b16 %v6411
        %v6682 = vunpack.c.h.b16 %v6411
        %v6683 = vunpack.c.l.b16 %v6412
        %v6684 = vunpack.c.l.b16 %v6413
        %v6685 = vunpack.c.h.b16 %v6413
        %v6686 = vunpack.c.l.b16 %v6414
        %v6687 = vunpack.c.l.b16 %v6415
        %v6688 = vunpack.c.h.b16 %v6415
        %v6689 = vunpack.c.l.b16 %v6416
        %v6690 = vunpack.c.l.b16 %v6417
        %v6691 = vunpack.c.h.b16 %v6417
        %v6692 = vunpack.c.l.b16 %v6418
        %v6693 = vunpack.c.l.b16 %v6419
        %v6694 = vunpack.c.h.b16 %v6419
        %v6695 = vunpack.c.l.b16 %v6420
        %v6696 = vunpack.c.l.b16 %v6421
        %v6697 = vunpack.c.h.b16 %v6421
        %v6698 = vunpack.c.l.b16 %v6422
        %v6699 = vunpack.c.l.b16 %v6423
        %v6700 = vunpack.c.h.b16 %v6423
        %v6701 = vunpack.c.l.b16 %v6424
        %v6702 = vunpack.c.l.b16 %v6425
        %v6703 = vunpack.c.h.b16 %v6425
        %v6704 = vunpack.c.l.b16 %v6426
        %v6705 = vunpack.c.l.b16 %v6427
        %v6706 = vunpack.c.h.b16 %v6427
        %v6707 = vunpack.c.l.b16 %v6428
        %v6708 = vunpack.c.l.b16 %v6429
        %v6709 = vunpack.c.h.b16 %v6429
        %v6710 = vunpack.c.l.b16 %v6430
        %v6711 = vunpack.c.l.b16 %v6431
        %v6712 = vunpack.c.h.b16 %v6431
        %v6713 = vunpack.c.l.b16 %v6432
        %v6714 = vunpack.c.l.b16 %v6433
        %v6715 = vunpack.c.h.b16 %v6433
        %v6716 = vunpack.c.l.b16 %v6434
        %v6717 = vunpack.c.l.b16 %v6435
        %v6718 = vunpack.c.h.b16 %v6435
        %v6719 = vunpack.c.l.b16 %v6436
        %v6720 = vunpack.c.l.b16 %v6437
        %v6721 = vunpack.c.h.b16 %v6437
        %v6722 = vunpack.c.l.b16 %v6438
        %v6723 = vunpack.c.l.b16 %v6439
        %v6724 = vunpack.c.h.b16 %v6439
        %v6725 = vunpack.c.l.b16 %v6440
        %v6726 = vunpack.c.l.b16 %v6441
        %v6727 = vunpack.c.h.b16 %v6441
        %v6728 = vunpack.c.l.b16 %v6442
        %v6729 = vunpack.c.l.b16 %v6443
        %v6730 = vunpack.c.h.b16 %v6443
        %v6731 = vunpack.c.l.b16 %v6444
        %v6732 = vunpack.c.l.b16 %v6445
        %v6733 = vunpack.c.h.b16 %v6445
        %v6734 = vunpack.c.l.b16 %v6446
        %v6735 = vunpack.c.l.b16 %v6447
        %v6736 = vunpack.c.h.b16 %v6447
        %v6737 = vunpack.c.l.b16 %v6448
        %v6738 = vunpack.c.l.b16 %v6449
        %v6739 = vunpack.c.h.b16 %v6449
        %v6740 = vunpack.c.l.b16 %v6450
        %v6741 = vunpack.c.l.b16 %v6451
        %v6742 = vunpack.c.h.b16 %v6451
        %v6743 = vunpack.c.l.b16 %v6452
        %v6744 = vunpack.c.l.b16 %v6453
        %v6745 = vunpack.c.h.b16 %v6453
        %v6746 = vunpack.c.l.b16 %v6454
        %v6747 = vunpack.c.l.b16 %v6455
        %v6748 = vunpack.c.h.b16 %v6455
        %v6749 = vunpack.c.l.b16 %v6456
        %v6750 = vunpack.c.l.b16 %v6457
        %v6751 = vunpack.c.h.b16 %v6457
        %v6752 = vunpack.c.l.b16 %v6458
        %v6753 = vunpack.c.l.b16 %v6459
        %v6754 = vunpack.c.h.b16 %v6459
        %v6755 = vunpack.c.l.b16 %v6460
        %v6756 = vunpack.c.l.b16 %v6461
        %v6757 = vunpack.c.h.b16 %v6461
        %v6758 = vunpack.c.l.b16 %v6462
        %v6759 = vunpack.c.l.b16 %v6463
        %v6760 = vunpack.c.h.b16 %v6463
        %v6761 = vunpack.c.l.b16 %v6464
        %v6762 = vunpack.c.l.b16 %v6465
        %v6763 = vunpack.c.h.b16 %v6465
        %v6764 = vunpack.c.l.b16 %v6466
        %v6765 = vunpack.c.l.b16 %v6467
        %v6766 = vunpack.c.h.b16 %v6467
        %v6767 = vunpack.c.l.b16 %v6468
        %v6768 = vunpack.c.l.b16 %v6469
        %v6769 = vunpack.c.h.b16 %v6469
        %v6770 = vunpack.c.l.b16 %v6470
        %v6771 = vunpack.c.l.b16 %v6471
        %v6772 = vunpack.c.h.b16 %v6471
        %v6773 = vunpack.c.l.b16 %v6472
        %v6774 = vunpack.c.l.b16 %v6473
        %v6775 = vunpack.c.h.b16 %v6473
        %v6776 = vunpack.c.l.b16 %v6474
        %v6777 = vunpack.c.l.b16 %v6475
        %v6778 = vunpack.c.h.b16 %v6475
        %v6779 = vunpack.c.l.b16 %v6476
        %v6780 = vunpack.c.l.b16 %v6477
        %v6781 = vunpack.c.h.b16 %v6477
        %v6782 = vunpack.c.l.b16 %v6478
        %v6783 = vunpack.c.l.b16 %v6479
        %v6784 = vunpack.c.h.b16 %v6479
        %v6785 = vunpack.c.l.b16 %v6480
        %v6786 = vunpack.c.l.b16 %v6481
        %v6787 = vunpack.c.h.b16 %v6481
        %v6788 = vunpack.c.l.b16 %v6482
        %v6789 = vunpack.c.l.b16 %v6483
        %v6790 = vunpack.c.h.b16 %v6483
        %v6791 = vunpack.c.l.b16 %v6484
        %v6792 = vunpack.c.l.b16 %v6485
        %v6793 = vunpack.c.h.b16 %v6485
        %v6794 = vunpack.c.l.b16 %v6486
        %v6795 = vunpack.c.l.b16 %v6487
        %v6796 = vunpack.c.h.b16 %v6487
        %v6797 = vunpack.c.l.b16 %v6488
        %v6798 = vunpack.c.l.b16 %v6489
        %v6799 = vunpack.c.h.b16 %v6489
        %v6800 = vunpack.c.l.b16 %v6490
        %v6801 = vunpack.c.l.b16 %v6491
        %v6802 = vunpack.c.h.b16 %v6491
        %v6803 = vunpack.c.l.b16 %v6492
        %v6804 = vunpack.c.l.b16 %v6493
        %v6805 = vunpack.c.h.b16 %v6493
        %v6806 = vunpack.c.l.b16 %v6494
        %v6807 = vunpack.c.l.b16 %v6495
        %v6808 = vunpack.c.h.b16 %v6495
        %v6809 = vunpack.c.l.b16 %v6496
        %v6810 = vunpack.c.l.b16 %v6497
        %v6811 = vunpack.c.h.b16 %v6497
        %v6812 = vunpack.c.l.b16 %v6498
        %v6813 = vunpack.c.l.b16 %v6499
        %v6814 = vunpack.c.h.b16 %v6499
        %v6815 = vunpack.c.l.b16 %v6500
        %v6816 = vunpack.c.l.b16 %v6501
        %v6817 = vunpack.c.h.b16 %v6501
        %v6818 = vunpack.c.l.b16 %v6502
        %v6819 = vunpack.c.l.b16 %v6503
        %v6820 = vunpack.c.h.b16 %v6503
        %v6821 = vunpack.c.l.b16 %v6504
        %v6822 = vunpack.c.l.b16 %v6505
        %v6823 = vunpack.c.h.b16 %v6505
        %v6824 = vunpack.c.l.b16 %v6506
        %v6825 = vunpack.c.l.b16 %v6507
        %v6826 = vunpack.c.h.b16 %v6507
        %v6827 = vunpack.c.l.b16 %v6508
        %v6828 = vunpack.c.l.b16 %v6509
        %v6829 = vunpack.c.h.b16 %v6509
        %v6830 = vunpack.c.l.b16 %v6510
        %v6831 = vpack.c.b16 %v6642, %v6639
        %v6832 = vpack.c.b16 %v6643, %v6640
        %v6833 = vpack.c.b16 %v6644, %v6641
        %v6834 = vpack.c.b16 %v6648, %v6645
        %v6835 = vpack.c.b16 %v6649, %v6646
        %v6836 = vpack.c.b16 %v6650, %v6647
        %v6837 = vpack.c.b16 %v6654, %v6651
        %v6838 = vpack.c.b16 %v6655, %v6652
        %v6839 = vpack.c.b16 %v6656, %v6653
        %v6840 = vpack.c.b16 %v6660, %v6657
        %v6841 = vpack.c.b16 %v6661, %v6658
        %v6842 = vpack.c.b16 %v6662, %v6659
        %v6843 = vpack.c.b16 %v6666, %v6663
        %v6844 = vpack.c.b16 %v6667, %v6664
        %v6845 = vpack.c.b16 %v6668, %v6665
        %v6846 = vpack.c.b16 %v6672, %v6669
        %v6847 = vpack.c.b16 %v6673, %v6670
        %v6848 = vpack.c.b16 %v6674, %v6671
        %v6849 = vpack.c.b16 %v6678, %v6675
        %v6850 = vpack.c.b16 %v6679, %v6676
        %v6851 = vpack.c.b16 %v6680, %v6677
        %v6852 = vpack.c.b16 %v6684, %v6681
        %v6853 = vpack.c.b16 %v6685, %v6682
        %v6854 = vpack.c.b16 %v6686, %v6683
        %v6855 = vpack.c.b16 %v6690, %v6687
        %v6856 = vpack.c.b16 %v6691, %v6688
        %v6857 = vpack.c.b16 %v6692, %v6689
        %v6858 = vpack.c.b16 %v6696, %v6693
        %v6859 = vpack.c.b16 %v6697, %v6694
        %v6860 = vpack.c.b16 %v6698, %v6695
        %v6861 = vpack.c.b16 %v6702, %v6699
        %v6862 = vpack.c.b16 %v6703, %v6700
        %v6863 = vpack.c.b16 %v6704, %v6701
        %v6864 = vpack.c.b16 %v6708, %v6705
        %v6865 = vpack.c.b16 %v6709, %v6706
        %v6866 = vpack.c.b16 %v6710, %v6707
        %v6867 = vpack.c.b16 %v6714, %v6711
        %v6868 = vpack.c.b16 %v6715, %v6712
        %v6869 = vpack.c.b16 %v6716, %v6713
        %v6870 = vpack.c.b16 %v6720, %v6717
        %v6871 = vpack.c.b16 %v6721, %v6718
        %v6872 = vpack.c.b16 %v6722, %v6719
        %v6873 = vpack.c.b16 %v6726, %v6723
        %v6874 = vpack.c.b16 %v6727, %v6724
        %v6875 = vpack.c.b16 %v6728, %v6725
        %v6876 = vpack.c.b16 %v6732, %v6729
        %v6877 = vpack.c.b16 %v6733, %v6730
        %v6878 = vpack.c.b16 %v6734, %v6731
        %v6879 = vpack.c.b16 %v6738, %v6735
        %v6880 = vpack.c.b16 %v6739, %v6736
        %v6881 = vpack.c.b16 %v6740, %v6737
        %v6882 = vpack.c.b16 %v6744, %v6741
        %v6883 = vpack.c.b16 %v6745, %v6742
        %v6884 = vpack.c.b16 %v6746, %v6743
        %v6885 = vpack.c.b16 %v6750, %v6747
        %v6886 = vpack.c.b16 %v6751, %v6748
        %v6887 = vpack.c.b16 %v6752, %v6749
        %v6888 = vpack.c.b16 %v6756, %v6753
        %v6889 = vpack.c.b16 %v6757, %v6754
        %v6890 = vpack.c.b16 %v6758, %v6755
        %v6891 = vpack.c.b16 %v6762, %v6759
        %v6892 = vpack.c.b16 %v6763, %v6760
        %v6893 = vpack.c.b16 %v6764, %v6761
        %v6894 = vpack.c.b16 %v6768, %v6765
        %v6895 = vpack.c.b16 %v6769, %v6766
        %v6896 = vpack.c.b16 %v6770, %v6767
        %v6897 = vpack.c.b16 %v6774, %v6771
        %v6898 = vpack.c.b16 %v6775, %v6772
        %v6899 = vpack.c.b16 %v6776, %v6773
        %v6900 = vpack.c.b16 %v6780, %v6777
        %v6901 = vpack.c.b16 %v6781, %v6778
        %v6902 = vpack.c.b16 %v6782, %v6779
        %v6903 = vpack.c.b16 %v6786, %v6783
        %v6904 = vpack.c.b16 %v6787, %v6784
        %v6905 = vpack.c.b16 %v6788, %v6785
        %v6906 = vpack.c.b16 %v6792, %v6789
        %v6907 = vpack.c.b16 %v6793, %v6790
        %v6908 = vpack.c.b16 %v6794, %v6791
        %v6909 = vpack.c.b16 %v6798, %v6795
        %v6910 = vpack.c.b16 %v6799, %v6796
        %v6911 = vpack.c.b16 %v6800, %v6797
        %v6912 = vpack.c.b16 %v6804, %v6801
        %v6913 = vpack.c.b16 %v6805, %v6802
        %v6914 = vpack.c.b16 %v6806, %v6803
        %v6915 = vpack.c.b16 %v6810, %v6807
        %v6916 = vpack.c.b16 %v6811, %v6808
        %v6917 = vpack.c.b16 %v6812, %v6809
        %v6918 = vpack.c.b16 %v6816, %v6813
        %v6919 = vpack.c.b16 %v6817, %v6814
        %v6920 = vpack.c.b16 %v6818, %v6815
        %v6921 = vpack.c.b16 %v6822, %v6819
        %v6922 = vpack.c.b16 %v6823, %v6820
        %v6923 = vpack.c.b16 %v6824, %v6821
        %v6924 = vpack.c.b16 %v6828, %v6825
        %v6925 = vpack.c.b16 %v6829, %v6826
        %v6926 = vpack.c.b16 %v6830, %v6827
        %7023 = vmatprep.subr.bf16.mxu0 %v6832
        %7024 = vmatpush1.bf16.msra.mxu0 %v6831
        %7025 = vmatprep.subr.bf16.mxu0 %v6835
        %7026 = vmatpush1.bf16.msra.mxu0 %v6834
        %7027 = vmatprep.subr.bf16.mxu0 %v6838
        %7028 = vmatpush1.bf16.msra.mxu0 %v6837
        %7029 = vmatprep.subr.bf16.mxu0 %v6841
        %7030 = vmatpush1.bf16.msra.mxu0 %v6840
        %7031 = vmatprep.subr.bf16.mxu0 %v6844
        %7032 = vmatpush1.bf16.msra.mxu0 %v6843
        %7033 = vmatprep.subr.bf16.mxu0 %v6847
        %7034 = vmatpush1.bf16.msra.mxu0 %v6846
        %7035 = vmatprep.subr.bf16.mxu0 %v6850
        %7036 = vmatpush1.bf16.msra.mxu0 %v6849
        %7037 = vmatprep.subr.bf16.mxu0 %v6853
        %7038 = vmatpush1.bf16.msra.mxu0 %v6852
        %7039 = vmatprep.subr.bf16.mxu0 %v6856
        %7040 = vmatpush1.bf16.msra.mxu0 %v6855
        %7041 = vmatprep.subr.bf16.mxu0 %v6859
        %7042 = vmatpush1.bf16.msra.mxu0 %v6858
        %7043 = vmatprep.subr.bf16.mxu0 %v6862
        %7044 = vmatpush1.bf16.msra.mxu0 %v6861
        %7045 = vmatprep.subr.bf16.mxu0 %v6865
        %7046 = vmatpush1.bf16.msra.mxu0 %v6864
        %7047 = vmatprep.subr.bf16.mxu0 %v6868
        %7048 = vmatpush1.bf16.msra.mxu0 %v6867
        %7049 = vmatprep.subr.bf16.mxu0 %v6871
        %7050 = vmatpush1.bf16.msra.mxu0 %v6870
        %7051 = vmatprep.subr.bf16.mxu0 %v6874
        %7052 = vmatpush1.bf16.msra.mxu0 %v6873
        %7053 = vmatprep.subr.bf16.mxu0 %v6877
        %7054 = vmatpush1.bf16.msra.mxu0 %v6876
        %7055 = vmatprep.mubr.bf16.mxu0 %v6320
        %7056 = vmatmul.mubr.bf16.gmra.mrb[0].mxu0 %v6319
        %v7057 = vpop.f32.mrb[0].mxu0
        %v7058 = vadd.f32 0.0, %v7057
        %v7059 = vpop.f32.mrb[0].mxu0
        %v7060 = vadd.f32 0.0, %v7059
        %v7061 = vpop.f32.mrb[0].mxu0
        %v7062 = vadd.f32 0.0, %v7061
        %v7063 = vpop.f32.mrb[0].mxu0
        %v7064 = vadd.f32 0.0, %v7063
        %7065 = vmatprep.mubr.bf16.mxu0 %v6324
        %7066 = vmatmul.mubr.bf16.gmra.mrb[0].mxu0 %v6323
        %v7067 = vpop.f32.mrb[0].mxu0
        %v7068 = vadd.f32 0.0, %v7067
        %v7069 = vpop.f32.mrb[0].mxu0
        %v7070 = vadd.f32 0.0, %v7069
        %v7071 = vpop.f32.mrb[0].mxu0
        %v7072 = vadd.f32 0.0, %v7071
        %v7073 = vpop.f32.mrb[0].mxu0
        %v7074 = vadd.f32 0.0, %v7073
        %7075 = vmatprep.mubr.bf16.mxu0 %v6328
        %7076 = vmatmul.mubr.bf16.gmra.mrb[0].mxu0 %v6327
        %v7077 = vpop.f32.mrb[0].mxu0
        %v7078 = vadd.f32 0.0, %v7077
        %v7079 = vpop.f32.mrb[0].mxu0
        %v7080 = vadd.f32 0.0, %v7079
        %v7081 = vpop.f32.mrb[0].mxu0
        %v7082 = vadd.f32 0.0, %v7081
        %v7083 = vpop.f32.mrb[0].mxu0
        %v7084 = vadd.f32 0.0, %v7083
        %7085 = vmatprep.mubr.bf16.mxu0 %v6332
        %7086 = vmatmul.mubr.bf16.gmra.mrb[0].mxu0 %v6331
        %v7087 = vpop.f32.mrb[0].mxu0
        %v7088 = vadd.f32 0.0, %v7087
        %v7089 = vpop.f32.mrb[0].mxu0
        %v7090 = vadd.f32 0.0, %v7089
        %v7091 = vpop.f32.mrb[0].mxu0
        %v7092 = vadd.f32 0.0, %v7091
        %v7093 = vpop.f32.mrb[0].mxu0
        %v7094 = vadd.f32 0.0, %v7093
        %7095 = vmatprep.mubr.bf16.mxu0 %v6336
        %7096 = vmatmul.mubr.bf16.gmra.mrb[0].mxu0 %v6335
        %v7097 = vpop.f32.mrb[0].mxu0
        %v7098 = vadd.f32 0.0, %v7097
        %v7099 = vpop.f32.mrb[0].mxu0
        %v7100 = vadd.f32 0.0, %v7099
        %v7101 = vpop.f32.mrb[0].mxu0
        %v7102 = vadd.f32 0.0, %v7101
        %v7103 = vpop.f32.mrb[0].mxu0
        %v7104 = vadd.f32 0.0, %v7103
        %7105 = vmatprep.mubr.bf16.mxu0 %v6340
        %7106 = vmatmul.mubr.bf16.gmra.mrb[0].mxu0 %v6339
        %v7107 = vpop.f32.mrb[0].mxu0
        %v7108 = vadd.f32 0.0, %v7107
        %v7109 = vpop.f32.mrb[0].mxu0
        %v7110 = vadd.f32 0.0, %v7109
        %v7111 = vpop.f32.mrb[0].mxu0
        %v7112 = vadd.f32 0.0, %v7111
        %v7113 = vpop.f32.mrb[0].mxu0
        %v7114 = vadd.f32 0.0, %v7113
        %7115 = vmatprep.mubr.bf16.mxu0 %v6344
        %7116 = vmatmul.mubr.bf16.gmra.mrb[0].mxu0 %v6343
        %v7117 = vpop.f32.mrb[0].mxu0
        %v7118 = vadd.f32 0.0, %v7117
        %v7119 = vpop.f32.mrb[0].mxu0
        %v7120 = vadd.f32 0.0, %v7119
        %v7121 = vpop.f32.mrb[0].mxu0
        %v7122 = vadd.f32 0.0, %v7121
        %v7123 = vpop.f32.mrb[0].mxu0
        %v7124 = vadd.f32 0.0, %v7123
        %7125 = vmatprep.mubr.bf16.mxu0 %v6348
        %7126 = vmatmul.mubr.bf16.gmra.mrb[0].mxu0 %v6347
        %v7127 = vpop.f32.mrb[0].mxu0
        %v7128 = vadd.f32 0.0, %v7127
        %v7129 = vpop.f32.mrb[0].mxu0
        %v7130 = vadd.f32 0.0, %v7129
        %v7131 = vpop.f32.mrb[0].mxu0
        %v7132 = vadd.f32 0.0, %v7131
        %v7133 = vpop.f32.mrb[0].mxu0
        %v7134 = vadd.f32 0.0, %v7133
        %7135 = vmatprep.mubr.bf16.mxu0 %v6352
        %7136 = vmatmul.mubr.bf16.gmra.mrb[0].mxu0 %v6351
        %v7137 = vpop.f32.mrb[0].mxu0
        %v7138 = vadd.f32 0.0, %v7137
        %v7139 = vpop.f32.mrb[0].mxu0
        %v7140 = vadd.f32 0.0, %v7139
        %v7141 = vpop.f32.mrb[0].mxu0
        %v7142 = vadd.f32 0.0, %v7141
        %v7143 = vpop.f32.mrb[0].mxu0
        %v7144 = vadd.f32 0.0, %v7143
        %7145 = vmatprep.mubr.bf16.mxu0 %v6356
        %7146 = vmatmul.mubr.bf16.gmra.mrb[0].mxu0 %v6355
        %v7147 = vpop.f32.mrb[0].mxu0
        %v7148 = vadd.f32 0.0, %v7147
        %v7149 = vpop.f32.mrb[0].mxu0
        %v7150 = vadd.f32 0.0, %v7149
        %v7151 = vpop.f32.mrb[0].mxu0
        %v7152 = vadd.f32 0.0, %v7151
        %v7153 = vpop.f32.mrb[0].mxu0
        %v7154 = vadd.f32 0.0, %v7153
        %7155 = vmatprep.mubr.bf16.mxu0 %v6360
        %7156 = vmatmul.mubr.bf16.gmra.mrb[0].mxu0 %v6359
        %v7157 = vpop.f32.mrb[0].mxu0
        %v7158 = vadd.f32 0.0, %v7157
        %v7159 = vpop.f32.mrb[0].mxu0
        %v7160 = vadd.f32 0.0, %v7159
        %v7161 = vpop.f32.mrb[0].mxu0
        %v7162 = vadd.f32 0.0, %v7161
        %v7163 = vpop.f32.mrb[0].mxu0
        %v7164 = vadd.f32 0.0, %v7163
        %7165 = vmatprep.mubr.bf16.mxu0 %v6364
        %7166 = vmatmul.mubr.bf16.gmra.mrb[0].mxu0 %v6363
        %v7167 = vpop.f32.mrb[0].mxu0
        %v7168 = vadd.f32 0.0, %v7167
        %v7169 = vpop.f32.mrb[0].mxu0
        %v7170 = vadd.f32 0.0, %v7169
        %v7171 = vpop.f32.mrb[0].mxu0
        %v7172 = vadd.f32 0.0, %v7171
        %v7173 = vpop.f32.mrb[0].mxu0
        %v7174 = vadd.f32 0.0, %v7173
        %7175 = vmatprep.mubr.bf16.mxu0 %v6368
        %7176 = vmatmul.mubr.bf16.gmra.mrb[0].mxu0 %v6367
        %v7177 = vpop.f32.mrb[0].mxu0
        %v7178 = vadd.f32 0.0, %v7177
        %v7179 = vpop.f32.mrb[0].mxu0
        %v7180 = vadd.f32 0.0, %v7179
        %v7181 = vpop.f32.mrb[0].mxu0
        %v7182 = vadd.f32 0.0, %v7181
        %v7183 = vpop.f32.mrb[0].mxu0
        %v7184 = vadd.f32 0.0, %v7183
        %7185 = vmatprep.mubr.bf16.mxu0 %v6372
        %7186 = vmatmul.mubr.bf16.gmra.mrb[0].mxu0 %v6371
        %v7187 = vpop.f32.mrb[0].mxu0
        %v7188 = vadd.f32 0.0, %v7187
        %v7189 = vpop.f32.mrb[0].mxu0
        %v7190 = vadd.f32 0.0, %v7189
        %v7191 = vpop.f32.mrb[0].mxu0
        %v7192 = vadd.f32 0.0, %v7191
        %v7193 = vpop.f32.mrb[0].mxu0
        %v7194 = vadd.f32 0.0, %v7193
        %7195 = vmatprep.mubr.bf16.mxu0 %v6376
        %7196 = vmatmul.mubr.bf16.gmra.mrb[0].mxu0 %v6375
        %v7197 = vpop.f32.mrb[0].mxu0
        %v7198 = vadd.f32 0.0, %v7197
        %v7199 = vpop.f32.mrb[0].mxu0
        %v7200 = vadd.f32 0.0, %v7199
        %v7201 = vpop.f32.mrb[0].mxu0
        %v7202 = vadd.f32 0.0, %v7201
        %v7203 = vpop.f32.mrb[0].mxu0
        %v7204 = vadd.f32 0.0, %v7203
        %7205 = vmatprep.mubr.bf16.mxu0 %v6380
        %7206 = vmatmul.mubr.bf16.gmra.mrb[0].mxu0 %v6379
        %v7207 = vpop.f32.mrb[0].mxu0
        %v7208 = vadd.f32 0.0, %v7207
        %v7209 = vpop.f32.mrb[0].mxu0
        %v7210 = vadd.f32 0.0, %v7209
        %v7211 = vpop.f32.mrb[0].mxu0
        %v7212 = vadd.f32 0.0, %v7211
        %v7213 = vpop.f32.mrb[0].mxu0
        %v7214 = vadd.f32 0.0, %v7213
        %7215 = vdwg.mxu0
        %7216 = vmatprep.subr.bf16.mxu0 %v6880
        %7217 = vmatpush1.bf16.msra.mxu0 %v6879
        %7218 = vmatprep.subr.bf16.mxu0 %v6883
        %7219 = vmatpush1.bf16.msra.mxu0 %v6882
        %7220 = vmatprep.subr.bf16.mxu0 %v6886
        %7221 = vmatpush1.bf16.msra.mxu0 %v6885
        %7222 = vmatprep.subr.bf16.mxu0 %v6889
        %7223 = vmatpush1.bf16.msra.mxu0 %v6888
        %7224 = vmatprep.subr.bf16.mxu0 %v6892
        %7225 = vmatpush1.bf16.msra.mxu0 %v6891
        %7226 = vmatprep.subr.bf16.mxu0 %v6895
        %7227 = vmatpush1.bf16.msra.mxu0 %v6894
        %7228 = vmatprep.subr.bf16.mxu0 %v6898
        %7229 = vmatpush1.bf16.msra.mxu0 %v6897
        %7230 = vmatprep.subr.bf16.mxu0 %v6901
        %7231 = vmatpush1.bf16.msra.mxu0 %v6900
        %7232 = vmatprep.subr.bf16.mxu0 %v6904
        %7233 = vmatpush1.bf16.msra.mxu0 %v6903
        %7234 = vmatprep.subr.bf16.mxu0 %v6907
        %7235 = vmatpush1.bf16.msra.mxu0 %v6906
        %7236 = vmatprep.subr.bf16.mxu0 %v6910
        %7237 = vmatpush1.bf16.msra.mxu0 %v6909
        %7238 = vmatprep.subr.bf16.mxu0 %v6913
        %7239 = vmatpush1.bf16.msra.mxu0 %v6912
        %7240 = vmatprep.subr.bf16.mxu0 %v6916
        %7241 = vmatpush1.bf16.msra.mxu0 %v6915
        %7242 = vmatprep.subr.bf16.mxu0 %v6919
        %7243 = vmatpush1.bf16.msra.mxu0 %v6918
        %7244 = vmatprep.subr.bf16.mxu0 %v6922
        %7245 = vmatpush1.bf16.msra.mxu0 %v6921
        %7246 = vmatprep.subr.bf16.mxu0 %v6925
        %7247 = vmatpush1.bf16.msra.mxu0 %v6924
        %7248 = vmatprep.mubr.bf16.mxu0 %v6322
        %7249 = vmatmul.mubr.bf16.gmra.mrb[0].mxu0 %v6321
        %v7250 = vpop.f32.mrb[0].mxu0
        %v7251 = vadd.f32 %v7058, %v7250
        %v7252 = vpop.f32.mrb[0].mxu0
        %v7253 = vadd.f32 %v7060, %v7252
        %v7254 = vpop.f32.mrb[0].mxu0
        %v7255 = vadd.f32 %v7062, %v7254
        %v7256 = vpop.f32.mrb[0].mxu0
        %v7257 = vadd.f32 %v7064, %v7256
        %7258 = vmatprep.mubr.bf16.mxu0 %v6326
        %7259 = vmatmul.mubr.bf16.gmra.mrb[0].mxu0 %v6325
        %v7260 = vpop.f32.mrb[0].mxu0
        %v7261 = vadd.f32 %v7068, %v7260
        %v7262 = vpop.f32.mrb[0].mxu0
        %v7263 = vadd.f32 %v7070, %v7262
        %v7264 = vpop.f32.mrb[0].mxu0
        %v7265 = vadd.f32 %v7072, %v7264
        %v7266 = vpop.f32.mrb[0].mxu0
        %v7267 = vadd.f32 %v7074, %v7266
        %7268 = vmatprep.mubr.bf16.mxu0 %v6330
        %7269 = vmatmul.mubr.bf16.gmra.mrb[0].mxu0 %v6329
        %v7270 = vpop.f32.mrb[0].mxu0
        %v7271 = vadd.f32 %v7078, %v7270
        %v7272 = vpop.f32.mrb[0].mxu0
        %v7273 = vadd.f32 %v7080, %v7272
        %v7274 = vpop.f32.mrb[0].mxu0
        %v7275 = vadd.f32 %v7082, %v7274
        %v7276 = vpop.f32.mrb[0].mxu0
        %v7277 = vadd.f32 %v7084, %v7276
        %7278 = vmatprep.mubr.bf16.mxu0 %v6334
        %7279 = vmatmul.mubr.bf16.gmra.mrb[0].mxu0 %v6333
        %v7280 = vpop.f32.mrb[0].mxu0
        %v7281 = vadd.f32 %v7088, %v7280
        %v7282 = vpop.f32.mrb[0].mxu0
        %v7283 = vadd.f32 %v7090, %v7282
        %v7284 = vpop.f32.mrb[0].mxu0
        %v7285 = vadd.f32 %v7092, %v7284
        %v7286 = vpop.f32.mrb[0].mxu0
        %v7287 = vadd.f32 %v7094, %v7286
        %7288 = vmatprep.mubr.bf16.mxu0 %v6338
        %7289 = vmatmul.mubr.bf16.gmra.mrb[0].mxu0 %v6337
        %v7290 = vpop.f32.mrb[0].mxu0
        %v7291 = vadd.f32 %v7098, %v7290
        %v7292 = vpop.f32.mrb[0].mxu0
        %v7293 = vadd.f32 %v7100, %v7292
        %v7294 = vpop.f32.mrb[0].mxu0
        %v7295 = vadd.f32 %v7102, %v7294
        %v7296 = vpop.f32.mrb[0].mxu0
        %v7297 = vadd.f32 %v7104, %v7296
        %7298 = vmatprep.mubr.bf16.mxu0 %v6342
        %7299 = vmatmul.mubr.bf16.gmra.mrb[0].mxu0 %v6341
        %v7300 = vpop.f32.mrb[0].mxu0
        %v7301 = vadd.f32 %v7108, %v7300
        %v7302 = vpop.f32.mrb[0].mxu0
        %v7303 = vadd.f32 %v7110, %v7302
        %v7304 = vpop.f32.mrb[0].mxu0
        %v7305 = vadd.f32 %v7112, %v7304
        %v7306 = vpop.f32.mrb[0].mxu0
        %v7307 = vadd.f32 %v7114, %v7306
        %7308 = vmatprep.mubr.bf16.mxu0 %v6346
        %7309 = vmatmul.mubr.bf16.gmra.mrb[0].mxu0 %v6345
        %v7310 = vpop.f32.mrb[0].mxu0
        %v7311 = vadd.f32 %v7118, %v7310
        %v7312 = vpop.f32.mrb[0].mxu0
        %v7313 = vadd.f32 %v7120, %v7312
        %v7314 = vpop.f32.mrb[0].mxu0
        %v7315 = vadd.f32 %v7122, %v7314
        %v7316 = vpop.f32.mrb[0].mxu0
        %v7317 = vadd.f32 %v7124, %v7316
        %7318 = vmatprep.mubr.bf16.mxu0 %v6350
        %7319 = vmatmul.mubr.bf16.gmra.mrb[0].mxu0 %v6349
        %v7320 = vpop.f32.mrb[0].mxu0
        %v7321 = vadd.f32 %v7128, %v7320
        %v7322 = vpop.f32.mrb[0].mxu0
        %v7323 = vadd.f32 %v7130, %v7322
        %v7324 = vpop.f32.mrb[0].mxu0
        %v7325 = vadd.f32 %v7132, %v7324
        %v7326 = vpop.f32.mrb[0].mxu0
        %v7327 = vadd.f32 %v7134, %v7326
        %7328 = vmatprep.mubr.bf16.mxu0 %v6354
        %7329 = vmatmul.mubr.bf16.gmra.mrb[0].mxu0 %v6353
        %v7330 = vpop.f32.mrb[0].mxu0
        %v7331 = vadd.f32 %v7138, %v7330
        %v7332 = vpop.f32.mrb[0].mxu0
        %v7333 = vadd.f32 %v7140, %v7332
        %v7334 = vpop.f32.mrb[0].mxu0
        %v7335 = vadd.f32 %v7142, %v7334
        %v7336 = vpop.f32.mrb[0].mxu0
        %v7337 = vadd.f32 %v7144, %v7336
        %7338 = vmatprep.mubr.bf16.mxu0 %v6358
        %7339 = vmatmul.mubr.bf16.gmra.mrb[0].mxu0 %v6357
        %v7340 = vpop.f32.mrb[0].mxu0
        %v7341 = vadd.f32 %v7148, %v7340
        %v7342 = vpop.f32.mrb[0].mxu0
        %v7343 = vadd.f32 %v7150, %v7342
        %v7344 = vpop.f32.mrb[0].mxu0
        %v7345 = vadd.f32 %v7152, %v7344
        %v7346 = vpop.f32.mrb[0].mxu0
        %v7347 = vadd.f32 %v7154, %v7346
        %7348 = vmatprep.mubr.bf16.mxu0 %v6362
        %7349 = vmatmul.mubr.bf16.gmra.mrb[0].mxu0 %v6361
        %v7350 = vpop.f32.mrb[0].mxu0
        %v7351 = vadd.f32 %v7158, %v7350
        %v7352 = vpop.f32.mrb[0].mxu0
        %v7353 = vadd.f32 %v7160, %v7352
        %v7354 = vpop.f32.mrb[0].mxu0
        %v7355 = vadd.f32 %v7162, %v7354
        %v7356 = vpop.f32.mrb[0].mxu0
        %v7357 = vadd.f32 %v7164, %v7356
        %7358 = vmatprep.mubr.bf16.mxu0 %v6366
        %7359 = vmatmul.mubr.bf16.gmra.mrb[0].mxu0 %v6365
        %v7360 = vpop.f32.mrb[0].mxu0
        %v7361 = vadd.f32 %v7168, %v7360
        %v7362 = vpop.f32.mrb[0].mxu0
        %v7363 = vadd.f32 %v7170, %v7362
        %v7364 = vpop.f32.mrb[0].mxu0
        %v7365 = vadd.f32 %v7172, %v7364
        %v7366 = vpop.f32.mrb[0].mxu0
        %v7367 = vadd.f32 %v7174, %v7366
        %7368 = vmatprep.mubr.bf16.mxu0 %v6370
        %7369 = vmatmul.mubr.bf16.gmra.mrb[0].mxu0 %v6369
        %v7370 = vpop.f32.mrb[0].mxu0
        %v7371 = vadd.f32 %v7178, %v7370
        %v7372 = vpop.f32.mrb[0].mxu0
        %v7373 = vadd.f32 %v7180, %v7372
        %v7374 = vpop.f32.mrb[0].mxu0
        %v7375 = vadd.f32 %v7182, %v7374
        %v7376 = vpop.f32.mrb[0].mxu0
        %v7377 = vadd.f32 %v7184, %v7376
        %7378 = vmatprep.mubr.bf16.mxu0 %v6374
        %7379 = vmatmul.mubr.bf16.gmra.mrb[0].mxu0 %v6373
        %v7380 = vpop.f32.mrb[0].mxu0
        %v7381 = vadd.f32 %v7188, %v7380
        %v7382 = vpop.f32.mrb[0].mxu0
        %v7383 = vadd.f32 %v7190, %v7382
        %v7384 = vpop.f32.mrb[0].mxu0
        %v7385 = vadd.f32 %v7192, %v7384
        %v7386 = vpop.f32.mrb[0].mxu0
        %v7387 = vadd.f32 %v7194, %v7386
        %7388 = vmatprep.mubr.bf16.mxu0 %v6378
        %7389 = vmatmul.mubr.bf16.gmra.mrb[0].mxu0 %v6377
        %v7390 = vpop.f32.mrb[0].mxu0
        %v7391 = vadd.f32 %v7198, %v7390
        %v7392 = vpop.f32.mrb[0].mxu0
        %v7393 = vadd.f32 %v7200, %v7392
        %v7394 = vpop.f32.mrb[0].mxu0
        %v7395 = vadd.f32 %v7202, %v7394
        %v7396 = vpop.f32.mrb[0].mxu0
        %v7397 = vadd.f32 %v7204, %v7396
        %7398 = vmatprep.mubr.bf16.mxu0 %v6382
        %7399 = vmatmul.mubr.bf16.gmra.mrb[0].mxu0 %v6381
        %v7400 = vpop.f32.mrb[0].mxu0
        %v7401 = vadd.f32 %v7208, %v7400
        %v7402 = vpop.f32.mrb[0].mxu0
        %v7403 = vadd.f32 %v7210, %v7402
        %v7404 = vpop.f32.mrb[0].mxu0
        %v7405 = vadd.f32 %v7212, %v7404
        %v7406 = vpop.f32.mrb[0].mxu0
        %v7407 = vadd.f32 %v7214, %v7406
        %7408 = vdwg.mxu0
        %7409 = vmatprep.subr.bf16.mxu0 0
        %7410 = vmatpush1.bf16.msra.mxu0 %v6833
        %7411 = vmatprep.subr.bf16.mxu0 0
        %7412 = vmatpush1.bf16.msra.mxu0 %v6836
        %7413 = vmatprep.subr.bf16.mxu0 0
        %7414 = vmatpush1.bf16.msra.mxu0 %v6839
        %7415 = vmatprep.subr.bf16.mxu0 0
        %7416 = vmatpush1.bf16.msra.mxu0 %v6842
        %7417 = vmatprep.subr.bf16.mxu0 0
        %7418 = vmatpush1.bf16.msra.mxu0 %v6845
        %7419 = vmatprep.subr.bf16.mxu0 0
        %7420 = vmatpush1.bf16.msra.mxu0 %v6848
        %7421 = vmatprep.subr.bf16.mxu0 0
        %7422 = vmatpush1.bf16.msra.mxu0 %v6851
        %7423 = vmatprep.subr.bf16.mxu0 0
        %7424 = vmatpush1.bf16.msra.mxu0 %v6854
        %7425 = vmatprep.subr.bf16.mxu0 0
        %7426 = vmatpush1.bf16.msra.mxu0 %v6857
        %7427 = vmatprep.subr.bf16.mxu0 0
        %7428 = vmatpush1.bf16.msra.mxu0 %v6860
        %7429 = vmatprep.subr.bf16.mxu0 0
        %7430 = vmatpush1.bf16.msra.mxu0 %v6863
        %7431 = vmatprep.subr.bf16.mxu0 0
        %7432 = vmatpush1.bf16.msra.mxu0 %v6866
        %7433 = vmatprep.subr.bf16.mxu0 0
        %7434 = vmatpush1.bf16.msra.mxu0 %v6869
        %7435 = vmatprep.subr.bf16.mxu0 0
        %7436 = vmatpush1.bf16.msra.mxu0 %v6872
        %7437 = vmatprep.subr.bf16.mxu0 0
        %7438 = vmatpush1.bf16.msra.mxu0 %v6875
        %7439 = vmatprep.subr.bf16.mxu0 0
        %7440 = vmatpush1.bf16.msra.mxu0 %v6878
        %7441 = vmatprep.mubr.bf16.mxu0 %v6320
        %7442 = vmatmul.mubr.bf16.gmra.mrb[0].mxu0 %v6319
        %v7443 = vpop.f32.mrb[0].mxu0
        %v7444 = vadd.f32 0.0, %v7443
        %v7445 = vpop.f32.mrb[0].mxu0
        %v7446 = vpop.f32.mrb[0].mxu0
        %v7447 = vadd.f32 0.0, %v7446
        %v7448 = vpop.f32.mrb[0].mxu0
        %7449 = vmatprep.mubr.bf16.mxu0 %v6324
        %7450 = vmatmul.mubr.bf16.gmra.mrb[0].mxu0 %v6323
        %v7451 = vpop.f32.mrb[0].mxu0
        %v7452 = vadd.f32 0.0, %v7451
        %v7453 = vpop.f32.mrb[0].mxu0
        %v7454 = vpop.f32.mrb[0].mxu0
        %v7455 = vadd.f32 0.0, %v7454
        %v7456 = vpop.f32.mrb[0].mxu0
        %7457 = vmatprep.mubr.bf16.mxu0 %v6328
        %7458 = vmatmul.mubr.bf16.gmra.mrb[0].mxu0 %v6327
        %v7459 = vpop.f32.mrb[0].mxu0
        %v7460 = vadd.f32 0.0, %v7459
        %v7461 = vpop.f32.mrb[0].mxu0
        %v7462 = vpop.f32.mrb[0].mxu0
        %v7463 = vadd.f32 0.0, %v7462
        %v7464 = vpop.f32.mrb[0].mxu0
        %7465 = vmatprep.mubr.bf16.mxu0 %v6332
        %7466 = vmatmul.mubr.bf16.gmra.mrb[0].mxu0 %v6331
        %v7467 = vpop.f32.mrb[0].mxu0
        %v7468 = vadd.f32 0.0, %v7467
        %v7469 = vpop.f32.mrb[0].mxu0
        %v7470 = vpop.f32.mrb[0].mxu0
        %v7471 = vadd.f32 0.0, %v7470
        %v7472 = vpop.f32.mrb[0].mxu0
        %7473 = vmatprep.mubr.bf16.mxu0 %v6336
        %7474 = vmatmul.mubr.bf16.gmra.mrb[0].mxu0 %v6335
        %v7475 = vpop.f32.mrb[0].mxu0
        %v7476 = vadd.f32 0.0, %v7475
        %v7477 = vpop.f32.mrb[0].mxu0
        %v7478 = vpop.f32.mrb[0].mxu0
        %v7479 = vadd.f32 0.0, %v7478
        %v7480 = vpop.f32.mrb[0].mxu0
        %7481 = vmatprep.mubr.bf16.mxu0 %v6340
        %7482 = vmatmul.mubr.bf16.gmra.mrb[0].mxu0 %v6339
        %v7483 = vpop.f32.mrb[0].mxu0
        %v7484 = vadd.f32 0.0, %v7483
        %v7485 = vpop.f32.mrb[0].mxu0
        %v7486 = vpop.f32.mrb[0].mxu0
        %v7487 = vadd.f32 0.0, %v7486
        %v7488 = vpop.f32.mrb[0].mxu0
        %7489 = vmatprep.mubr.bf16.mxu0 %v6344
        %7490 = vmatmul.mubr.bf16.gmra.mrb[0].mxu0 %v6343
        %v7491 = vpop.f32.mrb[0].mxu0
        %v7492 = vadd.f32 0.0, %v7491
        %v7493 = vpop.f32.mrb[0].mxu0
        %v7494 = vpop.f32.mrb[0].mxu0
        %v7495 = vadd.f32 0.0, %v7494
        %v7496 = vpop.f32.mrb[0].mxu0
        %7497 = vmatprep.mubr.bf16.mxu0 %v6348
        %7498 = vmatmul.mubr.bf16.gmra.mrb[0].mxu0 %v6347
        %v7499 = vpop.f32.mrb[0].mxu0
        %v7500 = vadd.f32 0.0, %v7499
        %v7501 = vpop.f32.mrb[0].mxu0
        %v7502 = vpop.f32.mrb[0].mxu0
        %v7503 = vadd.f32 0.0, %v7502
        %v7504 = vpop.f32.mrb[0].mxu0
        %7505 = vmatprep.mubr.bf16.mxu0 %v6352
        %7506 = vmatmul.mubr.bf16.gmra.mrb[0].mxu0 %v6351
        %v7507 = vpop.f32.mrb[0].mxu0
        %v7508 = vadd.f32 0.0, %v7507
        %v7509 = vpop.f32.mrb[0].mxu0
        %v7510 = vpop.f32.mrb[0].mxu0
        %v7511 = vadd.f32 0.0, %v7510
        %v7512 = vpop.f32.mrb[0].mxu0
        %7513 = vmatprep.mubr.bf16.mxu0 %v6356
        %7514 = vmatmul.mubr.bf16.gmra.mrb[0].mxu0 %v6355
        %v7515 = vpop.f32.mrb[0].mxu0
        %v7516 = vadd.f32 0.0, %v7515
        %v7517 = vpop.f32.mrb[0].mxu0
        %v7518 = vpop.f32.mrb[0].mxu0
        %v7519 = vadd.f32 0.0, %v7518
        %v7520 = vpop.f32.mrb[0].mxu0
        %7521 = vmatprep.mubr.bf16.mxu0 %v6360
        %7522 = vmatmul.mubr.bf16.gmra.mrb[0].mxu0 %v6359
        %v7523 = vpop.f32.mrb[0].mxu0
        %v7524 = vadd.f32 0.0, %v7523
        %v7525 = vpop.f32.mrb[0].mxu0
        %v7526 = vpop.f32.mrb[0].mxu0
        %v7527 = vadd.f32 0.0, %v7526
        %v7528 = vpop.f32.mrb[0].mxu0
        %7529 = vmatprep.mubr.bf16.mxu0 %v6364
        %7530 = vmatmul.mubr.bf16.gmra.mrb[0].mxu0 %v6363
        %v7531 = vpop.f32.mrb[0].mxu0
        %v7532 = vadd.f32 0.0, %v7531
        %v7533 = vpop.f32.mrb[0].mxu0
        %v7534 = vpop.f32.mrb[0].mxu0
        %v7535 = vadd.f32 0.0, %v7534
        %v7536 = vpop.f32.mrb[0].mxu0
        %7537 = vmatprep.mubr.bf16.mxu0 %v6368
        %7538 = vmatmul.mubr.bf16.gmra.mrb[0].mxu0 %v6367
        %v7539 = vpop.f32.mrb[0].mxu0
        %v7540 = vadd.f32 0.0, %v7539
        %v7541 = vpop.f32.mrb[0].mxu0
        %v7542 = vpop.f32.mrb[0].mxu0
        %v7543 = vadd.f32 0.0, %v7542
        %v7544 = vpop.f32.mrb[0].mxu0
        %7545 = vmatprep.mubr.bf16.mxu0 %v6372
        %7546 = vmatmul.mubr.bf16.gmra.mrb[0].mxu0 %v6371
        %v7547 = vpop.f32.mrb[0].mxu0
        %v7548 = vadd.f32 0.0, %v7547
        %v7549 = vpop.f32.mrb[0].mxu0
        %v7550 = vpop.f32.mrb[0].mxu0
        %v7551 = vadd.f32 0.0, %v7550
        %v7552 = vpop.f32.mrb[0].mxu0
        %7553 = vmatprep.mubr.bf16.mxu0 %v6376
        %7554 = vmatmul.mubr.bf16.gmra.mrb[0].mxu0 %v6375
        %v7555 = vpop.f32.mrb[0].mxu0
        %v7556 = vadd.f32 0.0, %v7555
        %v7557 = vpop.f32.mrb[0].mxu0
        %v7558 = vpop.f32.mrb[0].mxu0
        %v7559 = vadd.f32 0.0, %v7558
        %v7560 = vpop.f32.mrb[0].mxu0
        %7561 = vmatprep.mubr.bf16.mxu0 %v6380
        %7562 = vmatmul.mubr.bf16.gmra.mrb[0].mxu0 %v6379
        %v7563 = vpop.f32.mrb[0].mxu0
        %v7564 = vadd.f32 0.0, %v7563
        %v7565 = vpop.f32.mrb[0].mxu0
        %v7566 = vpop.f32.mrb[0].mxu0
        %v7567 = vadd.f32 0.0, %v7566
        %v7568 = vpop.f32.mrb[0].mxu0
        %7569 = vdwg.mxu0
        %7570 = vmatprep.subr.bf16.mxu0 0
        %7571 = vmatpush1.bf16.msra.mxu0 %v6881
        %7572 = vmatprep.subr.bf16.mxu0 0
        %7573 = vmatpush1.bf16.msra.mxu0 %v6884
        %7574 = vmatprep.subr.bf16.mxu0 0
        %7575 = vmatpush1.bf16.msra.mxu0 %v6887
        %7576 = vmatprep.subr.bf16.mxu0 0
        %7577 = vmatpush1.bf16.msra.mxu0 %v6890
        %7578 = vmatprep.subr.bf16.mxu0 0
        %7579 = vmatpush1.bf16.msra.mxu0 %v6893
        %7580 = vmatprep.subr.bf16.mxu0 0
        %7581 = vmatpush1.bf16.msra.mxu0 %v6896
        %7582 = vmatprep.subr.bf16.mxu0 0
        %7583 = vmatpush1.bf16.msra.mxu0 %v6899
        %7584 = vmatprep.subr.bf16.mxu0 0
        %7585 = vmatpush1.bf16.msra.mxu0 %v6902
        %7586 = vmatprep.subr.bf16.mxu0 0
        %7587 = vmatpush1.bf16.msra.mxu0 %v6905
        %7588 = vmatprep.subr.bf16.mxu0 0
        %7589 = vmatpush1.bf16.msra.mxu0 %v6908
        %7590 = vmatprep.subr.bf16.mxu0 0
        %7591 = vmatpush1.bf16.msra.mxu0 %v6911
        %7592 = vmatprep.subr.bf16.mxu0 0
        %7593 = vmatpush1.bf16.msra.mxu0 %v6914
        %7594 = vmatprep.subr.bf16.mxu0 0
        %7595 = vmatpush1.bf16.msra.mxu0 %v6917
        %7596 = vmatprep.subr.bf16.mxu0 0
        %7597 = vmatpush1.bf16.msra.mxu0 %v6920
        %7598 = vmatprep.subr.bf16.mxu0 0
        %7599 = vmatpush1.bf16.msra.mxu0 %v6923
        %7600 = vmatprep.subr.bf16.mxu0 0
        %7601 = vmatpush1.bf16.msra.mxu0 %v6926
        %7602 = vmatprep.mubr.bf16.mxu0 %v6322
        %7603 = vmatmul.mubr.bf16.gmra.mrb[0].mxu0 %v6321
        %v7604 = vpop.f32.mrb[0].mxu0
        %v7605 = vadd.f32 %v7444, %v7604
        %v7606 = vpop.f32.mrb[0].mxu0
        %v7607 = vpop.f32.mrb[0].mxu0
        %v7608 = vadd.f32 %v7447, %v7607
        %v7609 = vpop.f32.mrb[0].mxu0
        %7610 = vmatprep.mubr.bf16.mxu0 %v6326
        %7611 = vmatmul.mubr.bf16.gmra.mrb[0].mxu0 %v6325
        %v7612 = vpop.f32.mrb[0].mxu0
        %v7613 = vadd.f32 %v7452, %v7612
        %v7614 = vpop.f32.mrb[0].mxu0
        %v7615 = vpop.f32.mrb[0].mxu0
        %v7616 = vadd.f32 %v7455, %v7615
        %v7617 = vpop.f32.mrb[0].mxu0
        %7618 = vmatprep.mubr.bf16.mxu0 %v6330
        %7619 = vmatmul.mubr.bf16.gmra.mrb[0].mxu0 %v6329
        %v7620 = vpop.f32.mrb[0].mxu0
        %v7621 = vadd.f32 %v7460, %v7620
        %v7622 = vpop.f32.mrb[0].mxu0
        %v7623 = vpop.f32.mrb[0].mxu0
        %v7624 = vadd.f32 %v7463, %v7623
        %v7625 = vpop.f32.mrb[0].mxu0
        %7626 = vmatprep.mubr.bf16.mxu0 %v6334
        %7627 = vmatmul.mubr.bf16.gmra.mrb[0].mxu0 %v6333
        %v7628 = vpop.f32.mrb[0].mxu0
        %v7629 = vadd.f32 %v7468, %v7628
        %v7630 = vpop.f32.mrb[0].mxu0
        %v7631 = vpop.f32.mrb[0].mxu0
        %v7632 = vadd.f32 %v7471, %v7631
        %v7633 = vpop.f32.mrb[0].mxu0
        %7634 = vmatprep.mubr.bf16.mxu0 %v6338
        %7635 = vmatmul.mubr.bf16.gmra.mrb[0].mxu0 %v6337
        %v7636 = vpop.f32.mrb[0].mxu0
        %v7637 = vadd.f32 %v7476, %v7636
        %v7638 = vpop.f32.mrb[0].mxu0
        %v7639 = vpop.f32.mrb[0].mxu0
        %v7640 = vadd.f32 %v7479, %v7639
        %v7641 = vpop.f32.mrb[0].mxu0
        %7642 = vmatprep.mubr.bf16.mxu0 %v6342
        %7643 = vmatmul.mubr.bf16.gmra.mrb[0].mxu0 %v6341
        %v7644 = vpop.f32.mrb[0].mxu0
        %v7645 = vadd.f32 %v7484, %v7644
        %v7646 = vpop.f32.mrb[0].mxu0
        %v7647 = vpop.f32.mrb[0].mxu0
        %v7648 = vadd.f32 %v7487, %v7647
        %v7649 = vpop.f32.mrb[0].mxu0
        %7650 = vmatprep.mubr.bf16.mxu0 %v6346
        %7651 = vmatmul.mubr.bf16.gmra.mrb[0].mxu0 %v6345
        %v7652 = vpop.f32.mrb[0].mxu0
        %v7653 = vadd.f32 %v7492, %v7652
        %v7654 = vpop.f32.mrb[0].mxu0
        %v7655 = vpop.f32.mrb[0].mxu0
        %v7656 = vadd.f32 %v7495, %v7655
        %v7657 = vpop.f32.mrb[0].mxu0
        %7658 = vmatprep.mubr.bf16.mxu0 %v6350
        %7659 = vmatmul.mubr.bf16.gmra.mrb[0].mxu0 %v6349
        %v7660 = vpop.f32.mrb[0].mxu0
        %v7661 = vadd.f32 %v7500, %v7660
        %v7662 = vpop.f32.mrb[0].mxu0
        %v7663 = vpop.f32.mrb[0].mxu0
        %v7664 = vadd.f32 %v7503, %v7663
        %v7665 = vpop.f32.mrb[0].mxu0
        %7666 = vmatprep.mubr.bf16.mxu0 %v6354
        %7667 = vmatmul.mubr.bf16.gmra.mrb[0].mxu0 %v6353
        %v7668 = vpop.f32.mrb[0].mxu0
        %v7669 = vadd.f32 %v7508, %v7668
        %v7670 = vpop.f32.mrb[0].mxu0
        %v7671 = vpop.f32.mrb[0].mxu0
        %v7672 = vadd.f32 %v7511, %v7671
        %v7673 = vpop.f32.mrb[0].mxu0
        %7674 = vmatprep.mubr.bf16.mxu0 %v6358
        %7675 = vmatmul.mubr.bf16.gmra.mrb[0].mxu0 %v6357
        %v7676 = vpop.f32.mrb[0].mxu0
        %v7677 = vadd.f32 %v7516, %v7676
        %v7678 = vpop.f32.mrb[0].mxu0
        %v7679 = vpop.f32.mrb[0].mxu0
        %v7680 = vadd.f32 %v7519, %v7679
        %v7681 = vpop.f32.mrb[0].mxu0
        %7682 = vmatprep.mubr.bf16.mxu0 %v6362
        %7683 = vmatmul.mubr.bf16.gmra.mrb[0].mxu0 %v6361
        %v7684 = vpop.f32.mrb[0].mxu0
        %v7685 = vadd.f32 %v7524, %v7684
        %v7686 = vpop.f32.mrb[0].mxu0
        %v7687 = vpop.f32.mrb[0].mxu0
        %v7688 = vadd.f32 %v7527, %v7687
        %v7689 = vpop.f32.mrb[0].mxu0
        %7690 = vmatprep.mubr.bf16.mxu0 %v6366
        %7691 = vmatmul.mubr.bf16.gmra.mrb[0].mxu0 %v6365
        %v7692 = vpop.f32.mrb[0].mxu0
        %v7693 = vadd.f32 %v7532, %v7692
        %v7694 = vpop.f32.mrb[0].mxu0
        %v7695 = vpop.f32.mrb[0].mxu0
        %v7696 = vadd.f32 %v7535, %v7695
        %v7697 = vpop.f32.mrb[0].mxu0
        %7698 = vmatprep.mubr.bf16.mxu0 %v6370
        %7699 = vmatmul.mubr.bf16.gmra.mrb[0].mxu0 %v6369
        %v7700 = vpop.f32.mrb[0].mxu0
        %v7701 = vadd.f32 %v7540, %v7700
        %v7702 = vpop.f32.mrb[0].mxu0
        %v7703 = vpop.f32.mrb[0].mxu0
        %v7704 = vadd.f32 %v7543, %v7703
        %v7705 = vpop.f32.mrb[0].mxu0
        %7706 = vmatprep.mubr.bf16.mxu0 %v6374
        %7707 = vmatmul.mubr.bf16.gmra.mrb[0].mxu0 %v6373
        %v7708 = vpop.f32.mrb[0].mxu0
        %v7709 = vadd.f32 %v7548, %v7708
        %v7710 = vpop.f32.mrb[0].mxu0
        %v7711 = vpop.f32.mrb[0].mxu0
        %v7712 = vadd.f32 %v7551, %v7711
        %v7713 = vpop.f32.mrb[0].mxu0
        %7714 = vmatprep.mubr.bf16.mxu0 %v6378
        %7715 = vmatmul.mubr.bf16.gmra.mrb[0].mxu0 %v6377
        %v7716 = vpop.f32.mrb[0].mxu0
        %v7717 = vadd.f32 %v7556, %v7716
        %v7718 = vpop.f32.mrb[0].mxu0
        %v7719 = vpop.f32.mrb[0].mxu0
        %v7720 = vadd.f32 %v7559, %v7719
        %v7721 = vpop.f32.mrb[0].mxu0
        %7722 = vmatprep.mubr.bf16.mxu0 %v6382
        %7723 = vmatmul.mubr.bf16.gmra.mrb[0].mxu0 %v6381
        %v7724 = vpop.f32.mrb[0].mxu0
        %v7725 = vadd.f32 %v7564, %v7724
        %v7726 = vpop.f32.mrb[0].mxu0
        %v7727 = vpop.f32.mrb[0].mxu0
        %v7728 = vadd.f32 %v7567, %v7727
        %v7729 = vpop.f32.mrb[0].mxu0
        %7730 = vdwg.mxu0
        %v7732 = vlaneseq
        %v7733 = vshrl.u32 %v7732, 7
        %v7734 = vsub.s32 0, %v7733
        %v7735 = vrot.slane %v395, %v7734
        %v7736 = vlaneseq
        %v7737 = vshrl.u32 %v7736, 7
        %v7738 = vsub.s32 1, %v7737
        %v7739 = vrot.slane %v395, %v7738
        %v7742 = vadd.f32 %v7251, %v7735
        %v7743 = vadd.f32 %v7253, %v7739
        %v7744 = vadd.f32 %v7255, %v7735
        %v7745 = vadd.f32 %v7257, %v7739
        %v7746 = vadd.f32 %v7261, %v7735
        %v7747 = vadd.f32 %v7263, %v7739
        %v7748 = vadd.f32 %v7265, %v7735
        %v7749 = vadd.f32 %v7267, %v7739
        %v7750 = vadd.f32 %v7271, %v7735
        %v7751 = vadd.f32 %v7273, %v7739
        %v7752 = vadd.f32 %v7275, %v7735
        %v7753 = vadd.f32 %v7277, %v7739
        %v7754 = vadd.f32 %v7281, %v7735
        %v7755 = vadd.f32 %v7283, %v7739
        %v7756 = vadd.f32 %v7285, %v7735
        %v7757 = vadd.f32 %v7287, %v7739
        %v7758 = vadd.f32 %v7291, %v7735
        %v7759 = vadd.f32 %v7293, %v7739
        %v7760 = vadd.f32 %v7295, %v7735
        %v7761 = vadd.f32 %v7297, %v7739
        %v7762 = vadd.f32 %v7301, %v7735
        %v7763 = vadd.f32 %v7303, %v7739
        %v7764 = vadd.f32 %v7305, %v7735
        %v7765 = vadd.f32 %v7307, %v7739
        %v7766 = vadd.f32 %v7311, %v7735
        %v7767 = vadd.f32 %v7313, %v7739
        %v7768 = vadd.f32 %v7315, %v7735
        %v7769 = vadd.f32 %v7317, %v7739
        %v7770 = vadd.f32 %v7321, %v7735
        %v7771 = vadd.f32 %v7323, %v7739
        %v7772 = vadd.f32 %v7325, %v7735
        %v7773 = vadd.f32 %v7327, %v7739
        %v7774 = vadd.f32 %v7331, %v7735
        %v7775 = vadd.f32 %v7333, %v7739
        %v7776 = vadd.f32 %v7335, %v7735
        %v7777 = vadd.f32 %v7337, %v7739
        %v7778 = vadd.f32 %v7341, %v7735
        %v7779 = vadd.f32 %v7343, %v7739
        %v7780 = vadd.f32 %v7345, %v7735
        %v7781 = vadd.f32 %v7347, %v7739
        %v7782 = vadd.f32 %v7351, %v7735
        %v7783 = vadd.f32 %v7353, %v7739
        %v7784 = vadd.f32 %v7355, %v7735
        %v7785 = vadd.f32 %v7357, %v7739
        %v7786 = vadd.f32 %v7361, %v7735
        %v7787 = vadd.f32 %v7363, %v7739
        %v7788 = vadd.f32 %v7365, %v7735
        %v7789 = vadd.f32 %v7367, %v7739
        %v7790 = vadd.f32 %v7371, %v7735
        %v7791 = vadd.f32 %v7373, %v7739
        %v7792 = vadd.f32 %v7375, %v7735
        %v7793 = vadd.f32 %v7377, %v7739
        %v7794 = vadd.f32 %v7381, %v7735
        %v7795 = vadd.f32 %v7383, %v7739
        %v7796 = vadd.f32 %v7385, %v7735
        %v7797 = vadd.f32 %v7387, %v7739
        %v7798 = vadd.f32 %v7391, %v7735
        %v7799 = vadd.f32 %v7393, %v7739
        %v7800 = vadd.f32 %v7395, %v7735
        %v7801 = vadd.f32 %v7397, %v7739
        %v7802 = vadd.f32 %v7401, %v7735
        %v7803 = vadd.f32 %v7403, %v7739
        %v7804 = vadd.f32 %v7405, %v7735
        %v7805 = vadd.f32 %v7407, %v7739
        %v7806 = vmax.f32 %v7742, 0.0
        %v7807 = vmax.f32 %v7743, 0.0
        %v7808 = vmax.f32 %v7744, 0.0
        %v7809 = vmax.f32 %v7745, 0.0
        %v7810 = vmax.f32 %v7746, 0.0
        %v7811 = vmax.f32 %v7747, 0.0
        %v7812 = vmax.f32 %v7748, 0.0
        %v7813 = vmax.f32 %v7749, 0.0
        %v7814 = vmax.f32 %v7750, 0.0
        %v7815 = vmax.f32 %v7751, 0.0
        %v7816 = vmax.f32 %v7752, 0.0
        %v7817 = vmax.f32 %v7753, 0.0
        %v7818 = vmax.f32 %v7754, 0.0
        %v7819 = vmax.f32 %v7755, 0.0
        %v7820 = vmax.f32 %v7756, 0.0
        %v7821 = vmax.f32 %v7757, 0.0
        %v7822 = vmax.f32 %v7758, 0.0
        %v7823 = vmax.f32 %v7759, 0.0
        %v7824 = vmax.f32 %v7760, 0.0
        %v7825 = vmax.f32 %v7761, 0.0
        %v7826 = vmax.f32 %v7762, 0.0
        %v7827 = vmax.f32 %v7763, 0.0
        %v7828 = vmax.f32 %v7764, 0.0
        %v7829 = vmax.f32 %v7765, 0.0
        %v7830 = vmax.f32 %v7766, 0.0
        %v7831 = vmax.f32 %v7767, 0.0
        %v7832 = vmax.f32 %v7768, 0.0
        %v7833 = vmax.f32 %v7769, 0.0
        %v7834 = vmax.f32 %v7770, 0.0
        %v7835 = vmax.f32 %v7771, 0.0
        %v7836 = vmax.f32 %v7772, 0.0
        %v7837 = vmax.f32 %v7773, 0.0
        %v7838 = vmax.f32 %v7774, 0.0
        %v7839 = vmax.f32 %v7775, 0.0
        %v7840 = vmax.f32 %v7776, 0.0
        %v7841 = vmax.f32 %v7777, 0.0
        %v7842 = vmax.f32 %v7778, 0.0
        %v7843 = vmax.f32 %v7779, 0.0
        %v7844 = vmax.f32 %v7780, 0.0
        %v7845 = vmax.f32 %v7781, 0.0
        %v7846 = vmax.f32 %v7782, 0.0
        %v7847 = vmax.f32 %v7783, 0.0
        %v7848 = vmax.f32 %v7784, 0.0
        %v7849 = vmax.f32 %v7785, 0.0
        %v7850 = vmax.f32 %v7786, 0.0
        %v7851 = vmax.f32 %v7787, 0.0
        %v7852 = vmax.f32 %v7788, 0.0
        %v7853 = vmax.f32 %v7789, 0.0
        %v7854 = vmax.f32 %v7790, 0.0
        %v7855 = vmax.f32 %v7791, 0.0
        %v7856 = vmax.f32 %v7792, 0.0
        %v7857 = vmax.f32 %v7793, 0.0
        %v7858 = vmax.f32 %v7794, 0.0
        %v7859 = vmax.f32 %v7795, 0.0
        %v7860 = vmax.f32 %v7796, 0.0
        %v7861 = vmax.f32 %v7797, 0.0
        %v7862 = vmax.f32 %v7798, 0.0
        %v7863 = vmax.f32 %v7799, 0.0
        %v7864 = vmax.f32 %v7800, 0.0
        %v7865 = vmax.f32 %v7801, 0.0
        %v7866 = vmax.f32 %v7802, 0.0
        %v7867 = vmax.f32 %v7803, 0.0
        %v7868 = vmax.f32 %v7804, 0.0
        %v7869 = vmax.f32 %v7805, 0.0
        %v7871 = vlaneseq
        %v7872 = vshrl.u32 %v7871, 7
        %v7873 = vsub.s32 0, %v7872
        %v7874 = vrot.slane %v396, %v7873
        %v7876 = vadd.f32 %v7605, %v7874
        %v7877 = vadd.f32 %v7608, %v7874
        %v7878 = vadd.f32 %v7613, %v7874
        %v7879 = vadd.f32 %v7616, %v7874
        %v7880 = vadd.f32 %v7621, %v7874
        %v7881 = vadd.f32 %v7624, %v7874
        %v7882 = vadd.f32 %v7629, %v7874
        %v7883 = vadd.f32 %v7632, %v7874
        %v7884 = vadd.f32 %v7637, %v7874
        %v7885 = vadd.f32 %v7640, %v7874
        %v7886 = vadd.f32 %v7645, %v7874
        %v7887 = vadd.f32 %v7648, %v7874
        %v7888 = vadd.f32 %v7653, %v7874
        %v7889 = vadd.f32 %v7656, %v7874
        %v7890 = vadd.f32 %v7661, %v7874
        %v7891 = vadd.f32 %v7664, %v7874
        %v7892 = vadd.f32 %v7669, %v7874
        %v7893 = vadd.f32 %v7672, %v7874
        %v7894 = vadd.f32 %v7677, %v7874
        %v7895 = vadd.f32 %v7680, %v7874
        %v7896 = vadd.f32 %v7685, %v7874
        %v7897 = vadd.f32 %v7688, %v7874
        %v7898 = vadd.f32 %v7693, %v7874
        %v7899 = vadd.f32 %v7696, %v7874
        %v7900 = vadd.f32 %v7701, %v7874
        %v7901 = vadd.f32 %v7704, %v7874
        %v7902 = vadd.f32 %v7709, %v7874
        %v7903 = vadd.f32 %v7712, %v7874
        %v7904 = vadd.f32 %v7717, %v7874
        %v7905 = vadd.f32 %v7720, %v7874
        %v7906 = vadd.f32 %v7725, %v7874
        %v7907 = vadd.f32 %v7728, %v7874
        %v7908 = vpack.c.bf16 %v7808, %v7806
        %v7909 = vpack.c.bf16 %v7809, %v7807
        %v7910 = vpack.c.bf16 %v7812, %v7810
        %v7911 = vpack.c.bf16 %v7813, %v7811
        %v7912 = vpack.c.bf16 %v7816, %v7814
        %v7913 = vpack.c.bf16 %v7817, %v7815
        %v7914 = vpack.c.bf16 %v7820, %v7818
        %v7915 = vpack.c.bf16 %v7821, %v7819
        %v7916 = vpack.c.bf16 %v7824, %v7822
        %v7917 = vpack.c.bf16 %v7825, %v7823
        %v7918 = vpack.c.bf16 %v7828, %v7826
        %v7919 = vpack.c.bf16 %v7829, %v7827
        %v7920 = vpack.c.bf16 %v7832, %v7830
        %v7921 = vpack.c.bf16 %v7833, %v7831
        %v7922 = vpack.c.bf16 %v7836, %v7834
        %v7923 = vpack.c.bf16 %v7837, %v7835
        %v7924 = vpack.c.bf16 %v7840, %v7838
        %v7925 = vpack.c.bf16 %v7841, %v7839
        %v7926 = vpack.c.bf16 %v7844, %v7842
        %v7927 = vpack.c.bf16 %v7845, %v7843
        %v7928 = vpack.c.bf16 %v7848, %v7846
        %v7929 = vpack.c.bf16 %v7849, %v7847
        %v7930 = vpack.c.bf16 %v7852, %v7850
        %v7931 = vpack.c.bf16 %v7853, %v7851
        %v7932 = vpack.c.bf16 %v7856, %v7854
        %v7933 = vpack.c.bf16 %v7857, %v7855
        %v7934 = vpack.c.bf16 %v7860, %v7858
        %v7935 = vpack.c.bf16 %v7861, %v7859
        %v7936 = vpack.c.bf16 %v7864, %v7862
        %v7937 = vpack.c.bf16 %v7865, %v7863
        %v7938 = vpack.c.bf16 %v7868, %v7866
        %v7939 = vpack.c.bf16 %v7869, %v7867
        %v7940 = vld [vmem:[#allocation10] sm:$0xf]
        %v7941 = vld [vmem:[#allocation10 + $0x4] sm:$0xf]
        %v7942 = vld [vmem:[#allocation10 + $0x8] sm:$0xf]
        %v7943 = vld [vmem:[#allocation10 + $0xc] sm:$0xf]
        %v7944 = vld [vmem:[#allocation10 + $0x10] sm:$0xf]
        %v7945 = vld [vmem:[#allocation10 + $0x14] sm:$0xf]
        %v7946 = vld [vmem:[#allocation10 + $0x18] sm:$0xf]
        %v7947 = vld [vmem:[#allocation10 + $0x1c] sm:$0xf]
        %v7948 = vld [vmem:[#allocation10 + $0x20] sm:$0xf]
        %v7949 = vld [vmem:[#allocation10 + $0x24] sm:$0xf]
        %v7950 = vld [vmem:[#allocation10 + $0x28] sm:$0xf]
        %v7951 = vld [vmem:[#allocation10 + $0x2c] sm:$0xf]
        %v7952 = vld [vmem:[#allocation10 + $0x30] sm:$0xf]
        %v7953 = vld [vmem:[#allocation10 + $0x34] sm:$0xf]
        %v7954 = vld [vmem:[#allocation10 + $0x38] sm:$0xf]
        %v7955 = vld [vmem:[#allocation10 + $0x3c] sm:$0xf]
        %v7956 = vld [vmem:[#allocation10 + $0x40] sm:$0xf]
        %v7957 = vld [vmem:[#allocation10 + $0x44] sm:$0xf]
        %v7958 = vld [vmem:[#allocation10 + $0x48] sm:$0xf]
        %v7959 = vld [vmem:[#allocation10 + $0x4c] sm:$0xf]
        %v7960 = vld [vmem:[#allocation10 + $0x50] sm:$0xf]
        %v7961 = vld [vmem:[#allocation10 + $0x54] sm:$0xf]
        %v7962 = vld [vmem:[#allocation10 + $0x58] sm:$0xf]
        %v7963 = vld [vmem:[#allocation10 + $0x5c] sm:$0xf]
        %v7964 = vld [vmem:[#allocation10 + $0x60] sm:$0xf]
        %v7965 = vld [vmem:[#allocation10 + $0x64] sm:$0xf]
        %v7966 = vld [vmem:[#allocation10 + $0x68] sm:$0xf]
        %v7967 = vld [vmem:[#allocation10 + $0x6c] sm:$0xf]
        %v7968 = vld [vmem:[#allocation10 + $0x70] sm:$0xf]
        %v7969 = vld [vmem:[#allocation10 + $0x74] sm:$0xf]
        %v7970 = vld [vmem:[#allocation10 + $0x78] sm:$0xf]
        %v7971 = vld [vmem:[#allocation10 + $0x7c] sm:$0xf]
        %v7973 = vlaneseq
        %v7974 = vshrl.u32 %v7973, 7
        %v7975 = vsub.s32 0, %v7974
        %v7976 = vrot.slane %v397, %v7975
        %v8010 = vunpack.c.l.b16 %v7940
        %v8011 = vunpack.c.l.b16 %v7941
        %v8012 = vunpack.c.l.b16 %v7942
        %v8013 = vunpack.c.l.b16 %v7943
        %v8014 = vunpack.c.l.b16 %v7944
        %v8015 = vunpack.c.l.b16 %v7945
        %v8016 = vunpack.c.l.b16 %v7946
        %v8017 = vunpack.c.l.b16 %v7947
        %v8018 = vunpack.c.l.b16 %v7948
        %v8019 = vunpack.c.l.b16 %v7949
        %v8020 = vunpack.c.l.b16 %v7950
        %v8021 = vunpack.c.l.b16 %v7951
        %v8022 = vunpack.c.l.b16 %v7952
        %v8023 = vunpack.c.l.b16 %v7953
        %v8024 = vunpack.c.l.b16 %v7954
        %v8025 = vunpack.c.l.b16 %v7955
        %v8026 = vunpack.c.l.b16 %v7956
        %v8027 = vunpack.c.l.b16 %v7957
        %v8028 = vunpack.c.l.b16 %v7958
        %v8029 = vunpack.c.l.b16 %v7959
        %v8030 = vunpack.c.l.b16 %v7960
        %v8031 = vunpack.c.l.b16 %v7961
        %v8032 = vunpack.c.l.b16 %v7962
        %v8033 = vunpack.c.l.b16 %v7963
        %v8034 = vunpack.c.l.b16 %v7964
        %v8035 = vunpack.c.l.b16 %v7965
        %v8036 = vunpack.c.l.b16 %v7966
        %v8037 = vunpack.c.l.b16 %v7967
        %v8038 = vunpack.c.l.b16 %v7968
        %v8039 = vunpack.c.l.b16 %v7969
        %v8040 = vunpack.c.l.b16 %v7970
        %v8041 = vunpack.c.l.b16 %v7971
        %v8042 = vpack.c.b16 %v8011, %v8010
        %v8043 = vpack.c.b16 %v8013, %v8012
        %v8044 = vpack.c.b16 %v8015, %v8014
        %v8045 = vpack.c.b16 %v8017, %v8016
        %v8046 = vpack.c.b16 %v8019, %v8018
        %v8047 = vpack.c.b16 %v8021, %v8020
        %v8048 = vpack.c.b16 %v8023, %v8022
        %v8049 = vpack.c.b16 %v8025, %v8024
        %v8050 = vpack.c.b16 %v8027, %v8026
        %v8051 = vpack.c.b16 %v8029, %v8028
        %v8052 = vpack.c.b16 %v8031, %v8030
        %v8053 = vpack.c.b16 %v8033, %v8032
        %v8054 = vpack.c.b16 %v8035, %v8034
        %v8055 = vpack.c.b16 %v8037, %v8036
        %v8056 = vpack.c.b16 %v8039, %v8038
        %v8057 = vpack.c.b16 %v8041, %v8040
        %8074 = vmatprep.subr.bf16.mxu0 0
        %8075 = vmatpush1.bf16.msra.mxu0 %v8042
        %8076 = vmatprep.subr.bf16.mxu0 0
        %8077 = vmatpush1.bf16.msra.mxu0 %v8043
        %8078 = vmatprep.subr.bf16.mxu0 0
        %8079 = vmatpush1.bf16.msra.mxu0 %v8044
        %8080 = vmatprep.subr.bf16.mxu0 0
        %8081 = vmatpush1.bf16.msra.mxu0 %v8045
        %8082 = vmatprep.subr.bf16.mxu0 0
        %8083 = vmatpush1.bf16.msra.mxu0 %v8046
        %8084 = vmatprep.subr.bf16.mxu0 0
        %8085 = vmatpush1.bf16.msra.mxu0 %v8047
        %8086 = vmatprep.subr.bf16.mxu0 0
        %8087 = vmatpush1.bf16.msra.mxu0 %v8048
        %8088 = vmatprep.subr.bf16.mxu0 0
        %8089 = vmatpush1.bf16.msra.mxu0 %v8049
        %8090 = vmatprep.subr.bf16.mxu0 0
        %8091 = vmatpush1.bf16.msra.mxu0 %v8050
        %8092 = vmatprep.subr.bf16.mxu0 0
        %8093 = vmatpush1.bf16.msra.mxu0 %v8051
        %8094 = vmatprep.subr.bf16.mxu0 0
        %8095 = vmatpush1.bf16.msra.mxu0 %v8052
        %8096 = vmatprep.subr.bf16.mxu0 0
        %8097 = vmatpush1.bf16.msra.mxu0 %v8053
        %8098 = vmatprep.subr.bf16.mxu0 0
        %8099 = vmatpush1.bf16.msra.mxu0 %v8054
        %8100 = vmatprep.subr.bf16.mxu0 0
        %8101 = vmatpush1.bf16.msra.mxu0 %v8055
        %8102 = vmatprep.subr.bf16.mxu0 0
        %8103 = vmatpush1.bf16.msra.mxu0 %v8056
        %8104 = vmatprep.subr.bf16.mxu0 0
        %8105 = vmatpush1.bf16.msra.mxu0 %v8057
        %8106 = vmatprep.mubr.bf16.mxu0 %v7909
        %8107 = vmatmul.mubr.bf16.gmra.mrb[0].mxu0 %v7908
        %v8108 = vpop.f32.mrb[0].mxu0
        %v8109 = vadd.f32 %v7976, %v8108
        %v8110 = vpop.f32.mrb[0].mxu0
        %v8111 = vpop.f32.mrb[0].mxu0
        %v8112 = vadd.f32 %v7976, %v8111
        %v8113 = vpop.f32.mrb[0].mxu0
        %8114 = vmatprep.mubr.bf16.mxu0 %v7911
        %8115 = vmatmul.mubr.bf16.gmra.mrb[0].mxu0 %v7910
        %v8116 = vpop.f32.mrb[0].mxu0
        %v8117 = vadd.f32 %v7976, %v8116
        %v8118 = vpop.f32.mrb[0].mxu0
        %v8119 = vpop.f32.mrb[0].mxu0
        %v8120 = vadd.f32 %v7976, %v8119
        %v8121 = vpop.f32.mrb[0].mxu0
        %8122 = vmatprep.mubr.bf16.mxu0 %v7913
        %8123 = vmatmul.mubr.bf16.gmra.mrb[0].mxu0 %v7912
        %v8124 = vpop.f32.mrb[0].mxu0
        %v8125 = vadd.f32 %v7976, %v8124
        %v8126 = vpop.f32.mrb[0].mxu0
        %v8127 = vpop.f32.mrb[0].mxu0
        %v8128 = vadd.f32 %v7976, %v8127
        %v8129 = vpop.f32.mrb[0].mxu0
        %8130 = vmatprep.mubr.bf16.mxu0 %v7915
        %8131 = vmatmul.mubr.bf16.gmra.mrb[0].mxu0 %v7914
        %v8132 = vpop.f32.mrb[0].mxu0
        %v8133 = vadd.f32 %v7976, %v8132
        %v8134 = vpop.f32.mrb[0].mxu0
        %v8135 = vpop.f32.mrb[0].mxu0
        %v8136 = vadd.f32 %v7976, %v8135
        %v8137 = vpop.f32.mrb[0].mxu0
        %8138 = vmatprep.mubr.bf16.mxu0 %v7917
        %8139 = vmatmul.mubr.bf16.gmra.mrb[0].mxu0 %v7916
        %v8140 = vpop.f32.mrb[0].mxu0
        %v8141 = vadd.f32 %v7976, %v8140
        %v8142 = vpop.f32.mrb[0].mxu0
        %v8143 = vpop.f32.mrb[0].mxu0
        %v8144 = vadd.f32 %v7976, %v8143
        %v8145 = vpop.f32.mrb[0].mxu0
        %8146 = vmatprep.mubr.bf16.mxu0 %v7919
        %8147 = vmatmul.mubr.bf16.gmra.mrb[0].mxu0 %v7918
        %v8148 = vpop.f32.mrb[0].mxu0
        %v8149 = vadd.f32 %v7976, %v8148
        %v8150 = vpop.f32.mrb[0].mxu0
        %v8151 = vpop.f32.mrb[0].mxu0
        %v8152 = vadd.f32 %v7976, %v8151
        %v8153 = vpop.f32.mrb[0].mxu0
        %8154 = vmatprep.mubr.bf16.mxu0 %v7921
        %8155 = vmatmul.mubr.bf16.gmra.mrb[0].mxu0 %v7920
        %v8156 = vpop.f32.mrb[0].mxu0
        %v8157 = vadd.f32 %v7976, %v8156
        %v8158 = vpop.f32.mrb[0].mxu0
        %v8159 = vpop.f32.mrb[0].mxu0
        %v8160 = vadd.f32 %v7976, %v8159
        %v8161 = vpop.f32.mrb[0].mxu0
        %8162 = vmatprep.mubr.bf16.mxu0 %v7923
        %8163 = vmatmul.mubr.bf16.gmra.mrb[0].mxu0 %v7922
        %v8164 = vpop.f32.mrb[0].mxu0
        %v8165 = vadd.f32 %v7976, %v8164
        %v8166 = vpop.f32.mrb[0].mxu0
        %v8167 = vpop.f32.mrb[0].mxu0
        %v8168 = vadd.f32 %v7976, %v8167
        %v8169 = vpop.f32.mrb[0].mxu0
        %8170 = vmatprep.mubr.bf16.mxu0 %v7925
        %8171 = vmatmul.mubr.bf16.gmra.mrb[0].mxu0 %v7924
        %v8172 = vpop.f32.mrb[0].mxu0
        %v8173 = vadd.f32 %v7976, %v8172
        %v8174 = vpop.f32.mrb[0].mxu0
        %v8175 = vpop.f32.mrb[0].mxu0
        %v8176 = vadd.f32 %v7976, %v8175
        %v8177 = vpop.f32.mrb[0].mxu0
        %8178 = vmatprep.mubr.bf16.mxu0 %v7927
        %8179 = vmatmul.mubr.bf16.gmra.mrb[0].mxu0 %v7926
        %v8180 = vpop.f32.mrb[0].mxu0
        %v8181 = vadd.f32 %v7976, %v8180
        %v8182 = vpop.f32.mrb[0].mxu0
        %v8183 = vpop.f32.mrb[0].mxu0
        %v8184 = vadd.f32 %v7976, %v8183
        %v8185 = vpop.f32.mrb[0].mxu0
        %8186 = vmatprep.mubr.bf16.mxu0 %v7929
        %8187 = vmatmul.mubr.bf16.gmra.mrb[0].mxu0 %v7928
        %v8188 = vpop.f32.mrb[0].mxu0
        %v8189 = vadd.f32 %v7976, %v8188
        %v8190 = vpop.f32.mrb[0].mxu0
        %v8191 = vpop.f32.mrb[0].mxu0
        %v8192 = vadd.f32 %v7976, %v8191
        %v8193 = vpop.f32.mrb[0].mxu0
        %8194 = vmatprep.mubr.bf16.mxu0 %v7931
        %8195 = vmatmul.mubr.bf16.gmra.mrb[0].mxu0 %v7930
        %v8196 = vpop.f32.mrb[0].mxu0
        %v8197 = vadd.f32 %v7976, %v8196
        %v8198 = vpop.f32.mrb[0].mxu0
        %v8199 = vpop.f32.mrb[0].mxu0
        %v8200 = vadd.f32 %v7976, %v8199
        %v8201 = vpop.f32.mrb[0].mxu0
        %8202 = vmatprep.mubr.bf16.mxu0 %v7933
        %8203 = vmatmul.mubr.bf16.gmra.mrb[0].mxu0 %v7932
        %v8204 = vpop.f32.mrb[0].mxu0
        %v8205 = vadd.f32 %v7976, %v8204
        %v8206 = vpop.f32.mrb[0].mxu0
        %v8207 = vpop.f32.mrb[0].mxu0
        %v8208 = vadd.f32 %v7976, %v8207
        %v8209 = vpop.f32.mrb[0].mxu0
        %8210 = vmatprep.mubr.bf16.mxu0 %v7935
        %8211 = vmatmul.mubr.bf16.gmra.mrb[0].mxu0 %v7934
        %v8212 = vpop.f32.mrb[0].mxu0
        %v8213 = vadd.f32 %v7976, %v8212
        %v8214 = vpop.f32.mrb[0].mxu0
        %v8215 = vpop.f32.mrb[0].mxu0
        %v8216 = vadd.f32 %v7976, %v8215
        %v8217 = vpop.f32.mrb[0].mxu0
        %8218 = vmatprep.mubr.bf16.mxu0 %v7937
        %8219 = vmatmul.mubr.bf16.gmra.mrb[0].mxu0 %v7936
        %v8220 = vpop.f32.mrb[0].mxu0
        %v8221 = vadd.f32 %v7976, %v8220
        %v8222 = vpop.f32.mrb[0].mxu0
        %v8223 = vpop.f32.mrb[0].mxu0
        %v8224 = vadd.f32 %v7976, %v8223
        %v8225 = vpop.f32.mrb[0].mxu0
        %8226 = vmatprep.mubr.bf16.mxu0 %v7939
        %8227 = vmatmul.mubr.bf16.gmra.mrb[0].mxu0 %v7938
        %v8228 = vpop.f32.mrb[0].mxu0
        %v8229 = vadd.f32 %v7976, %v8228
        %v8230 = vpop.f32.mrb[0].mxu0
        %v8231 = vpop.f32.mrb[0].mxu0
        %v8232 = vadd.f32 %v7976, %v8231
        %v8233 = vpop.f32.mrb[0].mxu0
        %8234 = vdwg.mxu0
        %v8235 = vadd.f32 %v8109, %v7876
        %v8236 = vadd.f32 %v8112, %v7877
        %v8237 = vadd.f32 %v8117, %v7878
        %v8238 = vadd.f32 %v8120, %v7879
        %v8239 = vadd.f32 %v8125, %v7880
        %v8240 = vadd.f32 %v8128, %v7881
        %v8241 = vadd.f32 %v8133, %v7882
        %v8242 = vadd.f32 %v8136, %v7883
        %v8243 = vadd.f32 %v8141, %v7884
        %v8244 = vadd.f32 %v8144, %v7885
        %v8245 = vadd.f32 %v8149, %v7886
        %v8246 = vadd.f32 %v8152, %v7887
        %v8247 = vadd.f32 %v8157, %v7888
        %v8248 = vadd.f32 %v8160, %v7889
        %v8249 = vadd.f32 %v8165, %v7890
        %v8250 = vadd.f32 %v8168, %v7891
        %v8251 = vadd.f32 %v8173, %v7892
        %v8252 = vadd.f32 %v8176, %v7893
        %v8253 = vadd.f32 %v8181, %v7894
        %v8254 = vadd.f32 %v8184, %v7895
        %v8255 = vadd.f32 %v8189, %v7896
        %v8256 = vadd.f32 %v8192, %v7897
        %v8257 = vadd.f32 %v8197, %v7898
        %v8258 = vadd.f32 %v8200, %v7899
        %v8259 = vadd.f32 %v8205, %v7900
        %v8260 = vadd.f32 %v8208, %v7901
        %v8261 = vadd.f32 %v8213, %v7902
        %v8262 = vadd.f32 %v8216, %v7903
        %v8263 = vadd.f32 %v8221, %v7904
        %v8264 = vadd.f32 %v8224, %v7905
        %v8265 = vadd.f32 %v8229, %v7906
        %v8266 = vadd.f32 %v8232, %v7907
        %8267 = vst [vmem:[%s340] sm:$0xff] %v8235
        %8268 = vst [vmem:[%s340 + $0x8] sm:$0xff] %v8236
        %8269 = vst [vmem:[%s340 + $0x10] sm:$0xff] %v8237
        %8270 = vst [vmem:[%s340 + $0x18] sm:$0xff] %v8238
        %8271 = vst [vmem:[%s340 + $0x20] sm:$0xff] %v8239
        %8272 = vst [vmem:[%s340 + $0x28] sm:$0xff] %v8240
        %8273 = vst [vmem:[%s340 + $0x30] sm:$0xff] %v8241
        %8274 = vst [vmem:[%s340 + $0x38] sm:$0xff] %v8242
        %8275 = vst [vmem:[%s340 + $0x40] sm:$0xff] %v8243
        %8276 = vst [vmem:[%s340 + $0x48] sm:$0xff] %v8244
        %8277 = vst [vmem:[%s340 + $0x50] sm:$0xff] %v8245
        %8278 = vst [vmem:[%s340 + $0x58] sm:$0xff] %v8246
        %8279 = vst [vmem:[%s340 + $0x60] sm:$0xff] %v8247
        %8280 = vst [vmem:[%s340 + $0x68] sm:$0xff] %v8248
        %8281 = vst [vmem:[%s340 + $0x70] sm:$0xff] %v8249
        %8282 = vst [vmem:[%s340 + $0x78] sm:$0xff] %v8250
        %8283 = vst [vmem:[%s340 + $0x80] sm:$0xff] %v8251
        %8284 = vst [vmem:[%s340 + $0x88] sm:$0xff] %v8252
        %8285 = vst [vmem:[%s340 + $0x90] sm:$0xff] %v8253
        %8286 = vst [vmem:[%s340 + $0x98] sm:$0xff] %v8254
        %8287 = vst [vmem:[%s340 + $0xa0] sm:$0xff] %v8255
        %8288 = vst [vmem:[%s340 + $0xa8] sm:$0xff] %v8256
        %8289 = vst [vmem:[%s340 + $0xb0] sm:$0xff] %v8257
        %8290 = vst [vmem:[%s340 + $0xb8] sm:$0xff] %v8258
        %8291 = vst [vmem:[%s340 + $0xc0] sm:$0xff] %v8259
        %8292 = vst [vmem:[%s340 + $0xc8] sm:$0xff] %v8260
        %8293 = vst [vmem:[%s340 + $0xd0] sm:$0xff] %v8261
        %8294 = vst [vmem:[%s340 + $0xd8] sm:$0xff] %v8262
        %8295 = vst [vmem:[%s340 + $0xe0] sm:$0xff] %v8263
        %8296 = vst [vmem:[%s340 + $0xe8] sm:$0xff] %v8264
        %8297 = vst [vmem:[%s340 + $0xf0] sm:$0xff] %v8265
        %8298 = vst [vmem:[%s340 + $0xf8] sm:$0xff] %v8266
        %s8299 = sand.u32 %s165, 1
        %s8300 = scalar_lea.sflag [#allocation4], %s8299
        %s8301 = sand.u32 %s165, 1
        %s8302 = smul.addr %s8301, 256
        %s8303 = scalar_lea.vmem [#allocation13], %s8302
        // Predicated region
        $region69: #{tpu_custom_call.1} parent=43 // pred_check
          %p8304 = pneg %p175
        $region70: #{tpu_custom_call.1} parent=43 // pred_check_branch
          %8306 = sbr.rel (%p8304) target = $region72
        $region71: #{tpu_custom_call.1} parent=43 // pred_region
          %s8307 = smul.u32 32, %s26
          %s8309 = ssub.s32 4096, 4096
          %8310 = vsyncadd %s8300, %s8309
          %s8311 = smul.addr %s8307, 128
          %s8312 = scalar_lea.hbm %s6, %s8311
          %s8313 = sshll.u32 %s8303, 4
          %s8314 = int_to_ptr.vmem [resolvable:$true] %s8313
          %8319 = dma.vmem_to_hbm [thread:$0]  %s8314, 4096, %s8312, %s8300, 128, 128, 8
        $region72: #{tpu_custom_call.1} parent=43 // pred_fallthru
          _
      $region44: #{tpu_custom_call.1} parent=5 // pred_fallthru
        _
      %p8320 = scmp.le.s32.totalorder 2, %s21
      // Predicated region
      $region73: #{tpu_custom_call.1} parent=5 // pred_check
        %p8321 = pneg %p8320
      $region74: #{tpu_custom_call.1} parent=5 // pred_check_branch
        %8323 = sbr.rel (%p8321) target = $region76
      $region75: #{tpu_custom_call.1} parent=5 // pred_region
        %s8324 = ssub.s32 %s21, 2
        // Predicated region
        $region77: #{tpu_custom_call.1} parent=75 // pred_check
          %p8325 = pneg %p181
        $region78: #{tpu_custom_call.1} parent=75 // pred_check_branch
          %8327 = sbr.rel (%p8325) target = $region80
        $region79: #{tpu_custom_call.1} parent=75 // pred_region
          %s8328 = sand.u32 %s166, 1
          %s8329 = scalar_lea.sflag [#allocation4], %s8328
          %s8330 = sand.u32 %s166, 1
          %s8331 = smul.addr %s8330, 256
          %s8332 = scalar_lea.vmem [#allocation13], %s8331
          %8333 = dma.done %s8329, 4096
        $region80: #{tpu_custom_call.1} parent=75 // pred_fallthru
          _
      $region76: #{tpu_custom_call.1} parent=5 // pred_fallthru
        _
    $region6: #{tpu_custom_call.1} parent=1 // loop_footer
      %s25 = sadd.s32 1, %s21
    $region7: #{tpu_custom_call.1} parent=1 // loop_footer_branch
      %20 = sbr.rel target = $region3
    $region8: #{tpu_custom_call.1} parent=1 // loop_exit
      _
    %8334 = vsyncpa [#allocation3], 1
    %s8335 = scalar_lea.sflag [#allocation3], 1
    %8336 = vsyncpa %s8335, 1
    %8337 = vsyncpa [#allocation6], 1
    %8338 = vsyncpa [#allocation9], 1
    %8339 = vsyncpa [#allocation12], 1
    %8340 = vsyncpa [#allocation4], 1
    %s8341 = scalar_lea.sflag [#allocation4], 1
    %8342 = vsyncpa %s8341, 1

</llo_original>
